<compile_context>
chip_gen: v7x
topology: tpu7x:2x2x1
jax: 0.10.0
libtpu: 0.0.40
codegen_flags: <defaults>
</compile_context>

<pallas_src>
import jax
import jax.numpy as jnp
from jax.experimental import pallas as pl
from jax.experimental.pallas import tpu as pltpu

KSIZE = 5
POOL = 3

W0 = 133                          # input width required by fc1 (96 flat features)
C1, C2, C3 = 32, 16, 32
W1_OUT = W0 - KSIZE + 1           # 129
W1_P = W1_OUT // POOL             # 43
W2_OUT = W1_P - KSIZE + 1         # 39
W2_P = W2_OUT // POOL             # 13
W3_OUT = W2_P - KSIZE + 1         # 9
W3_P = W3_OUT // POOL             # 3
N_FLAT = W3_P * C3                # 96
N_OUT = 7


# ---------------------------------------------------------------------------
# Kernel: conv1(Toeplitz) -> maxpool/bias/relu -> 3 fused MXU dots.
# ---------------------------------------------------------------------------
def cnn4_kernel(x_ref, t1_ref, b1_ref, t2_ref, b2_ref, t3_ref, b3_ref,
                wf_ref, bf_ref, o_ref):
    tb = x_ref.shape[1]
    mxu_dt = t1_ref.dtype                                   # bf16 (fast) or f32

    x = x_ref[...].astype(mxu_dt)                           # (133, TB)

    # conv1 as one banded-Toeplitz MXU matmul: (4128, 133) @ (133, TB).
    h1 = jnp.dot(t1_ref[...], x, preferred_element_type=jnp.float32)   # (4128, TB)

    # maxPool1 (1,3)/3: leading-dim regroup + elementwise max.  Bias is constant
    # over each pooled window, so adding it after the pool is exact (3x cheaper).
    h1 = h1.reshape(W1_P, POOL, C1, tb)                     # (43, 3, 32, TB)
    h = jnp.maximum(jnp.maximum(h1[:, 0], h1[:, 1]), h1[:, 2])
    h = jnp.maximum(h + b1_ref[...][None], 0.0)             # bias + relu1, (43,32,TB)
    h = h.reshape(W1_P * C1, tb).astype(mxu_dt)             # free merge -> (1376, TB)

    # conv2 as ONE block-Toeplitz matmul + relu2.
    h2 = jnp.dot(t2_ref[...], h, preferred_element_type=jnp.float32) + b2_ref[...]
    h2 = jnp.maximum(h2, 0.0).astype(mxu_dt)                # (624, TB)

    # avgPool1 folded into conv3's weight -> one dot; then relu3.
    h3 = jnp.dot(t3_ref[...], h2, preferred_element_type=jnp.float32) + b3_ref[...]
    h3 = jnp.maximum(h3, 0.0).astype(mxu_dt)                # (288, TB)

    # TODO(synk): F.dropout(p=0.5) is identity here (eval mode); training mode would
    # need a pltpu.prng_* mask before this dot.
    # avgPool2 + flatten(+torch-order perm) + fc1 folded into one (7, 288) weight.
    o_ref[...] = (jnp.dot(wf_ref[...], h3, preferred_element_type=jnp.float32)
                  + bf_ref[...])


# ---------------------------------------------------------------------------
# One-time weight repacks (plain XLA, outside the kernel).
# ---------------------------------------------------------------------------
def conv_toeplitz(w, w_in):
    """w: (Cout, Cin, K) -> T: (Wout*Cout, Win*Cin), T[wo*Cout+o, (wo+k)*Cin+c] = w[o,c,k]."""
    cout, cin, ksz = w.shape
    w_out = w_in - ksz + 1
    t = jnp.zeros((w_out, cout, w_in, cin), jnp.float32)
    wo = jnp.arange(w_out)
    for k in range(ksz):
        t = t.at[wo, :, wo + k, :].set(
            jnp.broadcast_to(w[:, :, k].astype(jnp.float32), (w_out, cout, cin)))
    return t.reshape(w_out * cout, w_in * cin)


def avgpool_matrix(w_in, c):
    """A: (Wout*c, Win*c) with A[wp*c+ch, (3wp+j)*c+ch] = 1/3 (kernel 3, stride 3)."""
    w_out = w_in // POOL
    a = jnp.zeros((w_out, c, w_in, c), jnp.float32)
    wp = jnp.arange(w_out)
    eye = jnp.eye(c, dtype=jnp.float32) / POOL
    for j in range(POOL):
        a = a.at[wp, :, wp * POOL + j, :].set(jnp.broadcast_to(eye, (w_out, c, c)))
    return a.reshape(w_out * c, w_in * c)


def _choose_tb(n, tb_max=256):
    """Batch tile: multiple of 128; >= 2 grid steps when n > 128 (v7x dual-TC)."""
    if n <= 128:
        return 128
    half = -(-n // 2)                              # ceil(n/2)
    return max(128, min(tb_max, (half // 128) * 128))


def cnn4_forward(x_nchw, params, tb=None, use_bf16=True):
    """x_nchw: (N, 1, 1, 133) -> (N, 7).  tb (if given) must be a multiple of 128.

    On v5e/v6e (128 MiB VMEM) tb=512 is a valid choice; the default chooser caps at
    256 to keep >= 2 parallel grid steps and stay well inside v7x's 64 MiB VMEM.
    """
    w1, b1, w2, b2, w3, b3, wf, bf = params
    n = x_nchw.shape[0]
    assert x_nchw.shape[1:] == (1, 1, W0), x_nchw.shape
    if tb is None:
        tb = _choose_tb(n)
    assert tb % 128 == 0, tb

    # (N,1,1,W) -> (W, N): batch on lanes; lane-dense (W0, TB) DMA blocks.
    x_wn = jnp.transpose(x_nchw[:, 0, 0, :], (1, 0)).astype(jnp.float32)
    n_pad = pl.cdiv(n, tb) * tb
    if n_pad != n:
        x_wn = jnp.pad(x_wn, ((0, 0), (0, n_pad - n)))

    mxu_dtype = jnp.bfloat16 if use_bf16 else jnp.float32
    hp = jax.lax.Precision.HIGHEST

    # conv1 banded Toeplitz: (4128, 133).
    t1 = conv_toeplitz(w1, W0).astype(mxu_dtype)
    # conv2 block Toeplitz: (624, 1376).
    t2 = conv_toeplitz(w2, W1_P).astype(mxu_dtype)
    # conv3 with avgPool1 folded in: (288, 208) @ (208, 624) -> (288, 624).
    t3p = jnp.dot(conv_toeplitz(w3, W2_P), avgpool_matrix(W2_OUT, C2),
                  precision=hp).astype(mxu_dtype)
    # fc with avgPool2 + flatten folded in.  Torch flattens (C, W) channel-major
    # (c*3 + w); the kernel's width-major (w*32 + c) order needs a column perm.
    perm = jnp.array([c * W3_P + w for w in range(W3_P) for c in range(C3)],
                     dtype=jnp.int32)
    wf_perm = wf.astype(jnp.float32)[:, perm]                                 # (7, 96)
    wfp = jnp.dot(wf_perm, avgpool_matrix(W3_OUT, C3),
                  precision=hp).astype(mxu_dtype)                             # (7, 288)

    b1_k = b1.reshape(C1, 1).astype(jnp.float32)
    b2_k = jnp.tile(b2.astype(jnp.float32), W2_OUT).reshape(W2_OUT * C2, 1)   # (624,1)
    b3_k = jnp.tile(b3.astype(jnp.float32), W3_OUT).reshape(W3_OUT * C3, 1)   # (288,1)
    bf_k = bf.reshape(N_OUT, 1).astype(jnp.float32)

    def const_spec(shape):
        return pl.BlockSpec(shape, lambda i, _nd=len(shape): (0,) * _nd)

    out = pl.pallas_call(
        cnn4_kernel,
        out_shape=jax.ShapeDtypeStruct((N_OUT, n_pad), jnp.float32),
        grid=(n_pad // tb,),
        in_specs=[
            pl.BlockSpec((W0, tb), lambda i: (0, i)),     # batch tile of the input
            const_spec(t1.shape), const_spec(b1_k.shape),
            const_spec(t2.shape), const_spec(b2_k.shape),
            const_spec(t3p.shape), const_spec(b3_k.shape),
            const_spec(wfp.shape), const_spec(bf_k.shape),
        ],
        out_specs=pl.BlockSpec((N_OUT, tb), lambda i: (0, i)),
        compiler_params=pltpu.CompilerParams(
            dimension_semantics=("parallel",),            # per-tile output blocks
            vmem_limit_bytes=48 * 1024 * 1024),           # fits v7x's 64 MiB physical
    )(x_wn, t1, b1_k, t2, b2_k, t3p, b3_k, wfp, bf_k)

    return jnp.transpose(out[:, :n], (1, 0))              # (N, 7)


# ---------------------------------------------------------------------------
# Pure-JAX reference matching the PyTorch forward (eval mode).
# ---------------------------------------------------------------------------
def cnn4_reference(x_nchw, params):
    w1, b1, w2, b2, w3, b3, wf, bf = params
    hp = jax.lax.Precision.HIGHEST

    def conv(x, w, b):   # x (N, Cin, W), w (Cout, Cin, K), b (Cout,)
        k_taps = w.shape[2]
        w_out = x.shape[2] - k_taps + 1
        out = jnp.zeros((x.shape[0], w.shape[0], w_out), jnp.float32)
        for k in range(k_taps):
            out = out + jnp.einsum('ncw,oc->now', x[:, :, k:k + w_out], w[:, :, k],
                                   precision=hp)
        return out + b[None, :, None]

    def pool(x, reducer):  # (N, C, W)
        w_out = (x.shape[2] - POOL) // POOL + 1
        return reducer(
            x[:, :, :w_out * POOL].reshape(x.shape[0], x.shape[1], w_out, POOL),
            axis=-1)

    h = x_nchw[:, :, 0, :].astype(jnp.float32)
    h = conv(h, w1, b1)
    h = pool(h, jnp.max)
    h = jnp.maximum(h, 0.0)
    h = conv(h, w2, b2)
    h = jnp.maximum(h, 0.0)
    h = pool(h, jnp.mean)
    h = conv(h, w3, b3)
    h = jnp.maximum(h, 0.0)
    h = pool(h, jnp.mean)
    flat = h.reshape(h.shape[0], -1)                 # channel-major flatten == torch .view
    return jnp.dot(flat, wf.T, precision=hp) + bf[None, :]


if __name__ == "__main__":
    key = jax.random.PRNGKey(0)
    keys = jax.random.split(key, 9)
    w1 = 0.2 * jax.random.normal(keys[0], (C1, 1, KSIZE), jnp.float32)
    b1 = 0.1 * jax.random.normal(keys[1], (C1,), jnp.float32)
    w2 = 0.2 * jax.random.normal(keys[2], (C2, C1, KSIZE), jnp.float32)
    b2 = 0.1 * jax.random.normal(keys[3], (C2,), jnp.float32)
    w3 = 0.2 * jax.random.normal(keys[4], (C3, C2, KSIZE), jnp.float32)
    b3 = 0.1 * jax.random.normal(keys[5], (C3,), jnp.float32)
    wf = 0.2 * jax.random.normal(keys[6], (N_OUT, N_FLAT), jnp.float32)
    bf = 0.1 * jax.random.normal(keys[7], (N_OUT,), jnp.float32)
    params = (w1, b1, w2, b2, w3, b3, wf, bf)

    # Test A: f32 MXU path — verifies the Toeplitz / pool-fusion math exactly
    # (single tile, exercises batch padding).
    x_a = jax.random.normal(keys[8], (37, 1, 1, W0), jnp.float32)
    out_a = jax.block_until_ready(cnn4_forward(x_a, params, use_bf16=False))
    ref_a = jax.block_until_ready(cnn4_reference(x_a, params))
    assert out_a.shape == (37, N_OUT), out_a.shape
    assert bool(jnp.allclose(out_a, ref_a, rtol=1e-3, atol=1e-3)), (
        float(jnp.max(jnp.abs(out_a - ref_a))))

    # Test B: default bf16 MXU path, multi-tile grid (adaptive tb=128 -> 3 tiles),
    # parallel batch axis.  Tolerance scaled to the output magnitude because the
    # MXU operands are rounded to bf16 (f32 accumulation).
    x_b = jax.random.normal(jax.random.PRNGKey(1), (300, 1, 1, W0), jnp.float32)
    out_b = jax.block_until_ready(cnn4_forward(x_b, params))
    ref_b = jax.block_until_ready(cnn4_reference(x_b, params))
    assert out_b.shape == (300, N_OUT), out_b.shape
    scale = float(jnp.max(jnp.abs(ref_b)))
    max_err = float(jnp.max(jnp.abs(out_b - ref_b)))
    assert max_err <= 0.05 * scale + 0.05, (max_err, scale)

    print("KERNEL_OK")
</pallas_src>

<mosaic_0001>
module attributes {stable_mosaic.version = 11 : i64} {
  func.func @cnn4_kernel(%arg0: i32, %arg1: memref<133x128xf32, #tpu.memory_space<vmem>>, %arg2: memref<4128x133xf32, #tpu.memory_space<vmem>>, %arg3: memref<32x1xf32, #tpu.memory_space<vmem>>, %arg4: memref<624x1376xf32, #tpu.memory_space<vmem>>, %arg5: memref<624x1xf32, #tpu.memory_space<vmem>>, %arg6: memref<288x624xf32, #tpu.memory_space<vmem>>, %arg7: memref<288x1xf32, #tpu.memory_space<vmem>>, %arg8: memref<7x288xf32, #tpu.memory_space<vmem>>, %arg9: memref<7x1xf32, #tpu.memory_space<vmem>>, %arg10: memref<7x128xf32, #tpu.memory_space<vmem>>) attributes {dimension_semantics = [#tpu.dimension_semantics<parallel>], iteration_bounds = array<i64: 1>, scalar_prefetch = 0 : i64, scratch_operands = 0 : i64, tpu.core_type = #tpu.core_type<tc>, window_params = [{transform_indices = @transform_0, window_bounds = array<i64: 133, 128>}, {pipeline_mode = #tpu.pipeline_mode<synchronous>, transform_indices = @transform_1, window_bounds = array<i64: 4128, 133>}, {pipeline_mode = #tpu.pipeline_mode<synchronous>, transform_indices = @transform_2, window_bounds = array<i64: 32, 1>}, {pipeline_mode = #tpu.pipeline_mode<synchronous>, transform_indices = @transform_3, window_bounds = array<i64: 624, 1376>}, {pipeline_mode = #tpu.pipeline_mode<synchronous>, transform_indices = @transform_4, window_bounds = array<i64: 624, 1>}, {pipeline_mode = #tpu.pipeline_mode<synchronous>, transform_indices = @transform_5, window_bounds = array<i64: 288, 624>}, {pipeline_mode = #tpu.pipeline_mode<synchronous>, transform_indices = @transform_6, window_bounds = array<i64: 288, 1>}, {pipeline_mode = #tpu.pipeline_mode<synchronous>, transform_indices = @transform_7, window_bounds = array<i64: 7, 288>}, {pipeline_mode = #tpu.pipeline_mode<synchronous>, transform_indices = @transform_8, window_bounds = array<i64: 7, 1>}, {transform_indices = @transform_9, window_bounds = array<i64: 7, 128>}]} {
    %c0 = arith.constant 0 : index
    %c0_0 = arith.constant 0 : index
    %0 = vector.load %arg1[%c0, %c0_0] : memref<133x128xf32, #tpu.memory_space<vmem>>, vector<133x128xf32>
    %c0_1 = arith.constant 0 : index
    %c0_2 = arith.constant 0 : index
    %1 = vector.load %arg2[%c0_1, %c0_2] : memref<4128x133xf32, #tpu.memory_space<vmem>>, vector<4128x133xf32>
    %cst = arith.constant dense<0.000000e+00> : vector<4128x128xf32>
    %2 = tpu.matmul %1, %0, %cst {dimension_numbers = #tpu.dot_dimension_numbers<[1], [0], [0], [1], [0, 0, 1, 1], [], []>} : vector<4128x133xf32>, vector<133x128xf32>, vector<4128x128xf32> -> vector<4128x128xf32>
    %3 = vector.shape_cast %2 : vector<4128x128xf32> to vector<43x3x32x128xf32>
    %4 = vector.extract_strided_slice %3 {offsets = [0, 0, 0, 0], sizes = [43, 1, 32, 128], strides = [1, 1, 1, 1]} : vector<43x3x32x128xf32> to vector<43x1x32x128xf32>
    %5 = vector.shape_cast %4 : vector<43x1x32x128xf32> to vector<43x32x128xf32>
    %6 = vector.extract_strided_slice %3 {offsets = [0, 1, 0, 0], sizes = [43, 1, 32, 128], strides = [1, 1, 1, 1]} : vector<43x3x32x128xf32> to vector<43x1x32x128xf32>
    %7 = vector.shape_cast %6 : vector<43x1x32x128xf32> to vector<43x32x128xf32>
    %8 = arith.maximumf %5, %7 : vector<43x32x128xf32>
    %9 = vector.extract_strided_slice %3 {offsets = [0, 2, 0, 0], sizes = [43, 1, 32, 128], strides = [1, 1, 1, 1]} : vector<43x3x32x128xf32> to vector<43x1x32x128xf32>
    %10 = vector.shape_cast %9 : vector<43x1x32x128xf32> to vector<43x32x128xf32>
    %11 = arith.maximumf %8, %10 : vector<43x32x128xf32>
    %c0_3 = arith.constant 0 : index
    %c0_4 = arith.constant 0 : index
    %12 = vector.load %arg3[%c0_3, %c0_4] : memref<32x1xf32, #tpu.memory_space<vmem>>, vector<32x1xf32>
    %13 = vector.shape_cast %12 : vector<32x1xf32> to vector<1x32x1xf32>
    %14 = vector.broadcast %13 : vector<1x32x1xf32> to vector<43x32x128xf32>
    %15 = arith.addf %11, %14 : vector<43x32x128xf32>
    %cst_5 = arith.constant 0.000000e+00 : f32
    %16 = vector.broadcast %cst_5 : f32 to vector<43x32x128xf32>
    %17 = arith.maximumf %15, %16 : vector<43x32x128xf32>
    %18 = vector.shape_cast %17 : vector<43x32x128xf32> to vector<1376x128xf32>
    %c0_6 = arith.constant 0 : index
    %c0_7 = arith.constant 0 : index
    %19 = vector.load %arg4[%c0_6, %c0_7] : memref<624x1376xf32, #tpu.memory_space<vmem>>, vector<624x1376xf32>
    %cst_8 = arith.constant dense<0.000000e+00> : vector<624x128xf32>
    %20 = tpu.matmul %19, %18, %cst_8 {dimension_numbers = #tpu.dot_dimension_numbers<[1], [0], [0], [1], [0, 0, 1, 1], [], []>} : vector<624x1376xf32>, vector<1376x128xf32>, vector<624x128xf32> -> vector<624x128xf32>
    %c0_9 = arith.constant 0 : index
    %c0_10 = arith.constant 0 : index
    %21 = vector.load %arg5[%c0_9, %c0_10] : memref<624x1xf32, #tpu.memory_space<vmem>>, vector<624x1xf32>
    %22 = vector.broadcast %21 : vector<624x1xf32> to vector<624x128xf32>
    %23 = arith.addf %20, %22 : vector<624x128xf32>
    %cst_11 = arith.constant 0.000000e+00 : f32
    %24 = vector.broadcast %cst_11 : f32 to vector<624x128xf32>
    %25 = arith.maximumf %23, %24 : vector<624x128xf32>
    %c0_12 = arith.constant 0 : index
    %c0_13 = arith.constant 0 : index
    %26 = vector.load %arg6[%c0_12, %c0_13] : memref<288x624xf32, #tpu.memory_space<vmem>>, vector<288x624xf32>
    %cst_14 = arith.constant dense<0.000000e+00> : vector<288x128xf32>
    %27 = tpu.matmul %26, %25, %cst_14 {dimension_numbers = #tpu.dot_dimension_numbers<[1], [0], [0], [1], [0, 0, 1, 1], [], []>} : vector<288x624xf32>, vector<624x128xf32>, vector<288x128xf32> -> vector<288x128xf32>
    %c0_15 = arith.constant 0 : index
    %c0_16 = arith.constant 0 : index
    %28 = vector.load %arg7[%c0_15, %c0_16] : memref<288x1xf32, #tpu.memory_space<vmem>>, vector<288x1xf32>
    %29 = vector.broadcast %28 : vector<288x1xf32> to vector<288x128xf32>
    %30 = arith.addf %27, %29 : vector<288x128xf32>
    %cst_17 = arith.constant 0.000000e+00 : f32
    %31 = vector.broadcast %cst_17 : f32 to vector<288x128xf32>
    %32 = arith.maximumf %30, %31 : vector<288x128xf32>
    %c0_18 = arith.constant 0 : index
    %c0_19 = arith.constant 0 : index
    %33 = vector.load %arg8[%c0_18, %c0_19] : memref<7x288xf32, #tpu.memory_space<vmem>>, vector<7x288xf32>
    %cst_20 = arith.constant dense<0.000000e+00> : vector<7x128xf32>
    %34 = tpu.matmul %33, %32, %cst_20 {dimension_numbers = #tpu.dot_dimension_numbers<[1], [0], [0], [1], [0, 0, 1, 1], [], []>} : vector<7x288xf32>, vector<288x128xf32>, vector<7x128xf32> -> vector<7x128xf32>
    %c0_21 = arith.constant 0 : index
    %c0_22 = arith.constant 0 : index
    %35 = vector.load %arg9[%c0_21, %c0_22] : memref<7x1xf32, #tpu.memory_space<vmem>>, vector<7x1xf32>
    %36 = vector.broadcast %35 : vector<7x1xf32> to vector<7x128xf32>
    %37 = arith.addf %34, %36 : vector<7x128xf32>
    %c0_23 = arith.constant 0 : index
    %c0_24 = arith.constant 0 : index
    %38 = vector.load %arg10[%c0_23, %c0_24] : memref<7x128xf32, #tpu.memory_space<vmem>>, vector<7x128xf32>
    tpu.vector_store %arg10[%c0_23, %c0_24], %37 {strides = array<i32>} : memref<7x128xf32, #tpu.memory_space<vmem>>, vector<7x128xf32>,
    return
  }
  func.func @transform_0(%arg0: i32) -> (i32, i32) {
    %c0_i32 = arith.constant 0 : i32
    %c0_i32_0 = arith.constant 0 : i32
    return %c0_i32, %arg0 : i32, i32
  }
  func.func @transform_1(%arg0: i32) -> (i32, i32) {
    %c0_i32 = arith.constant 0 : i32
    %c0_i32_0 = arith.constant 0 : i32
    %c0_i32_1 = arith.constant 0 : i32
    return %c0_i32, %c0_i32_0 : i32, i32
  }
  func.func @transform_2(%arg0: i32) -> (i32, i32) {
    %c0_i32 = arith.constant 0 : i32
    %c0_i32_0 = arith.constant 0 : i32
    %c0_i32_1 = arith.constant 0 : i32
    return %c0_i32, %c0_i32_0 : i32, i32
  }
  func.func @transform_3(%arg0: i32) -> (i32, i32) {
    %c0_i32 = arith.constant 0 : i32
    %c0_i32_0 = arith.constant 0 : i32
    %c0_i32_1 = arith.constant 0 : i32
    return %c0_i32, %c0_i32_0 : i32, i32
  }
  func.func @transform_4(%arg0: i32) -> (i32, i32) {
    %c0_i32 = arith.constant 0 : i32
    %c0_i32_0 = arith.constant 0 : i32
    %c0_i32_1 = arith.constant 0 : i32
    return %c0_i32, %c0_i32_0 : i32, i32
  }
  func.func @transform_5(%arg0: i32) -> (i32, i32) {
    %c0_i32 = arith.constant 0 : i32
    %c0_i32_0 = arith.constant 0 : i32
    %c0_i32_1 = arith.constant 0 : i32
    return %c0_i32, %c0_i32_0 : i32, i32
  }
  func.func @transform_6(%arg0: i32) -> (i32, i32) {
    %c0_i32 = arith.constant 0 : i32
    %c0_i32_0 = arith.constant 0 : i32
    %c0_i32_1 = arith.constant 0 : i32
    return %c0_i32, %c0_i32_0 : i32, i32
  }
  func.func @transform_7(%arg0: i32) -> (i32, i32) {
    %c0_i32 = arith.constant 0 : i32
    %c0_i32_0 = arith.constant 0 : i32
    %c0_i32_1 = arith.constant 0 : i32
    return %c0_i32, %c0_i32_0 : i32, i32
  }
  func.func @transform_8(%arg0: i32) -> (i32, i32) {
    %c0_i32 = arith.constant 0 : i32
    %c0_i32_0 = arith.constant 0 : i32
    %c0_i32_1 = arith.constant 0 : i32
    return %c0_i32, %c0_i32_0 : i32, i32
  }
  func.func @transform_9(%arg0: i32) -> (i32, i32) {
    %c0_i32 = arith.constant 0 : i32
    %c0_i32_0 = arith.constant 0 : i32
    return %c0_i32, %arg0 : i32, i32
  }
}

</mosaic_0001>

<llo_original>
// kernel: tpu_custom_call.1
$region0: #{tpu_custom_call.1}
  #allocation0 [shape = 'u32[]', space=smem, size = 0x4, offset = 0x4, fixed_abs, tag = 'smem constant byte address 0x4 - core index']
  #allocation1 [shape = 'u32[144,128]{1,0:T(1,128)}', space=vmem, size = 0x12000, scoped, tag = 'internal scratch']
  %s0 = inlined_call_operand.vmem [shape: f32[133,128], index: 0, kind: input, shape index: {}]
  %s1 = inlined_call_operand.vmem [shape: f32[4128,133], index: 1, kind: input, shape index: {}]
  %s2 = inlined_call_operand.vmem [shape: f32[32,1], index: 2, kind: input, shape index: {}]
  %s3 = inlined_call_operand.vmem [shape: f32[624,1376], index: 3, kind: input, shape index: {}]
  %s4 = inlined_call_operand.vmem [shape: f32[624,1], index: 4, kind: input, shape index: {}]
  %s5 = inlined_call_operand.vmem [shape: f32[288,624], index: 5, kind: input, shape index: {}]
  %s6 = inlined_call_operand.vmem [shape: f32[288,1], index: 6, kind: input, shape index: {}]
  %s7 = inlined_call_operand.vmem [shape: f32[7,288], index: 7, kind: input, shape index: {}]
  %s8 = inlined_call_operand.vmem [shape: f32[7,1], index: 8, kind: input, shape index: {}]
  %s9 = inlined_call_operand.hbm [shape: f32[7,128], index: 9, kind: output, shape index: {}]
  %s10 = sld [smem:[#allocation0]]
  $region46: #{tpu_custom_call.1} parent=0
    _
  %s12 = ssub.s32 1, %s10
  %s13 = scalar_select 0, %s12, %s10
  $region1: #{tpu_custom_call.1} parent=0
    #allocation2 [shape = 'u8[4096]{0}', space=vmem, size = 0x1000, scoped, tag = 'output window, operand 0, single buffered']
    #allocation3 [shape = 's32[1]{0}', space=sflag, size = 0x4, scoped, tag = 'scoped memory for tpu_custom_call.1']
    %14 = vsyncpa [#allocation3], 0
    // Predicated region
    $region2: #{tpu_custom_call.1} parent=1 // pred_check
      _
    $region3: #{tpu_custom_call.1} parent=1 // pred_check_branch
      %16 = sbr.rel (0) target = $region5
    $region4: #{tpu_custom_call.1} parent=1 // pred_region
      _
    $region5: #{tpu_custom_call.1} parent=1 // pred_fallthru
      _
    // Predicated region
    $region6: #{tpu_custom_call.1} parent=1 // pred_check
      _
    $region7: #{tpu_custom_call.1} parent=1 // pred_check_branch
      %18 = sbr.rel (0) target = $region9
    $region8: #{tpu_custom_call.1} parent=1 // pred_region
      _
    $region9: #{tpu_custom_call.1} parent=1 // pred_fallthru
      _
    // Predicated region
    $region10: #{tpu_custom_call.1} parent=1 // pred_check
      _
    $region11: #{tpu_custom_call.1} parent=1 // pred_check_branch
      %20 = sbr.rel (0) target = $region13
    $region12: #{tpu_custom_call.1} parent=1 // pred_region
      _
    $region13: #{tpu_custom_call.1} parent=1 // pred_fallthru
      _
    // Predicated region
    $region14: #{tpu_custom_call.1} parent=1 // pred_check
      _
    $region15: #{tpu_custom_call.1} parent=1 // pred_check_branch
      %22 = sbr.rel (0) target = $region17
    $region16: #{tpu_custom_call.1} parent=1 // pred_region
      _
    $region17: #{tpu_custom_call.1} parent=1 // pred_fallthru
      _
    // Predicated region
    $region18: #{tpu_custom_call.1} parent=1 // pred_check
      _
    $region19: #{tpu_custom_call.1} parent=1 // pred_check_branch
      %24 = sbr.rel (0) target = $region21
    $region20: #{tpu_custom_call.1} parent=1 // pred_region
      _
    $region21: #{tpu_custom_call.1} parent=1 // pred_fallthru
      _
    // Predicated region
    $region22: #{tpu_custom_call.1} parent=1 // pred_check
      _
    $region23: #{tpu_custom_call.1} parent=1 // pred_check_branch
      %26 = sbr.rel (0) target = $region25
    $region24: #{tpu_custom_call.1} parent=1 // pred_region
      _
    $region25: #{tpu_custom_call.1} parent=1 // pred_fallthru
      _
    // Predicated region
    $region26: #{tpu_custom_call.1} parent=1 // pred_check
      _
    $region27: #{tpu_custom_call.1} parent=1 // pred_check_branch
      %28 = sbr.rel (0) target = $region29
    $region28: #{tpu_custom_call.1} parent=1 // pred_region
      _
    $region29: #{tpu_custom_call.1} parent=1 // pred_fallthru
      _
    // Predicated region
    $region30: #{tpu_custom_call.1} parent=1 // pred_check
      _
    $region31: #{tpu_custom_call.1} parent=1 // pred_check_branch
      %30 = sbr.rel (0) target = $region33
    $region32: #{tpu_custom_call.1} parent=1 // pred_region
      _
    $region33: #{tpu_custom_call.1} parent=1 // pred_fallthru
      _
    // Predicated region
    $region34: #{tpu_custom_call.1} parent=1 // pred_check
      _
    $region35: #{tpu_custom_call.1} parent=1 // pred_check_branch
      %32 = sbr.rel (0) target = $region37
    $region36: #{tpu_custom_call.1} parent=1 // pred_region
      _
    $region37: #{tpu_custom_call.1} parent=1 // pred_fallthru
      _
    %v33 = vld [vmem:[%s0] sm:$0xff]
    %v34 = vld [vmem:[%s0 + $0x8] sm:$0xff]
    %v35 = vld [vmem:[%s0 + $0x10] sm:$0xff]
    %v36 = vld [vmem:[%s0 + $0x18] sm:$0xff]
    %v37 = vld [vmem:[%s0 + $0x20] sm:$0xff]
    %v38 = vld [vmem:[%s0 + $0x28] sm:$0xff]
    %v39 = vld [vmem:[%s0 + $0x30] sm:$0xff]
    %v40 = vld [vmem:[%s0 + $0x38] sm:$0xff]
    %v41 = vld [vmem:[%s0 + $0x40] sm:$0xff]
    %v42 = vld [vmem:[%s0 + $0x48] sm:$0xff]
    %v43 = vld [vmem:[%s0 + $0x50] sm:$0xff]
    %v44 = vld [vmem:[%s0 + $0x58] sm:$0xff]
    %v45 = vld [vmem:[%s0 + $0x60] sm:$0xff]
    %v46 = vld [vmem:[%s0 + $0x68] sm:$0xff]
    %v47 = vld [vmem:[%s0 + $0x70] sm:$0xff]
    %v48 = vld [vmem:[%s0 + $0x78] sm:$0xff]
    %v49 = vld [vmem:[%s0 + $0x80] sm:$0x1f]
    %v50 = vld [vmem:[%s1] sm:$0xff]
    %v51 = vld [vmem:[%s1 + $0x8] sm:$0xff]
    %v52 = vld [vmem:[%s1 + $0x10] sm:$0xff]
    %v53 = vld [vmem:[%s1 + $0x18] sm:$0xff]
    %v54 = vld [vmem:[%s1 + $0x20] sm:$0xff]
    %v55 = vld [vmem:[%s1 + $0x28] sm:$0xff]
    %v56 = vld [vmem:[%s1 + $0x30] sm:$0xff]
    %v57 = vld [vmem:[%s1 + $0x38] sm:$0xff]
    %v58 = vld [vmem:[%s1 + $0x40] sm:$0xff]
    %v59 = vld [vmem:[%s1 + $0x48] sm:$0xff]
    %v60 = vld [vmem:[%s1 + $0x50] sm:$0xff]
    %v61 = vld [vmem:[%s1 + $0x58] sm:$0xff]
    %v62 = vld [vmem:[%s1 + $0x60] sm:$0xff]
    %v63 = vld [vmem:[%s1 + $0x68] sm:$0xff]
    %v64 = vld [vmem:[%s1 + $0x70] sm:$0xff]
    %v65 = vld [vmem:[%s1 + $0x78] sm:$0xff]
    %v66 = vld [vmem:[%s1 + $0x80] sm:$0xff]
    %v67 = vld [vmem:[%s1 + $0x88] sm:$0xff]
    %v68 = vld [vmem:[%s1 + $0x90] sm:$0xff]
    %v69 = vld [vmem:[%s1 + $0x98] sm:$0xff]
    %v70 = vld [vmem:[%s1 + $0xa0] sm:$0xff]
    %v71 = vld [vmem:[%s1 + $0xa8] sm:$0xff]
    %v72 = vld [vmem:[%s1 + $0xb0] sm:$0xff]
    %v73 = vld [vmem:[%s1 + $0xb8] sm:$0xff]
    %v74 = vld [vmem:[%s1 + $0xc0] sm:$0xff]
    %v75 = vld [vmem:[%s1 + $0xc8] sm:$0xff]
    %v76 = vld [vmem:[%s1 + $0xd0] sm:$0xff]
    %v77 = vld [vmem:[%s1 + $0xd8] sm:$0xff]
    %v78 = vld [vmem:[%s1 + $0xe0] sm:$0xff]
    %v79 = vld [vmem:[%s1 + $0xe8] sm:$0xff]
    %v80 = vld [vmem:[%s1 + $0xf0] sm:$0xff]
    %v81 = vld [vmem:[%s1 + $0xf8] sm:$0xff]
    %v82 = vld [vmem:[%s1 + $0x100] sm:$0xff]
    %v83 = vld [vmem:[%s1 + $0x108] sm:$0xff]
    %v84 = vld [vmem:[%s1 + $0x110] sm:$0xff]
    %v85 = vld [vmem:[%s1 + $0x118] sm:$0xff]
    %v86 = vld [vmem:[%s1 + $0x120] sm:$0xff]
    %v87 = vld [vmem:[%s1 + $0x128] sm:$0xff]
    %v88 = vld [vmem:[%s1 + $0x130] sm:$0xff]
    %v89 = vld [vmem:[%s1 + $0x138] sm:$0xff]
    %v90 = vld [vmem:[%s1 + $0x140] sm:$0xff]
    %v91 = vld [vmem:[%s1 + $0x148] sm:$0xff]
    %v92 = vld [vmem:[%s1 + $0x150] sm:$0xff]
    %v93 = vld [vmem:[%s1 + $0x158] sm:$0xff]
    %v94 = vld [vmem:[%s1 + $0x160] sm:$0xff]
    %v95 = vld [vmem:[%s1 + $0x168] sm:$0xff]
    %v96 = vld [vmem:[%s1 + $0x170] sm:$0xff]
    %v97 = vld [vmem:[%s1 + $0x178] sm:$0xff]
    %v98 = vld [vmem:[%s1 + $0x180] sm:$0xff]
    %v99 = vld [vmem:[%s1 + $0x188] sm:$0xff]
    %v100 = vld [vmem:[%s1 + $0x190] sm:$0xff]
    %v101 = vld [vmem:[%s1 + $0x198] sm:$0xff]
    %v102 = vld [vmem:[%s1 + $0x1a0] sm:$0xff]
    %v103 = vld [vmem:[%s1 + $0x1a8] sm:$0xff]
    %v104 = vld [vmem:[%s1 + $0x1b0] sm:$0xff]
    %v105 = vld [vmem:[%s1 + $0x1b8] sm:$0xff]
    %v106 = vld [vmem:[%s1 + $0x1c0] sm:$0xff]
    %v107 = vld [vmem:[%s1 + $0x1c8] sm:$0xff]
    %v108 = vld [vmem:[%s1 + $0x1d0] sm:$0xff]
    %v109 = vld [vmem:[%s1 + $0x1d8] sm:$0xff]
    %v110 = vld [vmem:[%s1 + $0x1e0] sm:$0xff]
    %v111 = vld [vmem:[%s1 + $0x1e8] sm:$0xff]
    %v112 = vld [vmem:[%s1 + $0x1f0] sm:$0xff]
    %v113 = vld [vmem:[%s1 + $0x1f8] sm:$0xff]
    %v114 = vld [vmem:[%s1 + $0x200] sm:$0xff]
    %v115 = vld [vmem:[%s1 + $0x208] sm:$0xff]
    %v116 = vld [vmem:[%s1 + $0x210] sm:$0xff]
    %v117 = vld [vmem:[%s1 + $0x218] sm:$0xff]
    %v118 = vld [vmem:[%s1 + $0x220] sm:$0xff]
    %v119 = vld [vmem:[%s1 + $0x228] sm:$0xff]
    %v120 = vld [vmem:[%s1 + $0x230] sm:$0xff]
    %v121 = vld [vmem:[%s1 + $0x238] sm:$0xff]
    %v122 = vld [vmem:[%s1 + $0x240] sm:$0xff]
    %v123 = vld [vmem:[%s1 + $0x248] sm:$0xff]
    %v124 = vld [vmem:[%s1 + $0x250] sm:$0xff]
    %v125 = vld [vmem:[%s1 + $0x258] sm:$0xff]
    %v126 = vld [vmem:[%s1 + $0x260] sm:$0xff]
    %v127 = vld [vmem:[%s1 + $0x268] sm:$0xff]
    %v128 = vld [vmem:[%s1 + $0x270] sm:$0xff]
    %v129 = vld [vmem:[%s1 + $0x278] sm:$0xff]
    %v130 = vld [vmem:[%s1 + $0x280] sm:$0xff]
    %v131 = vld [vmem:[%s1 + $0x288] sm:$0xff]
    %v132 = vld [vmem:[%s1 + $0x290] sm:$0xff]
    %v133 = vld [vmem:[%s1 + $0x298] sm:$0xff]
    %v134 = vld [vmem:[%s1 + $0x2a0] sm:$0xff]
    %v135 = vld [vmem:[%s1 + $0x2a8] sm:$0xff]
    %v136 = vld [vmem:[%s1 + $0x2b0] sm:$0xff]
    %v137 = vld [vmem:[%s1 + $0x2b8] sm:$0xff]
    %v138 = vld [vmem:[%s1 + $0x2c0] sm:$0xff]
    %v139 = vld [vmem:[%s1 + $0x2c8] sm:$0xff]
    %v140 = vld [vmem:[%s1 + $0x2d0] sm:$0xff]
    %v141 = vld [vmem:[%s1 + $0x2d8] sm:$0xff]
    %v142 = vld [vmem:[%s1 + $0x2e0] sm:$0xff]
    %v143 = vld [vmem:[%s1 + $0x2e8] sm:$0xff]
    %v144 = vld [vmem:[%s1 + $0x2f0] sm:$0xff]
    %v145 = vld [vmem:[%s1 + $0x2f8] sm:$0xff]
    %v146 = vld [vmem:[%s1 + $0x300] sm:$0xff]
    %v147 = vld [vmem:[%s1 + $0x308] sm:$0xff]
    %v148 = vld [vmem:[%s1 + $0x310] sm:$0xff]
    %v149 = vld [vmem:[%s1 + $0x318] sm:$0xff]
    %v150 = vld [vmem:[%s1 + $0x320] sm:$0xff]
    %v151 = vld [vmem:[%s1 + $0x328] sm:$0xff]
    %v152 = vld [vmem:[%s1 + $0x330] sm:$0xff]
    %v153 = vld [vmem:[%s1 + $0x338] sm:$0xff]
    %v154 = vld [vmem:[%s1 + $0x340] sm:$0xff]
    %v155 = vld [vmem:[%s1 + $0x348] sm:$0xff]
    %v156 = vld [vmem:[%s1 + $0x350] sm:$0xff]
    %v157 = vld [vmem:[%s1 + $0x358] sm:$0xff]
    %v158 = vld [vmem:[%s1 + $0x360] sm:$0xff]
    %v159 = vld [vmem:[%s1 + $0x368] sm:$0xff]
    %v160 = vld [vmem:[%s1 + $0x370] sm:$0xff]
    %v161 = vld [vmem:[%s1 + $0x378] sm:$0xff]
    %v162 = vld [vmem:[%s1 + $0x380] sm:$0xff]
    %v163 = vld [vmem:[%s1 + $0x388] sm:$0xff]
    %v164 = vld [vmem:[%s1 + $0x390] sm:$0xff]
    %v165 = vld [vmem:[%s1 + $0x398] sm:$0xff]
    %v166 = vld [vmem:[%s1 + $0x3a0] sm:$0xff]
    %v167 = vld [vmem:[%s1 + $0x3a8] sm:$0xff]
    %v168 = vld [vmem:[%s1 + $0x3b0] sm:$0xff]
    %v169 = vld [vmem:[%s1 + $0x3b8] sm:$0xff]
    %v170 = vld [vmem:[%s1 + $0x3c0] sm:$0xff]
    %v171 = vld [vmem:[%s1 + $0x3c8] sm:$0xff]
    %v172 = vld [vmem:[%s1 + $0x3d0] sm:$0xff]
    %v173 = vld [vmem:[%s1 + $0x3d8] sm:$0xff]
    %v174 = vld [vmem:[%s1 + $0x3e0] sm:$0xff]
    %v175 = vld [vmem:[%s1 + $0x3e8] sm:$0xff]
    %v176 = vld [vmem:[%s1 + $0x3f0] sm:$0xff]
    %v177 = vld [vmem:[%s1 + $0x3f8] sm:$0xff]
    %v178 = vld [vmem:[%s1 + $0x400] sm:$0xff]
    %v179 = vld [vmem:[%s1 + $0x408] sm:$0xff]
    %v180 = vld [vmem:[%s1 + $0x410] sm:$0xff]
    %v181 = vld [vmem:[%s1 + $0x418] sm:$0xff]
    %v182 = vld [vmem:[%s1 + $0x420] sm:$0xff]
    %v183 = vld [vmem:[%s1 + $0x428] sm:$0xff]
    %v184 = vld [vmem:[%s1 + $0x430] sm:$0xff]
    %v185 = vld [vmem:[%s1 + $0x438] sm:$0xff]
    %v186 = vld [vmem:[%s1 + $0x440] sm:$0xff]
    %v187 = vld [vmem:[%s1 + $0x448] sm:$0xff]
    %v188 = vld [vmem:[%s1 + $0x450] sm:$0xff]
    %v189 = vld [vmem:[%s1 + $0x458] sm:$0xff]
    %v190 = vld [vmem:[%s1 + $0x460] sm:$0xff]
    %v191 = vld [vmem:[%s1 + $0x468] sm:$0xff]
    %v192 = vld [vmem:[%s1 + $0x470] sm:$0xff]
    %v193 = vld [vmem:[%s1 + $0x478] sm:$0xff]
    %v194 = vld [vmem:[%s1 + $0x480] sm:$0xff]
    %v195 = vld [vmem:[%s1 + $0x488] sm:$0xff]
    %v196 = vld [vmem:[%s1 + $0x490] sm:$0xff]
    %v197 = vld [vmem:[%s1 + $0x498] sm:$0xff]
    %v198 = vld [vmem:[%s1 + $0x4a0] sm:$0xff]
    %v199 = vld [vmem:[%s1 + $0x4a8] sm:$0xff]
    %v200 = vld [vmem:[%s1 + $0x4b0] sm:$0xff]
    %v201 = vld [vmem:[%s1 + $0x4b8] sm:$0xff]
    %v202 = vld [vmem:[%s1 + $0x4c0] sm:$0xff]
    %v203 = vld [vmem:[%s1 + $0x4c8] sm:$0xff]
    %v204 = vld [vmem:[%s1 + $0x4d0] sm:$0xff]
    %v205 = vld [vmem:[%s1 + $0x4d8] sm:$0xff]
    %v206 = vld [vmem:[%s1 + $0x4e0] sm:$0xff]
    %v207 = vld [vmem:[%s1 + $0x4e8] sm:$0xff]
    %v208 = vld [vmem:[%s1 + $0x4f0] sm:$0xff]
    %v209 = vld [vmem:[%s1 + $0x4f8] sm:$0xff]
    %v210 = vld [vmem:[%s1 + $0x500] sm:$0xff]
    %v211 = vld [vmem:[%s1 + $0x508] sm:$0xff]
    %v212 = vld [vmem:[%s1 + $0x510] sm:$0xff]
    %v213 = vld [vmem:[%s1 + $0x518] sm:$0xff]
    %v214 = vld [vmem:[%s1 + $0x520] sm:$0xff]
    %v215 = vld [vmem:[%s1 + $0x528] sm:$0xff]
    %v216 = vld [vmem:[%s1 + $0x530] sm:$0xff]
    %v217 = vld [vmem:[%s1 + $0x538] sm:$0xff]
    %v218 = vld [vmem:[%s1 + $0x540] sm:$0xff]
    %v219 = vld [vmem:[%s1 + $0x548] sm:$0xff]
    %v220 = vld [vmem:[%s1 + $0x550] sm:$0xff]
    %v221 = vld [vmem:[%s1 + $0x558] sm:$0xff]
    %v222 = vld [vmem:[%s1 + $0x560] sm:$0xff]
    %v223 = vld [vmem:[%s1 + $0x568] sm:$0xff]
    %v224 = vld [vmem:[%s1 + $0x570] sm:$0xff]
    %v225 = vld [vmem:[%s1 + $0x578] sm:$0xff]
    %v226 = vld [vmem:[%s1 + $0x580] sm:$0xff]
    %v227 = vld [vmem:[%s1 + $0x588] sm:$0xff]
    %v228 = vld [vmem:[%s1 + $0x590] sm:$0xff]
    %v229 = vld [vmem:[%s1 + $0x598] sm:$0xff]
    %v230 = vld [vmem:[%s1 + $0x5a0] sm:$0xff]
    %v231 = vld [vmem:[%s1 + $0x5a8] sm:$0xff]
    %v232 = vld [vmem:[%s1 + $0x5b0] sm:$0xff]
    %v233 = vld [vmem:[%s1 + $0x5b8] sm:$0xff]
    %v234 = vld [vmem:[%s1 + $0x5c0] sm:$0xff]
    %v235 = vld [vmem:[%s1 + $0x5c8] sm:$0xff]
    %v236 = vld [vmem:[%s1 + $0x5d0] sm:$0xff]
    %v237 = vld [vmem:[%s1 + $0x5d8] sm:$0xff]
    %v238 = vld [vmem:[%s1 + $0x5e0] sm:$0xff]
    %v239 = vld [vmem:[%s1 + $0x5e8] sm:$0xff]
    %v240 = vld [vmem:[%s1 + $0x5f0] sm:$0xff]
    %v241 = vld [vmem:[%s1 + $0x5f8] sm:$0xff]
    %v242 = vld [vmem:[%s1 + $0x600] sm:$0xff]
    %v243 = vld [vmem:[%s1 + $0x608] sm:$0xff]
    %v244 = vld [vmem:[%s1 + $0x610] sm:$0xff]
    %v245 = vld [vmem:[%s1 + $0x618] sm:$0xff]
    %v246 = vld [vmem:[%s1 + $0x620] sm:$0xff]
    %v247 = vld [vmem:[%s1 + $0x628] sm:$0xff]
    %v248 = vld [vmem:[%s1 + $0x630] sm:$0xff]
    %v249 = vld [vmem:[%s1 + $0x638] sm:$0xff]
    %v250 = vld [vmem:[%s1 + $0x640] sm:$0xff]
    %v251 = vld [vmem:[%s1 + $0x648] sm:$0xff]
    %v252 = vld [vmem:[%s1 + $0x650] sm:$0xff]
    %v253 = vld [vmem:[%s1 + $0x658] sm:$0xff]
    %v254 = vld [vmem:[%s1 + $0x660] sm:$0xff]
    %v255 = vld [vmem:[%s1 + $0x668] sm:$0xff]
    %v256 = vld [vmem:[%s1 + $0x670] sm:$0xff]
    %v257 = vld [vmem:[%s1 + $0x678] sm:$0xff]
    %v258 = vld [vmem:[%s1 + $0x680] sm:$0xff]
    %v259 = vld [vmem:[%s1 + $0x688] sm:$0xff]
    %v260 = vld [vmem:[%s1 + $0x690] sm:$0xff]
    %v261 = vld [vmem:[%s1 + $0x698] sm:$0xff]
    %v262 = vld [vmem:[%s1 + $0x6a0] sm:$0xff]
    %v263 = vld [vmem:[%s1 + $0x6a8] sm:$0xff]
    %v264 = vld [vmem:[%s1 + $0x6b0] sm:$0xff]
    %v265 = vld [vmem:[%s1 + $0x6b8] sm:$0xff]
    %v266 = vld [vmem:[%s1 + $0x6c0] sm:$0xff]
    %v267 = vld [vmem:[%s1 + $0x6c8] sm:$0xff]
    %v268 = vld [vmem:[%s1 + $0x6d0] sm:$0xff]
    %v269 = vld [vmem:[%s1 + $0x6d8] sm:$0xff]
    %v270 = vld [vmem:[%s1 + $0x6e0] sm:$0xff]
    %v271 = vld [vmem:[%s1 + $0x6e8] sm:$0xff]
    %v272 = vld [vmem:[%s1 + $0x6f0] sm:$0xff]
    %v273 = vld [vmem:[%s1 + $0x6f8] sm:$0xff]
    %v274 = vld [vmem:[%s1 + $0x700] sm:$0xff]
    %v275 = vld [vmem:[%s1 + $0x708] sm:$0xff]
    %v276 = vld [vmem:[%s1 + $0x710] sm:$0xff]
    %v277 = vld [vmem:[%s1 + $0x718] sm:$0xff]
    %v278 = vld [vmem:[%s1 + $0x720] sm:$0xff]
    %v279 = vld [vmem:[%s1 + $0x728] sm:$0xff]
    %v280 = vld [vmem:[%s1 + $0x730] sm:$0xff]
    %v281 = vld [vmem:[%s1 + $0x738] sm:$0xff]
    %v282 = vld [vmem:[%s1 + $0x740] sm:$0xff]
    %v283 = vld [vmem:[%s1 + $0x748] sm:$0xff]
    %v284 = vld [vmem:[%s1 + $0x750] sm:$0xff]
    %v285 = vld [vmem:[%s1 + $0x758] sm:$0xff]
    %v286 = vld [vmem:[%s1 + $0x760] sm:$0xff]
    %v287 = vld [vmem:[%s1 + $0x768] sm:$0xff]
    %v288 = vld [vmem:[%s1 + $0x770] sm:$0xff]
    %v289 = vld [vmem:[%s1 + $0x778] sm:$0xff]
    %v290 = vld [vmem:[%s1 + $0x780] sm:$0xff]
    %v291 = vld [vmem:[%s1 + $0x788] sm:$0xff]
    %v292 = vld [vmem:[%s1 + $0x790] sm:$0xff]
    %v293 = vld [vmem:[%s1 + $0x798] sm:$0xff]
    %v294 = vld [vmem:[%s1 + $0x7a0] sm:$0xff]
    %v295 = vld [vmem:[%s1 + $0x7a8] sm:$0xff]
    %v296 = vld [vmem:[%s1 + $0x7b0] sm:$0xff]
    %v297 = vld [vmem:[%s1 + $0x7b8] sm:$0xff]
    %v298 = vld [vmem:[%s1 + $0x7c0] sm:$0xff]
    %v299 = vld [vmem:[%s1 + $0x7c8] sm:$0xff]
    %v300 = vld [vmem:[%s1 + $0x7d0] sm:$0xff]
    %v301 = vld [vmem:[%s1 + $0x7d8] sm:$0xff]
    %v302 = vld [vmem:[%s1 + $0x7e0] sm:$0xff]
    %v303 = vld [vmem:[%s1 + $0x7e8] sm:$0xff]
    %v304 = vld [vmem:[%s1 + $0x7f0] sm:$0xff]
    %v305 = vld [vmem:[%s1 + $0x7f8] sm:$0xff]
    %v306 = vld [vmem:[%s1 + $0x800] sm:$0xff]
    %v307 = vld [vmem:[%s1 + $0x808] sm:$0xff]
    %v308 = vld [vmem:[%s1 + $0x810] sm:$0xff]
    %v309 = vld [vmem:[%s1 + $0x818] sm:$0xff]
    %v310 = vld [vmem:[%s1 + $0x820] sm:$0xff]
    %v311 = vld [vmem:[%s1 + $0x828] sm:$0xff]
    %v312 = vld [vmem:[%s1 + $0x830] sm:$0xff]
    %v313 = vld [vmem:[%s1 + $0x838] sm:$0xff]
    %v314 = vld [vmem:[%s1 + $0x840] sm:$0xff]
    %v315 = vld [vmem:[%s1 + $0x848] sm:$0xff]
    %v316 = vld [vmem:[%s1 + $0x850] sm:$0xff]
    %v317 = vld [vmem:[%s1 + $0x858] sm:$0xff]
    %v318 = vld [vmem:[%s1 + $0x860] sm:$0xff]
    %v319 = vld [vmem:[%s1 + $0x868] sm:$0xff]
    %v320 = vld [vmem:[%s1 + $0x870] sm:$0xff]
    %v321 = vld [vmem:[%s1 + $0x878] sm:$0xff]
    %v322 = vld [vmem:[%s1 + $0x880] sm:$0xff]
    %v323 = vld [vmem:[%s1 + $0x888] sm:$0xff]
    %v324 = vld [vmem:[%s1 + $0x890] sm:$0xff]
    %v325 = vld [vmem:[%s1 + $0x898] sm:$0xff]
    %v326 = vld [vmem:[%s1 + $0x8a0] sm:$0xff]
    %v327 = vld [vmem:[%s1 + $0x8a8] sm:$0xff]
    %v328 = vld [vmem:[%s1 + $0x8b0] sm:$0xff]
    %v329 = vld [vmem:[%s1 + $0x8b8] sm:$0xff]
    %v330 = vld [vmem:[%s1 + $0x8c0] sm:$0xff]
    %v331 = vld [vmem:[%s1 + $0x8c8] sm:$0xff]
    %v332 = vld [vmem:[%s1 + $0x8d0] sm:$0xff]
    %v333 = vld [vmem:[%s1 + $0x8d8] sm:$0xff]
    %v334 = vld [vmem:[%s1 + $0x8e0] sm:$0xff]
    %v335 = vld [vmem:[%s1 + $0x8e8] sm:$0xff]
    %v336 = vld [vmem:[%s1 + $0x8f0] sm:$0xff]
    %v337 = vld [vmem:[%s1 + $0x8f8] sm:$0xff]
    %v338 = vld [vmem:[%s1 + $0x900] sm:$0xff]
    %v339 = vld [vmem:[%s1 + $0x908] sm:$0xff]
    %v340 = vld [vmem:[%s1 + $0x910] sm:$0xff]
    %v341 = vld [vmem:[%s1 + $0x918] sm:$0xff]
    %v342 = vld [vmem:[%s1 + $0x920] sm:$0xff]
    %v343 = vld [vmem:[%s1 + $0x928] sm:$0xff]
    %v344 = vld [vmem:[%s1 + $0x930] sm:$0xff]
    %v345 = vld [vmem:[%s1 + $0x938] sm:$0xff]
    %v346 = vld [vmem:[%s1 + $0x940] sm:$0xff]
    %v347 = vld [vmem:[%s1 + $0x948] sm:$0xff]
    %v348 = vld [vmem:[%s1 + $0x950] sm:$0xff]
    %v349 = vld [vmem:[%s1 + $0x958] sm:$0xff]
    %v350 = vld [vmem:[%s1 + $0x960] sm:$0xff]
    %v351 = vld [vmem:[%s1 + $0x968] sm:$0xff]
    %v352 = vld [vmem:[%s1 + $0x970] sm:$0xff]
    %v353 = vld [vmem:[%s1 + $0x978] sm:$0xff]
    %v354 = vld [vmem:[%s1 + $0x980] sm:$0xff]
    %v355 = vld [vmem:[%s1 + $0x988] sm:$0xff]
    %v356 = vld [vmem:[%s1 + $0x990] sm:$0xff]
    %v357 = vld [vmem:[%s1 + $0x998] sm:$0xff]
    %v358 = vld [vmem:[%s1 + $0x9a0] sm:$0xff]
    %v359 = vld [vmem:[%s1 + $0x9a8] sm:$0xff]
    %v360 = vld [vmem:[%s1 + $0x9b0] sm:$0xff]
    %v361 = vld [vmem:[%s1 + $0x9b8] sm:$0xff]
    %v362 = vld [vmem:[%s1 + $0x9c0] sm:$0xff]
    %v363 = vld [vmem:[%s1 + $0x9c8] sm:$0xff]
    %v364 = vld [vmem:[%s1 + $0x9d0] sm:$0xff]
    %v365 = vld [vmem:[%s1 + $0x9d8] sm:$0xff]
    %v366 = vld [vmem:[%s1 + $0x9e0] sm:$0xff]
    %v367 = vld [vmem:[%s1 + $0x9e8] sm:$0xff]
    %v368 = vld [vmem:[%s1 + $0x9f0] sm:$0xff]
    %v369 = vld [vmem:[%s1 + $0x9f8] sm:$0xff]
    %v370 = vld [vmem:[%s1 + $0xa00] sm:$0xff]
    %v371 = vld [vmem:[%s1 + $0xa08] sm:$0xff]
    %v372 = vld [vmem:[%s1 + $0xa10] sm:$0xff]
    %v373 = vld [vmem:[%s1 + $0xa18] sm:$0xff]
    %v374 = vld [vmem:[%s1 + $0xa20] sm:$0xff]
    %v375 = vld [vmem:[%s1 + $0xa28] sm:$0xff]
    %v376 = vld [vmem:[%s1 + $0xa30] sm:$0xff]
    %v377 = vld [vmem:[%s1 + $0xa38] sm:$0xff]
    %v378 = vld [vmem:[%s1 + $0xa40] sm:$0xff]
    %v379 = vld [vmem:[%s1 + $0xa48] sm:$0xff]
    %v380 = vld [vmem:[%s1 + $0xa50] sm:$0xff]
    %v381 = vld [vmem:[%s1 + $0xa58] sm:$0xff]
    %v382 = vld [vmem:[%s1 + $0xa60] sm:$0xff]
    %v383 = vld [vmem:[%s1 + $0xa68] sm:$0xff]
    %v384 = vld [vmem:[%s1 + $0xa70] sm:$0xff]
    %v385 = vld [vmem:[%s1 + $0xa78] sm:$0xff]
    %v386 = vld [vmem:[%s1 + $0xa80] sm:$0xff]
    %v387 = vld [vmem:[%s1 + $0xa88] sm:$0xff]
    %v388 = vld [vmem:[%s1 + $0xa90] sm:$0xff]
    %v389 = vld [vmem:[%s1 + $0xa98] sm:$0xff]
    %v390 = vld [vmem:[%s1 + $0xaa0] sm:$0xff]
    %v391 = vld [vmem:[%s1 + $0xaa8] sm:$0xff]
    %v392 = vld [vmem:[%s1 + $0xab0] sm:$0xff]
    %v393 = vld [vmem:[%s1 + $0xab8] sm:$0xff]
    %v394 = vld [vmem:[%s1 + $0xac0] sm:$0xff]
    %v395 = vld [vmem:[%s1 + $0xac8] sm:$0xff]
    %v396 = vld [vmem:[%s1 + $0xad0] sm:$0xff]
    %v397 = vld [vmem:[%s1 + $0xad8] sm:$0xff]
    %v398 = vld [vmem:[%s1 + $0xae0] sm:$0xff]
    %v399 = vld [vmem:[%s1 + $0xae8] sm:$0xff]
    %v400 = vld [vmem:[%s1 + $0xaf0] sm:$0xff]
    %v401 = vld [vmem:[%s1 + $0xaf8] sm:$0xff]
    %v402 = vld [vmem:[%s1 + $0xb00] sm:$0xff]
    %v403 = vld [vmem:[%s1 + $0xb08] sm:$0xff]
    %v404 = vld [vmem:[%s1 + $0xb10] sm:$0xff]
    %v405 = vld [vmem:[%s1 + $0xb18] sm:$0xff]
    %v406 = vld [vmem:[%s1 + $0xb20] sm:$0xff]
    %v407 = vld [vmem:[%s1 + $0xb28] sm:$0xff]
    %v408 = vld [vmem:[%s1 + $0xb30] sm:$0xff]
    %v409 = vld [vmem:[%s1 + $0xb38] sm:$0xff]
    %v410 = vld [vmem:[%s1 + $0xb40] sm:$0xff]
    %v411 = vld [vmem:[%s1 + $0xb48] sm:$0xff]
    %v412 = vld [vmem:[%s1 + $0xb50] sm:$0xff]
    %v413 = vld [vmem:[%s1 + $0xb58] sm:$0xff]
    %v414 = vld [vmem:[%s1 + $0xb60] sm:$0xff]
    %v415 = vld [vmem:[%s1 + $0xb68] sm:$0xff]
    %v416 = vld [vmem:[%s1 + $0xb70] sm:$0xff]
    %v417 = vld [vmem:[%s1 + $0xb78] sm:$0xff]
    %v418 = vld [vmem:[%s1 + $0xb80] sm:$0xff]
    %v419 = vld [vmem:[%s1 + $0xb88] sm:$0xff]
    %v420 = vld [vmem:[%s1 + $0xb90] sm:$0xff]
    %v421 = vld [vmem:[%s1 + $0xb98] sm:$0xff]
    %v422 = vld [vmem:[%s1 + $0xba0] sm:$0xff]
    %v423 = vld [vmem:[%s1 + $0xba8] sm:$0xff]
    %v424 = vld [vmem:[%s1 + $0xbb0] sm:$0xff]
    %v425 = vld [vmem:[%s1 + $0xbb8] sm:$0xff]
    %v426 = vld [vmem:[%s1 + $0xbc0] sm:$0xff]
    %v427 = vld [vmem:[%s1 + $0xbc8] sm:$0xff]
    %v428 = vld [vmem:[%s1 + $0xbd0] sm:$0xff]
    %v429 = vld [vmem:[%s1 + $0xbd8] sm:$0xff]
    %v430 = vld [vmem:[%s1 + $0xbe0] sm:$0xff]
    %v431 = vld [vmem:[%s1 + $0xbe8] sm:$0xff]
    %v432 = vld [vmem:[%s1 + $0xbf0] sm:$0xff]
    %v433 = vld [vmem:[%s1 + $0xbf8] sm:$0xff]
    %v434 = vld [vmem:[%s1 + $0xc00] sm:$0xff]
    %v435 = vld [vmem:[%s1 + $0xc08] sm:$0xff]
    %v436 = vld [vmem:[%s1 + $0xc10] sm:$0xff]
    %v437 = vld [vmem:[%s1 + $0xc18] sm:$0xff]
    %v438 = vld [vmem:[%s1 + $0xc20] sm:$0xff]
    %v439 = vld [vmem:[%s1 + $0xc28] sm:$0xff]
    %v440 = vld [vmem:[%s1 + $0xc30] sm:$0xff]
    %v441 = vld [vmem:[%s1 + $0xc38] sm:$0xff]
    %v442 = vld [vmem:[%s1 + $0xc40] sm:$0xff]
    %v443 = vld [vmem:[%s1 + $0xc48] sm:$0xff]
    %v444 = vld [vmem:[%s1 + $0xc50] sm:$0xff]
    %v445 = vld [vmem:[%s1 + $0xc58] sm:$0xff]
    %v446 = vld [vmem:[%s1 + $0xc60] sm:$0xff]
    %v447 = vld [vmem:[%s1 + $0xc68] sm:$0xff]
    %v448 = vld [vmem:[%s1 + $0xc70] sm:$0xff]
    %v449 = vld [vmem:[%s1 + $0xc78] sm:$0xff]
    %v450 = vld [vmem:[%s1 + $0xc80] sm:$0xff]
    %v451 = vld [vmem:[%s1 + $0xc88] sm:$0xff]
    %v452 = vld [vmem:[%s1 + $0xc90] sm:$0xff]
    %v453 = vld [vmem:[%s1 + $0xc98] sm:$0xff]
    %v454 = vld [vmem:[%s1 + $0xca0] sm:$0xff]
    %v455 = vld [vmem:[%s1 + $0xca8] sm:$0xff]
    %v456 = vld [vmem:[%s1 + $0xcb0] sm:$0xff]
    %v457 = vld [vmem:[%s1 + $0xcb8] sm:$0xff]
    %v458 = vld [vmem:[%s1 + $0xcc0] sm:$0xff]
    %v459 = vld [vmem:[%s1 + $0xcc8] sm:$0xff]
    %v460 = vld [vmem:[%s1 + $0xcd0] sm:$0xff]
    %v461 = vld [vmem:[%s1 + $0xcd8] sm:$0xff]
    %v462 = vld [vmem:[%s1 + $0xce0] sm:$0xff]
    %v463 = vld [vmem:[%s1 + $0xce8] sm:$0xff]
    %v464 = vld [vmem:[%s1 + $0xcf0] sm:$0xff]
    %v465 = vld [vmem:[%s1 + $0xcf8] sm:$0xff]
    %v466 = vld [vmem:[%s1 + $0xd00] sm:$0xff]
    %v467 = vld [vmem:[%s1 + $0xd08] sm:$0xff]
    %v468 = vld [vmem:[%s1 + $0xd10] sm:$0xff]
    %v469 = vld [vmem:[%s1 + $0xd18] sm:$0xff]
    %v470 = vld [vmem:[%s1 + $0xd20] sm:$0xff]
    %v471 = vld [vmem:[%s1 + $0xd28] sm:$0xff]
    %v472 = vld [vmem:[%s1 + $0xd30] sm:$0xff]
    %v473 = vld [vmem:[%s1 + $0xd38] sm:$0xff]
    %v474 = vld [vmem:[%s1 + $0xd40] sm:$0xff]
    %v475 = vld [vmem:[%s1 + $0xd48] sm:$0xff]
    %v476 = vld [vmem:[%s1 + $0xd50] sm:$0xff]
    %v477 = vld [vmem:[%s1 + $0xd58] sm:$0xff]
    %v478 = vld [vmem:[%s1 + $0xd60] sm:$0xff]
    %v479 = vld [vmem:[%s1 + $0xd68] sm:$0xff]
    %v480 = vld [vmem:[%s1 + $0xd70] sm:$0xff]
    %v481 = vld [vmem:[%s1 + $0xd78] sm:$0xff]
    %v482 = vld [vmem:[%s1 + $0xd80] sm:$0xff]
    %v483 = vld [vmem:[%s1 + $0xd88] sm:$0xff]
    %v484 = vld [vmem:[%s1 + $0xd90] sm:$0xff]
    %v485 = vld [vmem:[%s1 + $0xd98] sm:$0xff]
    %v486 = vld [vmem:[%s1 + $0xda0] sm:$0xff]
    %v487 = vld [vmem:[%s1 + $0xda8] sm:$0xff]
    %v488 = vld [vmem:[%s1 + $0xdb0] sm:$0xff]
    %v489 = vld [vmem:[%s1 + $0xdb8] sm:$0xff]
    %v490 = vld [vmem:[%s1 + $0xdc0] sm:$0xff]
    %v491 = vld [vmem:[%s1 + $0xdc8] sm:$0xff]
    %v492 = vld [vmem:[%s1 + $0xdd0] sm:$0xff]
    %v493 = vld [vmem:[%s1 + $0xdd8] sm:$0xff]
    %v494 = vld [vmem:[%s1 + $0xde0] sm:$0xff]
    %v495 = vld [vmem:[%s1 + $0xde8] sm:$0xff]
    %v496 = vld [vmem:[%s1 + $0xdf0] sm:$0xff]
    %v497 = vld [vmem:[%s1 + $0xdf8] sm:$0xff]
    %v498 = vld [vmem:[%s1 + $0xe00] sm:$0xff]
    %v499 = vld [vmem:[%s1 + $0xe08] sm:$0xff]
    %v500 = vld [vmem:[%s1 + $0xe10] sm:$0xff]
    %v501 = vld [vmem:[%s1 + $0xe18] sm:$0xff]
    %v502 = vld [vmem:[%s1 + $0xe20] sm:$0xff]
    %v503 = vld [vmem:[%s1 + $0xe28] sm:$0xff]
    %v504 = vld [vmem:[%s1 + $0xe30] sm:$0xff]
    %v505 = vld [vmem:[%s1 + $0xe38] sm:$0xff]
    %v506 = vld [vmem:[%s1 + $0xe40] sm:$0xff]
    %v507 = vld [vmem:[%s1 + $0xe48] sm:$0xff]
    %v508 = vld [vmem:[%s1 + $0xe50] sm:$0xff]
    %v509 = vld [vmem:[%s1 + $0xe58] sm:$0xff]
    %v510 = vld [vmem:[%s1 + $0xe60] sm:$0xff]
    %v511 = vld [vmem:[%s1 + $0xe68] sm:$0xff]
    %v512 = vld [vmem:[%s1 + $0xe70] sm:$0xff]
    %v513 = vld [vmem:[%s1 + $0xe78] sm:$0xff]
    %v514 = vld [vmem:[%s1 + $0xe80] sm:$0xff]
    %v515 = vld [vmem:[%s1 + $0xe88] sm:$0xff]
    %v516 = vld [vmem:[%s1 + $0xe90] sm:$0xff]
    %v517 = vld [vmem:[%s1 + $0xe98] sm:$0xff]
    %v518 = vld [vmem:[%s1 + $0xea0] sm:$0xff]
    %v519 = vld [vmem:[%s1 + $0xea8] sm:$0xff]
    %v520 = vld [vmem:[%s1 + $0xeb0] sm:$0xff]
    %v521 = vld [vmem:[%s1 + $0xeb8] sm:$0xff]
    %v522 = vld [vmem:[%s1 + $0xec0] sm:$0xff]
    %v523 = vld [vmem:[%s1 + $0xec8] sm:$0xff]
    %v524 = vld [vmem:[%s1 + $0xed0] sm:$0xff]
    %v525 = vld [vmem:[%s1 + $0xed8] sm:$0xff]
    %v526 = vld [vmem:[%s1 + $0xee0] sm:$0xff]
    %v527 = vld [vmem:[%s1 + $0xee8] sm:$0xff]
    %v528 = vld [vmem:[%s1 + $0xef0] sm:$0xff]
    %v529 = vld [vmem:[%s1 + $0xef8] sm:$0xff]
    %v530 = vld [vmem:[%s1 + $0xf00] sm:$0xff]
    %v531 = vld [vmem:[%s1 + $0xf08] sm:$0xff]
    %v532 = vld [vmem:[%s1 + $0xf10] sm:$0xff]
    %v533 = vld [vmem:[%s1 + $0xf18] sm:$0xff]
    %v534 = vld [vmem:[%s1 + $0xf20] sm:$0xff]
    %v535 = vld [vmem:[%s1 + $0xf28] sm:$0xff]
    %v536 = vld [vmem:[%s1 + $0xf30] sm:$0xff]
    %v537 = vld [vmem:[%s1 + $0xf38] sm:$0xff]
    %v538 = vld [vmem:[%s1 + $0xf40] sm:$0xff]
    %v539 = vld [vmem:[%s1 + $0xf48] sm:$0xff]
    %v540 = vld [vmem:[%s1 + $0xf50] sm:$0xff]
    %v541 = vld [vmem:[%s1 + $0xf58] sm:$0xff]
    %v542 = vld [vmem:[%s1 + $0xf60] sm:$0xff]
    %v543 = vld [vmem:[%s1 + $0xf68] sm:$0xff]
    %v544 = vld [vmem:[%s1 + $0xf70] sm:$0xff]
    %v545 = vld [vmem:[%s1 + $0xf78] sm:$0xff]
    %v546 = vld [vmem:[%s1 + $0xf80] sm:$0xff]
    %v547 = vld [vmem:[%s1 + $0xf88] sm:$0xff]
    %v548 = vld [vmem:[%s1 + $0xf90] sm:$0xff]
    %v549 = vld [vmem:[%s1 + $0xf98] sm:$0xff]
    %v550 = vld [vmem:[%s1 + $0xfa0] sm:$0xff]
    %v551 = vld [vmem:[%s1 + $0xfa8] sm:$0xff]
    %v552 = vld [vmem:[%s1 + $0xfb0] sm:$0xff]
    %v553 = vld [vmem:[%s1 + $0xfb8] sm:$0xff]
    %v554 = vld [vmem:[%s1 + $0xfc0] sm:$0xff]
    %v555 = vld [vmem:[%s1 + $0xfc8] sm:$0xff]
    %v556 = vld [vmem:[%s1 + $0xfd0] sm:$0xff]
    %v557 = vld [vmem:[%s1 + $0xfd8] sm:$0xff]
    %v558 = vld [vmem:[%s1 + $0xfe0] sm:$0xff]
    %v559 = vld [vmem:[%s1 + $0xfe8] sm:$0xff]
    %v560 = vld [vmem:[%s1 + $0xff0] sm:$0xff]
    %v561 = vld [vmem:[%s1 + $0xff8] sm:$0xff]
    %v562 = vld [vmem:[%s1 + $0x1000] sm:$0xff]
    %v563 = vld [vmem:[%s1 + $0x1008] sm:$0xff]
    %v564 = vld [vmem:[%s1 + $0x1010] sm:$0xff]
    %v565 = vld [vmem:[%s1 + $0x1018] sm:$0xff]
    %v566 = vld [vmem:[%s1 + $0x1020] sm:$0xff]
    %v567 = vld [vmem:[%s1 + $0x1028] sm:$0xff]
    %v568 = vld [vmem:[%s1 + $0x1030] sm:$0xff]
    %v569 = vld [vmem:[%s1 + $0x1038] sm:$0xff]
    %v570 = vld [vmem:[%s1 + $0x1040] sm:$0xff]
    %v571 = vld [vmem:[%s1 + $0x1048] sm:$0xff]
    %v572 = vld [vmem:[%s1 + $0x1050] sm:$0xff]
    %v573 = vld [vmem:[%s1 + $0x1058] sm:$0xff]
    %v574 = vld [vmem:[%s1 + $0x1060] sm:$0xff]
    %v575 = vld [vmem:[%s1 + $0x1068] sm:$0xff]
    %v576 = vld [vmem:[%s1 + $0x1070] sm:$0xff]
    %v577 = vld [vmem:[%s1 + $0x1078] sm:$0xff]
    %v578 = vld [vmem:[%s1 + $0x1080] sm:$0xff]
    %v579 = vld [vmem:[%s1 + $0x1088] sm:$0xff]
    %v580 = vld [vmem:[%s1 + $0x1090] sm:$0xff]
    %v581 = vld [vmem:[%s1 + $0x1098] sm:$0xff]
    %v582 = vld [vmem:[%s1 + $0x10a0] sm:$0xff]
    %v583 = vld [vmem:[%s1 + $0x10a8] sm:$0xff]
    %v584 = vld [vmem:[%s1 + $0x10b0] sm:$0xff]
    %v585 = vld [vmem:[%s1 + $0x10b8] sm:$0xff]
    %v586 = vld [vmem:[%s1 + $0x10c0] sm:$0xff]
    %v587 = vld [vmem:[%s1 + $0x10c8] sm:$0xff]
    %v588 = vld [vmem:[%s1 + $0x10d0] sm:$0xff]
    %v589 = vld [vmem:[%s1 + $0x10d8] sm:$0xff]
    %v590 = vld [vmem:[%s1 + $0x10e0] sm:$0xff]
    %v591 = vld [vmem:[%s1 + $0x10e8] sm:$0xff]
    %v592 = vld [vmem:[%s1 + $0x10f0] sm:$0xff]
    %v593 = vld [vmem:[%s1 + $0x10f8] sm:$0xff]
    %v594 = vld [vmem:[%s1 + $0x1100] sm:$0xff]
    %v595 = vld [vmem:[%s1 + $0x1108] sm:$0xff]
    %v596 = vld [vmem:[%s1 + $0x1110] sm:$0xff]
    %v597 = vld [vmem:[%s1 + $0x1118] sm:$0xff]
    %v598 = vld [vmem:[%s1 + $0x1120] sm:$0xff]
    %v599 = vld [vmem:[%s1 + $0x1128] sm:$0xff]
    %v600 = vld [vmem:[%s1 + $0x1130] sm:$0xff]
    %v601 = vld [vmem:[%s1 + $0x1138] sm:$0xff]
    %v602 = vld [vmem:[%s1 + $0x1140] sm:$0xff]
    %v603 = vld [vmem:[%s1 + $0x1148] sm:$0xff]
    %v604 = vld [vmem:[%s1 + $0x1150] sm:$0xff]
    %v605 = vld [vmem:[%s1 + $0x1158] sm:$0xff]
    %v606 = vld [vmem:[%s1 + $0x1160] sm:$0xff]
    %v607 = vld [vmem:[%s1 + $0x1168] sm:$0xff]
    %v608 = vld [vmem:[%s1 + $0x1170] sm:$0xff]
    %v609 = vld [vmem:[%s1 + $0x1178] sm:$0xff]
    %v610 = vld [vmem:[%s1 + $0x1180] sm:$0xff]
    %v611 = vld [vmem:[%s1 + $0x1188] sm:$0xff]
    %v612 = vld [vmem:[%s1 + $0x1190] sm:$0xff]
    %v613 = vld [vmem:[%s1 + $0x1198] sm:$0xff]
    %v614 = vld [vmem:[%s1 + $0x11a0] sm:$0xff]
    %v615 = vld [vmem:[%s1 + $0x11a8] sm:$0xff]
    %v616 = vld [vmem:[%s1 + $0x11b0] sm:$0xff]
    %v617 = vld [vmem:[%s1 + $0x11b8] sm:$0xff]
    %v618 = vld [vmem:[%s1 + $0x11c0] sm:$0xff]
    %v619 = vld [vmem:[%s1 + $0x11c8] sm:$0xff]
    %v620 = vld [vmem:[%s1 + $0x11d0] sm:$0xff]
    %v621 = vld [vmem:[%s1 + $0x11d8] sm:$0xff]
    %v622 = vld [vmem:[%s1 + $0x11e0] sm:$0xff]
    %v623 = vld [vmem:[%s1 + $0x11e8] sm:$0xff]
    %v624 = vld [vmem:[%s1 + $0x11f0] sm:$0xff]
    %v625 = vld [vmem:[%s1 + $0x11f8] sm:$0xff]
    %v626 = vld [vmem:[%s1 + $0x1200] sm:$0xff]
    %v627 = vld [vmem:[%s1 + $0x1208] sm:$0xff]
    %v628 = vld [vmem:[%s1 + $0x1210] sm:$0xff]
    %v629 = vld [vmem:[%s1 + $0x1218] sm:$0xff]
    %v630 = vld [vmem:[%s1 + $0x1220] sm:$0xff]
    %v631 = vld [vmem:[%s1 + $0x1228] sm:$0xff]
    %v632 = vld [vmem:[%s1 + $0x1230] sm:$0xff]
    %v633 = vld [vmem:[%s1 + $0x1238] sm:$0xff]
    %v634 = vld [vmem:[%s1 + $0x1240] sm:$0xff]
    %v635 = vld [vmem:[%s1 + $0x1248] sm:$0xff]
    %v636 = vld [vmem:[%s1 + $0x1250] sm:$0xff]
    %v637 = vld [vmem:[%s1 + $0x1258] sm:$0xff]
    %v638 = vld [vmem:[%s1 + $0x1260] sm:$0xff]
    %v639 = vld [vmem:[%s1 + $0x1268] sm:$0xff]
    %v640 = vld [vmem:[%s1 + $0x1270] sm:$0xff]
    %v641 = vld [vmem:[%s1 + $0x1278] sm:$0xff]
    %v642 = vld [vmem:[%s1 + $0x1280] sm:$0xff]
    %v643 = vld [vmem:[%s1 + $0x1288] sm:$0xff]
    %v644 = vld [vmem:[%s1 + $0x1290] sm:$0xff]
    %v645 = vld [vmem:[%s1 + $0x1298] sm:$0xff]
    %v646 = vld [vmem:[%s1 + $0x12a0] sm:$0xff]
    %v647 = vld [vmem:[%s1 + $0x12a8] sm:$0xff]
    %v648 = vld [vmem:[%s1 + $0x12b0] sm:$0xff]
    %v649 = vld [vmem:[%s1 + $0x12b8] sm:$0xff]
    %v650 = vld [vmem:[%s1 + $0x12c0] sm:$0xff]
    %v651 = vld [vmem:[%s1 + $0x12c8] sm:$0xff]
    %v652 = vld [vmem:[%s1 + $0x12d0] sm:$0xff]
    %v653 = vld [vmem:[%s1 + $0x12d8] sm:$0xff]
    %v654 = vld [vmem:[%s1 + $0x12e0] sm:$0xff]
    %v655 = vld [vmem:[%s1 + $0x12e8] sm:$0xff]
    %v656 = vld [vmem:[%s1 + $0x12f0] sm:$0xff]
    %v657 = vld [vmem:[%s1 + $0x12f8] sm:$0xff]
    %v658 = vld [vmem:[%s1 + $0x1300] sm:$0xff]
    %v659 = vld [vmem:[%s1 + $0x1308] sm:$0xff]
    %v660 = vld [vmem:[%s1 + $0x1310] sm:$0xff]
    %v661 = vld [vmem:[%s1 + $0x1318] sm:$0xff]
    %v662 = vld [vmem:[%s1 + $0x1320] sm:$0xff]
    %v663 = vld [vmem:[%s1 + $0x1328] sm:$0xff]
    %v664 = vld [vmem:[%s1 + $0x1330] sm:$0xff]
    %v665 = vld [vmem:[%s1 + $0x1338] sm:$0xff]
    %v666 = vld [vmem:[%s1 + $0x1340] sm:$0xff]
    %v667 = vld [vmem:[%s1 + $0x1348] sm:$0xff]
    %v668 = vld [vmem:[%s1 + $0x1350] sm:$0xff]
    %v669 = vld [vmem:[%s1 + $0x1358] sm:$0xff]
    %v670 = vld [vmem:[%s1 + $0x1360] sm:$0xff]
    %v671 = vld [vmem:[%s1 + $0x1368] sm:$0xff]
    %v672 = vld [vmem:[%s1 + $0x1370] sm:$0xff]
    %v673 = vld [vmem:[%s1 + $0x1378] sm:$0xff]
    %v674 = vld [vmem:[%s1 + $0x1380] sm:$0xff]
    %v675 = vld [vmem:[%s1 + $0x1388] sm:$0xff]
    %v676 = vld [vmem:[%s1 + $0x1390] sm:$0xff]
    %v677 = vld [vmem:[%s1 + $0x1398] sm:$0xff]
    %v678 = vld [vmem:[%s1 + $0x13a0] sm:$0xff]
    %v679 = vld [vmem:[%s1 + $0x13a8] sm:$0xff]
    %v680 = vld [vmem:[%s1 + $0x13b0] sm:$0xff]
    %v681 = vld [vmem:[%s1 + $0x13b8] sm:$0xff]
    %v682 = vld [vmem:[%s1 + $0x13c0] sm:$0xff]
    %v683 = vld [vmem:[%s1 + $0x13c8] sm:$0xff]
    %v684 = vld [vmem:[%s1 + $0x13d0] sm:$0xff]
    %v685 = vld [vmem:[%s1 + $0x13d8] sm:$0xff]
    %v686 = vld [vmem:[%s1 + $0x13e0] sm:$0xff]
    %v687 = vld [vmem:[%s1 + $0x13e8] sm:$0xff]
    %v688 = vld [vmem:[%s1 + $0x13f0] sm:$0xff]
    %v689 = vld [vmem:[%s1 + $0x13f8] sm:$0xff]
    %v690 = vld [vmem:[%s1 + $0x1400] sm:$0xff]
    %v691 = vld [vmem:[%s1 + $0x1408] sm:$0xff]
    %v692 = vld [vmem:[%s1 + $0x1410] sm:$0xff]
    %v693 = vld [vmem:[%s1 + $0x1418] sm:$0xff]
    %v694 = vld [vmem:[%s1 + $0x1420] sm:$0xff]
    %v695 = vld [vmem:[%s1 + $0x1428] sm:$0xff]
    %v696 = vld [vmem:[%s1 + $0x1430] sm:$0xff]
    %v697 = vld [vmem:[%s1 + $0x1438] sm:$0xff]
    %v698 = vld [vmem:[%s1 + $0x1440] sm:$0xff]
    %v699 = vld [vmem:[%s1 + $0x1448] sm:$0xff]
    %v700 = vld [vmem:[%s1 + $0x1450] sm:$0xff]
    %v701 = vld [vmem:[%s1 + $0x1458] sm:$0xff]
    %v702 = vld [vmem:[%s1 + $0x1460] sm:$0xff]
    %v703 = vld [vmem:[%s1 + $0x1468] sm:$0xff]
    %v704 = vld [vmem:[%s1 + $0x1470] sm:$0xff]
    %v705 = vld [vmem:[%s1 + $0x1478] sm:$0xff]
    %v706 = vld [vmem:[%s1 + $0x1480] sm:$0xff]
    %v707 = vld [vmem:[%s1 + $0x1488] sm:$0xff]
    %v708 = vld [vmem:[%s1 + $0x1490] sm:$0xff]
    %v709 = vld [vmem:[%s1 + $0x1498] sm:$0xff]
    %v710 = vld [vmem:[%s1 + $0x14a0] sm:$0xff]
    %v711 = vld [vmem:[%s1 + $0x14a8] sm:$0xff]
    %v712 = vld [vmem:[%s1 + $0x14b0] sm:$0xff]
    %v713 = vld [vmem:[%s1 + $0x14b8] sm:$0xff]
    %v714 = vld [vmem:[%s1 + $0x14c0] sm:$0xff]
    %v715 = vld [vmem:[%s1 + $0x14c8] sm:$0xff]
    %v716 = vld [vmem:[%s1 + $0x14d0] sm:$0xff]
    %v717 = vld [vmem:[%s1 + $0x14d8] sm:$0xff]
    %v718 = vld [vmem:[%s1 + $0x14e0] sm:$0xff]
    %v719 = vld [vmem:[%s1 + $0x14e8] sm:$0xff]
    %v720 = vld [vmem:[%s1 + $0x14f0] sm:$0xff]
    %v721 = vld [vmem:[%s1 + $0x14f8] sm:$0xff]
    %v722 = vld [vmem:[%s1 + $0x1500] sm:$0xff]
    %v723 = vld [vmem:[%s1 + $0x1508] sm:$0xff]
    %v724 = vld [vmem:[%s1 + $0x1510] sm:$0xff]
    %v725 = vld [vmem:[%s1 + $0x1518] sm:$0xff]
    %v726 = vld [vmem:[%s1 + $0x1520] sm:$0xff]
    %v727 = vld [vmem:[%s1 + $0x1528] sm:$0xff]
    %v728 = vld [vmem:[%s1 + $0x1530] sm:$0xff]
    %v729 = vld [vmem:[%s1 + $0x1538] sm:$0xff]
    %v730 = vld [vmem:[%s1 + $0x1540] sm:$0xff]
    %v731 = vld [vmem:[%s1 + $0x1548] sm:$0xff]
    %v732 = vld [vmem:[%s1 + $0x1550] sm:$0xff]
    %v733 = vld [vmem:[%s1 + $0x1558] sm:$0xff]
    %v734 = vld [vmem:[%s1 + $0x1560] sm:$0xff]
    %v735 = vld [vmem:[%s1 + $0x1568] sm:$0xff]
    %v736 = vld [vmem:[%s1 + $0x1570] sm:$0xff]
    %v737 = vld [vmem:[%s1 + $0x1578] sm:$0xff]
    %v738 = vld [vmem:[%s1 + $0x1580] sm:$0xff]
    %v739 = vld [vmem:[%s1 + $0x1588] sm:$0xff]
    %v740 = vld [vmem:[%s1 + $0x1590] sm:$0xff]
    %v741 = vld [vmem:[%s1 + $0x1598] sm:$0xff]
    %v742 = vld [vmem:[%s1 + $0x15a0] sm:$0xff]
    %v743 = vld [vmem:[%s1 + $0x15a8] sm:$0xff]
    %v744 = vld [vmem:[%s1 + $0x15b0] sm:$0xff]
    %v745 = vld [vmem:[%s1 + $0x15b8] sm:$0xff]
    %v746 = vld [vmem:[%s1 + $0x15c0] sm:$0xff]
    %v747 = vld [vmem:[%s1 + $0x15c8] sm:$0xff]
    %v748 = vld [vmem:[%s1 + $0x15d0] sm:$0xff]
    %v749 = vld [vmem:[%s1 + $0x15d8] sm:$0xff]
    %v750 = vld [vmem:[%s1 + $0x15e0] sm:$0xff]
    %v751 = vld [vmem:[%s1 + $0x15e8] sm:$0xff]
    %v752 = vld [vmem:[%s1 + $0x15f0] sm:$0xff]
    %v753 = vld [vmem:[%s1 + $0x15f8] sm:$0xff]
    %v754 = vld [vmem:[%s1 + $0x1600] sm:$0xff]
    %v755 = vld [vmem:[%s1 + $0x1608] sm:$0xff]
    %v756 = vld [vmem:[%s1 + $0x1610] sm:$0xff]
    %v757 = vld [vmem:[%s1 + $0x1618] sm:$0xff]
    %v758 = vld [vmem:[%s1 + $0x1620] sm:$0xff]
    %v759 = vld [vmem:[%s1 + $0x1628] sm:$0xff]
    %v760 = vld [vmem:[%s1 + $0x1630] sm:$0xff]
    %v761 = vld [vmem:[%s1 + $0x1638] sm:$0xff]
    %v762 = vld [vmem:[%s1 + $0x1640] sm:$0xff]
    %v763 = vld [vmem:[%s1 + $0x1648] sm:$0xff]
    %v764 = vld [vmem:[%s1 + $0x1650] sm:$0xff]
    %v765 = vld [vmem:[%s1 + $0x1658] sm:$0xff]
    %v766 = vld [vmem:[%s1 + $0x1660] sm:$0xff]
    %v767 = vld [vmem:[%s1 + $0x1668] sm:$0xff]
    %v768 = vld [vmem:[%s1 + $0x1670] sm:$0xff]
    %v769 = vld [vmem:[%s1 + $0x1678] sm:$0xff]
    %v770 = vld [vmem:[%s1 + $0x1680] sm:$0xff]
    %v771 = vld [vmem:[%s1 + $0x1688] sm:$0xff]
    %v772 = vld [vmem:[%s1 + $0x1690] sm:$0xff]
    %v773 = vld [vmem:[%s1 + $0x1698] sm:$0xff]
    %v774 = vld [vmem:[%s1 + $0x16a0] sm:$0xff]
    %v775 = vld [vmem:[%s1 + $0x16a8] sm:$0xff]
    %v776 = vld [vmem:[%s1 + $0x16b0] sm:$0xff]
    %v777 = vld [vmem:[%s1 + $0x16b8] sm:$0xff]
    %v778 = vld [vmem:[%s1 + $0x16c0] sm:$0xff]
    %v779 = vld [vmem:[%s1 + $0x16c8] sm:$0xff]
    %v780 = vld [vmem:[%s1 + $0x16d0] sm:$0xff]
    %v781 = vld [vmem:[%s1 + $0x16d8] sm:$0xff]
    %v782 = vld [vmem:[%s1 + $0x16e0] sm:$0xff]
    %v783 = vld [vmem:[%s1 + $0x16e8] sm:$0xff]
    %v784 = vld [vmem:[%s1 + $0x16f0] sm:$0xff]
    %v785 = vld [vmem:[%s1 + $0x16f8] sm:$0xff]
    %v786 = vld [vmem:[%s1 + $0x1700] sm:$0xff]
    %v787 = vld [vmem:[%s1 + $0x1708] sm:$0xff]
    %v788 = vld [vmem:[%s1 + $0x1710] sm:$0xff]
    %v789 = vld [vmem:[%s1 + $0x1718] sm:$0xff]
    %v790 = vld [vmem:[%s1 + $0x1720] sm:$0xff]
    %v791 = vld [vmem:[%s1 + $0x1728] sm:$0xff]
    %v792 = vld [vmem:[%s1 + $0x1730] sm:$0xff]
    %v793 = vld [vmem:[%s1 + $0x1738] sm:$0xff]
    %v794 = vld [vmem:[%s1 + $0x1740] sm:$0xff]
    %v795 = vld [vmem:[%s1 + $0x1748] sm:$0xff]
    %v796 = vld [vmem:[%s1 + $0x1750] sm:$0xff]
    %v797 = vld [vmem:[%s1 + $0x1758] sm:$0xff]
    %v798 = vld [vmem:[%s1 + $0x1760] sm:$0xff]
    %v799 = vld [vmem:[%s1 + $0x1768] sm:$0xff]
    %v800 = vld [vmem:[%s1 + $0x1770] sm:$0xff]
    %v801 = vld [vmem:[%s1 + $0x1778] sm:$0xff]
    %v802 = vld [vmem:[%s1 + $0x1780] sm:$0xff]
    %v803 = vld [vmem:[%s1 + $0x1788] sm:$0xff]
    %v804 = vld [vmem:[%s1 + $0x1790] sm:$0xff]
    %v805 = vld [vmem:[%s1 + $0x1798] sm:$0xff]
    %v806 = vld [vmem:[%s1 + $0x17a0] sm:$0xff]
    %v807 = vld [vmem:[%s1 + $0x17a8] sm:$0xff]
    %v808 = vld [vmem:[%s1 + $0x17b0] sm:$0xff]
    %v809 = vld [vmem:[%s1 + $0x17b8] sm:$0xff]
    %v810 = vld [vmem:[%s1 + $0x17c0] sm:$0xff]
    %v811 = vld [vmem:[%s1 + $0x17c8] sm:$0xff]
    %v812 = vld [vmem:[%s1 + $0x17d0] sm:$0xff]
    %v813 = vld [vmem:[%s1 + $0x17d8] sm:$0xff]
    %v814 = vld [vmem:[%s1 + $0x17e0] sm:$0xff]
    %v815 = vld [vmem:[%s1 + $0x17e8] sm:$0xff]
    %v816 = vld [vmem:[%s1 + $0x17f0] sm:$0xff]
    %v817 = vld [vmem:[%s1 + $0x17f8] sm:$0xff]
    %v818 = vld [vmem:[%s1 + $0x1800] sm:$0xff]
    %v819 = vld [vmem:[%s1 + $0x1808] sm:$0xff]
    %v820 = vld [vmem:[%s1 + $0x1810] sm:$0xff]
    %v821 = vld [vmem:[%s1 + $0x1818] sm:$0xff]
    %v822 = vld [vmem:[%s1 + $0x1820] sm:$0xff]
    %v823 = vld [vmem:[%s1 + $0x1828] sm:$0xff]
    %v824 = vld [vmem:[%s1 + $0x1830] sm:$0xff]
    %v825 = vld [vmem:[%s1 + $0x1838] sm:$0xff]
    %v826 = vld [vmem:[%s1 + $0x1840] sm:$0xff]
    %v827 = vld [vmem:[%s1 + $0x1848] sm:$0xff]
    %v828 = vld [vmem:[%s1 + $0x1850] sm:$0xff]
    %v829 = vld [vmem:[%s1 + $0x1858] sm:$0xff]
    %v830 = vld [vmem:[%s1 + $0x1860] sm:$0xff]
    %v831 = vld [vmem:[%s1 + $0x1868] sm:$0xff]
    %v832 = vld [vmem:[%s1 + $0x1870] sm:$0xff]
    %v833 = vld [vmem:[%s1 + $0x1878] sm:$0xff]
    %v834 = vld [vmem:[%s1 + $0x1880] sm:$0xff]
    %v835 = vld [vmem:[%s1 + $0x1888] sm:$0xff]
    %v836 = vld [vmem:[%s1 + $0x1890] sm:$0xff]
    %v837 = vld [vmem:[%s1 + $0x1898] sm:$0xff]
    %v838 = vld [vmem:[%s1 + $0x18a0] sm:$0xff]
    %v839 = vld [vmem:[%s1 + $0x18a8] sm:$0xff]
    %v840 = vld [vmem:[%s1 + $0x18b0] sm:$0xff]
    %v841 = vld [vmem:[%s1 + $0x18b8] sm:$0xff]
    %v842 = vld [vmem:[%s1 + $0x18c0] sm:$0xff]
    %v843 = vld [vmem:[%s1 + $0x18c8] sm:$0xff]
    %v844 = vld [vmem:[%s1 + $0x18d0] sm:$0xff]
    %v845 = vld [vmem:[%s1 + $0x18d8] sm:$0xff]
    %v846 = vld [vmem:[%s1 + $0x18e0] sm:$0xff]
    %v847 = vld [vmem:[%s1 + $0x18e8] sm:$0xff]
    %v848 = vld [vmem:[%s1 + $0x18f0] sm:$0xff]
    %v849 = vld [vmem:[%s1 + $0x18f8] sm:$0xff]
    %v850 = vld [vmem:[%s1 + $0x1900] sm:$0xff]
    %v851 = vld [vmem:[%s1 + $0x1908] sm:$0xff]
    %v852 = vld [vmem:[%s1 + $0x1910] sm:$0xff]
    %v853 = vld [vmem:[%s1 + $0x1918] sm:$0xff]
    %v854 = vld [vmem:[%s1 + $0x1920] sm:$0xff]
    %v855 = vld [vmem:[%s1 + $0x1928] sm:$0xff]
    %v856 = vld [vmem:[%s1 + $0x1930] sm:$0xff]
    %v857 = vld [vmem:[%s1 + $0x1938] sm:$0xff]
    %v858 = vld [vmem:[%s1 + $0x1940] sm:$0xff]
    %v859 = vld [vmem:[%s1 + $0x1948] sm:$0xff]
    %v860 = vld [vmem:[%s1 + $0x1950] sm:$0xff]
    %v861 = vld [vmem:[%s1 + $0x1958] sm:$0xff]
    %v862 = vld [vmem:[%s1 + $0x1960] sm:$0xff]
    %v863 = vld [vmem:[%s1 + $0x1968] sm:$0xff]
    %v864 = vld [vmem:[%s1 + $0x1970] sm:$0xff]
    %v865 = vld [vmem:[%s1 + $0x1978] sm:$0xff]
    %v866 = vld [vmem:[%s1 + $0x1980] sm:$0xff]
    %v867 = vld [vmem:[%s1 + $0x1988] sm:$0xff]
    %v868 = vld [vmem:[%s1 + $0x1990] sm:$0xff]
    %v869 = vld [vmem:[%s1 + $0x1998] sm:$0xff]
    %v870 = vld [vmem:[%s1 + $0x19a0] sm:$0xff]
    %v871 = vld [vmem:[%s1 + $0x19a8] sm:$0xff]
    %v872 = vld [vmem:[%s1 + $0x19b0] sm:$0xff]
    %v873 = vld [vmem:[%s1 + $0x19b8] sm:$0xff]
    %v874 = vld [vmem:[%s1 + $0x19c0] sm:$0xff]
    %v875 = vld [vmem:[%s1 + $0x19c8] sm:$0xff]
    %v876 = vld [vmem:[%s1 + $0x19d0] sm:$0xff]
    %v877 = vld [vmem:[%s1 + $0x19d8] sm:$0xff]
    %v878 = vld [vmem:[%s1 + $0x19e0] sm:$0xff]
    %v879 = vld [vmem:[%s1 + $0x19e8] sm:$0xff]
    %v880 = vld [vmem:[%s1 + $0x19f0] sm:$0xff]
    %v881 = vld [vmem:[%s1 + $0x19f8] sm:$0xff]
    %v882 = vld [vmem:[%s1 + $0x1a00] sm:$0xff]
    %v883 = vld [vmem:[%s1 + $0x1a08] sm:$0xff]
    %v884 = vld [vmem:[%s1 + $0x1a10] sm:$0xff]
    %v885 = vld [vmem:[%s1 + $0x1a18] sm:$0xff]
    %v886 = vld [vmem:[%s1 + $0x1a20] sm:$0xff]
    %v887 = vld [vmem:[%s1 + $0x1a28] sm:$0xff]
    %v888 = vld [vmem:[%s1 + $0x1a30] sm:$0xff]
    %v889 = vld [vmem:[%s1 + $0x1a38] sm:$0xff]
    %v890 = vld [vmem:[%s1 + $0x1a40] sm:$0xff]
    %v891 = vld [vmem:[%s1 + $0x1a48] sm:$0xff]
    %v892 = vld [vmem:[%s1 + $0x1a50] sm:$0xff]
    %v893 = vld [vmem:[%s1 + $0x1a58] sm:$0xff]
    %v894 = vld [vmem:[%s1 + $0x1a60] sm:$0xff]
    %v895 = vld [vmem:[%s1 + $0x1a68] sm:$0xff]
    %v896 = vld [vmem:[%s1 + $0x1a70] sm:$0xff]
    %v897 = vld [vmem:[%s1 + $0x1a78] sm:$0xff]
    %v898 = vld [vmem:[%s1 + $0x1a80] sm:$0xff]
    %v899 = vld [vmem:[%s1 + $0x1a88] sm:$0xff]
    %v900 = vld [vmem:[%s1 + $0x1a90] sm:$0xff]
    %v901 = vld [vmem:[%s1 + $0x1a98] sm:$0xff]
    %v902 = vld [vmem:[%s1 + $0x1aa0] sm:$0xff]
    %v903 = vld [vmem:[%s1 + $0x1aa8] sm:$0xff]
    %v904 = vld [vmem:[%s1 + $0x1ab0] sm:$0xff]
    %v905 = vld [vmem:[%s1 + $0x1ab8] sm:$0xff]
    %v906 = vld [vmem:[%s1 + $0x1ac0] sm:$0xff]
    %v907 = vld [vmem:[%s1 + $0x1ac8] sm:$0xff]
    %v908 = vld [vmem:[%s1 + $0x1ad0] sm:$0xff]
    %v909 = vld [vmem:[%s1 + $0x1ad8] sm:$0xff]
    %v910 = vld [vmem:[%s1 + $0x1ae0] sm:$0xff]
    %v911 = vld [vmem:[%s1 + $0x1ae8] sm:$0xff]
    %v912 = vld [vmem:[%s1 + $0x1af0] sm:$0xff]
    %v913 = vld [vmem:[%s1 + $0x1af8] sm:$0xff]
    %v914 = vld [vmem:[%s1 + $0x1b00] sm:$0xff]
    %v915 = vld [vmem:[%s1 + $0x1b08] sm:$0xff]
    %v916 = vld [vmem:[%s1 + $0x1b10] sm:$0xff]
    %v917 = vld [vmem:[%s1 + $0x1b18] sm:$0xff]
    %v918 = vld [vmem:[%s1 + $0x1b20] sm:$0xff]
    %v919 = vld [vmem:[%s1 + $0x1b28] sm:$0xff]
    %v920 = vld [vmem:[%s1 + $0x1b30] sm:$0xff]
    %v921 = vld [vmem:[%s1 + $0x1b38] sm:$0xff]
    %v922 = vld [vmem:[%s1 + $0x1b40] sm:$0xff]
    %v923 = vld [vmem:[%s1 + $0x1b48] sm:$0xff]
    %v924 = vld [vmem:[%s1 + $0x1b50] sm:$0xff]
    %v925 = vld [vmem:[%s1 + $0x1b58] sm:$0xff]
    %v926 = vld [vmem:[%s1 + $0x1b60] sm:$0xff]
    %v927 = vld [vmem:[%s1 + $0x1b68] sm:$0xff]
    %v928 = vld [vmem:[%s1 + $0x1b70] sm:$0xff]
    %v929 = vld [vmem:[%s1 + $0x1b78] sm:$0xff]
    %v930 = vld [vmem:[%s1 + $0x1b80] sm:$0xff]
    %v931 = vld [vmem:[%s1 + $0x1b88] sm:$0xff]
    %v932 = vld [vmem:[%s1 + $0x1b90] sm:$0xff]
    %v933 = vld [vmem:[%s1 + $0x1b98] sm:$0xff]
    %v934 = vld [vmem:[%s1 + $0x1ba0] sm:$0xff]
    %v935 = vld [vmem:[%s1 + $0x1ba8] sm:$0xff]
    %v936 = vld [vmem:[%s1 + $0x1bb0] sm:$0xff]
    %v937 = vld [vmem:[%s1 + $0x1bb8] sm:$0xff]
    %v938 = vld [vmem:[%s1 + $0x1bc0] sm:$0xff]
    %v939 = vld [vmem:[%s1 + $0x1bc8] sm:$0xff]
    %v940 = vld [vmem:[%s1 + $0x1bd0] sm:$0xff]
    %v941 = vld [vmem:[%s1 + $0x1bd8] sm:$0xff]
    %v942 = vld [vmem:[%s1 + $0x1be0] sm:$0xff]
    %v943 = vld [vmem:[%s1 + $0x1be8] sm:$0xff]
    %v944 = vld [vmem:[%s1 + $0x1bf0] sm:$0xff]
    %v945 = vld [vmem:[%s1 + $0x1bf8] sm:$0xff]
    %v946 = vld [vmem:[%s1 + $0x1c00] sm:$0xff]
    %v947 = vld [vmem:[%s1 + $0x1c08] sm:$0xff]
    %v948 = vld [vmem:[%s1 + $0x1c10] sm:$0xff]
    %v949 = vld [vmem:[%s1 + $0x1c18] sm:$0xff]
    %v950 = vld [vmem:[%s1 + $0x1c20] sm:$0xff]
    %v951 = vld [vmem:[%s1 + $0x1c28] sm:$0xff]
    %v952 = vld [vmem:[%s1 + $0x1c30] sm:$0xff]
    %v953 = vld [vmem:[%s1 + $0x1c38] sm:$0xff]
    %v954 = vld [vmem:[%s1 + $0x1c40] sm:$0xff]
    %v955 = vld [vmem:[%s1 + $0x1c48] sm:$0xff]
    %v956 = vld [vmem:[%s1 + $0x1c50] sm:$0xff]
    %v957 = vld [vmem:[%s1 + $0x1c58] sm:$0xff]
    %v958 = vld [vmem:[%s1 + $0x1c60] sm:$0xff]
    %v959 = vld [vmem:[%s1 + $0x1c68] sm:$0xff]
    %v960 = vld [vmem:[%s1 + $0x1c70] sm:$0xff]
    %v961 = vld [vmem:[%s1 + $0x1c78] sm:$0xff]
    %v962 = vld [vmem:[%s1 + $0x1c80] sm:$0xff]
    %v963 = vld [vmem:[%s1 + $0x1c88] sm:$0xff]
    %v964 = vld [vmem:[%s1 + $0x1c90] sm:$0xff]
    %v965 = vld [vmem:[%s1 + $0x1c98] sm:$0xff]
    %v966 = vld [vmem:[%s1 + $0x1ca0] sm:$0xff]
    %v967 = vld [vmem:[%s1 + $0x1ca8] sm:$0xff]
    %v968 = vld [vmem:[%s1 + $0x1cb0] sm:$0xff]
    %v969 = vld [vmem:[%s1 + $0x1cb8] sm:$0xff]
    %v970 = vld [vmem:[%s1 + $0x1cc0] sm:$0xff]
    %v971 = vld [vmem:[%s1 + $0x1cc8] sm:$0xff]
    %v972 = vld [vmem:[%s1 + $0x1cd0] sm:$0xff]
    %v973 = vld [vmem:[%s1 + $0x1cd8] sm:$0xff]
    %v974 = vld [vmem:[%s1 + $0x1ce0] sm:$0xff]
    %v975 = vld [vmem:[%s1 + $0x1ce8] sm:$0xff]
    %v976 = vld [vmem:[%s1 + $0x1cf0] sm:$0xff]
    %v977 = vld [vmem:[%s1 + $0x1cf8] sm:$0xff]
    %v978 = vld [vmem:[%s1 + $0x1d00] sm:$0xff]
    %v979 = vld [vmem:[%s1 + $0x1d08] sm:$0xff]
    %v980 = vld [vmem:[%s1 + $0x1d10] sm:$0xff]
    %v981 = vld [vmem:[%s1 + $0x1d18] sm:$0xff]
    %v982 = vld [vmem:[%s1 + $0x1d20] sm:$0xff]
    %v983 = vld [vmem:[%s1 + $0x1d28] sm:$0xff]
    %v984 = vld [vmem:[%s1 + $0x1d30] sm:$0xff]
    %v985 = vld [vmem:[%s1 + $0x1d38] sm:$0xff]
    %v986 = vld [vmem:[%s1 + $0x1d40] sm:$0xff]
    %v987 = vld [vmem:[%s1 + $0x1d48] sm:$0xff]
    %v988 = vld [vmem:[%s1 + $0x1d50] sm:$0xff]
    %v989 = vld [vmem:[%s1 + $0x1d58] sm:$0xff]
    %v990 = vld [vmem:[%s1 + $0x1d60] sm:$0xff]
    %v991 = vld [vmem:[%s1 + $0x1d68] sm:$0xff]
    %v992 = vld [vmem:[%s1 + $0x1d70] sm:$0xff]
    %v993 = vld [vmem:[%s1 + $0x1d78] sm:$0xff]
    %v994 = vld [vmem:[%s1 + $0x1d80] sm:$0xff]
    %v995 = vld [vmem:[%s1 + $0x1d88] sm:$0xff]
    %v996 = vld [vmem:[%s1 + $0x1d90] sm:$0xff]
    %v997 = vld [vmem:[%s1 + $0x1d98] sm:$0xff]
    %v998 = vld [vmem:[%s1 + $0x1da0] sm:$0xff]
    %v999 = vld [vmem:[%s1 + $0x1da8] sm:$0xff]
    %v1000 = vld [vmem:[%s1 + $0x1db0] sm:$0xff]
    %v1001 = vld [vmem:[%s1 + $0x1db8] sm:$0xff]
    %v1002 = vld [vmem:[%s1 + $0x1dc0] sm:$0xff]
    %v1003 = vld [vmem:[%s1 + $0x1dc8] sm:$0xff]
    %v1004 = vld [vmem:[%s1 + $0x1dd0] sm:$0xff]
    %v1005 = vld [vmem:[%s1 + $0x1dd8] sm:$0xff]
    %v1006 = vld [vmem:[%s1 + $0x1de0] sm:$0xff]
    %v1007 = vld [vmem:[%s1 + $0x1de8] sm:$0xff]
    %v1008 = vld [vmem:[%s1 + $0x1df0] sm:$0xff]
    %v1009 = vld [vmem:[%s1 + $0x1df8] sm:$0xff]
    %v1010 = vld [vmem:[%s1 + $0x1e00] sm:$0xff]
    %v1011 = vld [vmem:[%s1 + $0x1e08] sm:$0xff]
    %v1012 = vld [vmem:[%s1 + $0x1e10] sm:$0xff]
    %v1013 = vld [vmem:[%s1 + $0x1e18] sm:$0xff]
    %v1014 = vld [vmem:[%s1 + $0x1e20] sm:$0xff]
    %v1015 = vld [vmem:[%s1 + $0x1e28] sm:$0xff]
    %v1016 = vld [vmem:[%s1 + $0x1e30] sm:$0xff]
    %v1017 = vld [vmem:[%s1 + $0x1e38] sm:$0xff]
    %v1018 = vld [vmem:[%s1 + $0x1e40] sm:$0xff]
    %v1019 = vld [vmem:[%s1 + $0x1e48] sm:$0xff]
    %v1020 = vld [vmem:[%s1 + $0x1e50] sm:$0xff]
    %v1021 = vld [vmem:[%s1 + $0x1e58] sm:$0xff]
    %v1022 = vld [vmem:[%s1 + $0x1e60] sm:$0xff]
    %v1023 = vld [vmem:[%s1 + $0x1e68] sm:$0xff]
    %v1024 = vld [vmem:[%s1 + $0x1e70] sm:$0xff]
    %v1025 = vld [vmem:[%s1 + $0x1e78] sm:$0xff]
    %v1026 = vld [vmem:[%s1 + $0x1e80] sm:$0xff]
    %v1027 = vld [vmem:[%s1 + $0x1e88] sm:$0xff]
    %v1028 = vld [vmem:[%s1 + $0x1e90] sm:$0xff]
    %v1029 = vld [vmem:[%s1 + $0x1e98] sm:$0xff]
    %v1030 = vld [vmem:[%s1 + $0x1ea0] sm:$0xff]
    %v1031 = vld [vmem:[%s1 + $0x1ea8] sm:$0xff]
    %v1032 = vld [vmem:[%s1 + $0x1eb0] sm:$0xff]
    %v1033 = vld [vmem:[%s1 + $0x1eb8] sm:$0xff]
    %v1034 = vld [vmem:[%s1 + $0x1ec0] sm:$0xff]
    %v1035 = vld [vmem:[%s1 + $0x1ec8] sm:$0xff]
    %v1036 = vld [vmem:[%s1 + $0x1ed0] sm:$0xff]
    %v1037 = vld [vmem:[%s1 + $0x1ed8] sm:$0xff]
    %v1038 = vld [vmem:[%s1 + $0x1ee0] sm:$0xff]
    %v1039 = vld [vmem:[%s1 + $0x1ee8] sm:$0xff]
    %v1040 = vld [vmem:[%s1 + $0x1ef0] sm:$0xff]
    %v1041 = vld [vmem:[%s1 + $0x1ef8] sm:$0xff]
    %v1042 = vld [vmem:[%s1 + $0x1f00] sm:$0xff]
    %v1043 = vld [vmem:[%s1 + $0x1f08] sm:$0xff]
    %v1044 = vld [vmem:[%s1 + $0x1f10] sm:$0xff]
    %v1045 = vld [vmem:[%s1 + $0x1f18] sm:$0xff]
    %v1046 = vld [vmem:[%s1 + $0x1f20] sm:$0xff]
    %v1047 = vld [vmem:[%s1 + $0x1f28] sm:$0xff]
    %v1048 = vld [vmem:[%s1 + $0x1f30] sm:$0xff]
    %v1049 = vld [vmem:[%s1 + $0x1f38] sm:$0xff]
    %v1050 = vld [vmem:[%s1 + $0x1f40] sm:$0xff]
    %v1051 = vld [vmem:[%s1 + $0x1f48] sm:$0xff]
    %v1052 = vld [vmem:[%s1 + $0x1f50] sm:$0xff]
    %v1053 = vld [vmem:[%s1 + $0x1f58] sm:$0xff]
    %v1054 = vld [vmem:[%s1 + $0x1f60] sm:$0xff]
    %v1055 = vld [vmem:[%s1 + $0x1f68] sm:$0xff]
    %v1056 = vld [vmem:[%s1 + $0x1f70] sm:$0xff]
    %v1057 = vld [vmem:[%s1 + $0x1f78] sm:$0xff]
    %v1058 = vld [vmem:[%s1 + $0x1f80] sm:$0xff]
    %v1059 = vld [vmem:[%s1 + $0x1f88] sm:$0xff]
    %v1060 = vld [vmem:[%s1 + $0x1f90] sm:$0xff]
    %v1061 = vld [vmem:[%s1 + $0x1f98] sm:$0xff]
    %v1062 = vld [vmem:[%s1 + $0x1fa0] sm:$0xff]
    %v1063 = vld [vmem:[%s1 + $0x1fa8] sm:$0xff]
    %v1064 = vld [vmem:[%s1 + $0x1fb0] sm:$0xff]
    %v1065 = vld [vmem:[%s1 + $0x1fb8] sm:$0xff]
    %v1066 = vld [vmem:[%s1 + $0x1fc0] sm:$0xff]
    %v1067 = vld [vmem:[%s1 + $0x1fc8] sm:$0xff]
    %v1068 = vld [vmem:[%s1 + $0x1fd0] sm:$0xff]
    %v1069 = vld [vmem:[%s1 + $0x1fd8] sm:$0xff]
    %v1070 = vld [vmem:[%s1 + $0x1fe0] sm:$0xff]
    %v1071 = vld [vmem:[%s1 + $0x1fe8] sm:$0xff]
    %v1072 = vld [vmem:[%s1 + $0x1ff0] sm:$0xff]
    %v1073 = vld [vmem:[%s1 + $0x1ff8] sm:$0xff]
    %v1074 = vld [vmem:[%s1 + $0x2000] sm:$0xff]
    %v1075 = vld [vmem:[%s1 + $0x2008] sm:$0xff]
    %v1076 = vld [vmem:[%s1 + $0x2010] sm:$0xff]
    %v1077 = vld [vmem:[%s1 + $0x2018] sm:$0xff]
    %v1078 = vld [vmem:[%s1 + $0x2020] sm:$0xff]
    %v1079 = vld [vmem:[%s1 + $0x2028] sm:$0xff]
    %v1080 = vld [vmem:[%s1 + $0x2030] sm:$0xff]
    %v1081 = vld [vmem:[%s1 + $0x2038] sm:$0xff]
    %vm1082 = vcmask 39936
    %v1084 = vsel %vm1082, %v51, 0
    %v1087 = vsel %vm1082, %v53, 0
    %v1090 = vsel %vm1082, %v55, 0
    %v1093 = vsel %vm1082, %v57, 0
    %v1096 = vsel %vm1082, %v59, 0
    %v1099 = vsel %vm1082, %v61, 0
    %v1102 = vsel %vm1082, %v63, 0
    %v1105 = vsel %vm1082, %v65, 0
    %v1108 = vsel %vm1082, %v67, 0
    %v1111 = vsel %vm1082, %v69, 0
    %v1114 = vsel %vm1082, %v71, 0
    %v1117 = vsel %vm1082, %v73, 0
    %v1120 = vsel %vm1082, %v75, 0
    %v1123 = vsel %vm1082, %v77, 0
    %v1126 = vsel %vm1082, %v79, 0
    %v1129 = vsel %vm1082, %v81, 0
    %v1132 = vsel %vm1082, %v83, 0
    %v1135 = vsel %vm1082, %v85, 0
    %v1138 = vsel %vm1082, %v87, 0
    %v1141 = vsel %vm1082, %v89, 0
    %v1144 = vsel %vm1082, %v91, 0
    %v1147 = vsel %vm1082, %v93, 0
    %v1150 = vsel %vm1082, %v95, 0
    %v1153 = vsel %vm1082, %v97, 0
    %v1156 = vsel %vm1082, %v99, 0
    %v1159 = vsel %vm1082, %v101, 0
    %v1162 = vsel %vm1082, %v103, 0
    %v1165 = vsel %vm1082, %v105, 0
    %v1168 = vsel %vm1082, %v107, 0
    %v1171 = vsel %vm1082, %v109, 0
    %v1174 = vsel %vm1082, %v111, 0
    %v1177 = vsel %vm1082, %v113, 0
    %v1180 = vsel %vm1082, %v115, 0
    %v1183 = vsel %vm1082, %v117, 0
    %v1186 = vsel %vm1082, %v119, 0
    %v1189 = vsel %vm1082, %v121, 0
    %v1192 = vsel %vm1082, %v123, 0
    %v1195 = vsel %vm1082, %v125, 0
    %v1198 = vsel %vm1082, %v127, 0
    %v1201 = vsel %vm1082, %v129, 0
    %v1204 = vsel %vm1082, %v131, 0
    %v1207 = vsel %vm1082, %v133, 0
    %v1210 = vsel %vm1082, %v135, 0
    %v1213 = vsel %vm1082, %v137, 0
    %v1216 = vsel %vm1082, %v139, 0
    %v1219 = vsel %vm1082, %v141, 0
    %v1222 = vsel %vm1082, %v143, 0
    %v1225 = vsel %vm1082, %v145, 0
    %v1228 = vsel %vm1082, %v147, 0
    %v1231 = vsel %vm1082, %v149, 0
    %v1234 = vsel %vm1082, %v151, 0
    %v1237 = vsel %vm1082, %v153, 0
    %v1240 = vsel %vm1082, %v155, 0
    %v1243 = vsel %vm1082, %v157, 0
    %v1246 = vsel %vm1082, %v159, 0
    %v1249 = vsel %vm1082, %v161, 0
    %v1252 = vsel %vm1082, %v163, 0
    %v1255 = vsel %vm1082, %v165, 0
    %v1258 = vsel %vm1082, %v167, 0
    %v1261 = vsel %vm1082, %v169, 0
    %v1264 = vsel %vm1082, %v171, 0
    %v1267 = vsel %vm1082, %v173, 0
    %v1270 = vsel %vm1082, %v175, 0
    %v1273 = vsel %vm1082, %v177, 0
    %v1276 = vsel %vm1082, %v179, 0
    %v1279 = vsel %vm1082, %v181, 0
    %v1282 = vsel %vm1082, %v183, 0
    %v1285 = vsel %vm1082, %v185, 0
    %v1288 = vsel %vm1082, %v187, 0
    %v1291 = vsel %vm1082, %v189, 0
    %v1294 = vsel %vm1082, %v191, 0
    %v1297 = vsel %vm1082, %v193, 0
    %v1300 = vsel %vm1082, %v195, 0
    %v1303 = vsel %vm1082, %v197, 0
    %v1306 = vsel %vm1082, %v199, 0
    %v1309 = vsel %vm1082, %v201, 0
    %v1312 = vsel %vm1082, %v203, 0
    %v1315 = vsel %vm1082, %v205, 0
    %v1318 = vsel %vm1082, %v207, 0
    %v1321 = vsel %vm1082, %v209, 0
    %v1324 = vsel %vm1082, %v211, 0
    %v1327 = vsel %vm1082, %v213, 0
    %v1330 = vsel %vm1082, %v215, 0
    %v1333 = vsel %vm1082, %v217, 0
    %v1336 = vsel %vm1082, %v219, 0
    %v1339 = vsel %vm1082, %v221, 0
    %v1342 = vsel %vm1082, %v223, 0
    %v1345 = vsel %vm1082, %v225, 0
    %v1348 = vsel %vm1082, %v227, 0
    %v1351 = vsel %vm1082, %v229, 0
    %v1354 = vsel %vm1082, %v231, 0
    %v1357 = vsel %vm1082, %v233, 0
    %v1360 = vsel %vm1082, %v235, 0
    %v1363 = vsel %vm1082, %v237, 0
    %v1366 = vsel %vm1082, %v239, 0
    %v1369 = vsel %vm1082, %v241, 0
    %v1372 = vsel %vm1082, %v243, 0
    %v1375 = vsel %vm1082, %v245, 0
    %v1378 = vsel %vm1082, %v247, 0
    %v1381 = vsel %vm1082, %v249, 0
    %v1384 = vsel %vm1082, %v251, 0
    %v1387 = vsel %vm1082, %v253, 0
    %v1390 = vsel %vm1082, %v255, 0
    %v1393 = vsel %vm1082, %v257, 0
    %v1396 = vsel %vm1082, %v259, 0
    %v1399 = vsel %vm1082, %v261, 0
    %v1402 = vsel %vm1082, %v263, 0
    %v1405 = vsel %vm1082, %v265, 0
    %v1408 = vsel %vm1082, %v267, 0
    %v1411 = vsel %vm1082, %v269, 0
    %v1414 = vsel %vm1082, %v271, 0
    %v1417 = vsel %vm1082, %v273, 0
    %v1420 = vsel %vm1082, %v275, 0
    %v1423 = vsel %vm1082, %v277, 0
    %v1426 = vsel %vm1082, %v279, 0
    %v1429 = vsel %vm1082, %v281, 0
    %v1432 = vsel %vm1082, %v283, 0
    %v1435 = vsel %vm1082, %v285, 0
    %v1438 = vsel %vm1082, %v287, 0
    %v1441 = vsel %vm1082, %v289, 0
    %v1444 = vsel %vm1082, %v291, 0
    %v1447 = vsel %vm1082, %v293, 0
    %v1450 = vsel %vm1082, %v295, 0
    %v1453 = vsel %vm1082, %v297, 0
    %v1456 = vsel %vm1082, %v299, 0
    %v1459 = vsel %vm1082, %v301, 0
    %v1462 = vsel %vm1082, %v303, 0
    %v1465 = vsel %vm1082, %v305, 0
    %v1468 = vsel %vm1082, %v307, 0
    %v1471 = vsel %vm1082, %v309, 0
    %v1474 = vsel %vm1082, %v311, 0
    %v1477 = vsel %vm1082, %v313, 0
    %v1480 = vsel %vm1082, %v315, 0
    %v1483 = vsel %vm1082, %v317, 0
    %v1486 = vsel %vm1082, %v319, 0
    %v1489 = vsel %vm1082, %v321, 0
    %v1492 = vsel %vm1082, %v323, 0
    %v1495 = vsel %vm1082, %v325, 0
    %v1498 = vsel %vm1082, %v327, 0
    %v1501 = vsel %vm1082, %v329, 0
    %v1504 = vsel %vm1082, %v331, 0
    %v1507 = vsel %vm1082, %v333, 0
    %v1510 = vsel %vm1082, %v335, 0
    %v1513 = vsel %vm1082, %v337, 0
    %v1516 = vsel %vm1082, %v339, 0
    %v1519 = vsel %vm1082, %v341, 0
    %v1522 = vsel %vm1082, %v343, 0
    %v1525 = vsel %vm1082, %v345, 0
    %v1528 = vsel %vm1082, %v347, 0
    %v1531 = vsel %vm1082, %v349, 0
    %v1534 = vsel %vm1082, %v351, 0
    %v1537 = vsel %vm1082, %v353, 0
    %v1540 = vsel %vm1082, %v355, 0
    %v1543 = vsel %vm1082, %v357, 0
    %v1546 = vsel %vm1082, %v359, 0
    %v1549 = vsel %vm1082, %v361, 0
    %v1552 = vsel %vm1082, %v363, 0
    %v1555 = vsel %vm1082, %v365, 0
    %v1558 = vsel %vm1082, %v367, 0
    %v1561 = vsel %vm1082, %v369, 0
    %v1564 = vsel %vm1082, %v371, 0
    %v1567 = vsel %vm1082, %v373, 0
    %v1570 = vsel %vm1082, %v375, 0
    %v1573 = vsel %vm1082, %v377, 0
    %v1576 = vsel %vm1082, %v379, 0
    %v1579 = vsel %vm1082, %v381, 0
    %v1582 = vsel %vm1082, %v383, 0
    %v1585 = vsel %vm1082, %v385, 0
    %v1588 = vsel %vm1082, %v387, 0
    %v1591 = vsel %vm1082, %v389, 0
    %v1594 = vsel %vm1082, %v391, 0
    %v1597 = vsel %vm1082, %v393, 0
    %v1600 = vsel %vm1082, %v395, 0
    %v1603 = vsel %vm1082, %v397, 0
    %v1606 = vsel %vm1082, %v399, 0
    %v1609 = vsel %vm1082, %v401, 0
    %v1612 = vsel %vm1082, %v403, 0
    %v1615 = vsel %vm1082, %v405, 0
    %v1618 = vsel %vm1082, %v407, 0
    %v1621 = vsel %vm1082, %v409, 0
    %v1624 = vsel %vm1082, %v411, 0
    %v1627 = vsel %vm1082, %v413, 0
    %v1630 = vsel %vm1082, %v415, 0
    %v1633 = vsel %vm1082, %v417, 0
    %v1636 = vsel %vm1082, %v419, 0
    %v1639 = vsel %vm1082, %v421, 0
    %v1642 = vsel %vm1082, %v423, 0
    %v1645 = vsel %vm1082, %v425, 0
    %v1648 = vsel %vm1082, %v427, 0
    %v1651 = vsel %vm1082, %v429, 0
    %v1654 = vsel %vm1082, %v431, 0
    %v1657 = vsel %vm1082, %v433, 0
    %v1660 = vsel %vm1082, %v435, 0
    %v1663 = vsel %vm1082, %v437, 0
    %v1666 = vsel %vm1082, %v439, 0
    %v1669 = vsel %vm1082, %v441, 0
    %v1672 = vsel %vm1082, %v443, 0
    %v1675 = vsel %vm1082, %v445, 0
    %v1678 = vsel %vm1082, %v447, 0
    %v1681 = vsel %vm1082, %v449, 0
    %v1684 = vsel %vm1082, %v451, 0
    %v1687 = vsel %vm1082, %v453, 0
    %v1690 = vsel %vm1082, %v455, 0
    %v1693 = vsel %vm1082, %v457, 0
    %v1696 = vsel %vm1082, %v459, 0
    %v1699 = vsel %vm1082, %v461, 0
    %v1702 = vsel %vm1082, %v463, 0
    %v1705 = vsel %vm1082, %v465, 0
    %v1708 = vsel %vm1082, %v467, 0
    %v1711 = vsel %vm1082, %v469, 0
    %v1714 = vsel %vm1082, %v471, 0
    %v1717 = vsel %vm1082, %v473, 0
    %v1720 = vsel %vm1082, %v475, 0
    %v1723 = vsel %vm1082, %v477, 0
    %v1726 = vsel %vm1082, %v479, 0
    %v1729 = vsel %vm1082, %v481, 0
    %v1732 = vsel %vm1082, %v483, 0
    %v1735 = vsel %vm1082, %v485, 0
    %v1738 = vsel %vm1082, %v487, 0
    %v1741 = vsel %vm1082, %v489, 0
    %v1744 = vsel %vm1082, %v491, 0
    %v1747 = vsel %vm1082, %v493, 0
    %v1750 = vsel %vm1082, %v495, 0
    %v1753 = vsel %vm1082, %v497, 0
    %v1756 = vsel %vm1082, %v499, 0
    %v1759 = vsel %vm1082, %v501, 0
    %v1762 = vsel %vm1082, %v503, 0
    %v1765 = vsel %vm1082, %v505, 0
    %v1768 = vsel %vm1082, %v507, 0
    %v1771 = vsel %vm1082, %v509, 0
    %v1774 = vsel %vm1082, %v511, 0
    %v1777 = vsel %vm1082, %v513, 0
    %v1780 = vsel %vm1082, %v515, 0
    %v1783 = vsel %vm1082, %v517, 0
    %v1786 = vsel %vm1082, %v519, 0
    %v1789 = vsel %vm1082, %v521, 0
    %v1792 = vsel %vm1082, %v523, 0
    %v1795 = vsel %vm1082, %v525, 0
    %v1798 = vsel %vm1082, %v527, 0
    %v1801 = vsel %vm1082, %v529, 0
    %v1804 = vsel %vm1082, %v531, 0
    %v1807 = vsel %vm1082, %v533, 0
    %v1810 = vsel %vm1082, %v535, 0
    %v1813 = vsel %vm1082, %v537, 0
    %v1816 = vsel %vm1082, %v539, 0
    %v1819 = vsel %vm1082, %v541, 0
    %v1822 = vsel %vm1082, %v543, 0
    %v1825 = vsel %vm1082, %v545, 0
    %v1828 = vsel %vm1082, %v547, 0
    %v1831 = vsel %vm1082, %v549, 0
    %v1834 = vsel %vm1082, %v551, 0
    %v1837 = vsel %vm1082, %v553, 0
    %v1840 = vsel %vm1082, %v555, 0
    %v1843 = vsel %vm1082, %v557, 0
    %v1846 = vsel %vm1082, %v559, 0
    %v1849 = vsel %vm1082, %v561, 0
    %v1852 = vsel %vm1082, %v563, 0
    %v1855 = vsel %vm1082, %v565, 0
    %v1858 = vsel %vm1082, %v567, 0
    %v1861 = vsel %vm1082, %v569, 0
    %v1864 = vsel %vm1082, %v571, 0
    %v1867 = vsel %vm1082, %v573, 0
    %v1870 = vsel %vm1082, %v575, 0
    %v1873 = vsel %vm1082, %v577, 0
    %v1876 = vsel %vm1082, %v579, 0
    %v1879 = vsel %vm1082, %v581, 0
    %v1882 = vsel %vm1082, %v583, 0
    %v1885 = vsel %vm1082, %v585, 0
    %v1888 = vsel %vm1082, %v587, 0
    %v1891 = vsel %vm1082, %v589, 0
    %v1894 = vsel %vm1082, %v591, 0
    %v1897 = vsel %vm1082, %v593, 0
    %v1900 = vsel %vm1082, %v595, 0
    %v1903 = vsel %vm1082, %v597, 0
    %v1906 = vsel %vm1082, %v599, 0
    %v1909 = vsel %vm1082, %v601, 0
    %v1912 = vsel %vm1082, %v603, 0
    %v1915 = vsel %vm1082, %v605, 0
    %v1918 = vsel %vm1082, %v607, 0
    %v1921 = vsel %vm1082, %v609, 0
    %v1924 = vsel %vm1082, %v611, 0
    %v1927 = vsel %vm1082, %v613, 0
    %v1930 = vsel %vm1082, %v615, 0
    %v1933 = vsel %vm1082, %v617, 0
    %v1936 = vsel %vm1082, %v619, 0
    %v1939 = vsel %vm1082, %v621, 0
    %v1942 = vsel %vm1082, %v623, 0
    %v1945 = vsel %vm1082, %v625, 0
    %v1948 = vsel %vm1082, %v627, 0
    %v1951 = vsel %vm1082, %v629, 0
    %v1954 = vsel %vm1082, %v631, 0
    %v1957 = vsel %vm1082, %v633, 0
    %v1960 = vsel %vm1082, %v635, 0
    %v1963 = vsel %vm1082, %v637, 0
    %v1966 = vsel %vm1082, %v639, 0
    %v1969 = vsel %vm1082, %v641, 0
    %v1972 = vsel %vm1082, %v643, 0
    %v1975 = vsel %vm1082, %v645, 0
    %v1978 = vsel %vm1082, %v647, 0
    %v1981 = vsel %vm1082, %v649, 0
    %v1984 = vsel %vm1082, %v651, 0
    %v1987 = vsel %vm1082, %v653, 0
    %v1990 = vsel %vm1082, %v655, 0
    %v1993 = vsel %vm1082, %v657, 0
    %v1996 = vsel %vm1082, %v659, 0
    %v1999 = vsel %vm1082, %v661, 0
    %v2002 = vsel %vm1082, %v663, 0
    %v2005 = vsel %vm1082, %v665, 0
    %v2008 = vsel %vm1082, %v667, 0
    %v2011 = vsel %vm1082, %v669, 0
    %v2014 = vsel %vm1082, %v671, 0
    %v2017 = vsel %vm1082, %v673, 0
    %v2020 = vsel %vm1082, %v675, 0
    %v2023 = vsel %vm1082, %v677, 0
    %v2026 = vsel %vm1082, %v679, 0
    %v2029 = vsel %vm1082, %v681, 0
    %v2032 = vsel %vm1082, %v683, 0
    %v2035 = vsel %vm1082, %v685, 0
    %v2038 = vsel %vm1082, %v687, 0
    %v2041 = vsel %vm1082, %v689, 0
    %v2044 = vsel %vm1082, %v691, 0
    %v2047 = vsel %vm1082, %v693, 0
    %v2050 = vsel %vm1082, %v695, 0
    %v2053 = vsel %vm1082, %v697, 0
    %v2056 = vsel %vm1082, %v699, 0
    %v2059 = vsel %vm1082, %v701, 0
    %v2062 = vsel %vm1082, %v703, 0
    %v2065 = vsel %vm1082, %v705, 0
    %v2068 = vsel %vm1082, %v707, 0
    %v2071 = vsel %vm1082, %v709, 0
    %v2074 = vsel %vm1082, %v711, 0
    %v2077 = vsel %vm1082, %v713, 0
    %v2080 = vsel %vm1082, %v715, 0
    %v2083 = vsel %vm1082, %v717, 0
    %v2086 = vsel %vm1082, %v719, 0
    %v2089 = vsel %vm1082, %v721, 0
    %v2092 = vsel %vm1082, %v723, 0
    %v2095 = vsel %vm1082, %v725, 0
    %v2098 = vsel %vm1082, %v727, 0
    %v2101 = vsel %vm1082, %v729, 0
    %v2104 = vsel %vm1082, %v731, 0
    %v2107 = vsel %vm1082, %v733, 0
    %v2110 = vsel %vm1082, %v735, 0
    %v2113 = vsel %vm1082, %v737, 0
    %v2116 = vsel %vm1082, %v739, 0
    %v2119 = vsel %vm1082, %v741, 0
    %v2122 = vsel %vm1082, %v743, 0
    %v2125 = vsel %vm1082, %v745, 0
    %v2128 = vsel %vm1082, %v747, 0
    %v2131 = vsel %vm1082, %v749, 0
    %v2134 = vsel %vm1082, %v751, 0
    %v2137 = vsel %vm1082, %v753, 0
    %v2140 = vsel %vm1082, %v755, 0
    %v2143 = vsel %vm1082, %v757, 0
    %v2146 = vsel %vm1082, %v759, 0
    %v2149 = vsel %vm1082, %v761, 0
    %v2152 = vsel %vm1082, %v763, 0
    %v2155 = vsel %vm1082, %v765, 0
    %v2158 = vsel %vm1082, %v767, 0
    %v2161 = vsel %vm1082, %v769, 0
    %v2164 = vsel %vm1082, %v771, 0
    %v2167 = vsel %vm1082, %v773, 0
    %v2170 = vsel %vm1082, %v775, 0
    %v2173 = vsel %vm1082, %v777, 0
    %v2176 = vsel %vm1082, %v779, 0
    %v2179 = vsel %vm1082, %v781, 0
    %v2182 = vsel %vm1082, %v783, 0
    %v2185 = vsel %vm1082, %v785, 0
    %v2188 = vsel %vm1082, %v787, 0
    %v2191 = vsel %vm1082, %v789, 0
    %v2194 = vsel %vm1082, %v791, 0
    %v2197 = vsel %vm1082, %v793, 0
    %v2200 = vsel %vm1082, %v795, 0
    %v2203 = vsel %vm1082, %v797, 0
    %v2206 = vsel %vm1082, %v799, 0
    %v2209 = vsel %vm1082, %v801, 0
    %v2212 = vsel %vm1082, %v803, 0
    %v2215 = vsel %vm1082, %v805, 0
    %v2218 = vsel %vm1082, %v807, 0
    %v2221 = vsel %vm1082, %v809, 0
    %v2224 = vsel %vm1082, %v811, 0
    %v2227 = vsel %vm1082, %v813, 0
    %v2230 = vsel %vm1082, %v815, 0
    %v2233 = vsel %vm1082, %v817, 0
    %v2236 = vsel %vm1082, %v819, 0
    %v2239 = vsel %vm1082, %v821, 0
    %v2242 = vsel %vm1082, %v823, 0
    %v2245 = vsel %vm1082, %v825, 0
    %v2248 = vsel %vm1082, %v827, 0
    %v2251 = vsel %vm1082, %v829, 0
    %v2254 = vsel %vm1082, %v831, 0
    %v2257 = vsel %vm1082, %v833, 0
    %v2260 = vsel %vm1082, %v835, 0
    %v2263 = vsel %vm1082, %v837, 0
    %v2266 = vsel %vm1082, %v839, 0
    %v2269 = vsel %vm1082, %v841, 0
    %v2272 = vsel %vm1082, %v843, 0
    %v2275 = vsel %vm1082, %v845, 0
    %v2278 = vsel %vm1082, %v847, 0
    %v2281 = vsel %vm1082, %v849, 0
    %v2284 = vsel %vm1082, %v851, 0
    %v2287 = vsel %vm1082, %v853, 0
    %v2290 = vsel %vm1082, %v855, 0
    %v2293 = vsel %vm1082, %v857, 0
    %v2296 = vsel %vm1082, %v859, 0
    %v2299 = vsel %vm1082, %v861, 0
    %v2302 = vsel %vm1082, %v863, 0
    %v2305 = vsel %vm1082, %v865, 0
    %v2308 = vsel %vm1082, %v867, 0
    %v2311 = vsel %vm1082, %v869, 0
    %v2314 = vsel %vm1082, %v871, 0
    %v2317 = vsel %vm1082, %v873, 0
    %v2320 = vsel %vm1082, %v875, 0
    %v2323 = vsel %vm1082, %v877, 0
    %v2326 = vsel %vm1082, %v879, 0
    %v2329 = vsel %vm1082, %v881, 0
    %v2332 = vsel %vm1082, %v883, 0
    %v2335 = vsel %vm1082, %v885, 0
    %v2338 = vsel %vm1082, %v887, 0
    %v2341 = vsel %vm1082, %v889, 0
    %v2344 = vsel %vm1082, %v891, 0
    %v2347 = vsel %vm1082, %v893, 0
    %v2350 = vsel %vm1082, %v895, 0
    %v2353 = vsel %vm1082, %v897, 0
    %v2356 = vsel %vm1082, %v899, 0
    %v2359 = vsel %vm1082, %v901, 0
    %v2362 = vsel %vm1082, %v903, 0
    %v2365 = vsel %vm1082, %v905, 0
    %v2368 = vsel %vm1082, %v907, 0
    %v2371 = vsel %vm1082, %v909, 0
    %v2374 = vsel %vm1082, %v911, 0
    %v2377 = vsel %vm1082, %v913, 0
    %v2380 = vsel %vm1082, %v915, 0
    %v2383 = vsel %vm1082, %v917, 0
    %v2386 = vsel %vm1082, %v919, 0
    %v2389 = vsel %vm1082, %v921, 0
    %v2392 = vsel %vm1082, %v923, 0
    %v2395 = vsel %vm1082, %v925, 0
    %v2398 = vsel %vm1082, %v927, 0
    %v2401 = vsel %vm1082, %v929, 0
    %v2404 = vsel %vm1082, %v931, 0
    %v2407 = vsel %vm1082, %v933, 0
    %v2410 = vsel %vm1082, %v935, 0
    %v2413 = vsel %vm1082, %v937, 0
    %v2416 = vsel %vm1082, %v939, 0
    %v2419 = vsel %vm1082, %v941, 0
    %v2422 = vsel %vm1082, %v943, 0
    %v2425 = vsel %vm1082, %v945, 0
    %v2428 = vsel %vm1082, %v947, 0
    %v2431 = vsel %vm1082, %v949, 0
    %v2434 = vsel %vm1082, %v951, 0
    %v2437 = vsel %vm1082, %v953, 0
    %v2440 = vsel %vm1082, %v955, 0
    %v2443 = vsel %vm1082, %v957, 0
    %v2446 = vsel %vm1082, %v959, 0
    %v2449 = vsel %vm1082, %v961, 0
    %v2452 = vsel %vm1082, %v963, 0
    %v2455 = vsel %vm1082, %v965, 0
    %v2458 = vsel %vm1082, %v967, 0
    %v2461 = vsel %vm1082, %v969, 0
    %v2464 = vsel %vm1082, %v971, 0
    %v2467 = vsel %vm1082, %v973, 0
    %v2470 = vsel %vm1082, %v975, 0
    %v2473 = vsel %vm1082, %v977, 0
    %v2476 = vsel %vm1082, %v979, 0
    %v2479 = vsel %vm1082, %v981, 0
    %v2482 = vsel %vm1082, %v983, 0
    %v2485 = vsel %vm1082, %v985, 0
    %v2488 = vsel %vm1082, %v987, 0
    %v2491 = vsel %vm1082, %v989, 0
    %v2494 = vsel %vm1082, %v991, 0
    %v2497 = vsel %vm1082, %v993, 0
    %v2500 = vsel %vm1082, %v995, 0
    %v2503 = vsel %vm1082, %v997, 0
    %v2506 = vsel %vm1082, %v999, 0
    %v2509 = vsel %vm1082, %v1001, 0
    %v2512 = vsel %vm1082, %v1003, 0
    %v2515 = vsel %vm1082, %v1005, 0
    %v2518 = vsel %vm1082, %v1007, 0
    %v2521 = vsel %vm1082, %v1009, 0
    %v2524 = vsel %vm1082, %v1011, 0
    %v2527 = vsel %vm1082, %v1013, 0
    %v2530 = vsel %vm1082, %v1015, 0
    %v2533 = vsel %vm1082, %v1017, 0
    %v2536 = vsel %vm1082, %v1019, 0
    %v2539 = vsel %vm1082, %v1021, 0
    %v2542 = vsel %vm1082, %v1023, 0
    %v2545 = vsel %vm1082, %v1025, 0
    %v2548 = vsel %vm1082, %v1027, 0
    %v2551 = vsel %vm1082, %v1029, 0
    %v2554 = vsel %vm1082, %v1031, 0
    %v2557 = vsel %vm1082, %v1033, 0
    %v2560 = vsel %vm1082, %v1035, 0
    %v2563 = vsel %vm1082, %v1037, 0
    %v2566 = vsel %vm1082, %v1039, 0
    %v2569 = vsel %vm1082, %v1041, 0
    %v2572 = vsel %vm1082, %v1043, 0
    %v2575 = vsel %vm1082, %v1045, 0
    %v2578 = vsel %vm1082, %v1047, 0
    %v2581 = vsel %vm1082, %v1049, 0
    %v2584 = vsel %vm1082, %v1051, 0
    %v2587 = vsel %vm1082, %v1053, 0
    %v2590 = vsel %vm1082, %v1055, 0
    %v2593 = vsel %vm1082, %v1057, 0
    %v2596 = vsel %vm1082, %v1059, 0
    %v2599 = vsel %vm1082, %v1061, 0
    %v2602 = vsel %vm1082, %v1063, 0
    %v2605 = vsel %vm1082, %v1065, 0
    %v2608 = vsel %vm1082, %v1067, 0
    %v2611 = vsel %vm1082, %v1069, 0
    %v2614 = vsel %vm1082, %v1071, 0
    %v2617 = vsel %vm1082, %v1073, 0
    %v2620 = vsel %vm1082, %v1075, 0
    %v2623 = vsel %vm1082, %v1077, 0
    %v2626 = vsel %vm1082, %v1079, 0
    %v2629 = vsel %vm1082, %v1081, 0
    %vm2631 = vcmask 1044480
    %v2633 = vsel %vm2631, %v49, 0
    %2635 = vmatprep.subr.mxu0 0.0
    %2636 = vmatpush1.msra.mxu0 %v33
    %2637 = vmatprep.subr.mxu0 0.0
    %2638 = vmatpush1.msra.mxu0 %v34
    %2639 = vmatprep.subr.mxu0 0.0
    %2640 = vmatpush1.msra.mxu0 %v35
    %2641 = vmatprep.subr.mxu0 0.0
    %2642 = vmatpush1.msra.mxu0 %v36
    %2643 = vmatprep.subr.mxu0 0.0
    %2644 = vmatpush1.msra.mxu0 %v37
    %2645 = vmatprep.subr.mxu0 0.0
    %2646 = vmatpush1.msra.mxu0 %v38
    %2647 = vmatprep.subr.mxu0 0.0
    %2648 = vmatpush1.msra.mxu0 %v39
    %2649 = vmatprep.subr.mxu0 0.0
    %2650 = vmatpush1.msra.mxu0 %v40
    %2651 = vmatprep.subr.mxu0 0.0
    %2652 = vmatpush1.msra.mxu0 %v41
    %2653 = vmatprep.subr.mxu0 0.0
    %2654 = vmatpush1.msra.mxu0 %v42
    %2655 = vmatprep.subr.mxu0 0.0
    %2656 = vmatpush1.msra.mxu0 %v43
    %2657 = vmatprep.subr.mxu0 0.0
    %2658 = vmatpush1.msra.mxu0 %v44
    %2659 = vmatprep.subr.mxu0 0.0
    %2660 = vmatpush1.msra.mxu0 %v45
    %2661 = vmatprep.subr.mxu0 0.0
    %2662 = vmatpush1.msra.mxu0 %v46
    %2663 = vmatprep.subr.mxu0 0.0
    %2664 = vmatpush1.msra.mxu0 %v47
    %2665 = vmatprep.subr.mxu0 0.0
    %2666 = vmatpush1.msra.mxu0 %v48
    %2667 = vmatprep.subr.mxu0 0.0
    %2668 = vmatpush1.msra.mxu0 %v2633
    %2669 = vmatprep.subr.mxu0 0.0
    %2670 = vmatpush1.msra.mxu0 0.0
    %2671 = vmatprep.subr.mxu0 0.0
    %2672 = vmatpush1.msra.mxu0 0.0
    %2673 = vmatprep.subr.mxu0 0.0
    %2674 = vmatpush1.msra.mxu0 0.0
    %2675 = vmatprep.subr.mxu0 0.0
    %2676 = vmatpush1.msra.mxu0 0.0
    %2677 = vmatprep.subr.mxu0 0.0
    %2678 = vmatpush1.msra.mxu0 0.0
    %2679 = vmatprep.subr.mxu0 0.0
    %2680 = vmatpush1.msra.mxu0 0.0
    %2681 = vmatprep.subr.mxu0 0.0
    %2682 = vmatpush1.msra.mxu0 0.0
    %2683 = vmatprep.subr.mxu0 0.0
    %2684 = vmatpush1.msra.mxu0 0.0
    %2685 = vmatprep.subr.mxu0 0.0
    %2686 = vmatpush1.msra.mxu0 0.0
    %2687 = vmatprep.subr.mxu0 0.0
    %2688 = vmatpush1.msra.mxu0 0.0
    %2689 = vmatprep.subr.mxu0 0.0
    %2690 = vmatpush1.msra.mxu0 0.0
    %2691 = vmatprep.subr.mxu0 0.0
    %2692 = vmatpush1.msra.mxu0 0.0
    %2693 = vmatprep.subr.mxu0 0.0
    %2694 = vmatpush1.msra.mxu0 0.0
    %2695 = vmatprep.subr.mxu0 0.0
    %2696 = vmatpush1.msra.mxu0 0.0
    %2697 = vmatprep.subr.mxu0 0.0
    %2698 = vmatpush1.msra.mxu0 0.0
    %2699 = vmatprep.mubr.f32.mxu0 %v1084
    %2700 = vmatmul.mubr.f32.gmra.mrb[0].mxu0 %v50
    %v2701 = vpop.f32.mrb[0].mxu0
    %v2702 = vadd.f32 0.0, %v2701
    %v2703 = vpop.f32.mrb[0].mxu0
    %2704 = vmatprep.mubr.f32.mxu0 %v1087
    %2705 = vmatmul.mubr.f32.gmra.mrb[0].mxu0 %v52
    %v2706 = vpop.f32.mrb[0].mxu0
    %v2707 = vadd.f32 0.0, %v2706
    %v2708 = vpop.f32.mrb[0].mxu0
    %2709 = vmatprep.mubr.f32.mxu0 %v1090
    %2710 = vmatmul.mubr.f32.gmra.mrb[0].mxu0 %v54
    %v2711 = vpop.f32.mrb[0].mxu0
    %v2712 = vadd.f32 0.0, %v2711
    %v2713 = vpop.f32.mrb[0].mxu0
    %2714 = vmatprep.mubr.f32.mxu0 %v1093
    %2715 = vmatmul.mubr.f32.gmra.mrb[0].mxu0 %v56
    %v2716 = vpop.f32.mrb[0].mxu0
    %v2717 = vadd.f32 0.0, %v2716
    %v2718 = vpop.f32.mrb[0].mxu0
    %2719 = vmatprep.mubr.f32.mxu0 %v1096
    %2720 = vmatmul.mubr.f32.gmra.mrb[0].mxu0 %v58
    %v2721 = vpop.f32.mrb[0].mxu0
    %v2722 = vadd.f32 0.0, %v2721
    %v2723 = vpop.f32.mrb[0].mxu0
    %2724 = vmatprep.mubr.f32.mxu0 %v1099
    %2725 = vmatmul.mubr.f32.gmra.mrb[0].mxu0 %v60
    %v2726 = vpop.f32.mrb[0].mxu0
    %v2727 = vadd.f32 0.0, %v2726
    %v2728 = vpop.f32.mrb[0].mxu0
    %2729 = vmatprep.mubr.f32.mxu0 %v1102
    %2730 = vmatmul.mubr.f32.gmra.mrb[0].mxu0 %v62
    %v2731 = vpop.f32.mrb[0].mxu0
    %v2732 = vadd.f32 0.0, %v2731
    %v2733 = vpop.f32.mrb[0].mxu0
    %2734 = vmatprep.mubr.f32.mxu0 %v1105
    %2735 = vmatmul.mubr.f32.gmra.mrb[0].mxu0 %v64
    %v2736 = vpop.f32.mrb[0].mxu0
    %v2737 = vadd.f32 0.0, %v2736
    %v2738 = vpop.f32.mrb[0].mxu0
    %2739 = vmatprep.mubr.f32.mxu0 %v1108
    %2740 = vmatmul.mubr.f32.gmra.mrb[0].mxu0 %v66
    %v2741 = vpop.f32.mrb[0].mxu0
    %v2742 = vadd.f32 0.0, %v2741
    %v2743 = vpop.f32.mrb[0].mxu0
    %2744 = vmatprep.mubr.f32.mxu0 %v1111
    %2745 = vmatmul.mubr.f32.gmra.mrb[0].mxu0 %v68
    %v2746 = vpop.f32.mrb[0].mxu0
    %v2747 = vadd.f32 0.0, %v2746
    %v2748 = vpop.f32.mrb[0].mxu0
    %2749 = vmatprep.mubr.f32.mxu0 %v1114
    %2750 = vmatmul.mubr.f32.gmra.mrb[0].mxu0 %v70
    %v2751 = vpop.f32.mrb[0].mxu0
    %v2752 = vadd.f32 0.0, %v2751
    %v2753 = vpop.f32.mrb[0].mxu0
    %2754 = vmatprep.mubr.f32.mxu0 %v1117
    %2755 = vmatmul.mubr.f32.gmra.mrb[0].mxu0 %v72
    %v2756 = vpop.f32.mrb[0].mxu0
    %v2757 = vadd.f32 0.0, %v2756
    %v2758 = vpop.f32.mrb[0].mxu0
    %2759 = vmatprep.mubr.f32.mxu0 %v1120
    %2760 = vmatmul.mubr.f32.gmra.mrb[0].mxu0 %v74
    %v2761 = vpop.f32.mrb[0].mxu0
    %v2762 = vadd.f32 0.0, %v2761
    %v2763 = vpop.f32.mrb[0].mxu0
    %2764 = vmatprep.mubr.f32.mxu0 %v1123
    %2765 = vmatmul.mubr.f32.gmra.mrb[0].mxu0 %v76
    %v2766 = vpop.f32.mrb[0].mxu0
    %v2767 = vadd.f32 0.0, %v2766
    %v2768 = vpop.f32.mrb[0].mxu0
    %2769 = vmatprep.mubr.f32.mxu0 %v1126
    %2770 = vmatmul.mubr.f32.gmra.mrb[0].mxu0 %v78
    %v2771 = vpop.f32.mrb[0].mxu0
    %v2772 = vadd.f32 0.0, %v2771
    %v2773 = vpop.f32.mrb[0].mxu0
    %2774 = vmatprep.mubr.f32.mxu0 %v1129
    %2775 = vmatmul.mubr.f32.gmra.mrb[0].mxu0 %v80
    %v2776 = vpop.f32.mrb[0].mxu0
    %v2777 = vadd.f32 0.0, %v2776
    %v2778 = vpop.f32.mrb[0].mxu0
    %2779 = vmatprep.mubr.f32.mxu0 %v1132
    %2780 = vmatmul.mubr.f32.gmra.mrb[0].mxu0 %v82
    %v2781 = vpop.f32.mrb[0].mxu0
    %v2782 = vadd.f32 0.0, %v2781
    %v2783 = vpop.f32.mrb[0].mxu0
    %2784 = vmatprep.mubr.f32.mxu0 %v1135
    %2785 = vmatmul.mubr.f32.gmra.mrb[0].mxu0 %v84
    %v2786 = vpop.f32.mrb[0].mxu0
    %v2787 = vadd.f32 0.0, %v2786
    %v2788 = vpop.f32.mrb[0].mxu0
    %2789 = vmatprep.mubr.f32.mxu0 %v1138
    %2790 = vmatmul.mubr.f32.gmra.mrb[0].mxu0 %v86
    %v2791 = vpop.f32.mrb[0].mxu0
    %v2792 = vadd.f32 0.0, %v2791
    %v2793 = vpop.f32.mrb[0].mxu0
    %2794 = vmatprep.mubr.f32.mxu0 %v1141
    %2795 = vmatmul.mubr.f32.gmra.mrb[0].mxu0 %v88
    %v2796 = vpop.f32.mrb[0].mxu0
    %v2797 = vadd.f32 0.0, %v2796
    %v2798 = vpop.f32.mrb[0].mxu0
    %2799 = vmatprep.mubr.f32.mxu0 %v1144
    %2800 = vmatmul.mubr.f32.gmra.mrb[0].mxu0 %v90
    %v2801 = vpop.f32.mrb[0].mxu0
    %v2802 = vadd.f32 0.0, %v2801
    %v2803 = vpop.f32.mrb[0].mxu0
    %2804 = vmatprep.mubr.f32.mxu0 %v1147
    %2805 = vmatmul.mubr.f32.gmra.mrb[0].mxu0 %v92
    %v2806 = vpop.f32.mrb[0].mxu0
    %v2807 = vadd.f32 0.0, %v2806
    %v2808 = vpop.f32.mrb[0].mxu0
    %2809 = vmatprep.mubr.f32.mxu0 %v1150
    %2810 = vmatmul.mubr.f32.gmra.mrb[0].mxu0 %v94
    %v2811 = vpop.f32.mrb[0].mxu0
    %v2812 = vadd.f32 0.0, %v2811
    %v2813 = vpop.f32.mrb[0].mxu0
    %2814 = vmatprep.mubr.f32.mxu0 %v1153
    %2815 = vmatmul.mubr.f32.gmra.mrb[0].mxu0 %v96
    %v2816 = vpop.f32.mrb[0].mxu0
    %v2817 = vadd.f32 0.0, %v2816
    %v2818 = vpop.f32.mrb[0].mxu0
    %2819 = vmatprep.mubr.f32.mxu0 %v1156
    %2820 = vmatmul.mubr.f32.gmra.mrb[0].mxu0 %v98
    %v2821 = vpop.f32.mrb[0].mxu0
    %v2822 = vadd.f32 0.0, %v2821
    %v2823 = vpop.f32.mrb[0].mxu0
    %2824 = vmatprep.mubr.f32.mxu0 %v1159
    %2825 = vmatmul.mubr.f32.gmra.mrb[0].mxu0 %v100
    %v2826 = vpop.f32.mrb[0].mxu0
    %v2827 = vadd.f32 0.0, %v2826
    %v2828 = vpop.f32.mrb[0].mxu0
    %2829 = vmatprep.mubr.f32.mxu0 %v1162
    %2830 = vmatmul.mubr.f32.gmra.mrb[0].mxu0 %v102
    %v2831 = vpop.f32.mrb[0].mxu0
    %v2832 = vadd.f32 0.0, %v2831
    %v2833 = vpop.f32.mrb[0].mxu0
    %2834 = vmatprep.mubr.f32.mxu0 %v1165
    %2835 = vmatmul.mubr.f32.gmra.mrb[0].mxu0 %v104
    %v2836 = vpop.f32.mrb[0].mxu0
    %v2837 = vadd.f32 0.0, %v2836
    %v2838 = vpop.f32.mrb[0].mxu0
    %2839 = vmatprep.mubr.f32.mxu0 %v1168
    %2840 = vmatmul.mubr.f32.gmra.mrb[0].mxu0 %v106
    %v2841 = vpop.f32.mrb[0].mxu0
    %v2842 = vadd.f32 0.0, %v2841
    %v2843 = vpop.f32.mrb[0].mxu0
    %2844 = vmatprep.mubr.f32.mxu0 %v1171
    %2845 = vmatmul.mubr.f32.gmra.mrb[0].mxu0 %v108
    %v2846 = vpop.f32.mrb[0].mxu0
    %v2847 = vadd.f32 0.0, %v2846
    %v2848 = vpop.f32.mrb[0].mxu0
    %2849 = vmatprep.mubr.f32.mxu0 %v1174
    %2850 = vmatmul.mubr.f32.gmra.mrb[0].mxu0 %v110
    %v2851 = vpop.f32.mrb[0].mxu0
    %v2852 = vadd.f32 0.0, %v2851
    %v2853 = vpop.f32.mrb[0].mxu0
    %2854 = vmatprep.mubr.f32.mxu0 %v1177
    %2855 = vmatmul.mubr.f32.gmra.mrb[0].mxu0 %v112
    %v2856 = vpop.f32.mrb[0].mxu0
    %v2857 = vadd.f32 0.0, %v2856
    %v2858 = vpop.f32.mrb[0].mxu0
    %2859 = vmatprep.mubr.f32.mxu0 %v1180
    %2860 = vmatmul.mubr.f32.gmra.mrb[0].mxu0 %v114
    %v2861 = vpop.f32.mrb[0].mxu0
    %v2862 = vadd.f32 0.0, %v2861
    %v2863 = vpop.f32.mrb[0].mxu0
    %2864 = vmatprep.mubr.f32.mxu0 %v1183
    %2865 = vmatmul.mubr.f32.gmra.mrb[0].mxu0 %v116
    %v2866 = vpop.f32.mrb[0].mxu0
    %v2867 = vadd.f32 0.0, %v2866
    %v2868 = vpop.f32.mrb[0].mxu0
    %2869 = vmatprep.mubr.f32.mxu0 %v1186
    %2870 = vmatmul.mubr.f32.gmra.mrb[0].mxu0 %v118
    %v2871 = vpop.f32.mrb[0].mxu0
    %v2872 = vadd.f32 0.0, %v2871
    %v2873 = vpop.f32.mrb[0].mxu0
    %2874 = vmatprep.mubr.f32.mxu0 %v1189
    %2875 = vmatmul.mubr.f32.gmra.mrb[0].mxu0 %v120
    %v2876 = vpop.f32.mrb[0].mxu0
    %v2877 = vadd.f32 0.0, %v2876
    %v2878 = vpop.f32.mrb[0].mxu0
    %2879 = vmatprep.mubr.f32.mxu0 %v1192
    %2880 = vmatmul.mubr.f32.gmra.mrb[0].mxu0 %v122
    %v2881 = vpop.f32.mrb[0].mxu0
    %v2882 = vadd.f32 0.0, %v2881
    %v2883 = vpop.f32.mrb[0].mxu0
    %2884 = vmatprep.mubr.f32.mxu0 %v1195
    %2885 = vmatmul.mubr.f32.gmra.mrb[0].mxu0 %v124
    %v2886 = vpop.f32.mrb[0].mxu0
    %v2887 = vadd.f32 0.0, %v2886
    %v2888 = vpop.f32.mrb[0].mxu0
    %2889 = vmatprep.mubr.f32.mxu0 %v1198
    %2890 = vmatmul.mubr.f32.gmra.mrb[0].mxu0 %v126
    %v2891 = vpop.f32.mrb[0].mxu0
    %v2892 = vadd.f32 0.0, %v2891
    %v2893 = vpop.f32.mrb[0].mxu0
    %2894 = vmatprep.mubr.f32.mxu0 %v1201
    %2895 = vmatmul.mubr.f32.gmra.mrb[0].mxu0 %v128
    %v2896 = vpop.f32.mrb[0].mxu0
    %v2897 = vadd.f32 0.0, %v2896
    %v2898 = vpop.f32.mrb[0].mxu0
    %2899 = vmatprep.mubr.f32.mxu0 %v1204
    %2900 = vmatmul.mubr.f32.gmra.mrb[0].mxu0 %v130
    %v2901 = vpop.f32.mrb[0].mxu0
    %v2902 = vadd.f32 0.0, %v2901
    %v2903 = vpop.f32.mrb[0].mxu0
    %2904 = vmatprep.mubr.f32.mxu0 %v1207
    %2905 = vmatmul.mubr.f32.gmra.mrb[0].mxu0 %v132
    %v2906 = vpop.f32.mrb[0].mxu0
    %v2907 = vadd.f32 0.0, %v2906
    %v2908 = vpop.f32.mrb[0].mxu0
    %2909 = vmatprep.mubr.f32.mxu0 %v1210
    %2910 = vmatmul.mubr.f32.gmra.mrb[0].mxu0 %v134
    %v2911 = vpop.f32.mrb[0].mxu0
    %v2912 = vadd.f32 0.0, %v2911
    %v2913 = vpop.f32.mrb[0].mxu0
    %2914 = vmatprep.mubr.f32.mxu0 %v1213
    %2915 = vmatmul.mubr.f32.gmra.mrb[0].mxu0 %v136
    %v2916 = vpop.f32.mrb[0].mxu0
    %v2917 = vadd.f32 0.0, %v2916
    %v2918 = vpop.f32.mrb[0].mxu0
    %2919 = vmatprep.mubr.f32.mxu0 %v1216
    %2920 = vmatmul.mubr.f32.gmra.mrb[0].mxu0 %v138
    %v2921 = vpop.f32.mrb[0].mxu0
    %v2922 = vadd.f32 0.0, %v2921
    %v2923 = vpop.f32.mrb[0].mxu0
    %2924 = vmatprep.mubr.f32.mxu0 %v1219
    %2925 = vmatmul.mubr.f32.gmra.mrb[0].mxu0 %v140
    %v2926 = vpop.f32.mrb[0].mxu0
    %v2927 = vadd.f32 0.0, %v2926
    %v2928 = vpop.f32.mrb[0].mxu0
    %2929 = vmatprep.mubr.f32.mxu0 %v1222
    %2930 = vmatmul.mubr.f32.gmra.mrb[0].mxu0 %v142
    %v2931 = vpop.f32.mrb[0].mxu0
    %v2932 = vadd.f32 0.0, %v2931
    %v2933 = vpop.f32.mrb[0].mxu0
    %2934 = vmatprep.mubr.f32.mxu0 %v1225
    %2935 = vmatmul.mubr.f32.gmra.mrb[0].mxu0 %v144
    %v2936 = vpop.f32.mrb[0].mxu0
    %v2937 = vadd.f32 0.0, %v2936
    %v2938 = vpop.f32.mrb[0].mxu0
    %2939 = vmatprep.mubr.f32.mxu0 %v1228
    %2940 = vmatmul.mubr.f32.gmra.mrb[0].mxu0 %v146
    %v2941 = vpop.f32.mrb[0].mxu0
    %v2942 = vadd.f32 0.0, %v2941
    %v2943 = vpop.f32.mrb[0].mxu0
    %2944 = vmatprep.mubr.f32.mxu0 %v1231
    %2945 = vmatmul.mubr.f32.gmra.mrb[0].mxu0 %v148
    %v2946 = vpop.f32.mrb[0].mxu0
    %v2947 = vadd.f32 0.0, %v2946
    %v2948 = vpop.f32.mrb[0].mxu0
    %2949 = vmatprep.mubr.f32.mxu0 %v1234
    %2950 = vmatmul.mubr.f32.gmra.mrb[0].mxu0 %v150
    %v2951 = vpop.f32.mrb[0].mxu0
    %v2952 = vadd.f32 0.0, %v2951
    %v2953 = vpop.f32.mrb[0].mxu0
    %2954 = vmatprep.mubr.f32.mxu0 %v1237
    %2955 = vmatmul.mubr.f32.gmra.mrb[0].mxu0 %v152
    %v2956 = vpop.f32.mrb[0].mxu0
    %v2957 = vadd.f32 0.0, %v2956
    %v2958 = vpop.f32.mrb[0].mxu0
    %2959 = vmatprep.mubr.f32.mxu0 %v1240
    %2960 = vmatmul.mubr.f32.gmra.mrb[0].mxu0 %v154
    %v2961 = vpop.f32.mrb[0].mxu0
    %v2962 = vadd.f32 0.0, %v2961
    %v2963 = vpop.f32.mrb[0].mxu0
    %2964 = vmatprep.mubr.f32.mxu0 %v1243
    %2965 = vmatmul.mubr.f32.gmra.mrb[0].mxu0 %v156
    %v2966 = vpop.f32.mrb[0].mxu0
    %v2967 = vadd.f32 0.0, %v2966
    %v2968 = vpop.f32.mrb[0].mxu0
    %2969 = vmatprep.mubr.f32.mxu0 %v1246
    %2970 = vmatmul.mubr.f32.gmra.mrb[0].mxu0 %v158
    %v2971 = vpop.f32.mrb[0].mxu0
    %v2972 = vadd.f32 0.0, %v2971
    %v2973 = vpop.f32.mrb[0].mxu0
    %2974 = vmatprep.mubr.f32.mxu0 %v1249
    %2975 = vmatmul.mubr.f32.gmra.mrb[0].mxu0 %v160
    %v2976 = vpop.f32.mrb[0].mxu0
    %v2977 = vadd.f32 0.0, %v2976
    %v2978 = vpop.f32.mrb[0].mxu0
    %2979 = vmatprep.mubr.f32.mxu0 %v1252
    %2980 = vmatmul.mubr.f32.gmra.mrb[0].mxu0 %v162
    %v2981 = vpop.f32.mrb[0].mxu0
    %v2982 = vadd.f32 0.0, %v2981
    %v2983 = vpop.f32.mrb[0].mxu0
    %2984 = vmatprep.mubr.f32.mxu0 %v1255
    %2985 = vmatmul.mubr.f32.gmra.mrb[0].mxu0 %v164
    %v2986 = vpop.f32.mrb[0].mxu0
    %v2987 = vadd.f32 0.0, %v2986
    %v2988 = vpop.f32.mrb[0].mxu0
    %2989 = vmatprep.mubr.f32.mxu0 %v1258
    %2990 = vmatmul.mubr.f32.gmra.mrb[0].mxu0 %v166
    %v2991 = vpop.f32.mrb[0].mxu0
    %v2992 = vadd.f32 0.0, %v2991
    %v2993 = vpop.f32.mrb[0].mxu0
    %2994 = vmatprep.mubr.f32.mxu0 %v1261
    %2995 = vmatmul.mubr.f32.gmra.mrb[0].mxu0 %v168
    %v2996 = vpop.f32.mrb[0].mxu0
    %v2997 = vadd.f32 0.0, %v2996
    %v2998 = vpop.f32.mrb[0].mxu0
    %2999 = vmatprep.mubr.f32.mxu0 %v1264
    %3000 = vmatmul.mubr.f32.gmra.mrb[0].mxu0 %v170
    %v3001 = vpop.f32.mrb[0].mxu0
    %v3002 = vadd.f32 0.0, %v3001
    %v3003 = vpop.f32.mrb[0].mxu0
    %3004 = vmatprep.mubr.f32.mxu0 %v1267
    %3005 = vmatmul.mubr.f32.gmra.mrb[0].mxu0 %v172
    %v3006 = vpop.f32.mrb[0].mxu0
    %v3007 = vadd.f32 0.0, %v3006
    %v3008 = vpop.f32.mrb[0].mxu0
    %3009 = vmatprep.mubr.f32.mxu0 %v1270
    %3010 = vmatmul.mubr.f32.gmra.mrb[0].mxu0 %v174
    %v3011 = vpop.f32.mrb[0].mxu0
    %v3012 = vadd.f32 0.0, %v3011
    %v3013 = vpop.f32.mrb[0].mxu0
    %3014 = vmatprep.mubr.f32.mxu0 %v1273
    %3015 = vmatmul.mubr.f32.gmra.mrb[0].mxu0 %v176
    %v3016 = vpop.f32.mrb[0].mxu0
    %v3017 = vadd.f32 0.0, %v3016
    %v3018 = vpop.f32.mrb[0].mxu0
    %3019 = vmatprep.mubr.f32.mxu0 %v1276
    %3020 = vmatmul.mubr.f32.gmra.mrb[0].mxu0 %v178
    %v3021 = vpop.f32.mrb[0].mxu0
    %v3022 = vadd.f32 0.0, %v3021
    %v3023 = vpop.f32.mrb[0].mxu0
    %3024 = vmatprep.mubr.f32.mxu0 %v1279
    %3025 = vmatmul.mubr.f32.gmra.mrb[0].mxu0 %v180
    %v3026 = vpop.f32.mrb[0].mxu0
    %v3027 = vadd.f32 0.0, %v3026
    %v3028 = vpop.f32.mrb[0].mxu0
    %3029 = vmatprep.mubr.f32.mxu0 %v1282
    %3030 = vmatmul.mubr.f32.gmra.mrb[0].mxu0 %v182
    %v3031 = vpop.f32.mrb[0].mxu0
    %v3032 = vadd.f32 0.0, %v3031
    %v3033 = vpop.f32.mrb[0].mxu0
    %3034 = vmatprep.mubr.f32.mxu0 %v1285
    %3035 = vmatmul.mubr.f32.gmra.mrb[0].mxu0 %v184
    %v3036 = vpop.f32.mrb[0].mxu0
    %v3037 = vadd.f32 0.0, %v3036
    %v3038 = vpop.f32.mrb[0].mxu0
    %3039 = vmatprep.mubr.f32.mxu0 %v1288
    %3040 = vmatmul.mubr.f32.gmra.mrb[0].mxu0 %v186
    %v3041 = vpop.f32.mrb[0].mxu0
    %v3042 = vadd.f32 0.0, %v3041
    %v3043 = vpop.f32.mrb[0].mxu0
    %3044 = vmatprep.mubr.f32.mxu0 %v1291
    %3045 = vmatmul.mubr.f32.gmra.mrb[0].mxu0 %v188
    %v3046 = vpop.f32.mrb[0].mxu0
    %v3047 = vadd.f32 0.0, %v3046
    %v3048 = vpop.f32.mrb[0].mxu0
    %3049 = vmatprep.mubr.f32.mxu0 %v1294
    %3050 = vmatmul.mubr.f32.gmra.mrb[0].mxu0 %v190
    %v3051 = vpop.f32.mrb[0].mxu0
    %v3052 = vadd.f32 0.0, %v3051
    %v3053 = vpop.f32.mrb[0].mxu0
    %3054 = vmatprep.mubr.f32.mxu0 %v1297
    %3055 = vmatmul.mubr.f32.gmra.mrb[0].mxu0 %v192
    %v3056 = vpop.f32.mrb[0].mxu0
    %v3057 = vadd.f32 0.0, %v3056
    %v3058 = vpop.f32.mrb[0].mxu0
    %3059 = vmatprep.mubr.f32.mxu0 %v1300
    %3060 = vmatmul.mubr.f32.gmra.mrb[0].mxu0 %v194
    %v3061 = vpop.f32.mrb[0].mxu0
    %v3062 = vadd.f32 0.0, %v3061
    %v3063 = vpop.f32.mrb[0].mxu0
    %3064 = vmatprep.mubr.f32.mxu0 %v1303
    %3065 = vmatmul.mubr.f32.gmra.mrb[0].mxu0 %v196
    %v3066 = vpop.f32.mrb[0].mxu0
    %v3067 = vadd.f32 0.0, %v3066
    %v3068 = vpop.f32.mrb[0].mxu0
    %3069 = vmatprep.mubr.f32.mxu0 %v1306
    %3070 = vmatmul.mubr.f32.gmra.mrb[0].mxu0 %v198
    %v3071 = vpop.f32.mrb[0].mxu0
    %v3072 = vadd.f32 0.0, %v3071
    %v3073 = vpop.f32.mrb[0].mxu0
    %3074 = vmatprep.mubr.f32.mxu0 %v1309
    %3075 = vmatmul.mubr.f32.gmra.mrb[0].mxu0 %v200
    %v3076 = vpop.f32.mrb[0].mxu0
    %v3077 = vadd.f32 0.0, %v3076
    %v3078 = vpop.f32.mrb[0].mxu0
    %3079 = vmatprep.mubr.f32.mxu0 %v1312
    %3080 = vmatmul.mubr.f32.gmra.mrb[0].mxu0 %v202
    %v3081 = vpop.f32.mrb[0].mxu0
    %v3082 = vadd.f32 0.0, %v3081
    %v3083 = vpop.f32.mrb[0].mxu0
    %3084 = vmatprep.mubr.f32.mxu0 %v1315
    %3085 = vmatmul.mubr.f32.gmra.mrb[0].mxu0 %v204
    %v3086 = vpop.f32.mrb[0].mxu0
    %v3087 = vadd.f32 0.0, %v3086
    %v3088 = vpop.f32.mrb[0].mxu0
    %3089 = vmatprep.mubr.f32.mxu0 %v1318
    %3090 = vmatmul.mubr.f32.gmra.mrb[0].mxu0 %v206
    %v3091 = vpop.f32.mrb[0].mxu0
    %v3092 = vadd.f32 0.0, %v3091
    %v3093 = vpop.f32.mrb[0].mxu0
    %3094 = vmatprep.mubr.f32.mxu0 %v1321
    %3095 = vmatmul.mubr.f32.gmra.mrb[0].mxu0 %v208
    %v3096 = vpop.f32.mrb[0].mxu0
    %v3097 = vadd.f32 0.0, %v3096
    %v3098 = vpop.f32.mrb[0].mxu0
    %3099 = vmatprep.mubr.f32.mxu0 %v1324
    %3100 = vmatmul.mubr.f32.gmra.mrb[0].mxu0 %v210
    %v3101 = vpop.f32.mrb[0].mxu0
    %v3102 = vadd.f32 0.0, %v3101
    %v3103 = vpop.f32.mrb[0].mxu0
    %3104 = vmatprep.mubr.f32.mxu0 %v1327
    %3105 = vmatmul.mubr.f32.gmra.mrb[0].mxu0 %v212
    %v3106 = vpop.f32.mrb[0].mxu0
    %v3107 = vadd.f32 0.0, %v3106
    %v3108 = vpop.f32.mrb[0].mxu0
    %3109 = vmatprep.mubr.f32.mxu0 %v1330
    %3110 = vmatmul.mubr.f32.gmra.mrb[0].mxu0 %v214
    %v3111 = vpop.f32.mrb[0].mxu0
    %v3112 = vadd.f32 0.0, %v3111
    %v3113 = vpop.f32.mrb[0].mxu0
    %3114 = vmatprep.mubr.f32.mxu0 %v1333
    %3115 = vmatmul.mubr.f32.gmra.mrb[0].mxu0 %v216
    %v3116 = vpop.f32.mrb[0].mxu0
    %v3117 = vadd.f32 0.0, %v3116
    %v3118 = vpop.f32.mrb[0].mxu0
    %3119 = vmatprep.mubr.f32.mxu0 %v1336
    %3120 = vmatmul.mubr.f32.gmra.mrb[0].mxu0 %v218
    %v3121 = vpop.f32.mrb[0].mxu0
    %v3122 = vadd.f32 0.0, %v3121
    %v3123 = vpop.f32.mrb[0].mxu0
    %3124 = vmatprep.mubr.f32.mxu0 %v1339
    %3125 = vmatmul.mubr.f32.gmra.mrb[0].mxu0 %v220
    %v3126 = vpop.f32.mrb[0].mxu0
    %v3127 = vadd.f32 0.0, %v3126
    %v3128 = vpop.f32.mrb[0].mxu0
    %3129 = vmatprep.mubr.f32.mxu0 %v1342
    %3130 = vmatmul.mubr.f32.gmra.mrb[0].mxu0 %v222
    %v3131 = vpop.f32.mrb[0].mxu0
    %v3132 = vadd.f32 0.0, %v3131
    %v3133 = vpop.f32.mrb[0].mxu0
    %3134 = vmatprep.mubr.f32.mxu0 %v1345
    %3135 = vmatmul.mubr.f32.gmra.mrb[0].mxu0 %v224
    %v3136 = vpop.f32.mrb[0].mxu0
    %v3137 = vadd.f32 0.0, %v3136
    %v3138 = vpop.f32.mrb[0].mxu0
    %3139 = vmatprep.mubr.f32.mxu0 %v1348
    %3140 = vmatmul.mubr.f32.gmra.mrb[0].mxu0 %v226
    %v3141 = vpop.f32.mrb[0].mxu0
    %v3142 = vadd.f32 0.0, %v3141
    %v3143 = vpop.f32.mrb[0].mxu0
    %3144 = vmatprep.mubr.f32.mxu0 %v1351
    %3145 = vmatmul.mubr.f32.gmra.mrb[0].mxu0 %v228
    %v3146 = vpop.f32.mrb[0].mxu0
    %v3147 = vadd.f32 0.0, %v3146
    %v3148 = vpop.f32.mrb[0].mxu0
    %3149 = vmatprep.mubr.f32.mxu0 %v1354
    %3150 = vmatmul.mubr.f32.gmra.mrb[0].mxu0 %v230
    %v3151 = vpop.f32.mrb[0].mxu0
    %v3152 = vadd.f32 0.0, %v3151
    %v3153 = vpop.f32.mrb[0].mxu0
    %3154 = vmatprep.mubr.f32.mxu0 %v1357
    %3155 = vmatmul.mubr.f32.gmra.mrb[0].mxu0 %v232
    %v3156 = vpop.f32.mrb[0].mxu0
    %v3157 = vadd.f32 0.0, %v3156
    %v3158 = vpop.f32.mrb[0].mxu0
    %3159 = vmatprep.mubr.f32.mxu0 %v1360
    %3160 = vmatmul.mubr.f32.gmra.mrb[0].mxu0 %v234
    %v3161 = vpop.f32.mrb[0].mxu0
    %v3162 = vadd.f32 0.0, %v3161
    %v3163 = vpop.f32.mrb[0].mxu0
    %3164 = vmatprep.mubr.f32.mxu0 %v1363
    %3165 = vmatmul.mubr.f32.gmra.mrb[0].mxu0 %v236
    %v3166 = vpop.f32.mrb[0].mxu0
    %v3167 = vadd.f32 0.0, %v3166
    %v3168 = vpop.f32.mrb[0].mxu0
    %3169 = vmatprep.mubr.f32.mxu0 %v1366
    %3170 = vmatmul.mubr.f32.gmra.mrb[0].mxu0 %v238
    %v3171 = vpop.f32.mrb[0].mxu0
    %v3172 = vadd.f32 0.0, %v3171
    %v3173 = vpop.f32.mrb[0].mxu0
    %3174 = vmatprep.mubr.f32.mxu0 %v1369
    %3175 = vmatmul.mubr.f32.gmra.mrb[0].mxu0 %v240
    %v3176 = vpop.f32.mrb[0].mxu0
    %v3177 = vadd.f32 0.0, %v3176
    %v3178 = vpop.f32.mrb[0].mxu0
    %3179 = vmatprep.mubr.f32.mxu0 %v1372
    %3180 = vmatmul.mubr.f32.gmra.mrb[0].mxu0 %v242
    %v3181 = vpop.f32.mrb[0].mxu0
    %v3182 = vadd.f32 0.0, %v3181
    %v3183 = vpop.f32.mrb[0].mxu0
    %3184 = vmatprep.mubr.f32.mxu0 %v1375
    %3185 = vmatmul.mubr.f32.gmra.mrb[0].mxu0 %v244
    %v3186 = vpop.f32.mrb[0].mxu0
    %v3187 = vadd.f32 0.0, %v3186
    %v3188 = vpop.f32.mrb[0].mxu0
    %3189 = vmatprep.mubr.f32.mxu0 %v1378
    %3190 = vmatmul.mubr.f32.gmra.mrb[0].mxu0 %v246
    %v3191 = vpop.f32.mrb[0].mxu0
    %v3192 = vadd.f32 0.0, %v3191
    %v3193 = vpop.f32.mrb[0].mxu0
    %3194 = vmatprep.mubr.f32.mxu0 %v1381
    %3195 = vmatmul.mubr.f32.gmra.mrb[0].mxu0 %v248
    %v3196 = vpop.f32.mrb[0].mxu0
    %v3197 = vadd.f32 0.0, %v3196
    %v3198 = vpop.f32.mrb[0].mxu0
    %3199 = vmatprep.mubr.f32.mxu0 %v1384
    %3200 = vmatmul.mubr.f32.gmra.mrb[0].mxu0 %v250
    %v3201 = vpop.f32.mrb[0].mxu0
    %v3202 = vadd.f32 0.0, %v3201
    %v3203 = vpop.f32.mrb[0].mxu0
    %3204 = vmatprep.mubr.f32.mxu0 %v1387
    %3205 = vmatmul.mubr.f32.gmra.mrb[0].mxu0 %v252
    %v3206 = vpop.f32.mrb[0].mxu0
    %v3207 = vadd.f32 0.0, %v3206
    %v3208 = vpop.f32.mrb[0].mxu0
    %3209 = vmatprep.mubr.f32.mxu0 %v1390
    %3210 = vmatmul.mubr.f32.gmra.mrb[0].mxu0 %v254
    %v3211 = vpop.f32.mrb[0].mxu0
    %v3212 = vadd.f32 0.0, %v3211
    %v3213 = vpop.f32.mrb[0].mxu0
    %3214 = vmatprep.mubr.f32.mxu0 %v1393
    %3215 = vmatmul.mubr.f32.gmra.mrb[0].mxu0 %v256
    %v3216 = vpop.f32.mrb[0].mxu0
    %v3217 = vadd.f32 0.0, %v3216
    %v3218 = vpop.f32.mrb[0].mxu0
    %3219 = vmatprep.mubr.f32.mxu0 %v1396
    %3220 = vmatmul.mubr.f32.gmra.mrb[0].mxu0 %v258
    %v3221 = vpop.f32.mrb[0].mxu0
    %v3222 = vadd.f32 0.0, %v3221
    %v3223 = vpop.f32.mrb[0].mxu0
    %3224 = vmatprep.mubr.f32.mxu0 %v1399
    %3225 = vmatmul.mubr.f32.gmra.mrb[0].mxu0 %v260
    %v3226 = vpop.f32.mrb[0].mxu0
    %v3227 = vadd.f32 0.0, %v3226
    %v3228 = vpop.f32.mrb[0].mxu0
    %3229 = vmatprep.mubr.f32.mxu0 %v1402
    %3230 = vmatmul.mubr.f32.gmra.mrb[0].mxu0 %v262
    %v3231 = vpop.f32.mrb[0].mxu0
    %v3232 = vadd.f32 0.0, %v3231
    %v3233 = vpop.f32.mrb[0].mxu0
    %3234 = vmatprep.mubr.f32.mxu0 %v1405
    %3235 = vmatmul.mubr.f32.gmra.mrb[0].mxu0 %v264
    %v3236 = vpop.f32.mrb[0].mxu0
    %v3237 = vadd.f32 0.0, %v3236
    %v3238 = vpop.f32.mrb[0].mxu0
    %3239 = vmatprep.mubr.f32.mxu0 %v1408
    %3240 = vmatmul.mubr.f32.gmra.mrb[0].mxu0 %v266
    %v3241 = vpop.f32.mrb[0].mxu0
    %v3242 = vadd.f32 0.0, %v3241
    %v3243 = vpop.f32.mrb[0].mxu0
    %3244 = vmatprep.mubr.f32.mxu0 %v1411
    %3245 = vmatmul.mubr.f32.gmra.mrb[0].mxu0 %v268
    %v3246 = vpop.f32.mrb[0].mxu0
    %v3247 = vadd.f32 0.0, %v3246
    %v3248 = vpop.f32.mrb[0].mxu0
    %3249 = vmatprep.mubr.f32.mxu0 %v1414
    %3250 = vmatmul.mubr.f32.gmra.mrb[0].mxu0 %v270
    %v3251 = vpop.f32.mrb[0].mxu0
    %v3252 = vadd.f32 0.0, %v3251
    %v3253 = vpop.f32.mrb[0].mxu0
    %3254 = vmatprep.mubr.f32.mxu0 %v1417
    %3255 = vmatmul.mubr.f32.gmra.mrb[0].mxu0 %v272
    %v3256 = vpop.f32.mrb[0].mxu0
    %v3257 = vadd.f32 0.0, %v3256
    %v3258 = vpop.f32.mrb[0].mxu0
    %3259 = vmatprep.mubr.f32.mxu0 %v1420
    %3260 = vmatmul.mubr.f32.gmra.mrb[0].mxu0 %v274
    %v3261 = vpop.f32.mrb[0].mxu0
    %v3262 = vadd.f32 0.0, %v3261
    %v3263 = vpop.f32.mrb[0].mxu0
    %3264 = vmatprep.mubr.f32.mxu0 %v1423
    %3265 = vmatmul.mubr.f32.gmra.mrb[0].mxu0 %v276
    %v3266 = vpop.f32.mrb[0].mxu0
    %v3267 = vadd.f32 0.0, %v3266
    %v3268 = vpop.f32.mrb[0].mxu0
    %3269 = vmatprep.mubr.f32.mxu0 %v1426
    %3270 = vmatmul.mubr.f32.gmra.mrb[0].mxu0 %v278
    %v3271 = vpop.f32.mrb[0].mxu0
    %v3272 = vadd.f32 0.0, %v3271
    %v3273 = vpop.f32.mrb[0].mxu0
    %3274 = vmatprep.mubr.f32.mxu0 %v1429
    %3275 = vmatmul.mubr.f32.gmra.mrb[0].mxu0 %v280
    %v3276 = vpop.f32.mrb[0].mxu0
    %v3277 = vadd.f32 0.0, %v3276
    %v3278 = vpop.f32.mrb[0].mxu0
    %3279 = vmatprep.mubr.f32.mxu0 %v1432
    %3280 = vmatmul.mubr.f32.gmra.mrb[0].mxu0 %v282
    %v3281 = vpop.f32.mrb[0].mxu0
    %v3282 = vadd.f32 0.0, %v3281
    %v3283 = vpop.f32.mrb[0].mxu0
    %3284 = vmatprep.mubr.f32.mxu0 %v1435
    %3285 = vmatmul.mubr.f32.gmra.mrb[0].mxu0 %v284
    %v3286 = vpop.f32.mrb[0].mxu0
    %v3287 = vadd.f32 0.0, %v3286
    %v3288 = vpop.f32.mrb[0].mxu0
    %3289 = vmatprep.mubr.f32.mxu0 %v1438
    %3290 = vmatmul.mubr.f32.gmra.mrb[0].mxu0 %v286
    %v3291 = vpop.f32.mrb[0].mxu0
    %v3292 = vadd.f32 0.0, %v3291
    %v3293 = vpop.f32.mrb[0].mxu0
    %3294 = vmatprep.mubr.f32.mxu0 %v1441
    %3295 = vmatmul.mubr.f32.gmra.mrb[0].mxu0 %v288
    %v3296 = vpop.f32.mrb[0].mxu0
    %v3297 = vadd.f32 0.0, %v3296
    %v3298 = vpop.f32.mrb[0].mxu0
    %3299 = vmatprep.mubr.f32.mxu0 %v1444
    %3300 = vmatmul.mubr.f32.gmra.mrb[0].mxu0 %v290
    %v3301 = vpop.f32.mrb[0].mxu0
    %v3302 = vadd.f32 0.0, %v3301
    %v3303 = vpop.f32.mrb[0].mxu0
    %3304 = vmatprep.mubr.f32.mxu0 %v1447
    %3305 = vmatmul.mubr.f32.gmra.mrb[0].mxu0 %v292
    %v3306 = vpop.f32.mrb[0].mxu0
    %v3307 = vadd.f32 0.0, %v3306
    %v3308 = vpop.f32.mrb[0].mxu0
    %3309 = vmatprep.mubr.f32.mxu0 %v1450
    %3310 = vmatmul.mubr.f32.gmra.mrb[0].mxu0 %v294
    %v3311 = vpop.f32.mrb[0].mxu0
    %v3312 = vadd.f32 0.0, %v3311
    %v3313 = vpop.f32.mrb[0].mxu0
    %3314 = vmatprep.mubr.f32.mxu0 %v1453
    %3315 = vmatmul.mubr.f32.gmra.mrb[0].mxu0 %v296
    %v3316 = vpop.f32.mrb[0].mxu0
    %v3317 = vadd.f32 0.0, %v3316
    %v3318 = vpop.f32.mrb[0].mxu0
    %3319 = vmatprep.mubr.f32.mxu0 %v1456
    %3320 = vmatmul.mubr.f32.gmra.mrb[0].mxu0 %v298
    %v3321 = vpop.f32.mrb[0].mxu0
    %v3322 = vadd.f32 0.0, %v3321
    %v3323 = vpop.f32.mrb[0].mxu0
    %3324 = vmatprep.mubr.f32.mxu0 %v1459
    %3325 = vmatmul.mubr.f32.gmra.mrb[0].mxu0 %v300
    %v3326 = vpop.f32.mrb[0].mxu0
    %v3327 = vadd.f32 0.0, %v3326
    %v3328 = vpop.f32.mrb[0].mxu0
    %3329 = vmatprep.mubr.f32.mxu0 %v1462
    %3330 = vmatmul.mubr.f32.gmra.mrb[0].mxu0 %v302
    %v3331 = vpop.f32.mrb[0].mxu0
    %v3332 = vadd.f32 0.0, %v3331
    %v3333 = vpop.f32.mrb[0].mxu0
    %3334 = vmatprep.mubr.f32.mxu0 %v1465
    %3335 = vmatmul.mubr.f32.gmra.mrb[0].mxu0 %v304
    %v3336 = vpop.f32.mrb[0].mxu0
    %v3337 = vadd.f32 0.0, %v3336
    %v3338 = vpop.f32.mrb[0].mxu0
    %3339 = vmatprep.mubr.f32.mxu0 %v1468
    %3340 = vmatmul.mubr.f32.gmra.mrb[0].mxu0 %v306
    %v3341 = vpop.f32.mrb[0].mxu0
    %v3342 = vadd.f32 0.0, %v3341
    %v3343 = vpop.f32.mrb[0].mxu0
    %3344 = vmatprep.mubr.f32.mxu0 %v1471
    %3345 = vmatmul.mubr.f32.gmra.mrb[0].mxu0 %v308
    %v3346 = vpop.f32.mrb[0].mxu0
    %v3347 = vadd.f32 0.0, %v3346
    %v3348 = vpop.f32.mrb[0].mxu0
    %3349 = vmatprep.mubr.f32.mxu0 %v1474
    %3350 = vmatmul.mubr.f32.gmra.mrb[0].mxu0 %v310
    %v3351 = vpop.f32.mrb[0].mxu0
    %v3352 = vadd.f32 0.0, %v3351
    %v3353 = vpop.f32.mrb[0].mxu0
    %3354 = vmatprep.mubr.f32.mxu0 %v1477
    %3355 = vmatmul.mubr.f32.gmra.mrb[0].mxu0 %v312
    %v3356 = vpop.f32.mrb[0].mxu0
    %v3357 = vadd.f32 0.0, %v3356
    %v3358 = vpop.f32.mrb[0].mxu0
    %3359 = vmatprep.mubr.f32.mxu0 %v1480
    %3360 = vmatmul.mubr.f32.gmra.mrb[0].mxu0 %v314
    %v3361 = vpop.f32.mrb[0].mxu0
    %v3362 = vadd.f32 0.0, %v3361
    %v3363 = vpop.f32.mrb[0].mxu0
    %3364 = vmatprep.mubr.f32.mxu0 %v1483
    %3365 = vmatmul.mubr.f32.gmra.mrb[0].mxu0 %v316
    %v3366 = vpop.f32.mrb[0].mxu0
    %v3367 = vadd.f32 0.0, %v3366
    %v3368 = vpop.f32.mrb[0].mxu0
    %3369 = vmatprep.mubr.f32.mxu0 %v1486
    %3370 = vmatmul.mubr.f32.gmra.mrb[0].mxu0 %v318
    %v3371 = vpop.f32.mrb[0].mxu0
    %v3372 = vadd.f32 0.0, %v3371
    %v3373 = vpop.f32.mrb[0].mxu0
    %3374 = vmatprep.mubr.f32.mxu0 %v1489
    %3375 = vmatmul.mubr.f32.gmra.mrb[0].mxu0 %v320
    %v3376 = vpop.f32.mrb[0].mxu0
    %v3377 = vadd.f32 0.0, %v3376
    %v3378 = vpop.f32.mrb[0].mxu0
    %3379 = vmatprep.mubr.f32.mxu0 %v1492
    %3380 = vmatmul.mubr.f32.gmra.mrb[0].mxu0 %v322
    %v3381 = vpop.f32.mrb[0].mxu0
    %v3382 = vadd.f32 0.0, %v3381
    %v3383 = vpop.f32.mrb[0].mxu0
    %3384 = vmatprep.mubr.f32.mxu0 %v1495
    %3385 = vmatmul.mubr.f32.gmra.mrb[0].mxu0 %v324
    %v3386 = vpop.f32.mrb[0].mxu0
    %v3387 = vadd.f32 0.0, %v3386
    %v3388 = vpop.f32.mrb[0].mxu0
    %3389 = vmatprep.mubr.f32.mxu0 %v1498
    %3390 = vmatmul.mubr.f32.gmra.mrb[0].mxu0 %v326
    %v3391 = vpop.f32.mrb[0].mxu0
    %v3392 = vadd.f32 0.0, %v3391
    %v3393 = vpop.f32.mrb[0].mxu0
    %3394 = vmatprep.mubr.f32.mxu0 %v1501
    %3395 = vmatmul.mubr.f32.gmra.mrb[0].mxu0 %v328
    %v3396 = vpop.f32.mrb[0].mxu0
    %v3397 = vadd.f32 0.0, %v3396
    %v3398 = vpop.f32.mrb[0].mxu0
    %3399 = vmatprep.mubr.f32.mxu0 %v1504
    %3400 = vmatmul.mubr.f32.gmra.mrb[0].mxu0 %v330
    %v3401 = vpop.f32.mrb[0].mxu0
    %v3402 = vadd.f32 0.0, %v3401
    %v3403 = vpop.f32.mrb[0].mxu0
    %3404 = vmatprep.mubr.f32.mxu0 %v1507
    %3405 = vmatmul.mubr.f32.gmra.mrb[0].mxu0 %v332
    %v3406 = vpop.f32.mrb[0].mxu0
    %v3407 = vadd.f32 0.0, %v3406
    %v3408 = vpop.f32.mrb[0].mxu0
    %3409 = vmatprep.mubr.f32.mxu0 %v1510
    %3410 = vmatmul.mubr.f32.gmra.mrb[0].mxu0 %v334
    %v3411 = vpop.f32.mrb[0].mxu0
    %v3412 = vadd.f32 0.0, %v3411
    %v3413 = vpop.f32.mrb[0].mxu0
    %3414 = vmatprep.mubr.f32.mxu0 %v1513
    %3415 = vmatmul.mubr.f32.gmra.mrb[0].mxu0 %v336
    %v3416 = vpop.f32.mrb[0].mxu0
    %v3417 = vadd.f32 0.0, %v3416
    %v3418 = vpop.f32.mrb[0].mxu0
    %3419 = vmatprep.mubr.f32.mxu0 %v1516
    %3420 = vmatmul.mubr.f32.gmra.mrb[0].mxu0 %v338
    %v3421 = vpop.f32.mrb[0].mxu0
    %v3422 = vadd.f32 0.0, %v3421
    %v3423 = vpop.f32.mrb[0].mxu0
    %3424 = vmatprep.mubr.f32.mxu0 %v1519
    %3425 = vmatmul.mubr.f32.gmra.mrb[0].mxu0 %v340
    %v3426 = vpop.f32.mrb[0].mxu0
    %v3427 = vadd.f32 0.0, %v3426
    %v3428 = vpop.f32.mrb[0].mxu0
    %3429 = vmatprep.mubr.f32.mxu0 %v1522
    %3430 = vmatmul.mubr.f32.gmra.mrb[0].mxu0 %v342
    %v3431 = vpop.f32.mrb[0].mxu0
    %v3432 = vadd.f32 0.0, %v3431
    %v3433 = vpop.f32.mrb[0].mxu0
    %3434 = vmatprep.mubr.f32.mxu0 %v1525
    %3435 = vmatmul.mubr.f32.gmra.mrb[0].mxu0 %v344
    %v3436 = vpop.f32.mrb[0].mxu0
    %v3437 = vadd.f32 0.0, %v3436
    %v3438 = vpop.f32.mrb[0].mxu0
    %3439 = vmatprep.mubr.f32.mxu0 %v1528
    %3440 = vmatmul.mubr.f32.gmra.mrb[0].mxu0 %v346
    %v3441 = vpop.f32.mrb[0].mxu0
    %v3442 = vadd.f32 0.0, %v3441
    %v3443 = vpop.f32.mrb[0].mxu0
    %3444 = vmatprep.mubr.f32.mxu0 %v1531
    %3445 = vmatmul.mubr.f32.gmra.mrb[0].mxu0 %v348
    %v3446 = vpop.f32.mrb[0].mxu0
    %v3447 = vadd.f32 0.0, %v3446
    %v3448 = vpop.f32.mrb[0].mxu0
    %3449 = vmatprep.mubr.f32.mxu0 %v1534
    %3450 = vmatmul.mubr.f32.gmra.mrb[0].mxu0 %v350
    %v3451 = vpop.f32.mrb[0].mxu0
    %v3452 = vadd.f32 0.0, %v3451
    %v3453 = vpop.f32.mrb[0].mxu0
    %3454 = vmatprep.mubr.f32.mxu0 %v1537
    %3455 = vmatmul.mubr.f32.gmra.mrb[0].mxu0 %v352
    %v3456 = vpop.f32.mrb[0].mxu0
    %v3457 = vadd.f32 0.0, %v3456
    %v3458 = vpop.f32.mrb[0].mxu0
    %3459 = vmatprep.mubr.f32.mxu0 %v1540
    %3460 = vmatmul.mubr.f32.gmra.mrb[0].mxu0 %v354
    %v3461 = vpop.f32.mrb[0].mxu0
    %v3462 = vadd.f32 0.0, %v3461
    %v3463 = vpop.f32.mrb[0].mxu0
    %3464 = vmatprep.mubr.f32.mxu0 %v1543
    %3465 = vmatmul.mubr.f32.gmra.mrb[0].mxu0 %v356
    %v3466 = vpop.f32.mrb[0].mxu0
    %v3467 = vadd.f32 0.0, %v3466
    %v3468 = vpop.f32.mrb[0].mxu0
    %3469 = vmatprep.mubr.f32.mxu0 %v1546
    %3470 = vmatmul.mubr.f32.gmra.mrb[0].mxu0 %v358
    %v3471 = vpop.f32.mrb[0].mxu0
    %v3472 = vadd.f32 0.0, %v3471
    %v3473 = vpop.f32.mrb[0].mxu0
    %3474 = vmatprep.mubr.f32.mxu0 %v1549
    %3475 = vmatmul.mubr.f32.gmra.mrb[0].mxu0 %v360
    %v3476 = vpop.f32.mrb[0].mxu0
    %v3477 = vadd.f32 0.0, %v3476
    %v3478 = vpop.f32.mrb[0].mxu0
    %3479 = vmatprep.mubr.f32.mxu0 %v1552
    %3480 = vmatmul.mubr.f32.gmra.mrb[0].mxu0 %v362
    %v3481 = vpop.f32.mrb[0].mxu0
    %v3482 = vadd.f32 0.0, %v3481
    %v3483 = vpop.f32.mrb[0].mxu0
    %3484 = vmatprep.mubr.f32.mxu0 %v1555
    %3485 = vmatmul.mubr.f32.gmra.mrb[0].mxu0 %v364
    %v3486 = vpop.f32.mrb[0].mxu0
    %v3487 = vadd.f32 0.0, %v3486
    %v3488 = vpop.f32.mrb[0].mxu0
    %3489 = vmatprep.mubr.f32.mxu0 %v1558
    %3490 = vmatmul.mubr.f32.gmra.mrb[0].mxu0 %v366
    %v3491 = vpop.f32.mrb[0].mxu0
    %v3492 = vadd.f32 0.0, %v3491
    %v3493 = vpop.f32.mrb[0].mxu0
    %3494 = vmatprep.mubr.f32.mxu0 %v1561
    %3495 = vmatmul.mubr.f32.gmra.mrb[0].mxu0 %v368
    %v3496 = vpop.f32.mrb[0].mxu0
    %v3497 = vadd.f32 0.0, %v3496
    %v3498 = vpop.f32.mrb[0].mxu0
    %3499 = vmatprep.mubr.f32.mxu0 %v1564
    %3500 = vmatmul.mubr.f32.gmra.mrb[0].mxu0 %v370
    %v3501 = vpop.f32.mrb[0].mxu0
    %v3502 = vadd.f32 0.0, %v3501
    %v3503 = vpop.f32.mrb[0].mxu0
    %3504 = vmatprep.mubr.f32.mxu0 %v1567
    %3505 = vmatmul.mubr.f32.gmra.mrb[0].mxu0 %v372
    %v3506 = vpop.f32.mrb[0].mxu0
    %v3507 = vadd.f32 0.0, %v3506
    %v3508 = vpop.f32.mrb[0].mxu0
    %3509 = vmatprep.mubr.f32.mxu0 %v1570
    %3510 = vmatmul.mubr.f32.gmra.mrb[0].mxu0 %v374
    %v3511 = vpop.f32.mrb[0].mxu0
    %v3512 = vadd.f32 0.0, %v3511
    %v3513 = vpop.f32.mrb[0].mxu0
    %3514 = vmatprep.mubr.f32.mxu0 %v1573
    %3515 = vmatmul.mubr.f32.gmra.mrb[0].mxu0 %v376
    %v3516 = vpop.f32.mrb[0].mxu0
    %v3517 = vadd.f32 0.0, %v3516
    %v3518 = vpop.f32.mrb[0].mxu0
    %3519 = vmatprep.mubr.f32.mxu0 %v1576
    %3520 = vmatmul.mubr.f32.gmra.mrb[0].mxu0 %v378
    %v3521 = vpop.f32.mrb[0].mxu0
    %v3522 = vadd.f32 0.0, %v3521
    %v3523 = vpop.f32.mrb[0].mxu0
    %3524 = vmatprep.mubr.f32.mxu0 %v1579
    %3525 = vmatmul.mubr.f32.gmra.mrb[0].mxu0 %v380
    %v3526 = vpop.f32.mrb[0].mxu0
    %v3527 = vadd.f32 0.0, %v3526
    %v3528 = vpop.f32.mrb[0].mxu0
    %3529 = vmatprep.mubr.f32.mxu0 %v1582
    %3530 = vmatmul.mubr.f32.gmra.mrb[0].mxu0 %v382
    %v3531 = vpop.f32.mrb[0].mxu0
    %v3532 = vadd.f32 0.0, %v3531
    %v3533 = vpop.f32.mrb[0].mxu0
    %3534 = vmatprep.mubr.f32.mxu0 %v1585
    %3535 = vmatmul.mubr.f32.gmra.mrb[0].mxu0 %v384
    %v3536 = vpop.f32.mrb[0].mxu0
    %v3537 = vadd.f32 0.0, %v3536
    %v3538 = vpop.f32.mrb[0].mxu0
    %3539 = vmatprep.mubr.f32.mxu0 %v1588
    %3540 = vmatmul.mubr.f32.gmra.mrb[0].mxu0 %v386
    %v3541 = vpop.f32.mrb[0].mxu0
    %v3542 = vadd.f32 0.0, %v3541
    %v3543 = vpop.f32.mrb[0].mxu0
    %3544 = vmatprep.mubr.f32.mxu0 %v1591
    %3545 = vmatmul.mubr.f32.gmra.mrb[0].mxu0 %v388
    %v3546 = vpop.f32.mrb[0].mxu0
    %v3547 = vadd.f32 0.0, %v3546
    %v3548 = vpop.f32.mrb[0].mxu0
    %3549 = vmatprep.mubr.f32.mxu0 %v1594
    %3550 = vmatmul.mubr.f32.gmra.mrb[0].mxu0 %v390
    %v3551 = vpop.f32.mrb[0].mxu0
    %v3552 = vadd.f32 0.0, %v3551
    %v3553 = vpop.f32.mrb[0].mxu0
    %3554 = vmatprep.mubr.f32.mxu0 %v1597
    %3555 = vmatmul.mubr.f32.gmra.mrb[0].mxu0 %v392
    %v3556 = vpop.f32.mrb[0].mxu0
    %v3557 = vadd.f32 0.0, %v3556
    %v3558 = vpop.f32.mrb[0].mxu0
    %3559 = vmatprep.mubr.f32.mxu0 %v1600
    %3560 = vmatmul.mubr.f32.gmra.mrb[0].mxu0 %v394
    %v3561 = vpop.f32.mrb[0].mxu0
    %v3562 = vadd.f32 0.0, %v3561
    %v3563 = vpop.f32.mrb[0].mxu0
    %3564 = vmatprep.mubr.f32.mxu0 %v1603
    %3565 = vmatmul.mubr.f32.gmra.mrb[0].mxu0 %v396
    %v3566 = vpop.f32.mrb[0].mxu0
    %v3567 = vadd.f32 0.0, %v3566
    %v3568 = vpop.f32.mrb[0].mxu0
    %3569 = vmatprep.mubr.f32.mxu0 %v1606
    %3570 = vmatmul.mubr.f32.gmra.mrb[0].mxu0 %v398
    %v3571 = vpop.f32.mrb[0].mxu0
    %v3572 = vadd.f32 0.0, %v3571
    %v3573 = vpop.f32.mrb[0].mxu0
    %3574 = vmatprep.mubr.f32.mxu0 %v1609
    %3575 = vmatmul.mubr.f32.gmra.mrb[0].mxu0 %v400
    %v3576 = vpop.f32.mrb[0].mxu0
    %v3577 = vadd.f32 0.0, %v3576
    %v3578 = vpop.f32.mrb[0].mxu0
    %3579 = vmatprep.mubr.f32.mxu0 %v1612
    %3580 = vmatmul.mubr.f32.gmra.mrb[0].mxu0 %v402
    %v3581 = vpop.f32.mrb[0].mxu0
    %v3582 = vadd.f32 0.0, %v3581
    %v3583 = vpop.f32.mrb[0].mxu0
    %3584 = vmatprep.mubr.f32.mxu0 %v1615
    %3585 = vmatmul.mubr.f32.gmra.mrb[0].mxu0 %v404
    %v3586 = vpop.f32.mrb[0].mxu0
    %v3587 = vadd.f32 0.0, %v3586
    %v3588 = vpop.f32.mrb[0].mxu0
    %3589 = vmatprep.mubr.f32.mxu0 %v1618
    %3590 = vmatmul.mubr.f32.gmra.mrb[0].mxu0 %v406
    %v3591 = vpop.f32.mrb[0].mxu0
    %v3592 = vadd.f32 0.0, %v3591
    %v3593 = vpop.f32.mrb[0].mxu0
    %3594 = vmatprep.mubr.f32.mxu0 %v1621
    %3595 = vmatmul.mubr.f32.gmra.mrb[0].mxu0 %v408
    %v3596 = vpop.f32.mrb[0].mxu0
    %v3597 = vadd.f32 0.0, %v3596
    %v3598 = vpop.f32.mrb[0].mxu0
    %3599 = vmatprep.mubr.f32.mxu0 %v1624
    %3600 = vmatmul.mubr.f32.gmra.mrb[0].mxu0 %v410
    %v3601 = vpop.f32.mrb[0].mxu0
    %v3602 = vadd.f32 0.0, %v3601
    %v3603 = vpop.f32.mrb[0].mxu0
    %3604 = vmatprep.mubr.f32.mxu0 %v1627
    %3605 = vmatmul.mubr.f32.gmra.mrb[0].mxu0 %v412
    %v3606 = vpop.f32.mrb[0].mxu0
    %v3607 = vadd.f32 0.0, %v3606
    %v3608 = vpop.f32.mrb[0].mxu0
    %3609 = vmatprep.mubr.f32.mxu0 %v1630
    %3610 = vmatmul.mubr.f32.gmra.mrb[0].mxu0 %v414
    %v3611 = vpop.f32.mrb[0].mxu0
    %v3612 = vadd.f32 0.0, %v3611
    %v3613 = vpop.f32.mrb[0].mxu0
    %3614 = vmatprep.mubr.f32.mxu0 %v1633
    %3615 = vmatmul.mubr.f32.gmra.mrb[0].mxu0 %v416
    %v3616 = vpop.f32.mrb[0].mxu0
    %v3617 = vadd.f32 0.0, %v3616
    %v3618 = vpop.f32.mrb[0].mxu0
    %3619 = vmatprep.mubr.f32.mxu0 %v1636
    %3620 = vmatmul.mubr.f32.gmra.mrb[0].mxu0 %v418
    %v3621 = vpop.f32.mrb[0].mxu0
    %v3622 = vadd.f32 0.0, %v3621
    %v3623 = vpop.f32.mrb[0].mxu0
    %3624 = vmatprep.mubr.f32.mxu0 %v1639
    %3625 = vmatmul.mubr.f32.gmra.mrb[0].mxu0 %v420
    %v3626 = vpop.f32.mrb[0].mxu0
    %v3627 = vadd.f32 0.0, %v3626
    %v3628 = vpop.f32.mrb[0].mxu0
    %3629 = vmatprep.mubr.f32.mxu0 %v1642
    %3630 = vmatmul.mubr.f32.gmra.mrb[0].mxu0 %v422
    %v3631 = vpop.f32.mrb[0].mxu0
    %v3632 = vadd.f32 0.0, %v3631
    %v3633 = vpop.f32.mrb[0].mxu0
    %3634 = vmatprep.mubr.f32.mxu0 %v1645
    %3635 = vmatmul.mubr.f32.gmra.mrb[0].mxu0 %v424
    %v3636 = vpop.f32.mrb[0].mxu0
    %v3637 = vadd.f32 0.0, %v3636
    %v3638 = vpop.f32.mrb[0].mxu0
    %3639 = vmatprep.mubr.f32.mxu0 %v1648
    %3640 = vmatmul.mubr.f32.gmra.mrb[0].mxu0 %v426
    %v3641 = vpop.f32.mrb[0].mxu0
    %v3642 = vadd.f32 0.0, %v3641
    %v3643 = vpop.f32.mrb[0].mxu0
    %3644 = vmatprep.mubr.f32.mxu0 %v1651
    %3645 = vmatmul.mubr.f32.gmra.mrb[0].mxu0 %v428
    %v3646 = vpop.f32.mrb[0].mxu0
    %v3647 = vadd.f32 0.0, %v3646
    %v3648 = vpop.f32.mrb[0].mxu0
    %3649 = vmatprep.mubr.f32.mxu0 %v1654
    %3650 = vmatmul.mubr.f32.gmra.mrb[0].mxu0 %v430
    %v3651 = vpop.f32.mrb[0].mxu0
    %v3652 = vadd.f32 0.0, %v3651
    %v3653 = vpop.f32.mrb[0].mxu0
    %3654 = vmatprep.mubr.f32.mxu0 %v1657
    %3655 = vmatmul.mubr.f32.gmra.mrb[0].mxu0 %v432
    %v3656 = vpop.f32.mrb[0].mxu0
    %v3657 = vadd.f32 0.0, %v3656
    %v3658 = vpop.f32.mrb[0].mxu0
    %3659 = vmatprep.mubr.f32.mxu0 %v1660
    %3660 = vmatmul.mubr.f32.gmra.mrb[0].mxu0 %v434
    %v3661 = vpop.f32.mrb[0].mxu0
    %v3662 = vadd.f32 0.0, %v3661
    %v3663 = vpop.f32.mrb[0].mxu0
    %3664 = vmatprep.mubr.f32.mxu0 %v1663
    %3665 = vmatmul.mubr.f32.gmra.mrb[0].mxu0 %v436
    %v3666 = vpop.f32.mrb[0].mxu0
    %v3667 = vadd.f32 0.0, %v3666
    %v3668 = vpop.f32.mrb[0].mxu0
    %3669 = vmatprep.mubr.f32.mxu0 %v1666
    %3670 = vmatmul.mubr.f32.gmra.mrb[0].mxu0 %v438
    %v3671 = vpop.f32.mrb[0].mxu0
    %v3672 = vadd.f32 0.0, %v3671
    %v3673 = vpop.f32.mrb[0].mxu0
    %3674 = vmatprep.mubr.f32.mxu0 %v1669
    %3675 = vmatmul.mubr.f32.gmra.mrb[0].mxu0 %v440
    %v3676 = vpop.f32.mrb[0].mxu0
    %v3677 = vadd.f32 0.0, %v3676
    %v3678 = vpop.f32.mrb[0].mxu0
    %3679 = vmatprep.mubr.f32.mxu0 %v1672
    %3680 = vmatmul.mubr.f32.gmra.mrb[0].mxu0 %v442
    %v3681 = vpop.f32.mrb[0].mxu0
    %v3682 = vadd.f32 0.0, %v3681
    %v3683 = vpop.f32.mrb[0].mxu0
    %3684 = vmatprep.mubr.f32.mxu0 %v1675
    %3685 = vmatmul.mubr.f32.gmra.mrb[0].mxu0 %v444
    %v3686 = vpop.f32.mrb[0].mxu0
    %v3687 = vadd.f32 0.0, %v3686
    %v3688 = vpop.f32.mrb[0].mxu0
    %3689 = vmatprep.mubr.f32.mxu0 %v1678
    %3690 = vmatmul.mubr.f32.gmra.mrb[0].mxu0 %v446
    %v3691 = vpop.f32.mrb[0].mxu0
    %v3692 = vadd.f32 0.0, %v3691
    %v3693 = vpop.f32.mrb[0].mxu0
    %3694 = vmatprep.mubr.f32.mxu0 %v1681
    %3695 = vmatmul.mubr.f32.gmra.mrb[0].mxu0 %v448
    %v3696 = vpop.f32.mrb[0].mxu0
    %v3697 = vadd.f32 0.0, %v3696
    %v3698 = vpop.f32.mrb[0].mxu0
    %3699 = vmatprep.mubr.f32.mxu0 %v1684
    %3700 = vmatmul.mubr.f32.gmra.mrb[0].mxu0 %v450
    %v3701 = vpop.f32.mrb[0].mxu0
    %v3702 = vadd.f32 0.0, %v3701
    %v3703 = vpop.f32.mrb[0].mxu0
    %3704 = vmatprep.mubr.f32.mxu0 %v1687
    %3705 = vmatmul.mubr.f32.gmra.mrb[0].mxu0 %v452
    %v3706 = vpop.f32.mrb[0].mxu0
    %v3707 = vadd.f32 0.0, %v3706
    %v3708 = vpop.f32.mrb[0].mxu0
    %3709 = vmatprep.mubr.f32.mxu0 %v1690
    %3710 = vmatmul.mubr.f32.gmra.mrb[0].mxu0 %v454
    %v3711 = vpop.f32.mrb[0].mxu0
    %v3712 = vadd.f32 0.0, %v3711
    %v3713 = vpop.f32.mrb[0].mxu0
    %3714 = vmatprep.mubr.f32.mxu0 %v1693
    %3715 = vmatmul.mubr.f32.gmra.mrb[0].mxu0 %v456
    %v3716 = vpop.f32.mrb[0].mxu0
    %v3717 = vadd.f32 0.0, %v3716
    %v3718 = vpop.f32.mrb[0].mxu0
    %3719 = vmatprep.mubr.f32.mxu0 %v1696
    %3720 = vmatmul.mubr.f32.gmra.mrb[0].mxu0 %v458
    %v3721 = vpop.f32.mrb[0].mxu0
    %v3722 = vadd.f32 0.0, %v3721
    %v3723 = vpop.f32.mrb[0].mxu0
    %3724 = vmatprep.mubr.f32.mxu0 %v1699
    %3725 = vmatmul.mubr.f32.gmra.mrb[0].mxu0 %v460
    %v3726 = vpop.f32.mrb[0].mxu0
    %v3727 = vadd.f32 0.0, %v3726
    %v3728 = vpop.f32.mrb[0].mxu0
    %3729 = vmatprep.mubr.f32.mxu0 %v1702
    %3730 = vmatmul.mubr.f32.gmra.mrb[0].mxu0 %v462
    %v3731 = vpop.f32.mrb[0].mxu0
    %v3732 = vadd.f32 0.0, %v3731
    %v3733 = vpop.f32.mrb[0].mxu0
    %3734 = vmatprep.mubr.f32.mxu0 %v1705
    %3735 = vmatmul.mubr.f32.gmra.mrb[0].mxu0 %v464
    %v3736 = vpop.f32.mrb[0].mxu0
    %v3737 = vadd.f32 0.0, %v3736
    %v3738 = vpop.f32.mrb[0].mxu0
    %3739 = vmatprep.mubr.f32.mxu0 %v1708
    %3740 = vmatmul.mubr.f32.gmra.mrb[0].mxu0 %v466
    %v3741 = vpop.f32.mrb[0].mxu0
    %v3742 = vadd.f32 0.0, %v3741
    %v3743 = vpop.f32.mrb[0].mxu0
    %3744 = vmatprep.mubr.f32.mxu0 %v1711
    %3745 = vmatmul.mubr.f32.gmra.mrb[0].mxu0 %v468
    %v3746 = vpop.f32.mrb[0].mxu0
    %v3747 = vadd.f32 0.0, %v3746
    %v3748 = vpop.f32.mrb[0].mxu0
    %3749 = vmatprep.mubr.f32.mxu0 %v1714
    %3750 = vmatmul.mubr.f32.gmra.mrb[0].mxu0 %v470
    %v3751 = vpop.f32.mrb[0].mxu0
    %v3752 = vadd.f32 0.0, %v3751
    %v3753 = vpop.f32.mrb[0].mxu0
    %3754 = vmatprep.mubr.f32.mxu0 %v1717
    %3755 = vmatmul.mubr.f32.gmra.mrb[0].mxu0 %v472
    %v3756 = vpop.f32.mrb[0].mxu0
    %v3757 = vadd.f32 0.0, %v3756
    %v3758 = vpop.f32.mrb[0].mxu0
    %3759 = vmatprep.mubr.f32.mxu0 %v1720
    %3760 = vmatmul.mubr.f32.gmra.mrb[0].mxu0 %v474
    %v3761 = vpop.f32.mrb[0].mxu0
    %v3762 = vadd.f32 0.0, %v3761
    %v3763 = vpop.f32.mrb[0].mxu0
    %3764 = vmatprep.mubr.f32.mxu0 %v1723
    %3765 = vmatmul.mubr.f32.gmra.mrb[0].mxu0 %v476
    %v3766 = vpop.f32.mrb[0].mxu0
    %v3767 = vadd.f32 0.0, %v3766
    %v3768 = vpop.f32.mrb[0].mxu0
    %3769 = vmatprep.mubr.f32.mxu0 %v1726
    %3770 = vmatmul.mubr.f32.gmra.mrb[0].mxu0 %v478
    %v3771 = vpop.f32.mrb[0].mxu0
    %v3772 = vadd.f32 0.0, %v3771
    %v3773 = vpop.f32.mrb[0].mxu0
    %3774 = vmatprep.mubr.f32.mxu0 %v1729
    %3775 = vmatmul.mubr.f32.gmra.mrb[0].mxu0 %v480
    %v3776 = vpop.f32.mrb[0].mxu0
    %v3777 = vadd.f32 0.0, %v3776
    %v3778 = vpop.f32.mrb[0].mxu0
    %3779 = vmatprep.mubr.f32.mxu0 %v1732
    %3780 = vmatmul.mubr.f32.gmra.mrb[0].mxu0 %v482
    %v3781 = vpop.f32.mrb[0].mxu0
    %v3782 = vadd.f32 0.0, %v3781
    %v3783 = vpop.f32.mrb[0].mxu0
    %3784 = vmatprep.mubr.f32.mxu0 %v1735
    %3785 = vmatmul.mubr.f32.gmra.mrb[0].mxu0 %v484
    %v3786 = vpop.f32.mrb[0].mxu0
    %v3787 = vadd.f32 0.0, %v3786
    %v3788 = vpop.f32.mrb[0].mxu0
    %3789 = vmatprep.mubr.f32.mxu0 %v1738
    %3790 = vmatmul.mubr.f32.gmra.mrb[0].mxu0 %v486
    %v3791 = vpop.f32.mrb[0].mxu0
    %v3792 = vadd.f32 0.0, %v3791
    %v3793 = vpop.f32.mrb[0].mxu0
    %3794 = vmatprep.mubr.f32.mxu0 %v1741
    %3795 = vmatmul.mubr.f32.gmra.mrb[0].mxu0 %v488
    %v3796 = vpop.f32.mrb[0].mxu0
    %v3797 = vadd.f32 0.0, %v3796
    %v3798 = vpop.f32.mrb[0].mxu0
    %3799 = vmatprep.mubr.f32.mxu0 %v1744
    %3800 = vmatmul.mubr.f32.gmra.mrb[0].mxu0 %v490
    %v3801 = vpop.f32.mrb[0].mxu0
    %v3802 = vadd.f32 0.0, %v3801
    %v3803 = vpop.f32.mrb[0].mxu0
    %3804 = vmatprep.mubr.f32.mxu0 %v1747
    %3805 = vmatmul.mubr.f32.gmra.mrb[0].mxu0 %v492
    %v3806 = vpop.f32.mrb[0].mxu0
    %v3807 = vadd.f32 0.0, %v3806
    %v3808 = vpop.f32.mrb[0].mxu0
    %3809 = vmatprep.mubr.f32.mxu0 %v1750
    %3810 = vmatmul.mubr.f32.gmra.mrb[0].mxu0 %v494
    %v3811 = vpop.f32.mrb[0].mxu0
    %v3812 = vadd.f32 0.0, %v3811
    %v3813 = vpop.f32.mrb[0].mxu0
    %3814 = vmatprep.mubr.f32.mxu0 %v1753
    %3815 = vmatmul.mubr.f32.gmra.mrb[0].mxu0 %v496
    %v3816 = vpop.f32.mrb[0].mxu0
    %v3817 = vadd.f32 0.0, %v3816
    %v3818 = vpop.f32.mrb[0].mxu0
    %3819 = vmatprep.mubr.f32.mxu0 %v1756
    %3820 = vmatmul.mubr.f32.gmra.mrb[0].mxu0 %v498
    %v3821 = vpop.f32.mrb[0].mxu0
    %v3822 = vadd.f32 0.0, %v3821
    %v3823 = vpop.f32.mrb[0].mxu0
    %3824 = vmatprep.mubr.f32.mxu0 %v1759
    %3825 = vmatmul.mubr.f32.gmra.mrb[0].mxu0 %v500
    %v3826 = vpop.f32.mrb[0].mxu0
    %v3827 = vadd.f32 0.0, %v3826
    %v3828 = vpop.f32.mrb[0].mxu0
    %3829 = vmatprep.mubr.f32.mxu0 %v1762
    %3830 = vmatmul.mubr.f32.gmra.mrb[0].mxu0 %v502
    %v3831 = vpop.f32.mrb[0].mxu0
    %v3832 = vadd.f32 0.0, %v3831
    %v3833 = vpop.f32.mrb[0].mxu0
    %3834 = vmatprep.mubr.f32.mxu0 %v1765
    %3835 = vmatmul.mubr.f32.gmra.mrb[0].mxu0 %v504
    %v3836 = vpop.f32.mrb[0].mxu0
    %v3837 = vadd.f32 0.0, %v3836
    %v3838 = vpop.f32.mrb[0].mxu0
    %3839 = vmatprep.mubr.f32.mxu0 %v1768
    %3840 = vmatmul.mubr.f32.gmra.mrb[0].mxu0 %v506
    %v3841 = vpop.f32.mrb[0].mxu0
    %v3842 = vadd.f32 0.0, %v3841
    %v3843 = vpop.f32.mrb[0].mxu0
    %3844 = vmatprep.mubr.f32.mxu0 %v1771
    %3845 = vmatmul.mubr.f32.gmra.mrb[0].mxu0 %v508
    %v3846 = vpop.f32.mrb[0].mxu0
    %v3847 = vadd.f32 0.0, %v3846
    %v3848 = vpop.f32.mrb[0].mxu0
    %3849 = vmatprep.mubr.f32.mxu0 %v1774
    %3850 = vmatmul.mubr.f32.gmra.mrb[0].mxu0 %v510
    %v3851 = vpop.f32.mrb[0].mxu0
    %v3852 = vadd.f32 0.0, %v3851
    %v3853 = vpop.f32.mrb[0].mxu0
    %3854 = vmatprep.mubr.f32.mxu0 %v1777
    %3855 = vmatmul.mubr.f32.gmra.mrb[0].mxu0 %v512
    %v3856 = vpop.f32.mrb[0].mxu0
    %v3857 = vadd.f32 0.0, %v3856
    %v3858 = vpop.f32.mrb[0].mxu0
    %3859 = vmatprep.mubr.f32.mxu0 %v1780
    %3860 = vmatmul.mubr.f32.gmra.mrb[0].mxu0 %v514
    %v3861 = vpop.f32.mrb[0].mxu0
    %v3862 = vadd.f32 0.0, %v3861
    %v3863 = vpop.f32.mrb[0].mxu0
    %3864 = vmatprep.mubr.f32.mxu0 %v1783
    %3865 = vmatmul.mubr.f32.gmra.mrb[0].mxu0 %v516
    %v3866 = vpop.f32.mrb[0].mxu0
    %v3867 = vadd.f32 0.0, %v3866
    %v3868 = vpop.f32.mrb[0].mxu0
    %3869 = vmatprep.mubr.f32.mxu0 %v1786
    %3870 = vmatmul.mubr.f32.gmra.mrb[0].mxu0 %v518
    %v3871 = vpop.f32.mrb[0].mxu0
    %v3872 = vadd.f32 0.0, %v3871
    %v3873 = vpop.f32.mrb[0].mxu0
    %3874 = vmatprep.mubr.f32.mxu0 %v1789
    %3875 = vmatmul.mubr.f32.gmra.mrb[0].mxu0 %v520
    %v3876 = vpop.f32.mrb[0].mxu0
    %v3877 = vadd.f32 0.0, %v3876
    %v3878 = vpop.f32.mrb[0].mxu0
    %3879 = vmatprep.mubr.f32.mxu0 %v1792
    %3880 = vmatmul.mubr.f32.gmra.mrb[0].mxu0 %v522
    %v3881 = vpop.f32.mrb[0].mxu0
    %v3882 = vadd.f32 0.0, %v3881
    %v3883 = vpop.f32.mrb[0].mxu0
    %3884 = vmatprep.mubr.f32.mxu0 %v1795
    %3885 = vmatmul.mubr.f32.gmra.mrb[0].mxu0 %v524
    %v3886 = vpop.f32.mrb[0].mxu0
    %v3887 = vadd.f32 0.0, %v3886
    %v3888 = vpop.f32.mrb[0].mxu0
    %3889 = vmatprep.mubr.f32.mxu0 %v1798
    %3890 = vmatmul.mubr.f32.gmra.mrb[0].mxu0 %v526
    %v3891 = vpop.f32.mrb[0].mxu0
    %v3892 = vadd.f32 0.0, %v3891
    %v3893 = vpop.f32.mrb[0].mxu0
    %3894 = vmatprep.mubr.f32.mxu0 %v1801
    %3895 = vmatmul.mubr.f32.gmra.mrb[0].mxu0 %v528
    %v3896 = vpop.f32.mrb[0].mxu0
    %v3897 = vadd.f32 0.0, %v3896
    %v3898 = vpop.f32.mrb[0].mxu0
    %3899 = vmatprep.mubr.f32.mxu0 %v1804
    %3900 = vmatmul.mubr.f32.gmra.mrb[0].mxu0 %v530
    %v3901 = vpop.f32.mrb[0].mxu0
    %v3902 = vadd.f32 0.0, %v3901
    %v3903 = vpop.f32.mrb[0].mxu0
    %3904 = vmatprep.mubr.f32.mxu0 %v1807
    %3905 = vmatmul.mubr.f32.gmra.mrb[0].mxu0 %v532
    %v3906 = vpop.f32.mrb[0].mxu0
    %v3907 = vadd.f32 0.0, %v3906
    %v3908 = vpop.f32.mrb[0].mxu0
    %3909 = vmatprep.mubr.f32.mxu0 %v1810
    %3910 = vmatmul.mubr.f32.gmra.mrb[0].mxu0 %v534
    %v3911 = vpop.f32.mrb[0].mxu0
    %v3912 = vadd.f32 0.0, %v3911
    %v3913 = vpop.f32.mrb[0].mxu0
    %3914 = vmatprep.mubr.f32.mxu0 %v1813
    %3915 = vmatmul.mubr.f32.gmra.mrb[0].mxu0 %v536
    %v3916 = vpop.f32.mrb[0].mxu0
    %v3917 = vadd.f32 0.0, %v3916
    %v3918 = vpop.f32.mrb[0].mxu0
    %3919 = vmatprep.mubr.f32.mxu0 %v1816
    %3920 = vmatmul.mubr.f32.gmra.mrb[0].mxu0 %v538
    %v3921 = vpop.f32.mrb[0].mxu0
    %v3922 = vadd.f32 0.0, %v3921
    %v3923 = vpop.f32.mrb[0].mxu0
    %3924 = vmatprep.mubr.f32.mxu0 %v1819
    %3925 = vmatmul.mubr.f32.gmra.mrb[0].mxu0 %v540
    %v3926 = vpop.f32.mrb[0].mxu0
    %v3927 = vadd.f32 0.0, %v3926
    %v3928 = vpop.f32.mrb[0].mxu0
    %3929 = vmatprep.mubr.f32.mxu0 %v1822
    %3930 = vmatmul.mubr.f32.gmra.mrb[0].mxu0 %v542
    %v3931 = vpop.f32.mrb[0].mxu0
    %v3932 = vadd.f32 0.0, %v3931
    %v3933 = vpop.f32.mrb[0].mxu0
    %3934 = vmatprep.mubr.f32.mxu0 %v1825
    %3935 = vmatmul.mubr.f32.gmra.mrb[0].mxu0 %v544
    %v3936 = vpop.f32.mrb[0].mxu0
    %v3937 = vadd.f32 0.0, %v3936
    %v3938 = vpop.f32.mrb[0].mxu0
    %3939 = vmatprep.mubr.f32.mxu0 %v1828
    %3940 = vmatmul.mubr.f32.gmra.mrb[0].mxu0 %v546
    %v3941 = vpop.f32.mrb[0].mxu0
    %v3942 = vadd.f32 0.0, %v3941
    %v3943 = vpop.f32.mrb[0].mxu0
    %3944 = vmatprep.mubr.f32.mxu0 %v1831
    %3945 = vmatmul.mubr.f32.gmra.mrb[0].mxu0 %v548
    %v3946 = vpop.f32.mrb[0].mxu0
    %v3947 = vadd.f32 0.0, %v3946
    %v3948 = vpop.f32.mrb[0].mxu0
    %3949 = vmatprep.mubr.f32.mxu0 %v1834
    %3950 = vmatmul.mubr.f32.gmra.mrb[0].mxu0 %v550
    %v3951 = vpop.f32.mrb[0].mxu0
    %v3952 = vadd.f32 0.0, %v3951
    %v3953 = vpop.f32.mrb[0].mxu0
    %3954 = vmatprep.mubr.f32.mxu0 %v1837
    %3955 = vmatmul.mubr.f32.gmra.mrb[0].mxu0 %v552
    %v3956 = vpop.f32.mrb[0].mxu0
    %v3957 = vadd.f32 0.0, %v3956
    %v3958 = vpop.f32.mrb[0].mxu0
    %3959 = vmatprep.mubr.f32.mxu0 %v1840
    %3960 = vmatmul.mubr.f32.gmra.mrb[0].mxu0 %v554
    %v3961 = vpop.f32.mrb[0].mxu0
    %v3962 = vadd.f32 0.0, %v3961
    %v3963 = vpop.f32.mrb[0].mxu0
    %3964 = vmatprep.mubr.f32.mxu0 %v1843
    %3965 = vmatmul.mubr.f32.gmra.mrb[0].mxu0 %v556
    %v3966 = vpop.f32.mrb[0].mxu0
    %v3967 = vadd.f32 0.0, %v3966
    %v3968 = vpop.f32.mrb[0].mxu0
    %3969 = vmatprep.mubr.f32.mxu0 %v1846
    %3970 = vmatmul.mubr.f32.gmra.mrb[0].mxu0 %v558
    %v3971 = vpop.f32.mrb[0].mxu0
    %v3972 = vadd.f32 0.0, %v3971
    %v3973 = vpop.f32.mrb[0].mxu0
    %3974 = vmatprep.mubr.f32.mxu0 %v1849
    %3975 = vmatmul.mubr.f32.gmra.mrb[0].mxu0 %v560
    %v3976 = vpop.f32.mrb[0].mxu0
    %v3977 = vadd.f32 0.0, %v3976
    %v3978 = vpop.f32.mrb[0].mxu0
    %3979 = vmatprep.mubr.f32.mxu0 %v1852
    %3980 = vmatmul.mubr.f32.gmra.mrb[0].mxu0 %v562
    %v3981 = vpop.f32.mrb[0].mxu0
    %v3982 = vadd.f32 0.0, %v3981
    %v3983 = vpop.f32.mrb[0].mxu0
    %3984 = vmatprep.mubr.f32.mxu0 %v1855
    %3985 = vmatmul.mubr.f32.gmra.mrb[0].mxu0 %v564
    %v3986 = vpop.f32.mrb[0].mxu0
    %v3987 = vadd.f32 0.0, %v3986
    %v3988 = vpop.f32.mrb[0].mxu0
    %3989 = vmatprep.mubr.f32.mxu0 %v1858
    %3990 = vmatmul.mubr.f32.gmra.mrb[0].mxu0 %v566
    %v3991 = vpop.f32.mrb[0].mxu0
    %v3992 = vadd.f32 0.0, %v3991
    %v3993 = vpop.f32.mrb[0].mxu0
    %3994 = vmatprep.mubr.f32.mxu0 %v1861
    %3995 = vmatmul.mubr.f32.gmra.mrb[0].mxu0 %v568
    %v3996 = vpop.f32.mrb[0].mxu0
    %v3997 = vadd.f32 0.0, %v3996
    %v3998 = vpop.f32.mrb[0].mxu0
    %3999 = vmatprep.mubr.f32.mxu0 %v1864
    %4000 = vmatmul.mubr.f32.gmra.mrb[0].mxu0 %v570
    %v4001 = vpop.f32.mrb[0].mxu0
    %v4002 = vadd.f32 0.0, %v4001
    %v4003 = vpop.f32.mrb[0].mxu0
    %4004 = vmatprep.mubr.f32.mxu0 %v1867
    %4005 = vmatmul.mubr.f32.gmra.mrb[0].mxu0 %v572
    %v4006 = vpop.f32.mrb[0].mxu0
    %v4007 = vadd.f32 0.0, %v4006
    %v4008 = vpop.f32.mrb[0].mxu0
    %4009 = vmatprep.mubr.f32.mxu0 %v1870
    %4010 = vmatmul.mubr.f32.gmra.mrb[0].mxu0 %v574
    %v4011 = vpop.f32.mrb[0].mxu0
    %v4012 = vadd.f32 0.0, %v4011
    %v4013 = vpop.f32.mrb[0].mxu0
    %4014 = vmatprep.mubr.f32.mxu0 %v1873
    %4015 = vmatmul.mubr.f32.gmra.mrb[0].mxu0 %v576
    %v4016 = vpop.f32.mrb[0].mxu0
    %v4017 = vadd.f32 0.0, %v4016
    %v4018 = vpop.f32.mrb[0].mxu0
    %4019 = vmatprep.mubr.f32.mxu0 %v1876
    %4020 = vmatmul.mubr.f32.gmra.mrb[0].mxu0 %v578
    %v4021 = vpop.f32.mrb[0].mxu0
    %v4022 = vadd.f32 0.0, %v4021
    %v4023 = vpop.f32.mrb[0].mxu0
    %4024 = vmatprep.mubr.f32.mxu0 %v1879
    %4025 = vmatmul.mubr.f32.gmra.mrb[0].mxu0 %v580
    %v4026 = vpop.f32.mrb[0].mxu0
    %v4027 = vadd.f32 0.0, %v4026
    %v4028 = vpop.f32.mrb[0].mxu0
    %4029 = vmatprep.mubr.f32.mxu0 %v1882
    %4030 = vmatmul.mubr.f32.gmra.mrb[0].mxu0 %v582
    %v4031 = vpop.f32.mrb[0].mxu0
    %v4032 = vadd.f32 0.0, %v4031
    %v4033 = vpop.f32.mrb[0].mxu0
    %4034 = vmatprep.mubr.f32.mxu0 %v1885
    %4035 = vmatmul.mubr.f32.gmra.mrb[0].mxu0 %v584
    %v4036 = vpop.f32.mrb[0].mxu0
    %v4037 = vadd.f32 0.0, %v4036
    %v4038 = vpop.f32.mrb[0].mxu0
    %4039 = vmatprep.mubr.f32.mxu0 %v1888
    %4040 = vmatmul.mubr.f32.gmra.mrb[0].mxu0 %v586
    %v4041 = vpop.f32.mrb[0].mxu0
    %v4042 = vadd.f32 0.0, %v4041
    %v4043 = vpop.f32.mrb[0].mxu0
    %4044 = vmatprep.mubr.f32.mxu0 %v1891
    %4045 = vmatmul.mubr.f32.gmra.mrb[0].mxu0 %v588
    %v4046 = vpop.f32.mrb[0].mxu0
    %v4047 = vadd.f32 0.0, %v4046
    %v4048 = vpop.f32.mrb[0].mxu0
    %4049 = vmatprep.mubr.f32.mxu0 %v1894
    %4050 = vmatmul.mubr.f32.gmra.mrb[0].mxu0 %v590
    %v4051 = vpop.f32.mrb[0].mxu0
    %v4052 = vadd.f32 0.0, %v4051
    %v4053 = vpop.f32.mrb[0].mxu0
    %4054 = vmatprep.mubr.f32.mxu0 %v1897
    %4055 = vmatmul.mubr.f32.gmra.mrb[0].mxu0 %v592
    %v4056 = vpop.f32.mrb[0].mxu0
    %v4057 = vadd.f32 0.0, %v4056
    %v4058 = vpop.f32.mrb[0].mxu0
    %4059 = vmatprep.mubr.f32.mxu0 %v1900
    %4060 = vmatmul.mubr.f32.gmra.mrb[0].mxu0 %v594
    %v4061 = vpop.f32.mrb[0].mxu0
    %v4062 = vadd.f32 0.0, %v4061
    %v4063 = vpop.f32.mrb[0].mxu0
    %4064 = vmatprep.mubr.f32.mxu0 %v1903
    %4065 = vmatmul.mubr.f32.gmra.mrb[0].mxu0 %v596
    %v4066 = vpop.f32.mrb[0].mxu0
    %v4067 = vadd.f32 0.0, %v4066
    %v4068 = vpop.f32.mrb[0].mxu0
    %4069 = vmatprep.mubr.f32.mxu0 %v1906
    %4070 = vmatmul.mubr.f32.gmra.mrb[0].mxu0 %v598
    %v4071 = vpop.f32.mrb[0].mxu0
    %v4072 = vadd.f32 0.0, %v4071
    %v4073 = vpop.f32.mrb[0].mxu0
    %4074 = vmatprep.mubr.f32.mxu0 %v1909
    %4075 = vmatmul.mubr.f32.gmra.mrb[0].mxu0 %v600
    %v4076 = vpop.f32.mrb[0].mxu0
    %v4077 = vadd.f32 0.0, %v4076
    %v4078 = vpop.f32.mrb[0].mxu0
    %4079 = vmatprep.mubr.f32.mxu0 %v1912
    %4080 = vmatmul.mubr.f32.gmra.mrb[0].mxu0 %v602
    %v4081 = vpop.f32.mrb[0].mxu0
    %v4082 = vadd.f32 0.0, %v4081
    %v4083 = vpop.f32.mrb[0].mxu0
    %4084 = vmatprep.mubr.f32.mxu0 %v1915
    %4085 = vmatmul.mubr.f32.gmra.mrb[0].mxu0 %v604
    %v4086 = vpop.f32.mrb[0].mxu0
    %v4087 = vadd.f32 0.0, %v4086
    %v4088 = vpop.f32.mrb[0].mxu0
    %4089 = vmatprep.mubr.f32.mxu0 %v1918
    %4090 = vmatmul.mubr.f32.gmra.mrb[0].mxu0 %v606
    %v4091 = vpop.f32.mrb[0].mxu0
    %v4092 = vadd.f32 0.0, %v4091
    %v4093 = vpop.f32.mrb[0].mxu0
    %4094 = vmatprep.mubr.f32.mxu0 %v1921
    %4095 = vmatmul.mubr.f32.gmra.mrb[0].mxu0 %v608
    %v4096 = vpop.f32.mrb[0].mxu0
    %v4097 = vadd.f32 0.0, %v4096
    %v4098 = vpop.f32.mrb[0].mxu0
    %4099 = vmatprep.mubr.f32.mxu0 %v1924
    %4100 = vmatmul.mubr.f32.gmra.mrb[0].mxu0 %v610
    %v4101 = vpop.f32.mrb[0].mxu0
    %v4102 = vadd.f32 0.0, %v4101
    %v4103 = vpop.f32.mrb[0].mxu0
    %4104 = vmatprep.mubr.f32.mxu0 %v1927
    %4105 = vmatmul.mubr.f32.gmra.mrb[0].mxu0 %v612
    %v4106 = vpop.f32.mrb[0].mxu0
    %v4107 = vadd.f32 0.0, %v4106
    %v4108 = vpop.f32.mrb[0].mxu0
    %4109 = vmatprep.mubr.f32.mxu0 %v1930
    %4110 = vmatmul.mubr.f32.gmra.mrb[0].mxu0 %v614
    %v4111 = vpop.f32.mrb[0].mxu0
    %v4112 = vadd.f32 0.0, %v4111
    %v4113 = vpop.f32.mrb[0].mxu0
    %4114 = vmatprep.mubr.f32.mxu0 %v1933
    %4115 = vmatmul.mubr.f32.gmra.mrb[0].mxu0 %v616
    %v4116 = vpop.f32.mrb[0].mxu0
    %v4117 = vadd.f32 0.0, %v4116
    %v4118 = vpop.f32.mrb[0].mxu0
    %4119 = vmatprep.mubr.f32.mxu0 %v1936
    %4120 = vmatmul.mubr.f32.gmra.mrb[0].mxu0 %v618
    %v4121 = vpop.f32.mrb[0].mxu0
    %v4122 = vadd.f32 0.0, %v4121
    %v4123 = vpop.f32.mrb[0].mxu0
    %4124 = vmatprep.mubr.f32.mxu0 %v1939
    %4125 = vmatmul.mubr.f32.gmra.mrb[0].mxu0 %v620
    %v4126 = vpop.f32.mrb[0].mxu0
    %v4127 = vadd.f32 0.0, %v4126
    %v4128 = vpop.f32.mrb[0].mxu0
    %4129 = vmatprep.mubr.f32.mxu0 %v1942
    %4130 = vmatmul.mubr.f32.gmra.mrb[0].mxu0 %v622
    %v4131 = vpop.f32.mrb[0].mxu0
    %v4132 = vadd.f32 0.0, %v4131
    %v4133 = vpop.f32.mrb[0].mxu0
    %4134 = vmatprep.mubr.f32.mxu0 %v1945
    %4135 = vmatmul.mubr.f32.gmra.mrb[0].mxu0 %v624
    %v4136 = vpop.f32.mrb[0].mxu0
    %v4137 = vadd.f32 0.0, %v4136
    %v4138 = vpop.f32.mrb[0].mxu0
    %4139 = vmatprep.mubr.f32.mxu0 %v1948
    %4140 = vmatmul.mubr.f32.gmra.mrb[0].mxu0 %v626
    %v4141 = vpop.f32.mrb[0].mxu0
    %v4142 = vadd.f32 0.0, %v4141
    %v4143 = vpop.f32.mrb[0].mxu0
    %4144 = vmatprep.mubr.f32.mxu0 %v1951
    %4145 = vmatmul.mubr.f32.gmra.mrb[0].mxu0 %v628
    %v4146 = vpop.f32.mrb[0].mxu0
    %v4147 = vadd.f32 0.0, %v4146
    %v4148 = vpop.f32.mrb[0].mxu0
    %4149 = vmatprep.mubr.f32.mxu0 %v1954
    %4150 = vmatmul.mubr.f32.gmra.mrb[0].mxu0 %v630
    %v4151 = vpop.f32.mrb[0].mxu0
    %v4152 = vadd.f32 0.0, %v4151
    %v4153 = vpop.f32.mrb[0].mxu0
    %4154 = vmatprep.mubr.f32.mxu0 %v1957
    %4155 = vmatmul.mubr.f32.gmra.mrb[0].mxu0 %v632
    %v4156 = vpop.f32.mrb[0].mxu0
    %v4157 = vadd.f32 0.0, %v4156
    %v4158 = vpop.f32.mrb[0].mxu0
    %4159 = vmatprep.mubr.f32.mxu0 %v1960
    %4160 = vmatmul.mubr.f32.gmra.mrb[0].mxu0 %v634
    %v4161 = vpop.f32.mrb[0].mxu0
    %v4162 = vadd.f32 0.0, %v4161
    %v4163 = vpop.f32.mrb[0].mxu0
    %4164 = vmatprep.mubr.f32.mxu0 %v1963
    %4165 = vmatmul.mubr.f32.gmra.mrb[0].mxu0 %v636
    %v4166 = vpop.f32.mrb[0].mxu0
    %v4167 = vadd.f32 0.0, %v4166
    %v4168 = vpop.f32.mrb[0].mxu0
    %4169 = vmatprep.mubr.f32.mxu0 %v1966
    %4170 = vmatmul.mubr.f32.gmra.mrb[0].mxu0 %v638
    %v4171 = vpop.f32.mrb[0].mxu0
    %v4172 = vadd.f32 0.0, %v4171
    %v4173 = vpop.f32.mrb[0].mxu0
    %4174 = vmatprep.mubr.f32.mxu0 %v1969
    %4175 = vmatmul.mubr.f32.gmra.mrb[0].mxu0 %v640
    %v4176 = vpop.f32.mrb[0].mxu0
    %v4177 = vadd.f32 0.0, %v4176
    %v4178 = vpop.f32.mrb[0].mxu0
    %4179 = vmatprep.mubr.f32.mxu0 %v1972
    %4180 = vmatmul.mubr.f32.gmra.mrb[0].mxu0 %v642
    %v4181 = vpop.f32.mrb[0].mxu0
    %v4182 = vadd.f32 0.0, %v4181
    %v4183 = vpop.f32.mrb[0].mxu0
    %4184 = vmatprep.mubr.f32.mxu0 %v1975
    %4185 = vmatmul.mubr.f32.gmra.mrb[0].mxu0 %v644
    %v4186 = vpop.f32.mrb[0].mxu0
    %v4187 = vadd.f32 0.0, %v4186
    %v4188 = vpop.f32.mrb[0].mxu0
    %4189 = vmatprep.mubr.f32.mxu0 %v1978
    %4190 = vmatmul.mubr.f32.gmra.mrb[0].mxu0 %v646
    %v4191 = vpop.f32.mrb[0].mxu0
    %v4192 = vadd.f32 0.0, %v4191
    %v4193 = vpop.f32.mrb[0].mxu0
    %4194 = vmatprep.mubr.f32.mxu0 %v1981
    %4195 = vmatmul.mubr.f32.gmra.mrb[0].mxu0 %v648
    %v4196 = vpop.f32.mrb[0].mxu0
    %v4197 = vadd.f32 0.0, %v4196
    %v4198 = vpop.f32.mrb[0].mxu0
    %4199 = vmatprep.mubr.f32.mxu0 %v1984
    %4200 = vmatmul.mubr.f32.gmra.mrb[0].mxu0 %v650
    %v4201 = vpop.f32.mrb[0].mxu0
    %v4202 = vadd.f32 0.0, %v4201
    %v4203 = vpop.f32.mrb[0].mxu0
    %4204 = vmatprep.mubr.f32.mxu0 %v1987
    %4205 = vmatmul.mubr.f32.gmra.mrb[0].mxu0 %v652
    %v4206 = vpop.f32.mrb[0].mxu0
    %v4207 = vadd.f32 0.0, %v4206
    %v4208 = vpop.f32.mrb[0].mxu0
    %4209 = vmatprep.mubr.f32.mxu0 %v1990
    %4210 = vmatmul.mubr.f32.gmra.mrb[0].mxu0 %v654
    %v4211 = vpop.f32.mrb[0].mxu0
    %v4212 = vadd.f32 0.0, %v4211
    %v4213 = vpop.f32.mrb[0].mxu0
    %4214 = vmatprep.mubr.f32.mxu0 %v1993
    %4215 = vmatmul.mubr.f32.gmra.mrb[0].mxu0 %v656
    %v4216 = vpop.f32.mrb[0].mxu0
    %v4217 = vadd.f32 0.0, %v4216
    %v4218 = vpop.f32.mrb[0].mxu0
    %4219 = vmatprep.mubr.f32.mxu0 %v1996
    %4220 = vmatmul.mubr.f32.gmra.mrb[0].mxu0 %v658
    %v4221 = vpop.f32.mrb[0].mxu0
    %v4222 = vadd.f32 0.0, %v4221
    %v4223 = vpop.f32.mrb[0].mxu0
    %4224 = vmatprep.mubr.f32.mxu0 %v1999
    %4225 = vmatmul.mubr.f32.gmra.mrb[0].mxu0 %v660
    %v4226 = vpop.f32.mrb[0].mxu0
    %v4227 = vadd.f32 0.0, %v4226
    %v4228 = vpop.f32.mrb[0].mxu0
    %4229 = vmatprep.mubr.f32.mxu0 %v2002
    %4230 = vmatmul.mubr.f32.gmra.mrb[0].mxu0 %v662
    %v4231 = vpop.f32.mrb[0].mxu0
    %v4232 = vadd.f32 0.0, %v4231
    %v4233 = vpop.f32.mrb[0].mxu0
    %4234 = vmatprep.mubr.f32.mxu0 %v2005
    %4235 = vmatmul.mubr.f32.gmra.mrb[0].mxu0 %v664
    %v4236 = vpop.f32.mrb[0].mxu0
    %v4237 = vadd.f32 0.0, %v4236
    %v4238 = vpop.f32.mrb[0].mxu0
    %4239 = vmatprep.mubr.f32.mxu0 %v2008
    %4240 = vmatmul.mubr.f32.gmra.mrb[0].mxu0 %v666
    %v4241 = vpop.f32.mrb[0].mxu0
    %v4242 = vadd.f32 0.0, %v4241
    %v4243 = vpop.f32.mrb[0].mxu0
    %4244 = vmatprep.mubr.f32.mxu0 %v2011
    %4245 = vmatmul.mubr.f32.gmra.mrb[0].mxu0 %v668
    %v4246 = vpop.f32.mrb[0].mxu0
    %v4247 = vadd.f32 0.0, %v4246
    %v4248 = vpop.f32.mrb[0].mxu0
    %4249 = vmatprep.mubr.f32.mxu0 %v2014
    %4250 = vmatmul.mubr.f32.gmra.mrb[0].mxu0 %v670
    %v4251 = vpop.f32.mrb[0].mxu0
    %v4252 = vadd.f32 0.0, %v4251
    %v4253 = vpop.f32.mrb[0].mxu0
    %4254 = vmatprep.mubr.f32.mxu0 %v2017
    %4255 = vmatmul.mubr.f32.gmra.mrb[0].mxu0 %v672
    %v4256 = vpop.f32.mrb[0].mxu0
    %v4257 = vadd.f32 0.0, %v4256
    %v4258 = vpop.f32.mrb[0].mxu0
    %4259 = vmatprep.mubr.f32.mxu0 %v2020
    %4260 = vmatmul.mubr.f32.gmra.mrb[0].mxu0 %v674
    %v4261 = vpop.f32.mrb[0].mxu0
    %v4262 = vadd.f32 0.0, %v4261
    %v4263 = vpop.f32.mrb[0].mxu0
    %4264 = vmatprep.mubr.f32.mxu0 %v2023
    %4265 = vmatmul.mubr.f32.gmra.mrb[0].mxu0 %v676
    %v4266 = vpop.f32.mrb[0].mxu0
    %v4267 = vadd.f32 0.0, %v4266
    %v4268 = vpop.f32.mrb[0].mxu0
    %4269 = vmatprep.mubr.f32.mxu0 %v2026
    %4270 = vmatmul.mubr.f32.gmra.mrb[0].mxu0 %v678
    %v4271 = vpop.f32.mrb[0].mxu0
    %v4272 = vadd.f32 0.0, %v4271
    %v4273 = vpop.f32.mrb[0].mxu0
    %4274 = vmatprep.mubr.f32.mxu0 %v2029
    %4275 = vmatmul.mubr.f32.gmra.mrb[0].mxu0 %v680
    %v4276 = vpop.f32.mrb[0].mxu0
    %v4277 = vadd.f32 0.0, %v4276
    %v4278 = vpop.f32.mrb[0].mxu0
    %4279 = vmatprep.mubr.f32.mxu0 %v2032
    %4280 = vmatmul.mubr.f32.gmra.mrb[0].mxu0 %v682
    %v4281 = vpop.f32.mrb[0].mxu0
    %v4282 = vadd.f32 0.0, %v4281
    %v4283 = vpop.f32.mrb[0].mxu0
    %4284 = vmatprep.mubr.f32.mxu0 %v2035
    %4285 = vmatmul.mubr.f32.gmra.mrb[0].mxu0 %v684
    %v4286 = vpop.f32.mrb[0].mxu0
    %v4287 = vadd.f32 0.0, %v4286
    %v4288 = vpop.f32.mrb[0].mxu0
    %4289 = vmatprep.mubr.f32.mxu0 %v2038
    %4290 = vmatmul.mubr.f32.gmra.mrb[0].mxu0 %v686
    %v4291 = vpop.f32.mrb[0].mxu0
    %v4292 = vadd.f32 0.0, %v4291
    %v4293 = vpop.f32.mrb[0].mxu0
    %4294 = vmatprep.mubr.f32.mxu0 %v2041
    %4295 = vmatmul.mubr.f32.gmra.mrb[0].mxu0 %v688
    %v4296 = vpop.f32.mrb[0].mxu0
    %v4297 = vadd.f32 0.0, %v4296
    %v4298 = vpop.f32.mrb[0].mxu0
    %4299 = vmatprep.mubr.f32.mxu0 %v2044
    %4300 = vmatmul.mubr.f32.gmra.mrb[0].mxu0 %v690
    %v4301 = vpop.f32.mrb[0].mxu0
    %v4302 = vadd.f32 0.0, %v4301
    %v4303 = vpop.f32.mrb[0].mxu0
    %4304 = vmatprep.mubr.f32.mxu0 %v2047
    %4305 = vmatmul.mubr.f32.gmra.mrb[0].mxu0 %v692
    %v4306 = vpop.f32.mrb[0].mxu0
    %v4307 = vadd.f32 0.0, %v4306
    %v4308 = vpop.f32.mrb[0].mxu0
    %4309 = vmatprep.mubr.f32.mxu0 %v2050
    %4310 = vmatmul.mubr.f32.gmra.mrb[0].mxu0 %v694
    %v4311 = vpop.f32.mrb[0].mxu0
    %v4312 = vadd.f32 0.0, %v4311
    %v4313 = vpop.f32.mrb[0].mxu0
    %4314 = vmatprep.mubr.f32.mxu0 %v2053
    %4315 = vmatmul.mubr.f32.gmra.mrb[0].mxu0 %v696
    %v4316 = vpop.f32.mrb[0].mxu0
    %v4317 = vadd.f32 0.0, %v4316
    %v4318 = vpop.f32.mrb[0].mxu0
    %4319 = vmatprep.mubr.f32.mxu0 %v2056
    %4320 = vmatmul.mubr.f32.gmra.mrb[0].mxu0 %v698
    %v4321 = vpop.f32.mrb[0].mxu0
    %v4322 = vadd.f32 0.0, %v4321
    %v4323 = vpop.f32.mrb[0].mxu0
    %4324 = vmatprep.mubr.f32.mxu0 %v2059
    %4325 = vmatmul.mubr.f32.gmra.mrb[0].mxu0 %v700
    %v4326 = vpop.f32.mrb[0].mxu0
    %v4327 = vadd.f32 0.0, %v4326
    %v4328 = vpop.f32.mrb[0].mxu0
    %4329 = vmatprep.mubr.f32.mxu0 %v2062
    %4330 = vmatmul.mubr.f32.gmra.mrb[0].mxu0 %v702
    %v4331 = vpop.f32.mrb[0].mxu0
    %v4332 = vadd.f32 0.0, %v4331
    %v4333 = vpop.f32.mrb[0].mxu0
    %4334 = vmatprep.mubr.f32.mxu0 %v2065
    %4335 = vmatmul.mubr.f32.gmra.mrb[0].mxu0 %v704
    %v4336 = vpop.f32.mrb[0].mxu0
    %v4337 = vadd.f32 0.0, %v4336
    %v4338 = vpop.f32.mrb[0].mxu0
    %4339 = vmatprep.mubr.f32.mxu0 %v2068
    %4340 = vmatmul.mubr.f32.gmra.mrb[0].mxu0 %v706
    %v4341 = vpop.f32.mrb[0].mxu0
    %v4342 = vadd.f32 0.0, %v4341
    %v4343 = vpop.f32.mrb[0].mxu0
    %4344 = vmatprep.mubr.f32.mxu0 %v2071
    %4345 = vmatmul.mubr.f32.gmra.mrb[0].mxu0 %v708
    %v4346 = vpop.f32.mrb[0].mxu0
    %v4347 = vadd.f32 0.0, %v4346
    %v4348 = vpop.f32.mrb[0].mxu0
    %4349 = vmatprep.mubr.f32.mxu0 %v2074
    %4350 = vmatmul.mubr.f32.gmra.mrb[0].mxu0 %v710
    %v4351 = vpop.f32.mrb[0].mxu0
    %v4352 = vadd.f32 0.0, %v4351
    %v4353 = vpop.f32.mrb[0].mxu0
    %4354 = vmatprep.mubr.f32.mxu0 %v2077
    %4355 = vmatmul.mubr.f32.gmra.mrb[0].mxu0 %v712
    %v4356 = vpop.f32.mrb[0].mxu0
    %v4357 = vadd.f32 0.0, %v4356
    %v4358 = vpop.f32.mrb[0].mxu0
    %4359 = vmatprep.mubr.f32.mxu0 %v2080
    %4360 = vmatmul.mubr.f32.gmra.mrb[0].mxu0 %v714
    %v4361 = vpop.f32.mrb[0].mxu0
    %v4362 = vadd.f32 0.0, %v4361
    %v4363 = vpop.f32.mrb[0].mxu0
    %4364 = vmatprep.mubr.f32.mxu0 %v2083
    %4365 = vmatmul.mubr.f32.gmra.mrb[0].mxu0 %v716
    %v4366 = vpop.f32.mrb[0].mxu0
    %v4367 = vadd.f32 0.0, %v4366
    %v4368 = vpop.f32.mrb[0].mxu0
    %4369 = vmatprep.mubr.f32.mxu0 %v2086
    %4370 = vmatmul.mubr.f32.gmra.mrb[0].mxu0 %v718
    %v4371 = vpop.f32.mrb[0].mxu0
    %v4372 = vadd.f32 0.0, %v4371
    %v4373 = vpop.f32.mrb[0].mxu0
    %4374 = vmatprep.mubr.f32.mxu0 %v2089
    %4375 = vmatmul.mubr.f32.gmra.mrb[0].mxu0 %v720
    %v4376 = vpop.f32.mrb[0].mxu0
    %v4377 = vadd.f32 0.0, %v4376
    %v4378 = vpop.f32.mrb[0].mxu0
    %4379 = vmatprep.mubr.f32.mxu0 %v2092
    %4380 = vmatmul.mubr.f32.gmra.mrb[0].mxu0 %v722
    %v4381 = vpop.f32.mrb[0].mxu0
    %v4382 = vadd.f32 0.0, %v4381
    %v4383 = vpop.f32.mrb[0].mxu0
    %4384 = vmatprep.mubr.f32.mxu0 %v2095
    %4385 = vmatmul.mubr.f32.gmra.mrb[0].mxu0 %v724
    %v4386 = vpop.f32.mrb[0].mxu0
    %v4387 = vadd.f32 0.0, %v4386
    %v4388 = vpop.f32.mrb[0].mxu0
    %4389 = vmatprep.mubr.f32.mxu0 %v2098
    %4390 = vmatmul.mubr.f32.gmra.mrb[0].mxu0 %v726
    %v4391 = vpop.f32.mrb[0].mxu0
    %v4392 = vadd.f32 0.0, %v4391
    %v4393 = vpop.f32.mrb[0].mxu0
    %4394 = vmatprep.mubr.f32.mxu0 %v2101
    %4395 = vmatmul.mubr.f32.gmra.mrb[0].mxu0 %v728
    %v4396 = vpop.f32.mrb[0].mxu0
    %v4397 = vadd.f32 0.0, %v4396
    %v4398 = vpop.f32.mrb[0].mxu0
    %4399 = vmatprep.mubr.f32.mxu0 %v2104
    %4400 = vmatmul.mubr.f32.gmra.mrb[0].mxu0 %v730
    %v4401 = vpop.f32.mrb[0].mxu0
    %v4402 = vadd.f32 0.0, %v4401
    %v4403 = vpop.f32.mrb[0].mxu0
    %4404 = vmatprep.mubr.f32.mxu0 %v2107
    %4405 = vmatmul.mubr.f32.gmra.mrb[0].mxu0 %v732
    %v4406 = vpop.f32.mrb[0].mxu0
    %v4407 = vadd.f32 0.0, %v4406
    %v4408 = vpop.f32.mrb[0].mxu0
    %4409 = vmatprep.mubr.f32.mxu0 %v2110
    %4410 = vmatmul.mubr.f32.gmra.mrb[0].mxu0 %v734
    %v4411 = vpop.f32.mrb[0].mxu0
    %v4412 = vadd.f32 0.0, %v4411
    %v4413 = vpop.f32.mrb[0].mxu0
    %4414 = vmatprep.mubr.f32.mxu0 %v2113
    %4415 = vmatmul.mubr.f32.gmra.mrb[0].mxu0 %v736
    %v4416 = vpop.f32.mrb[0].mxu0
    %v4417 = vadd.f32 0.0, %v4416
    %v4418 = vpop.f32.mrb[0].mxu0
    %4419 = vmatprep.mubr.f32.mxu0 %v2116
    %4420 = vmatmul.mubr.f32.gmra.mrb[0].mxu0 %v738
    %v4421 = vpop.f32.mrb[0].mxu0
    %v4422 = vadd.f32 0.0, %v4421
    %v4423 = vpop.f32.mrb[0].mxu0
    %4424 = vmatprep.mubr.f32.mxu0 %v2119
    %4425 = vmatmul.mubr.f32.gmra.mrb[0].mxu0 %v740
    %v4426 = vpop.f32.mrb[0].mxu0
    %v4427 = vadd.f32 0.0, %v4426
    %v4428 = vpop.f32.mrb[0].mxu0
    %4429 = vmatprep.mubr.f32.mxu0 %v2122
    %4430 = vmatmul.mubr.f32.gmra.mrb[0].mxu0 %v742
    %v4431 = vpop.f32.mrb[0].mxu0
    %v4432 = vadd.f32 0.0, %v4431
    %v4433 = vpop.f32.mrb[0].mxu0
    %4434 = vmatprep.mubr.f32.mxu0 %v2125
    %4435 = vmatmul.mubr.f32.gmra.mrb[0].mxu0 %v744
    %v4436 = vpop.f32.mrb[0].mxu0
    %v4437 = vadd.f32 0.0, %v4436
    %v4438 = vpop.f32.mrb[0].mxu0
    %4439 = vmatprep.mubr.f32.mxu0 %v2128
    %4440 = vmatmul.mubr.f32.gmra.mrb[0].mxu0 %v746
    %v4441 = vpop.f32.mrb[0].mxu0
    %v4442 = vadd.f32 0.0, %v4441
    %v4443 = vpop.f32.mrb[0].mxu0
    %4444 = vmatprep.mubr.f32.mxu0 %v2131
    %4445 = vmatmul.mubr.f32.gmra.mrb[0].mxu0 %v748
    %v4446 = vpop.f32.mrb[0].mxu0
    %v4447 = vadd.f32 0.0, %v4446
    %v4448 = vpop.f32.mrb[0].mxu0
    %4449 = vmatprep.mubr.f32.mxu0 %v2134
    %4450 = vmatmul.mubr.f32.gmra.mrb[0].mxu0 %v750
    %v4451 = vpop.f32.mrb[0].mxu0
    %v4452 = vadd.f32 0.0, %v4451
    %v4453 = vpop.f32.mrb[0].mxu0
    %4454 = vmatprep.mubr.f32.mxu0 %v2137
    %4455 = vmatmul.mubr.f32.gmra.mrb[0].mxu0 %v752
    %v4456 = vpop.f32.mrb[0].mxu0
    %v4457 = vadd.f32 0.0, %v4456
    %v4458 = vpop.f32.mrb[0].mxu0
    %4459 = vmatprep.mubr.f32.mxu0 %v2140
    %4460 = vmatmul.mubr.f32.gmra.mrb[0].mxu0 %v754
    %v4461 = vpop.f32.mrb[0].mxu0
    %v4462 = vadd.f32 0.0, %v4461
    %v4463 = vpop.f32.mrb[0].mxu0
    %4464 = vmatprep.mubr.f32.mxu0 %v2143
    %4465 = vmatmul.mubr.f32.gmra.mrb[0].mxu0 %v756
    %v4466 = vpop.f32.mrb[0].mxu0
    %v4467 = vadd.f32 0.0, %v4466
    %v4468 = vpop.f32.mrb[0].mxu0
    %4469 = vmatprep.mubr.f32.mxu0 %v2146
    %4470 = vmatmul.mubr.f32.gmra.mrb[0].mxu0 %v758
    %v4471 = vpop.f32.mrb[0].mxu0
    %v4472 = vadd.f32 0.0, %v4471
    %v4473 = vpop.f32.mrb[0].mxu0
    %4474 = vmatprep.mubr.f32.mxu0 %v2149
    %4475 = vmatmul.mubr.f32.gmra.mrb[0].mxu0 %v760
    %v4476 = vpop.f32.mrb[0].mxu0
    %v4477 = vadd.f32 0.0, %v4476
    %v4478 = vpop.f32.mrb[0].mxu0
    %4479 = vmatprep.mubr.f32.mxu0 %v2152
    %4480 = vmatmul.mubr.f32.gmra.mrb[0].mxu0 %v762
    %v4481 = vpop.f32.mrb[0].mxu0
    %v4482 = vadd.f32 0.0, %v4481
    %v4483 = vpop.f32.mrb[0].mxu0
    %4484 = vmatprep.mubr.f32.mxu0 %v2155
    %4485 = vmatmul.mubr.f32.gmra.mrb[0].mxu0 %v764
    %v4486 = vpop.f32.mrb[0].mxu0
    %v4487 = vadd.f32 0.0, %v4486
    %v4488 = vpop.f32.mrb[0].mxu0
    %4489 = vmatprep.mubr.f32.mxu0 %v2158
    %4490 = vmatmul.mubr.f32.gmra.mrb[0].mxu0 %v766
    %v4491 = vpop.f32.mrb[0].mxu0
    %v4492 = vadd.f32 0.0, %v4491
    %v4493 = vpop.f32.mrb[0].mxu0
    %4494 = vmatprep.mubr.f32.mxu0 %v2161
    %4495 = vmatmul.mubr.f32.gmra.mrb[0].mxu0 %v768
    %v4496 = vpop.f32.mrb[0].mxu0
    %v4497 = vadd.f32 0.0, %v4496
    %v4498 = vpop.f32.mrb[0].mxu0
    %4499 = vmatprep.mubr.f32.mxu0 %v2164
    %4500 = vmatmul.mubr.f32.gmra.mrb[0].mxu0 %v770
    %v4501 = vpop.f32.mrb[0].mxu0
    %v4502 = vadd.f32 0.0, %v4501
    %v4503 = vpop.f32.mrb[0].mxu0
    %4504 = vmatprep.mubr.f32.mxu0 %v2167
    %4505 = vmatmul.mubr.f32.gmra.mrb[0].mxu0 %v772
    %v4506 = vpop.f32.mrb[0].mxu0
    %v4507 = vadd.f32 0.0, %v4506
    %v4508 = vpop.f32.mrb[0].mxu0
    %4509 = vmatprep.mubr.f32.mxu0 %v2170
    %4510 = vmatmul.mubr.f32.gmra.mrb[0].mxu0 %v774
    %v4511 = vpop.f32.mrb[0].mxu0
    %v4512 = vadd.f32 0.0, %v4511
    %v4513 = vpop.f32.mrb[0].mxu0
    %4514 = vmatprep.mubr.f32.mxu0 %v2173
    %4515 = vmatmul.mubr.f32.gmra.mrb[0].mxu0 %v776
    %v4516 = vpop.f32.mrb[0].mxu0
    %v4517 = vadd.f32 0.0, %v4516
    %v4518 = vpop.f32.mrb[0].mxu0
    %4519 = vmatprep.mubr.f32.mxu0 %v2176
    %4520 = vmatmul.mubr.f32.gmra.mrb[0].mxu0 %v778
    %v4521 = vpop.f32.mrb[0].mxu0
    %v4522 = vadd.f32 0.0, %v4521
    %v4523 = vpop.f32.mrb[0].mxu0
    %4524 = vmatprep.mubr.f32.mxu0 %v2179
    %4525 = vmatmul.mubr.f32.gmra.mrb[0].mxu0 %v780
    %v4526 = vpop.f32.mrb[0].mxu0
    %v4527 = vadd.f32 0.0, %v4526
    %v4528 = vpop.f32.mrb[0].mxu0
    %4529 = vmatprep.mubr.f32.mxu0 %v2182
    %4530 = vmatmul.mubr.f32.gmra.mrb[0].mxu0 %v782
    %v4531 = vpop.f32.mrb[0].mxu0
    %v4532 = vadd.f32 0.0, %v4531
    %v4533 = vpop.f32.mrb[0].mxu0
    %4534 = vmatprep.mubr.f32.mxu0 %v2185
    %4535 = vmatmul.mubr.f32.gmra.mrb[0].mxu0 %v784
    %v4536 = vpop.f32.mrb[0].mxu0
    %v4537 = vadd.f32 0.0, %v4536
    %v4538 = vpop.f32.mrb[0].mxu0
    %4539 = vmatprep.mubr.f32.mxu0 %v2188
    %4540 = vmatmul.mubr.f32.gmra.mrb[0].mxu0 %v786
    %v4541 = vpop.f32.mrb[0].mxu0
    %v4542 = vadd.f32 0.0, %v4541
    %v4543 = vpop.f32.mrb[0].mxu0
    %4544 = vmatprep.mubr.f32.mxu0 %v2191
    %4545 = vmatmul.mubr.f32.gmra.mrb[0].mxu0 %v788
    %v4546 = vpop.f32.mrb[0].mxu0
    %v4547 = vadd.f32 0.0, %v4546
    %v4548 = vpop.f32.mrb[0].mxu0
    %4549 = vmatprep.mubr.f32.mxu0 %v2194
    %4550 = vmatmul.mubr.f32.gmra.mrb[0].mxu0 %v790
    %v4551 = vpop.f32.mrb[0].mxu0
    %v4552 = vadd.f32 0.0, %v4551
    %v4553 = vpop.f32.mrb[0].mxu0
    %4554 = vmatprep.mubr.f32.mxu0 %v2197
    %4555 = vmatmul.mubr.f32.gmra.mrb[0].mxu0 %v792
    %v4556 = vpop.f32.mrb[0].mxu0
    %v4557 = vadd.f32 0.0, %v4556
    %v4558 = vpop.f32.mrb[0].mxu0
    %4559 = vmatprep.mubr.f32.mxu0 %v2200
    %4560 = vmatmul.mubr.f32.gmra.mrb[0].mxu0 %v794
    %v4561 = vpop.f32.mrb[0].mxu0
    %v4562 = vadd.f32 0.0, %v4561
    %v4563 = vpop.f32.mrb[0].mxu0
    %4564 = vmatprep.mubr.f32.mxu0 %v2203
    %4565 = vmatmul.mubr.f32.gmra.mrb[0].mxu0 %v796
    %v4566 = vpop.f32.mrb[0].mxu0
    %v4567 = vadd.f32 0.0, %v4566
    %v4568 = vpop.f32.mrb[0].mxu0
    %4569 = vmatprep.mubr.f32.mxu0 %v2206
    %4570 = vmatmul.mubr.f32.gmra.mrb[0].mxu0 %v798
    %v4571 = vpop.f32.mrb[0].mxu0
    %v4572 = vadd.f32 0.0, %v4571
    %v4573 = vpop.f32.mrb[0].mxu0
    %4574 = vmatprep.mubr.f32.mxu0 %v2209
    %4575 = vmatmul.mubr.f32.gmra.mrb[0].mxu0 %v800
    %v4576 = vpop.f32.mrb[0].mxu0
    %v4577 = vadd.f32 0.0, %v4576
    %v4578 = vpop.f32.mrb[0].mxu0
    %4579 = vmatprep.mubr.f32.mxu0 %v2212
    %4580 = vmatmul.mubr.f32.gmra.mrb[0].mxu0 %v802
    %v4581 = vpop.f32.mrb[0].mxu0
    %v4582 = vadd.f32 0.0, %v4581
    %v4583 = vpop.f32.mrb[0].mxu0
    %4584 = vmatprep.mubr.f32.mxu0 %v2215
    %4585 = vmatmul.mubr.f32.gmra.mrb[0].mxu0 %v804
    %v4586 = vpop.f32.mrb[0].mxu0
    %v4587 = vadd.f32 0.0, %v4586
    %v4588 = vpop.f32.mrb[0].mxu0
    %4589 = vmatprep.mubr.f32.mxu0 %v2218
    %4590 = vmatmul.mubr.f32.gmra.mrb[0].mxu0 %v806
    %v4591 = vpop.f32.mrb[0].mxu0
    %v4592 = vadd.f32 0.0, %v4591
    %v4593 = vpop.f32.mrb[0].mxu0
    %4594 = vmatprep.mubr.f32.mxu0 %v2221
    %4595 = vmatmul.mubr.f32.gmra.mrb[0].mxu0 %v808
    %v4596 = vpop.f32.mrb[0].mxu0
    %v4597 = vadd.f32 0.0, %v4596
    %v4598 = vpop.f32.mrb[0].mxu0
    %4599 = vmatprep.mubr.f32.mxu0 %v2224
    %4600 = vmatmul.mubr.f32.gmra.mrb[0].mxu0 %v810
    %v4601 = vpop.f32.mrb[0].mxu0
    %v4602 = vadd.f32 0.0, %v4601
    %v4603 = vpop.f32.mrb[0].mxu0
    %4604 = vmatprep.mubr.f32.mxu0 %v2227
    %4605 = vmatmul.mubr.f32.gmra.mrb[0].mxu0 %v812
    %v4606 = vpop.f32.mrb[0].mxu0
    %v4607 = vadd.f32 0.0, %v4606
    %v4608 = vpop.f32.mrb[0].mxu0
    %4609 = vmatprep.mubr.f32.mxu0 %v2230
    %4610 = vmatmul.mubr.f32.gmra.mrb[0].mxu0 %v814
    %v4611 = vpop.f32.mrb[0].mxu0
    %v4612 = vadd.f32 0.0, %v4611
    %v4613 = vpop.f32.mrb[0].mxu0
    %4614 = vmatprep.mubr.f32.mxu0 %v2233
    %4615 = vmatmul.mubr.f32.gmra.mrb[0].mxu0 %v816
    %v4616 = vpop.f32.mrb[0].mxu0
    %v4617 = vadd.f32 0.0, %v4616
    %v4618 = vpop.f32.mrb[0].mxu0
    %4619 = vmatprep.mubr.f32.mxu0 %v2236
    %4620 = vmatmul.mubr.f32.gmra.mrb[0].mxu0 %v818
    %v4621 = vpop.f32.mrb[0].mxu0
    %v4622 = vadd.f32 0.0, %v4621
    %v4623 = vpop.f32.mrb[0].mxu0
    %4624 = vmatprep.mubr.f32.mxu0 %v2239
    %4625 = vmatmul.mubr.f32.gmra.mrb[0].mxu0 %v820
    %v4626 = vpop.f32.mrb[0].mxu0
    %v4627 = vadd.f32 0.0, %v4626
    %v4628 = vpop.f32.mrb[0].mxu0
    %4629 = vmatprep.mubr.f32.mxu0 %v2242
    %4630 = vmatmul.mubr.f32.gmra.mrb[0].mxu0 %v822
    %v4631 = vpop.f32.mrb[0].mxu0
    %v4632 = vadd.f32 0.0, %v4631
    %v4633 = vpop.f32.mrb[0].mxu0
    %4634 = vmatprep.mubr.f32.mxu0 %v2245
    %4635 = vmatmul.mubr.f32.gmra.mrb[0].mxu0 %v824
    %v4636 = vpop.f32.mrb[0].mxu0
    %v4637 = vadd.f32 0.0, %v4636
    %v4638 = vpop.f32.mrb[0].mxu0
    %4639 = vmatprep.mubr.f32.mxu0 %v2248
    %4640 = vmatmul.mubr.f32.gmra.mrb[0].mxu0 %v826
    %v4641 = vpop.f32.mrb[0].mxu0
    %v4642 = vadd.f32 0.0, %v4641
    %v4643 = vpop.f32.mrb[0].mxu0
    %4644 = vmatprep.mubr.f32.mxu0 %v2251
    %4645 = vmatmul.mubr.f32.gmra.mrb[0].mxu0 %v828
    %v4646 = vpop.f32.mrb[0].mxu0
    %v4647 = vadd.f32 0.0, %v4646
    %v4648 = vpop.f32.mrb[0].mxu0
    %4649 = vmatprep.mubr.f32.mxu0 %v2254
    %4650 = vmatmul.mubr.f32.gmra.mrb[0].mxu0 %v830
    %v4651 = vpop.f32.mrb[0].mxu0
    %v4652 = vadd.f32 0.0, %v4651
    %v4653 = vpop.f32.mrb[0].mxu0
    %4654 = vmatprep.mubr.f32.mxu0 %v2257
    %4655 = vmatmul.mubr.f32.gmra.mrb[0].mxu0 %v832
    %v4656 = vpop.f32.mrb[0].mxu0
    %v4657 = vadd.f32 0.0, %v4656
    %v4658 = vpop.f32.mrb[0].mxu0
    %4659 = vmatprep.mubr.f32.mxu0 %v2260
    %4660 = vmatmul.mubr.f32.gmra.mrb[0].mxu0 %v834
    %v4661 = vpop.f32.mrb[0].mxu0
    %v4662 = vadd.f32 0.0, %v4661
    %v4663 = vpop.f32.mrb[0].mxu0
    %4664 = vmatprep.mubr.f32.mxu0 %v2263
    %4665 = vmatmul.mubr.f32.gmra.mrb[0].mxu0 %v836
    %v4666 = vpop.f32.mrb[0].mxu0
    %v4667 = vadd.f32 0.0, %v4666
    %v4668 = vpop.f32.mrb[0].mxu0
    %4669 = vmatprep.mubr.f32.mxu0 %v2266
    %4670 = vmatmul.mubr.f32.gmra.mrb[0].mxu0 %v838
    %v4671 = vpop.f32.mrb[0].mxu0
    %v4672 = vadd.f32 0.0, %v4671
    %v4673 = vpop.f32.mrb[0].mxu0
    %4674 = vmatprep.mubr.f32.mxu0 %v2269
    %4675 = vmatmul.mubr.f32.gmra.mrb[0].mxu0 %v840
    %v4676 = vpop.f32.mrb[0].mxu0
    %v4677 = vadd.f32 0.0, %v4676
    %v4678 = vpop.f32.mrb[0].mxu0
    %4679 = vmatprep.mubr.f32.mxu0 %v2272
    %4680 = vmatmul.mubr.f32.gmra.mrb[0].mxu0 %v842
    %v4681 = vpop.f32.mrb[0].mxu0
    %v4682 = vadd.f32 0.0, %v4681
    %v4683 = vpop.f32.mrb[0].mxu0
    %4684 = vmatprep.mubr.f32.mxu0 %v2275
    %4685 = vmatmul.mubr.f32.gmra.mrb[0].mxu0 %v844
    %v4686 = vpop.f32.mrb[0].mxu0
    %v4687 = vadd.f32 0.0, %v4686
    %v4688 = vpop.f32.mrb[0].mxu0
    %4689 = vmatprep.mubr.f32.mxu0 %v2278
    %4690 = vmatmul.mubr.f32.gmra.mrb[0].mxu0 %v846
    %v4691 = vpop.f32.mrb[0].mxu0
    %v4692 = vadd.f32 0.0, %v4691
    %v4693 = vpop.f32.mrb[0].mxu0
    %4694 = vmatprep.mubr.f32.mxu0 %v2281
    %4695 = vmatmul.mubr.f32.gmra.mrb[0].mxu0 %v848
    %v4696 = vpop.f32.mrb[0].mxu0
    %v4697 = vadd.f32 0.0, %v4696
    %v4698 = vpop.f32.mrb[0].mxu0
    %4699 = vmatprep.mubr.f32.mxu0 %v2284
    %4700 = vmatmul.mubr.f32.gmra.mrb[0].mxu0 %v850
    %v4701 = vpop.f32.mrb[0].mxu0
    %v4702 = vadd.f32 0.0, %v4701
    %v4703 = vpop.f32.mrb[0].mxu0
    %4704 = vmatprep.mubr.f32.mxu0 %v2287
    %4705 = vmatmul.mubr.f32.gmra.mrb[0].mxu0 %v852
    %v4706 = vpop.f32.mrb[0].mxu0
    %v4707 = vadd.f32 0.0, %v4706
    %v4708 = vpop.f32.mrb[0].mxu0
    %4709 = vmatprep.mubr.f32.mxu0 %v2290
    %4710 = vmatmul.mubr.f32.gmra.mrb[0].mxu0 %v854
    %v4711 = vpop.f32.mrb[0].mxu0
    %v4712 = vadd.f32 0.0, %v4711
    %v4713 = vpop.f32.mrb[0].mxu0
    %4714 = vmatprep.mubr.f32.mxu0 %v2293
    %4715 = vmatmul.mubr.f32.gmra.mrb[0].mxu0 %v856
    %v4716 = vpop.f32.mrb[0].mxu0
    %v4717 = vadd.f32 0.0, %v4716
    %v4718 = vpop.f32.mrb[0].mxu0
    %4719 = vmatprep.mubr.f32.mxu0 %v2296
    %4720 = vmatmul.mubr.f32.gmra.mrb[0].mxu0 %v858
    %v4721 = vpop.f32.mrb[0].mxu0
    %v4722 = vadd.f32 0.0, %v4721
    %v4723 = vpop.f32.mrb[0].mxu0
    %4724 = vmatprep.mubr.f32.mxu0 %v2299
    %4725 = vmatmul.mubr.f32.gmra.mrb[0].mxu0 %v860
    %v4726 = vpop.f32.mrb[0].mxu0
    %v4727 = vadd.f32 0.0, %v4726
    %v4728 = vpop.f32.mrb[0].mxu0
    %4729 = vmatprep.mubr.f32.mxu0 %v2302
    %4730 = vmatmul.mubr.f32.gmra.mrb[0].mxu0 %v862
    %v4731 = vpop.f32.mrb[0].mxu0
    %v4732 = vadd.f32 0.0, %v4731
    %v4733 = vpop.f32.mrb[0].mxu0
    %4734 = vmatprep.mubr.f32.mxu0 %v2305
    %4735 = vmatmul.mubr.f32.gmra.mrb[0].mxu0 %v864
    %v4736 = vpop.f32.mrb[0].mxu0
    %v4737 = vadd.f32 0.0, %v4736
    %v4738 = vpop.f32.mrb[0].mxu0
    %4739 = vmatprep.mubr.f32.mxu0 %v2308
    %4740 = vmatmul.mubr.f32.gmra.mrb[0].mxu0 %v866
    %v4741 = vpop.f32.mrb[0].mxu0
    %v4742 = vadd.f32 0.0, %v4741
    %v4743 = vpop.f32.mrb[0].mxu0
    %4744 = vmatprep.mubr.f32.mxu0 %v2311
    %4745 = vmatmul.mubr.f32.gmra.mrb[0].mxu0 %v868
    %v4746 = vpop.f32.mrb[0].mxu0
    %v4747 = vadd.f32 0.0, %v4746
    %v4748 = vpop.f32.mrb[0].mxu0
    %4749 = vmatprep.mubr.f32.mxu0 %v2314
    %4750 = vmatmul.mubr.f32.gmra.mrb[0].mxu0 %v870
    %v4751 = vpop.f32.mrb[0].mxu0
    %v4752 = vadd.f32 0.0, %v4751
    %v4753 = vpop.f32.mrb[0].mxu0
    %4754 = vmatprep.mubr.f32.mxu0 %v2317
    %4755 = vmatmul.mubr.f32.gmra.mrb[0].mxu0 %v872
    %v4756 = vpop.f32.mrb[0].mxu0
    %v4757 = vadd.f32 0.0, %v4756
    %v4758 = vpop.f32.mrb[0].mxu0
    %4759 = vmatprep.mubr.f32.mxu0 %v2320
    %4760 = vmatmul.mubr.f32.gmra.mrb[0].mxu0 %v874
    %v4761 = vpop.f32.mrb[0].mxu0
    %v4762 = vadd.f32 0.0, %v4761
    %v4763 = vpop.f32.mrb[0].mxu0
    %4764 = vmatprep.mubr.f32.mxu0 %v2323
    %4765 = vmatmul.mubr.f32.gmra.mrb[0].mxu0 %v876
    %v4766 = vpop.f32.mrb[0].mxu0
    %v4767 = vadd.f32 0.0, %v4766
    %v4768 = vpop.f32.mrb[0].mxu0
    %4769 = vmatprep.mubr.f32.mxu0 %v2326
    %4770 = vmatmul.mubr.f32.gmra.mrb[0].mxu0 %v878
    %v4771 = vpop.f32.mrb[0].mxu0
    %v4772 = vadd.f32 0.0, %v4771
    %v4773 = vpop.f32.mrb[0].mxu0
    %4774 = vmatprep.mubr.f32.mxu0 %v2329
    %4775 = vmatmul.mubr.f32.gmra.mrb[0].mxu0 %v880
    %v4776 = vpop.f32.mrb[0].mxu0
    %v4777 = vadd.f32 0.0, %v4776
    %v4778 = vpop.f32.mrb[0].mxu0
    %4779 = vmatprep.mubr.f32.mxu0 %v2332
    %4780 = vmatmul.mubr.f32.gmra.mrb[0].mxu0 %v882
    %v4781 = vpop.f32.mrb[0].mxu0
    %v4782 = vadd.f32 0.0, %v4781
    %v4783 = vpop.f32.mrb[0].mxu0
    %4784 = vmatprep.mubr.f32.mxu0 %v2335
    %4785 = vmatmul.mubr.f32.gmra.mrb[0].mxu0 %v884
    %v4786 = vpop.f32.mrb[0].mxu0
    %v4787 = vadd.f32 0.0, %v4786
    %v4788 = vpop.f32.mrb[0].mxu0
    %4789 = vmatprep.mubr.f32.mxu0 %v2338
    %4790 = vmatmul.mubr.f32.gmra.mrb[0].mxu0 %v886
    %v4791 = vpop.f32.mrb[0].mxu0
    %v4792 = vadd.f32 0.0, %v4791
    %v4793 = vpop.f32.mrb[0].mxu0
    %4794 = vmatprep.mubr.f32.mxu0 %v2341
    %4795 = vmatmul.mubr.f32.gmra.mrb[0].mxu0 %v888
    %v4796 = vpop.f32.mrb[0].mxu0
    %v4797 = vadd.f32 0.0, %v4796
    %v4798 = vpop.f32.mrb[0].mxu0
    %4799 = vmatprep.mubr.f32.mxu0 %v2344
    %4800 = vmatmul.mubr.f32.gmra.mrb[0].mxu0 %v890
    %v4801 = vpop.f32.mrb[0].mxu0
    %v4802 = vadd.f32 0.0, %v4801
    %v4803 = vpop.f32.mrb[0].mxu0
    %4804 = vmatprep.mubr.f32.mxu0 %v2347
    %4805 = vmatmul.mubr.f32.gmra.mrb[0].mxu0 %v892
    %v4806 = vpop.f32.mrb[0].mxu0
    %v4807 = vadd.f32 0.0, %v4806
    %v4808 = vpop.f32.mrb[0].mxu0
    %4809 = vmatprep.mubr.f32.mxu0 %v2350
    %4810 = vmatmul.mubr.f32.gmra.mrb[0].mxu0 %v894
    %v4811 = vpop.f32.mrb[0].mxu0
    %v4812 = vadd.f32 0.0, %v4811
    %v4813 = vpop.f32.mrb[0].mxu0
    %4814 = vmatprep.mubr.f32.mxu0 %v2353
    %4815 = vmatmul.mubr.f32.gmra.mrb[0].mxu0 %v896
    %v4816 = vpop.f32.mrb[0].mxu0
    %v4817 = vadd.f32 0.0, %v4816
    %v4818 = vpop.f32.mrb[0].mxu0
    %4819 = vmatprep.mubr.f32.mxu0 %v2356
    %4820 = vmatmul.mubr.f32.gmra.mrb[0].mxu0 %v898
    %v4821 = vpop.f32.mrb[0].mxu0
    %v4822 = vadd.f32 0.0, %v4821
    %v4823 = vpop.f32.mrb[0].mxu0
    %4824 = vmatprep.mubr.f32.mxu0 %v2359
    %4825 = vmatmul.mubr.f32.gmra.mrb[0].mxu0 %v900
    %v4826 = vpop.f32.mrb[0].mxu0
    %v4827 = vadd.f32 0.0, %v4826
    %v4828 = vpop.f32.mrb[0].mxu0
    %4829 = vmatprep.mubr.f32.mxu0 %v2362
    %4830 = vmatmul.mubr.f32.gmra.mrb[0].mxu0 %v902
    %v4831 = vpop.f32.mrb[0].mxu0
    %v4832 = vadd.f32 0.0, %v4831
    %v4833 = vpop.f32.mrb[0].mxu0
    %4834 = vmatprep.mubr.f32.mxu0 %v2365
    %4835 = vmatmul.mubr.f32.gmra.mrb[0].mxu0 %v904
    %v4836 = vpop.f32.mrb[0].mxu0
    %v4837 = vadd.f32 0.0, %v4836
    %v4838 = vpop.f32.mrb[0].mxu0
    %4839 = vmatprep.mubr.f32.mxu0 %v2368
    %4840 = vmatmul.mubr.f32.gmra.mrb[0].mxu0 %v906
    %v4841 = vpop.f32.mrb[0].mxu0
    %v4842 = vadd.f32 0.0, %v4841
    %v4843 = vpop.f32.mrb[0].mxu0
    %4844 = vmatprep.mubr.f32.mxu0 %v2371
    %4845 = vmatmul.mubr.f32.gmra.mrb[0].mxu0 %v908
    %v4846 = vpop.f32.mrb[0].mxu0
    %v4847 = vadd.f32 0.0, %v4846
    %v4848 = vpop.f32.mrb[0].mxu0
    %4849 = vmatprep.mubr.f32.mxu0 %v2374
    %4850 = vmatmul.mubr.f32.gmra.mrb[0].mxu0 %v910
    %v4851 = vpop.f32.mrb[0].mxu0
    %v4852 = vadd.f32 0.0, %v4851
    %v4853 = vpop.f32.mrb[0].mxu0
    %4854 = vmatprep.mubr.f32.mxu0 %v2377
    %4855 = vmatmul.mubr.f32.gmra.mrb[0].mxu0 %v912
    %v4856 = vpop.f32.mrb[0].mxu0
    %v4857 = vadd.f32 0.0, %v4856
    %v4858 = vpop.f32.mrb[0].mxu0
    %4859 = vmatprep.mubr.f32.mxu0 %v2380
    %4860 = vmatmul.mubr.f32.gmra.mrb[0].mxu0 %v914
    %v4861 = vpop.f32.mrb[0].mxu0
    %v4862 = vadd.f32 0.0, %v4861
    %v4863 = vpop.f32.mrb[0].mxu0
    %4864 = vmatprep.mubr.f32.mxu0 %v2383
    %4865 = vmatmul.mubr.f32.gmra.mrb[0].mxu0 %v916
    %v4866 = vpop.f32.mrb[0].mxu0
    %v4867 = vadd.f32 0.0, %v4866
    %v4868 = vpop.f32.mrb[0].mxu0
    %4869 = vmatprep.mubr.f32.mxu0 %v2386
    %4870 = vmatmul.mubr.f32.gmra.mrb[0].mxu0 %v918
    %v4871 = vpop.f32.mrb[0].mxu0
    %v4872 = vadd.f32 0.0, %v4871
    %v4873 = vpop.f32.mrb[0].mxu0
    %4874 = vmatprep.mubr.f32.mxu0 %v2389
    %4875 = vmatmul.mubr.f32.gmra.mrb[0].mxu0 %v920
    %v4876 = vpop.f32.mrb[0].mxu0
    %v4877 = vadd.f32 0.0, %v4876
    %v4878 = vpop.f32.mrb[0].mxu0
    %4879 = vmatprep.mubr.f32.mxu0 %v2392
    %4880 = vmatmul.mubr.f32.gmra.mrb[0].mxu0 %v922
    %v4881 = vpop.f32.mrb[0].mxu0
    %v4882 = vadd.f32 0.0, %v4881
    %v4883 = vpop.f32.mrb[0].mxu0
    %4884 = vmatprep.mubr.f32.mxu0 %v2395
    %4885 = vmatmul.mubr.f32.gmra.mrb[0].mxu0 %v924
    %v4886 = vpop.f32.mrb[0].mxu0
    %v4887 = vadd.f32 0.0, %v4886
    %v4888 = vpop.f32.mrb[0].mxu0
    %4889 = vmatprep.mubr.f32.mxu0 %v2398
    %4890 = vmatmul.mubr.f32.gmra.mrb[0].mxu0 %v926
    %v4891 = vpop.f32.mrb[0].mxu0
    %v4892 = vadd.f32 0.0, %v4891
    %v4893 = vpop.f32.mrb[0].mxu0
    %4894 = vmatprep.mubr.f32.mxu0 %v2401
    %4895 = vmatmul.mubr.f32.gmra.mrb[0].mxu0 %v928
    %v4896 = vpop.f32.mrb[0].mxu0
    %v4897 = vadd.f32 0.0, %v4896
    %v4898 = vpop.f32.mrb[0].mxu0
    %4899 = vmatprep.mubr.f32.mxu0 %v2404
    %4900 = vmatmul.mubr.f32.gmra.mrb[0].mxu0 %v930
    %v4901 = vpop.f32.mrb[0].mxu0
    %v4902 = vadd.f32 0.0, %v4901
    %v4903 = vpop.f32.mrb[0].mxu0
    %4904 = vmatprep.mubr.f32.mxu0 %v2407
    %4905 = vmatmul.mubr.f32.gmra.mrb[0].mxu0 %v932
    %v4906 = vpop.f32.mrb[0].mxu0
    %v4907 = vadd.f32 0.0, %v4906
    %v4908 = vpop.f32.mrb[0].mxu0
    %4909 = vmatprep.mubr.f32.mxu0 %v2410
    %4910 = vmatmul.mubr.f32.gmra.mrb[0].mxu0 %v934
    %v4911 = vpop.f32.mrb[0].mxu0
    %v4912 = vadd.f32 0.0, %v4911
    %v4913 = vpop.f32.mrb[0].mxu0
    %4914 = vmatprep.mubr.f32.mxu0 %v2413
    %4915 = vmatmul.mubr.f32.gmra.mrb[0].mxu0 %v936
    %v4916 = vpop.f32.mrb[0].mxu0
    %v4917 = vadd.f32 0.0, %v4916
    %v4918 = vpop.f32.mrb[0].mxu0
    %4919 = vmatprep.mubr.f32.mxu0 %v2416
    %4920 = vmatmul.mubr.f32.gmra.mrb[0].mxu0 %v938
    %v4921 = vpop.f32.mrb[0].mxu0
    %v4922 = vadd.f32 0.0, %v4921
    %v4923 = vpop.f32.mrb[0].mxu0
    %4924 = vmatprep.mubr.f32.mxu0 %v2419
    %4925 = vmatmul.mubr.f32.gmra.mrb[0].mxu0 %v940
    %v4926 = vpop.f32.mrb[0].mxu0
    %v4927 = vadd.f32 0.0, %v4926
    %v4928 = vpop.f32.mrb[0].mxu0
    %4929 = vmatprep.mubr.f32.mxu0 %v2422
    %4930 = vmatmul.mubr.f32.gmra.mrb[0].mxu0 %v942
    %v4931 = vpop.f32.mrb[0].mxu0
    %v4932 = vadd.f32 0.0, %v4931
    %v4933 = vpop.f32.mrb[0].mxu0
    %4934 = vmatprep.mubr.f32.mxu0 %v2425
    %4935 = vmatmul.mubr.f32.gmra.mrb[0].mxu0 %v944
    %v4936 = vpop.f32.mrb[0].mxu0
    %v4937 = vadd.f32 0.0, %v4936
    %v4938 = vpop.f32.mrb[0].mxu0
    %4939 = vmatprep.mubr.f32.mxu0 %v2428
    %4940 = vmatmul.mubr.f32.gmra.mrb[0].mxu0 %v946
    %v4941 = vpop.f32.mrb[0].mxu0
    %v4942 = vadd.f32 0.0, %v4941
    %v4943 = vpop.f32.mrb[0].mxu0
    %4944 = vmatprep.mubr.f32.mxu0 %v2431
    %4945 = vmatmul.mubr.f32.gmra.mrb[0].mxu0 %v948
    %v4946 = vpop.f32.mrb[0].mxu0
    %v4947 = vadd.f32 0.0, %v4946
    %v4948 = vpop.f32.mrb[0].mxu0
    %4949 = vmatprep.mubr.f32.mxu0 %v2434
    %4950 = vmatmul.mubr.f32.gmra.mrb[0].mxu0 %v950
    %v4951 = vpop.f32.mrb[0].mxu0
    %v4952 = vadd.f32 0.0, %v4951
    %v4953 = vpop.f32.mrb[0].mxu0
    %4954 = vmatprep.mubr.f32.mxu0 %v2437
    %4955 = vmatmul.mubr.f32.gmra.mrb[0].mxu0 %v952
    %v4956 = vpop.f32.mrb[0].mxu0
    %v4957 = vadd.f32 0.0, %v4956
    %v4958 = vpop.f32.mrb[0].mxu0
    %4959 = vmatprep.mubr.f32.mxu0 %v2440
    %4960 = vmatmul.mubr.f32.gmra.mrb[0].mxu0 %v954
    %v4961 = vpop.f32.mrb[0].mxu0
    %v4962 = vadd.f32 0.0, %v4961
    %v4963 = vpop.f32.mrb[0].mxu0
    %4964 = vmatprep.mubr.f32.mxu0 %v2443
    %4965 = vmatmul.mubr.f32.gmra.mrb[0].mxu0 %v956
    %v4966 = vpop.f32.mrb[0].mxu0
    %v4967 = vadd.f32 0.0, %v4966
    %v4968 = vpop.f32.mrb[0].mxu0
    %4969 = vmatprep.mubr.f32.mxu0 %v2446
    %4970 = vmatmul.mubr.f32.gmra.mrb[0].mxu0 %v958
    %v4971 = vpop.f32.mrb[0].mxu0
    %v4972 = vadd.f32 0.0, %v4971
    %v4973 = vpop.f32.mrb[0].mxu0
    %4974 = vmatprep.mubr.f32.mxu0 %v2449
    %4975 = vmatmul.mubr.f32.gmra.mrb[0].mxu0 %v960
    %v4976 = vpop.f32.mrb[0].mxu0
    %v4977 = vadd.f32 0.0, %v4976
    %v4978 = vpop.f32.mrb[0].mxu0
    %4979 = vmatprep.mubr.f32.mxu0 %v2452
    %4980 = vmatmul.mubr.f32.gmra.mrb[0].mxu0 %v962
    %v4981 = vpop.f32.mrb[0].mxu0
    %v4982 = vadd.f32 0.0, %v4981
    %v4983 = vpop.f32.mrb[0].mxu0
    %4984 = vmatprep.mubr.f32.mxu0 %v2455
    %4985 = vmatmul.mubr.f32.gmra.mrb[0].mxu0 %v964
    %v4986 = vpop.f32.mrb[0].mxu0
    %v4987 = vadd.f32 0.0, %v4986
    %v4988 = vpop.f32.mrb[0].mxu0
    %4989 = vmatprep.mubr.f32.mxu0 %v2458
    %4990 = vmatmul.mubr.f32.gmra.mrb[0].mxu0 %v966
    %v4991 = vpop.f32.mrb[0].mxu0
    %v4992 = vadd.f32 0.0, %v4991
    %v4993 = vpop.f32.mrb[0].mxu0
    %4994 = vmatprep.mubr.f32.mxu0 %v2461
    %4995 = vmatmul.mubr.f32.gmra.mrb[0].mxu0 %v968
    %v4996 = vpop.f32.mrb[0].mxu0
    %v4997 = vadd.f32 0.0, %v4996
    %v4998 = vpop.f32.mrb[0].mxu0
    %4999 = vmatprep.mubr.f32.mxu0 %v2464
    %5000 = vmatmul.mubr.f32.gmra.mrb[0].mxu0 %v970
    %v5001 = vpop.f32.mrb[0].mxu0
    %v5002 = vadd.f32 0.0, %v5001
    %v5003 = vpop.f32.mrb[0].mxu0
    %5004 = vmatprep.mubr.f32.mxu0 %v2467
    %5005 = vmatmul.mubr.f32.gmra.mrb[0].mxu0 %v972
    %v5006 = vpop.f32.mrb[0].mxu0
    %v5007 = vadd.f32 0.0, %v5006
    %v5008 = vpop.f32.mrb[0].mxu0
    %5009 = vmatprep.mubr.f32.mxu0 %v2470
    %5010 = vmatmul.mubr.f32.gmra.mrb[0].mxu0 %v974
    %v5011 = vpop.f32.mrb[0].mxu0
    %v5012 = vadd.f32 0.0, %v5011
    %v5013 = vpop.f32.mrb[0].mxu0
    %5014 = vmatprep.mubr.f32.mxu0 %v2473
    %5015 = vmatmul.mubr.f32.gmra.mrb[0].mxu0 %v976
    %v5016 = vpop.f32.mrb[0].mxu0
    %v5017 = vadd.f32 0.0, %v5016
    %v5018 = vpop.f32.mrb[0].mxu0
    %5019 = vmatprep.mubr.f32.mxu0 %v2476
    %5020 = vmatmul.mubr.f32.gmra.mrb[0].mxu0 %v978
    %v5021 = vpop.f32.mrb[0].mxu0
    %v5022 = vadd.f32 0.0, %v5021
    %v5023 = vpop.f32.mrb[0].mxu0
    %5024 = vmatprep.mubr.f32.mxu0 %v2479
    %5025 = vmatmul.mubr.f32.gmra.mrb[0].mxu0 %v980
    %v5026 = vpop.f32.mrb[0].mxu0
    %v5027 = vadd.f32 0.0, %v5026
    %v5028 = vpop.f32.mrb[0].mxu0
    %5029 = vmatprep.mubr.f32.mxu0 %v2482
    %5030 = vmatmul.mubr.f32.gmra.mrb[0].mxu0 %v982
    %v5031 = vpop.f32.mrb[0].mxu0
    %v5032 = vadd.f32 0.0, %v5031
    %v5033 = vpop.f32.mrb[0].mxu0
    %5034 = vmatprep.mubr.f32.mxu0 %v2485
    %5035 = vmatmul.mubr.f32.gmra.mrb[0].mxu0 %v984
    %v5036 = vpop.f32.mrb[0].mxu0
    %v5037 = vadd.f32 0.0, %v5036
    %v5038 = vpop.f32.mrb[0].mxu0
    %5039 = vmatprep.mubr.f32.mxu0 %v2488
    %5040 = vmatmul.mubr.f32.gmra.mrb[0].mxu0 %v986
    %v5041 = vpop.f32.mrb[0].mxu0
    %v5042 = vadd.f32 0.0, %v5041
    %v5043 = vpop.f32.mrb[0].mxu0
    %5044 = vmatprep.mubr.f32.mxu0 %v2491
    %5045 = vmatmul.mubr.f32.gmra.mrb[0].mxu0 %v988
    %v5046 = vpop.f32.mrb[0].mxu0
    %v5047 = vadd.f32 0.0, %v5046
    %v5048 = vpop.f32.mrb[0].mxu0
    %5049 = vmatprep.mubr.f32.mxu0 %v2494
    %5050 = vmatmul.mubr.f32.gmra.mrb[0].mxu0 %v990
    %v5051 = vpop.f32.mrb[0].mxu0
    %v5052 = vadd.f32 0.0, %v5051
    %v5053 = vpop.f32.mrb[0].mxu0
    %5054 = vmatprep.mubr.f32.mxu0 %v2497
    %5055 = vmatmul.mubr.f32.gmra.mrb[0].mxu0 %v992
    %v5056 = vpop.f32.mrb[0].mxu0
    %v5057 = vadd.f32 0.0, %v5056
    %v5058 = vpop.f32.mrb[0].mxu0
    %5059 = vmatprep.mubr.f32.mxu0 %v2500
    %5060 = vmatmul.mubr.f32.gmra.mrb[0].mxu0 %v994
    %v5061 = vpop.f32.mrb[0].mxu0
    %v5062 = vadd.f32 0.0, %v5061
    %v5063 = vpop.f32.mrb[0].mxu0
    %5064 = vmatprep.mubr.f32.mxu0 %v2503
    %5065 = vmatmul.mubr.f32.gmra.mrb[0].mxu0 %v996
    %v5066 = vpop.f32.mrb[0].mxu0
    %v5067 = vadd.f32 0.0, %v5066
    %v5068 = vpop.f32.mrb[0].mxu0
    %5069 = vmatprep.mubr.f32.mxu0 %v2506
    %5070 = vmatmul.mubr.f32.gmra.mrb[0].mxu0 %v998
    %v5071 = vpop.f32.mrb[0].mxu0
    %v5072 = vadd.f32 0.0, %v5071
    %v5073 = vpop.f32.mrb[0].mxu0
    %5074 = vmatprep.mubr.f32.mxu0 %v2509
    %5075 = vmatmul.mubr.f32.gmra.mrb[0].mxu0 %v1000
    %v5076 = vpop.f32.mrb[0].mxu0
    %v5077 = vadd.f32 0.0, %v5076
    %v5078 = vpop.f32.mrb[0].mxu0
    %5079 = vmatprep.mubr.f32.mxu0 %v2512
    %5080 = vmatmul.mubr.f32.gmra.mrb[0].mxu0 %v1002
    %v5081 = vpop.f32.mrb[0].mxu0
    %v5082 = vadd.f32 0.0, %v5081
    %v5083 = vpop.f32.mrb[0].mxu0
    %5084 = vmatprep.mubr.f32.mxu0 %v2515
    %5085 = vmatmul.mubr.f32.gmra.mrb[0].mxu0 %v1004
    %v5086 = vpop.f32.mrb[0].mxu0
    %v5087 = vadd.f32 0.0, %v5086
    %v5088 = vpop.f32.mrb[0].mxu0
    %5089 = vmatprep.mubr.f32.mxu0 %v2518
    %5090 = vmatmul.mubr.f32.gmra.mrb[0].mxu0 %v1006
    %v5091 = vpop.f32.mrb[0].mxu0
    %v5092 = vadd.f32 0.0, %v5091
    %v5093 = vpop.f32.mrb[0].mxu0
    %5094 = vmatprep.mubr.f32.mxu0 %v2521
    %5095 = vmatmul.mubr.f32.gmra.mrb[0].mxu0 %v1008
    %v5096 = vpop.f32.mrb[0].mxu0
    %v5097 = vadd.f32 0.0, %v5096
    %v5098 = vpop.f32.mrb[0].mxu0
    %5099 = vmatprep.mubr.f32.mxu0 %v2524
    %5100 = vmatmul.mubr.f32.gmra.mrb[0].mxu0 %v1010
    %v5101 = vpop.f32.mrb[0].mxu0
    %v5102 = vadd.f32 0.0, %v5101
    %v5103 = vpop.f32.mrb[0].mxu0
    %5104 = vmatprep.mubr.f32.mxu0 %v2527
    %5105 = vmatmul.mubr.f32.gmra.mrb[0].mxu0 %v1012
    %v5106 = vpop.f32.mrb[0].mxu0
    %v5107 = vadd.f32 0.0, %v5106
    %v5108 = vpop.f32.mrb[0].mxu0
    %5109 = vmatprep.mubr.f32.mxu0 %v2530
    %5110 = vmatmul.mubr.f32.gmra.mrb[0].mxu0 %v1014
    %v5111 = vpop.f32.mrb[0].mxu0
    %v5112 = vadd.f32 0.0, %v5111
    %v5113 = vpop.f32.mrb[0].mxu0
    %5114 = vmatprep.mubr.f32.mxu0 %v2533
    %5115 = vmatmul.mubr.f32.gmra.mrb[0].mxu0 %v1016
    %v5116 = vpop.f32.mrb[0].mxu0
    %v5117 = vadd.f32 0.0, %v5116
    %v5118 = vpop.f32.mrb[0].mxu0
    %5119 = vmatprep.mubr.f32.mxu0 %v2536
    %5120 = vmatmul.mubr.f32.gmra.mrb[0].mxu0 %v1018
    %v5121 = vpop.f32.mrb[0].mxu0
    %v5122 = vadd.f32 0.0, %v5121
    %v5123 = vpop.f32.mrb[0].mxu0
    %5124 = vmatprep.mubr.f32.mxu0 %v2539
    %5125 = vmatmul.mubr.f32.gmra.mrb[0].mxu0 %v1020
    %v5126 = vpop.f32.mrb[0].mxu0
    %v5127 = vadd.f32 0.0, %v5126
    %v5128 = vpop.f32.mrb[0].mxu0
    %5129 = vmatprep.mubr.f32.mxu0 %v2542
    %5130 = vmatmul.mubr.f32.gmra.mrb[0].mxu0 %v1022
    %v5131 = vpop.f32.mrb[0].mxu0
    %v5132 = vadd.f32 0.0, %v5131
    %v5133 = vpop.f32.mrb[0].mxu0
    %5134 = vmatprep.mubr.f32.mxu0 %v2545
    %5135 = vmatmul.mubr.f32.gmra.mrb[0].mxu0 %v1024
    %v5136 = vpop.f32.mrb[0].mxu0
    %v5137 = vadd.f32 0.0, %v5136
    %v5138 = vpop.f32.mrb[0].mxu0
    %5139 = vmatprep.mubr.f32.mxu0 %v2548
    %5140 = vmatmul.mubr.f32.gmra.mrb[0].mxu0 %v1026
    %v5141 = vpop.f32.mrb[0].mxu0
    %v5142 = vadd.f32 0.0, %v5141
    %v5143 = vpop.f32.mrb[0].mxu0
    %5144 = vmatprep.mubr.f32.mxu0 %v2551
    %5145 = vmatmul.mubr.f32.gmra.mrb[0].mxu0 %v1028
    %v5146 = vpop.f32.mrb[0].mxu0
    %v5147 = vadd.f32 0.0, %v5146
    %v5148 = vpop.f32.mrb[0].mxu0
    %5149 = vmatprep.mubr.f32.mxu0 %v2554
    %5150 = vmatmul.mubr.f32.gmra.mrb[0].mxu0 %v1030
    %v5151 = vpop.f32.mrb[0].mxu0
    %v5152 = vadd.f32 0.0, %v5151
    %v5153 = vpop.f32.mrb[0].mxu0
    %5154 = vmatprep.mubr.f32.mxu0 %v2557
    %5155 = vmatmul.mubr.f32.gmra.mrb[0].mxu0 %v1032
    %v5156 = vpop.f32.mrb[0].mxu0
    %v5157 = vadd.f32 0.0, %v5156
    %v5158 = vpop.f32.mrb[0].mxu0
    %5159 = vmatprep.mubr.f32.mxu0 %v2560
    %5160 = vmatmul.mubr.f32.gmra.mrb[0].mxu0 %v1034
    %v5161 = vpop.f32.mrb[0].mxu0
    %v5162 = vadd.f32 0.0, %v5161
    %v5163 = vpop.f32.mrb[0].mxu0
    %5164 = vmatprep.mubr.f32.mxu0 %v2563
    %5165 = vmatmul.mubr.f32.gmra.mrb[0].mxu0 %v1036
    %v5166 = vpop.f32.mrb[0].mxu0
    %v5167 = vadd.f32 0.0, %v5166
    %v5168 = vpop.f32.mrb[0].mxu0
    %5169 = vmatprep.mubr.f32.mxu0 %v2566
    %5170 = vmatmul.mubr.f32.gmra.mrb[0].mxu0 %v1038
    %v5171 = vpop.f32.mrb[0].mxu0
    %v5172 = vadd.f32 0.0, %v5171
    %v5173 = vpop.f32.mrb[0].mxu0
    %5174 = vmatprep.mubr.f32.mxu0 %v2569
    %5175 = vmatmul.mubr.f32.gmra.mrb[0].mxu0 %v1040
    %v5176 = vpop.f32.mrb[0].mxu0
    %v5177 = vadd.f32 0.0, %v5176
    %v5178 = vpop.f32.mrb[0].mxu0
    %5179 = vmatprep.mubr.f32.mxu0 %v2572
    %5180 = vmatmul.mubr.f32.gmra.mrb[0].mxu0 %v1042
    %v5181 = vpop.f32.mrb[0].mxu0
    %v5182 = vadd.f32 0.0, %v5181
    %v5183 = vpop.f32.mrb[0].mxu0
    %5184 = vmatprep.mubr.f32.mxu0 %v2575
    %5185 = vmatmul.mubr.f32.gmra.mrb[0].mxu0 %v1044
    %v5186 = vpop.f32.mrb[0].mxu0
    %v5187 = vadd.f32 0.0, %v5186
    %v5188 = vpop.f32.mrb[0].mxu0
    %5189 = vmatprep.mubr.f32.mxu0 %v2578
    %5190 = vmatmul.mubr.f32.gmra.mrb[0].mxu0 %v1046
    %v5191 = vpop.f32.mrb[0].mxu0
    %v5192 = vadd.f32 0.0, %v5191
    %v5193 = vpop.f32.mrb[0].mxu0
    %5194 = vmatprep.mubr.f32.mxu0 %v2581
    %5195 = vmatmul.mubr.f32.gmra.mrb[0].mxu0 %v1048
    %v5196 = vpop.f32.mrb[0].mxu0
    %v5197 = vadd.f32 0.0, %v5196
    %v5198 = vpop.f32.mrb[0].mxu0
    %5199 = vmatprep.mubr.f32.mxu0 %v2584
    %5200 = vmatmul.mubr.f32.gmra.mrb[0].mxu0 %v1050
    %v5201 = vpop.f32.mrb[0].mxu0
    %v5202 = vadd.f32 0.0, %v5201
    %v5203 = vpop.f32.mrb[0].mxu0
    %5204 = vmatprep.mubr.f32.mxu0 %v2587
    %5205 = vmatmul.mubr.f32.gmra.mrb[0].mxu0 %v1052
    %v5206 = vpop.f32.mrb[0].mxu0
    %v5207 = vadd.f32 0.0, %v5206
    %v5208 = vpop.f32.mrb[0].mxu0
    %5209 = vmatprep.mubr.f32.mxu0 %v2590
    %5210 = vmatmul.mubr.f32.gmra.mrb[0].mxu0 %v1054
    %v5211 = vpop.f32.mrb[0].mxu0
    %v5212 = vadd.f32 0.0, %v5211
    %v5213 = vpop.f32.mrb[0].mxu0
    %5214 = vmatprep.mubr.f32.mxu0 %v2593
    %5215 = vmatmul.mubr.f32.gmra.mrb[0].mxu0 %v1056
    %v5216 = vpop.f32.mrb[0].mxu0
    %v5217 = vadd.f32 0.0, %v5216
    %v5218 = vpop.f32.mrb[0].mxu0
    %5219 = vmatprep.mubr.f32.mxu0 %v2596
    %5220 = vmatmul.mubr.f32.gmra.mrb[0].mxu0 %v1058
    %v5221 = vpop.f32.mrb[0].mxu0
    %v5222 = vadd.f32 0.0, %v5221
    %v5223 = vpop.f32.mrb[0].mxu0
    %5224 = vmatprep.mubr.f32.mxu0 %v2599
    %5225 = vmatmul.mubr.f32.gmra.mrb[0].mxu0 %v1060
    %v5226 = vpop.f32.mrb[0].mxu0
    %v5227 = vadd.f32 0.0, %v5226
    %v5228 = vpop.f32.mrb[0].mxu0
    %5229 = vmatprep.mubr.f32.mxu0 %v2602
    %5230 = vmatmul.mubr.f32.gmra.mrb[0].mxu0 %v1062
    %v5231 = vpop.f32.mrb[0].mxu0
    %v5232 = vadd.f32 0.0, %v5231
    %v5233 = vpop.f32.mrb[0].mxu0
    %5234 = vmatprep.mubr.f32.mxu0 %v2605
    %5235 = vmatmul.mubr.f32.gmra.mrb[0].mxu0 %v1064
    %v5236 = vpop.f32.mrb[0].mxu0
    %v5237 = vadd.f32 0.0, %v5236
    %v5238 = vpop.f32.mrb[0].mxu0
    %5239 = vmatprep.mubr.f32.mxu0 %v2608
    %5240 = vmatmul.mubr.f32.gmra.mrb[0].mxu0 %v1066
    %v5241 = vpop.f32.mrb[0].mxu0
    %v5242 = vadd.f32 0.0, %v5241
    %v5243 = vpop.f32.mrb[0].mxu0
    %5244 = vmatprep.mubr.f32.mxu0 %v2611
    %5245 = vmatmul.mubr.f32.gmra.mrb[0].mxu0 %v1068
    %v5246 = vpop.f32.mrb[0].mxu0
    %v5247 = vadd.f32 0.0, %v5246
    %v5248 = vpop.f32.mrb[0].mxu0
    %5249 = vmatprep.mubr.f32.mxu0 %v2614
    %5250 = vmatmul.mubr.f32.gmra.mrb[0].mxu0 %v1070
    %v5251 = vpop.f32.mrb[0].mxu0
    %v5252 = vadd.f32 0.0, %v5251
    %v5253 = vpop.f32.mrb[0].mxu0
    %5254 = vmatprep.mubr.f32.mxu0 %v2617
    %5255 = vmatmul.mubr.f32.gmra.mrb[0].mxu0 %v1072
    %v5256 = vpop.f32.mrb[0].mxu0
    %v5257 = vadd.f32 0.0, %v5256
    %v5258 = vpop.f32.mrb[0].mxu0
    %5259 = vmatprep.mubr.f32.mxu0 %v2620
    %5260 = vmatmul.mubr.f32.gmra.mrb[0].mxu0 %v1074
    %v5261 = vpop.f32.mrb[0].mxu0
    %v5262 = vadd.f32 0.0, %v5261
    %v5263 = vpop.f32.mrb[0].mxu0
    %5264 = vmatprep.mubr.f32.mxu0 %v2623
    %5265 = vmatmul.mubr.f32.gmra.mrb[0].mxu0 %v1076
    %v5266 = vpop.f32.mrb[0].mxu0
    %v5267 = vadd.f32 0.0, %v5266
    %v5268 = vpop.f32.mrb[0].mxu0
    %5269 = vmatprep.mubr.f32.mxu0 %v2626
    %5270 = vmatmul.mubr.f32.gmra.mrb[0].mxu0 %v1078
    %v5271 = vpop.f32.mrb[0].mxu0
    %v5272 = vadd.f32 0.0, %v5271
    %v5273 = vpop.f32.mrb[0].mxu0
    %5274 = vmatprep.mubr.f32.mxu0 %v2629
    %5275 = vmatmul.mubr.f32.gmra.mrb[0].mxu0 %v1080
    %v5276 = vpop.f32.mrb[0].mxu0
    %v5277 = vadd.f32 0.0, %v5276
    %v5278 = vpop.f32.mrb[0].mxu0
    %5279 = vdwg.mxu0
    %v5280 = vmax.f32 %v2702, %v2722
    %v5281 = vmax.f32 %v2707, %v2727
    %v5282 = vmax.f32 %v2712, %v2732
    %v5283 = vmax.f32 %v2717, %v2737
    %v5284 = vmax.f32 %v2762, %v2782
    %v5285 = vmax.f32 %v2767, %v2787
    %v5286 = vmax.f32 %v2772, %v2792
    %v5287 = vmax.f32 %v2777, %v2797
    %v5288 = vmax.f32 %v2822, %v2842
    %v5289 = vmax.f32 %v2827, %v2847
    %v5290 = vmax.f32 %v2832, %v2852
    %v5291 = vmax.f32 %v2837, %v2857
    %v5292 = vmax.f32 %v2882, %v2902
    %v5293 = vmax.f32 %v2887, %v2907
    %v5294 = vmax.f32 %v2892, %v2912
    %v5295 = vmax.f32 %v2897, %v2917
    %v5296 = vmax.f32 %v2942, %v2962
    %v5297 = vmax.f32 %v2947, %v2967
    %v5298 = vmax.f32 %v2952, %v2972
    %v5299 = vmax.f32 %v2957, %v2977
    %v5300 = vmax.f32 %v3002, %v3022
    %v5301 = vmax.f32 %v3007, %v3027
    %v5302 = vmax.f32 %v3012, %v3032
    %v5303 = vmax.f32 %v3017, %v3037
    %v5304 = vmax.f32 %v3062, %v3082
    %v5305 = vmax.f32 %v3067, %v3087
    %v5306 = vmax.f32 %v3072, %v3092
    %v5307 = vmax.f32 %v3077, %v3097
    %v5308 = vmax.f32 %v3122, %v3142
    %v5309 = vmax.f32 %v3127, %v3147
    %v5310 = vmax.f32 %v3132, %v3152
    %v5311 = vmax.f32 %v3137, %v3157
    %v5312 = vmax.f32 %v3182, %v3202
    %v5313 = vmax.f32 %v3187, %v3207
    %v5314 = vmax.f32 %v3192, %v3212
    %v5315 = vmax.f32 %v3197, %v3217
    %v5316 = vmax.f32 %v3242, %v3262
    %v5317 = vmax.f32 %v3247, %v3267
    %v5318 = vmax.f32 %v3252, %v3272
    %v5319 = vmax.f32 %v3257, %v3277
    %v5320 = vmax.f32 %v3302, %v3322
    %v5321 = vmax.f32 %v3307, %v3327
    %v5322 = vmax.f32 %v3312, %v3332
    %v5323 = vmax.f32 %v3317, %v3337
    %v5324 = vmax.f32 %v3362, %v3382
    %v5325 = vmax.f32 %v3367, %v3387
    %v5326 = vmax.f32 %v3372, %v3392
    %v5327 = vmax.f32 %v3377, %v3397
    %v5328 = vmax.f32 %v3422, %v3442
    %v5329 = vmax.f32 %v3427, %v3447
    %v5330 = vmax.f32 %v3432, %v3452
    %v5331 = vmax.f32 %v3437, %v3457
    %v5332 = vmax.f32 %v3482, %v3502
    %v5333 = vmax.f32 %v3487, %v3507
    %v5334 = vmax.f32 %v3492, %v3512
    %v5335 = vmax.f32 %v3497, %v3517
    %v5336 = vmax.f32 %v3542, %v3562
    %v5337 = vmax.f32 %v3547, %v3567
    %v5338 = vmax.f32 %v3552, %v3572
    %v5339 = vmax.f32 %v3557, %v3577
    %v5340 = vmax.f32 %v3602, %v3622
    %v5341 = vmax.f32 %v3607, %v3627
    %v5342 = vmax.f32 %v3612, %v3632
    %v5343 = vmax.f32 %v3617, %v3637
    %v5344 = vmax.f32 %v3662, %v3682
    %v5345 = vmax.f32 %v3667, %v3687
    %v5346 = vmax.f32 %v3672, %v3692
    %v5347 = vmax.f32 %v3677, %v3697
    %v5348 = vmax.f32 %v3722, %v3742
    %v5349 = vmax.f32 %v3727, %v3747
    %v5350 = vmax.f32 %v3732, %v3752
    %v5351 = vmax.f32 %v3737, %v3757
    %v5352 = vmax.f32 %v3782, %v3802
    %v5353 = vmax.f32 %v3787, %v3807
    %v5354 = vmax.f32 %v3792, %v3812
    %v5355 = vmax.f32 %v3797, %v3817
    %v5356 = vmax.f32 %v3842, %v3862
    %v5357 = vmax.f32 %v3847, %v3867
    %v5358 = vmax.f32 %v3852, %v3872
    %v5359 = vmax.f32 %v3857, %v3877
    %v5360 = vmax.f32 %v3902, %v3922
    %v5361 = vmax.f32 %v3907, %v3927
    %v5362 = vmax.f32 %v3912, %v3932
    %v5363 = vmax.f32 %v3917, %v3937
    %v5364 = vmax.f32 %v3962, %v3982
    %v5365 = vmax.f32 %v3967, %v3987
    %v5366 = vmax.f32 %v3972, %v3992
    %v5367 = vmax.f32 %v3977, %v3997
    %v5368 = vmax.f32 %v4022, %v4042
    %v5369 = vmax.f32 %v4027, %v4047
    %v5370 = vmax.f32 %v4032, %v4052
    %v5371 = vmax.f32 %v4037, %v4057
    %v5372 = vmax.f32 %v4082, %v4102
    %v5373 = vmax.f32 %v4087, %v4107
    %v5374 = vmax.f32 %v4092, %v4112
    %v5375 = vmax.f32 %v4097, %v4117
    %v5376 = vmax.f32 %v4142, %v4162
    %v5377 = vmax.f32 %v4147, %v4167
    %v5378 = vmax.f32 %v4152, %v4172
    %v5379 = vmax.f32 %v4157, %v4177
    %v5380 = vmax.f32 %v4202, %v4222
    %v5381 = vmax.f32 %v4207, %v4227
    %v5382 = vmax.f32 %v4212, %v4232
    %v5383 = vmax.f32 %v4217, %v4237
    %v5384 = vmax.f32 %v4262, %v4282
    %v5385 = vmax.f32 %v4267, %v4287
    %v5386 = vmax.f32 %v4272, %v4292
    %v5387 = vmax.f32 %v4277, %v4297
    %v5388 = vmax.f32 %v4322, %v4342
    %v5389 = vmax.f32 %v4327, %v4347
    %v5390 = vmax.f32 %v4332, %v4352
    %v5391 = vmax.f32 %v4337, %v4357
    %v5392 = vmax.f32 %v4382, %v4402
    %v5393 = vmax.f32 %v4387, %v4407
    %v5394 = vmax.f32 %v4392, %v4412
    %v5395 = vmax.f32 %v4397, %v4417
    %v5396 = vmax.f32 %v4442, %v4462
    %v5397 = vmax.f32 %v4447, %v4467
    %v5398 = vmax.f32 %v4452, %v4472
    %v5399 = vmax.f32 %v4457, %v4477
    %v5400 = vmax.f32 %v4502, %v4522
    %v5401 = vmax.f32 %v4507, %v4527
    %v5402 = vmax.f32 %v4512, %v4532
    %v5403 = vmax.f32 %v4517, %v4537
    %v5404 = vmax.f32 %v4562, %v4582
    %v5405 = vmax.f32 %v4567, %v4587
    %v5406 = vmax.f32 %v4572, %v4592
    %v5407 = vmax.f32 %v4577, %v4597
    %v5408 = vmax.f32 %v4622, %v4642
    %v5409 = vmax.f32 %v4627, %v4647
    %v5410 = vmax.f32 %v4632, %v4652
    %v5411 = vmax.f32 %v4637, %v4657
    %v5412 = vmax.f32 %v4682, %v4702
    %v5413 = vmax.f32 %v4687, %v4707
    %v5414 = vmax.f32 %v4692, %v4712
    %v5415 = vmax.f32 %v4697, %v4717
    %v5416 = vmax.f32 %v4742, %v4762
    %v5417 = vmax.f32 %v4747, %v4767
    %v5418 = vmax.f32 %v4752, %v4772
    %v5419 = vmax.f32 %v4757, %v4777
    %v5420 = vmax.f32 %v4802, %v4822
    %v5421 = vmax.f32 %v4807, %v4827
    %v5422 = vmax.f32 %v4812, %v4832
    %v5423 = vmax.f32 %v4817, %v4837
    %v5424 = vmax.f32 %v4862, %v4882
    %v5425 = vmax.f32 %v4867, %v4887
    %v5426 = vmax.f32 %v4872, %v4892
    %v5427 = vmax.f32 %v4877, %v4897
    %v5428 = vmax.f32 %v4922, %v4942
    %v5429 = vmax.f32 %v4927, %v4947
    %v5430 = vmax.f32 %v4932, %v4952
    %v5431 = vmax.f32 %v4937, %v4957
    %v5432 = vmax.f32 %v4982, %v5002
    %v5433 = vmax.f32 %v4987, %v5007
    %v5434 = vmax.f32 %v4992, %v5012
    %v5435 = vmax.f32 %v4997, %v5017
    %v5436 = vmax.f32 %v5042, %v5062
    %v5437 = vmax.f32 %v5047, %v5067
    %v5438 = vmax.f32 %v5052, %v5072
    %v5439 = vmax.f32 %v5057, %v5077
    %v5440 = vmax.f32 %v5102, %v5122
    %v5441 = vmax.f32 %v5107, %v5127
    %v5442 = vmax.f32 %v5112, %v5132
    %v5443 = vmax.f32 %v5117, %v5137
    %v5444 = vmax.f32 %v5162, %v5182
    %v5445 = vmax.f32 %v5167, %v5187
    %v5446 = vmax.f32 %v5172, %v5192
    %v5447 = vmax.f32 %v5177, %v5197
    %v5448 = vmax.f32 %v5222, %v5242
    %v5449 = vmax.f32 %v5227, %v5247
    %v5450 = vmax.f32 %v5232, %v5252
    %v5451 = vmax.f32 %v5237, %v5257
    %v5452 = vmax.f32 %v5280, %v2742
    %v5453 = vmax.f32 %v5281, %v2747
    %v5454 = vmax.f32 %v5282, %v2752
    %v5455 = vmax.f32 %v5283, %v2757
    %v5456 = vmax.f32 %v5284, %v2802
    %v5457 = vmax.f32 %v5285, %v2807
    %v5458 = vmax.f32 %v5286, %v2812
    %v5459 = vmax.f32 %v5287, %v2817
    %v5460 = vmax.f32 %v5288, %v2862
    %v5461 = vmax.f32 %v5289, %v2867
    %v5462 = vmax.f32 %v5290, %v2872
    %v5463 = vmax.f32 %v5291, %v2877
    %v5464 = vmax.f32 %v5292, %v2922
    %v5465 = vmax.f32 %v5293, %v2927
    %v5466 = vmax.f32 %v5294, %v2932
    %v5467 = vmax.f32 %v5295, %v2937
    %v5468 = vmax.f32 %v5296, %v2982
    %v5469 = vmax.f32 %v5297, %v2987
    %v5470 = vmax.f32 %v5298, %v2992
    %v5471 = vmax.f32 %v5299, %v2997
    %v5472 = vmax.f32 %v5300, %v3042
    %v5473 = vmax.f32 %v5301, %v3047
    %v5474 = vmax.f32 %v5302, %v3052
    %v5475 = vmax.f32 %v5303, %v3057
    %v5476 = vmax.f32 %v5304, %v3102
    %v5477 = vmax.f32 %v5305, %v3107
    %v5478 = vmax.f32 %v5306, %v3112
    %v5479 = vmax.f32 %v5307, %v3117
    %v5480 = vmax.f32 %v5308, %v3162
    %v5481 = vmax.f32 %v5309, %v3167
    %v5482 = vmax.f32 %v5310, %v3172
    %v5483 = vmax.f32 %v5311, %v3177
    %v5484 = vmax.f32 %v5312, %v3222
    %v5485 = vmax.f32 %v5313, %v3227
    %v5486 = vmax.f32 %v5314, %v3232
    %v5487 = vmax.f32 %v5315, %v3237
    %v5488 = vmax.f32 %v5316, %v3282
    %v5489 = vmax.f32 %v5317, %v3287
    %v5490 = vmax.f32 %v5318, %v3292
    %v5491 = vmax.f32 %v5319, %v3297
    %v5492 = vmax.f32 %v5320, %v3342
    %v5493 = vmax.f32 %v5321, %v3347
    %v5494 = vmax.f32 %v5322, %v3352
    %v5495 = vmax.f32 %v5323, %v3357
    %v5496 = vmax.f32 %v5324, %v3402
    %v5497 = vmax.f32 %v5325, %v3407
    %v5498 = vmax.f32 %v5326, %v3412
    %v5499 = vmax.f32 %v5327, %v3417
    %v5500 = vmax.f32 %v5328, %v3462
    %v5501 = vmax.f32 %v5329, %v3467
    %v5502 = vmax.f32 %v5330, %v3472
    %v5503 = vmax.f32 %v5331, %v3477
    %v5504 = vmax.f32 %v5332, %v3522
    %v5505 = vmax.f32 %v5333, %v3527
    %v5506 = vmax.f32 %v5334, %v3532
    %v5507 = vmax.f32 %v5335, %v3537
    %v5508 = vmax.f32 %v5336, %v3582
    %v5509 = vmax.f32 %v5337, %v3587
    %v5510 = vmax.f32 %v5338, %v3592
    %v5511 = vmax.f32 %v5339, %v3597
    %v5512 = vmax.f32 %v5340, %v3642
    %v5513 = vmax.f32 %v5341, %v3647
    %v5514 = vmax.f32 %v5342, %v3652
    %v5515 = vmax.f32 %v5343, %v3657
    %v5516 = vmax.f32 %v5344, %v3702
    %v5517 = vmax.f32 %v5345, %v3707
    %v5518 = vmax.f32 %v5346, %v3712
    %v5519 = vmax.f32 %v5347, %v3717
    %v5520 = vmax.f32 %v5348, %v3762
    %v5521 = vmax.f32 %v5349, %v3767
    %v5522 = vmax.f32 %v5350, %v3772
    %v5523 = vmax.f32 %v5351, %v3777
    %v5524 = vmax.f32 %v5352, %v3822
    %v5525 = vmax.f32 %v5353, %v3827
    %v5526 = vmax.f32 %v5354, %v3832
    %v5527 = vmax.f32 %v5355, %v3837
    %v5528 = vmax.f32 %v5356, %v3882
    %v5529 = vmax.f32 %v5357, %v3887
    %v5530 = vmax.f32 %v5358, %v3892
    %v5531 = vmax.f32 %v5359, %v3897
    %v5532 = vmax.f32 %v5360, %v3942
    %v5533 = vmax.f32 %v5361, %v3947
    %v5534 = vmax.f32 %v5362, %v3952
    %v5535 = vmax.f32 %v5363, %v3957
    %v5536 = vmax.f32 %v5364, %v4002
    %v5537 = vmax.f32 %v5365, %v4007
    %v5538 = vmax.f32 %v5366, %v4012
    %v5539 = vmax.f32 %v5367, %v4017
    %v5540 = vmax.f32 %v5368, %v4062
    %v5541 = vmax.f32 %v5369, %v4067
    %v5542 = vmax.f32 %v5370, %v4072
    %v5543 = vmax.f32 %v5371, %v4077
    %v5544 = vmax.f32 %v5372, %v4122
    %v5545 = vmax.f32 %v5373, %v4127
    %v5546 = vmax.f32 %v5374, %v4132
    %v5547 = vmax.f32 %v5375, %v4137
    %v5548 = vmax.f32 %v5376, %v4182
    %v5549 = vmax.f32 %v5377, %v4187
    %v5550 = vmax.f32 %v5378, %v4192
    %v5551 = vmax.f32 %v5379, %v4197
    %v5552 = vmax.f32 %v5380, %v4242
    %v5553 = vmax.f32 %v5381, %v4247
    %v5554 = vmax.f32 %v5382, %v4252
    %v5555 = vmax.f32 %v5383, %v4257
    %v5556 = vmax.f32 %v5384, %v4302
    %v5557 = vmax.f32 %v5385, %v4307
    %v5558 = vmax.f32 %v5386, %v4312
    %v5559 = vmax.f32 %v5387, %v4317
    %v5560 = vmax.f32 %v5388, %v4362
    %v5561 = vmax.f32 %v5389, %v4367
    %v5562 = vmax.f32 %v5390, %v4372
    %v5563 = vmax.f32 %v5391, %v4377
    %v5564 = vmax.f32 %v5392, %v4422
    %v5565 = vmax.f32 %v5393, %v4427
    %v5566 = vmax.f32 %v5394, %v4432
    %v5567 = vmax.f32 %v5395, %v4437
    %v5568 = vmax.f32 %v5396, %v4482
    %v5569 = vmax.f32 %v5397, %v4487
    %v5570 = vmax.f32 %v5398, %v4492
    %v5571 = vmax.f32 %v5399, %v4497
    %v5572 = vmax.f32 %v5400, %v4542
    %v5573 = vmax.f32 %v5401, %v4547
    %v5574 = vmax.f32 %v5402, %v4552
    %v5575 = vmax.f32 %v5403, %v4557
    %v5576 = vmax.f32 %v5404, %v4602
    %v5577 = vmax.f32 %v5405, %v4607
    %v5578 = vmax.f32 %v5406, %v4612
    %v5579 = vmax.f32 %v5407, %v4617
    %v5580 = vmax.f32 %v5408, %v4662
    %v5581 = vmax.f32 %v5409, %v4667
    %v5582 = vmax.f32 %v5410, %v4672
    %v5583 = vmax.f32 %v5411, %v4677
    %v5584 = vmax.f32 %v5412, %v4722
    %v5585 = vmax.f32 %v5413, %v4727
    %v5586 = vmax.f32 %v5414, %v4732
    %v5587 = vmax.f32 %v5415, %v4737
    %v5588 = vmax.f32 %v5416, %v4782
    %v5589 = vmax.f32 %v5417, %v4787
    %v5590 = vmax.f32 %v5418, %v4792
    %v5591 = vmax.f32 %v5419, %v4797
    %v5592 = vmax.f32 %v5420, %v4842
    %v5593 = vmax.f32 %v5421, %v4847
    %v5594 = vmax.f32 %v5422, %v4852
    %v5595 = vmax.f32 %v5423, %v4857
    %v5596 = vmax.f32 %v5424, %v4902
    %v5597 = vmax.f32 %v5425, %v4907
    %v5598 = vmax.f32 %v5426, %v4912
    %v5599 = vmax.f32 %v5427, %v4917
    %v5600 = vmax.f32 %v5428, %v4962
    %v5601 = vmax.f32 %v5429, %v4967
    %v5602 = vmax.f32 %v5430, %v4972
    %v5603 = vmax.f32 %v5431, %v4977
    %v5604 = vmax.f32 %v5432, %v5022
    %v5605 = vmax.f32 %v5433, %v5027
    %v5606 = vmax.f32 %v5434, %v5032
    %v5607 = vmax.f32 %v5435, %v5037
    %v5608 = vmax.f32 %v5436, %v5082
    %v5609 = vmax.f32 %v5437, %v5087
    %v5610 = vmax.f32 %v5438, %v5092
    %v5611 = vmax.f32 %v5439, %v5097
    %v5612 = vmax.f32 %v5440, %v5142
    %v5613 = vmax.f32 %v5441, %v5147
    %v5614 = vmax.f32 %v5442, %v5152
    %v5615 = vmax.f32 %v5443, %v5157
    %v5616 = vmax.f32 %v5444, %v5202
    %v5617 = vmax.f32 %v5445, %v5207
    %v5618 = vmax.f32 %v5446, %v5212
    %v5619 = vmax.f32 %v5447, %v5217
    %v5620 = vmax.f32 %v5448, %v5262
    %v5621 = vmax.f32 %v5449, %v5267
    %v5622 = vmax.f32 %v5450, %v5272
    %v5623 = vmax.f32 %v5451, %v5277
    %v5624 = vld [vmem:[%s2] sm:$0xff]
    %v5625 = vld [vmem:[%s2 + $0x8] sm:$0xff]
    %v5626 = vld [vmem:[%s2 + $0x10] sm:$0xff]
    %v5627 = vld [vmem:[%s2 + $0x18] sm:$0xff]
    %5629 = vset.pattern.permute.xlu0 0
    %5630 = vperm.xlu0 %5629, %v5624
    %v5631 = vpop.permute.xlu0 %5630
    %5634 = vset.pattern.permute.xlu0 0
    %5635 = vperm.xlu0 %5634, %v5625
    %v5636 = vpop.permute.xlu0 %5635
    %5639 = vset.pattern.permute.xlu0 0
    %5640 = vperm.xlu0 %5639, %v5626
    %v5641 = vpop.permute.xlu0 %5640
    %5644 = vset.pattern.permute.xlu0 0
    %5645 = vperm.xlu0 %5644, %v5627
    %v5646 = vpop.permute.xlu0 %5645
    %v5648 = vadd.f32 %v5452, %v5631
    %v5649 = vadd.f32 %v5453, %v5636
    %v5650 = vadd.f32 %v5454, %v5641
    %v5651 = vadd.f32 %v5455, %v5646
    %v5652 = vadd.f32 %v5456, %v5631
    %v5653 = vadd.f32 %v5457, %v5636
    %v5654 = vadd.f32 %v5458, %v5641
    %v5655 = vadd.f32 %v5459, %v5646
    %v5656 = vadd.f32 %v5460, %v5631
    %v5657 = vadd.f32 %v5461, %v5636
    %v5658 = vadd.f32 %v5462, %v5641
    %v5659 = vadd.f32 %v5463, %v5646
    %v5660 = vadd.f32 %v5464, %v5631
    %v5661 = vadd.f32 %v5465, %v5636
    %v5662 = vadd.f32 %v5466, %v5641
    %v5663 = vadd.f32 %v5467, %v5646
    %v5664 = vadd.f32 %v5468, %v5631
    %v5665 = vadd.f32 %v5469, %v5636
    %v5666 = vadd.f32 %v5470, %v5641
    %v5667 = vadd.f32 %v5471, %v5646
    %v5668 = vadd.f32 %v5472, %v5631
    %v5669 = vadd.f32 %v5473, %v5636
    %v5670 = vadd.f32 %v5474, %v5641
    %v5671 = vadd.f32 %v5475, %v5646
    %v5672 = vadd.f32 %v5476, %v5631
    %v5673 = vadd.f32 %v5477, %v5636
    %v5674 = vadd.f32 %v5478, %v5641
    %v5675 = vadd.f32 %v5479, %v5646
    %v5676 = vadd.f32 %v5480, %v5631
    %v5677 = vadd.f32 %v5481, %v5636
    %v5678 = vadd.f32 %v5482, %v5641
    %v5679 = vadd.f32 %v5483, %v5646
    %v5680 = vadd.f32 %v5484, %v5631
    %v5681 = vadd.f32 %v5485, %v5636
    %v5682 = vadd.f32 %v5486, %v5641
    %v5683 = vadd.f32 %v5487, %v5646
    %v5684 = vadd.f32 %v5488, %v5631
    %v5685 = vadd.f32 %v5489, %v5636
    %v5686 = vadd.f32 %v5490, %v5641
    %v5687 = vadd.f32 %v5491, %v5646
    %v5688 = vadd.f32 %v5492, %v5631
    %v5689 = vadd.f32 %v5493, %v5636
    %v5690 = vadd.f32 %v5494, %v5641
    %v5691 = vadd.f32 %v5495, %v5646
    %v5692 = vadd.f32 %v5496, %v5631
    %v5693 = vadd.f32 %v5497, %v5636
    %v5694 = vadd.f32 %v5498, %v5641
    %v5695 = vadd.f32 %v5499, %v5646
    %v5696 = vadd.f32 %v5500, %v5631
    %v5697 = vadd.f32 %v5501, %v5636
    %v5698 = vadd.f32 %v5502, %v5641
    %v5699 = vadd.f32 %v5503, %v5646
    %v5700 = vadd.f32 %v5504, %v5631
    %v5701 = vadd.f32 %v5505, %v5636
    %v5702 = vadd.f32 %v5506, %v5641
    %v5703 = vadd.f32 %v5507, %v5646
    %v5704 = vadd.f32 %v5508, %v5631
    %v5705 = vadd.f32 %v5509, %v5636
    %v5706 = vadd.f32 %v5510, %v5641
    %v5707 = vadd.f32 %v5511, %v5646
    %v5708 = vadd.f32 %v5512, %v5631
    %v5709 = vadd.f32 %v5513, %v5636
    %v5710 = vadd.f32 %v5514, %v5641
    %v5711 = vadd.f32 %v5515, %v5646
    %v5712 = vadd.f32 %v5516, %v5631
    %v5713 = vadd.f32 %v5517, %v5636
    %v5714 = vadd.f32 %v5518, %v5641
    %v5715 = vadd.f32 %v5519, %v5646
    %v5716 = vadd.f32 %v5520, %v5631
    %v5717 = vadd.f32 %v5521, %v5636
    %v5718 = vadd.f32 %v5522, %v5641
    %v5719 = vadd.f32 %v5523, %v5646
    %v5720 = vadd.f32 %v5524, %v5631
    %v5721 = vadd.f32 %v5525, %v5636
    %v5722 = vadd.f32 %v5526, %v5641
    %v5723 = vadd.f32 %v5527, %v5646
    %v5724 = vadd.f32 %v5528, %v5631
    %v5725 = vadd.f32 %v5529, %v5636
    %v5726 = vadd.f32 %v5530, %v5641
    %v5727 = vadd.f32 %v5531, %v5646
    %v5728 = vadd.f32 %v5532, %v5631
    %v5729 = vadd.f32 %v5533, %v5636
    %v5730 = vadd.f32 %v5534, %v5641
    %v5731 = vadd.f32 %v5535, %v5646
    %v5732 = vadd.f32 %v5536, %v5631
    %v5733 = vadd.f32 %v5537, %v5636
    %v5734 = vadd.f32 %v5538, %v5641
    %v5735 = vadd.f32 %v5539, %v5646
    %v5736 = vadd.f32 %v5540, %v5631
    %v5737 = vadd.f32 %v5541, %v5636
    %v5738 = vadd.f32 %v5542, %v5641
    %v5739 = vadd.f32 %v5543, %v5646
    %v5740 = vadd.f32 %v5544, %v5631
    %v5741 = vadd.f32 %v5545, %v5636
    %v5742 = vadd.f32 %v5546, %v5641
    %v5743 = vadd.f32 %v5547, %v5646
    %v5744 = vadd.f32 %v5548, %v5631
    %v5745 = vadd.f32 %v5549, %v5636
    %v5746 = vadd.f32 %v5550, %v5641
    %v5747 = vadd.f32 %v5551, %v5646
    %v5748 = vadd.f32 %v5552, %v5631
    %v5749 = vadd.f32 %v5553, %v5636
    %v5750 = vadd.f32 %v5554, %v5641
    %v5751 = vadd.f32 %v5555, %v5646
    %v5752 = vadd.f32 %v5556, %v5631
    %v5753 = vadd.f32 %v5557, %v5636
    %v5754 = vadd.f32 %v5558, %v5641
    %v5755 = vadd.f32 %v5559, %v5646
    %v5756 = vadd.f32 %v5560, %v5631
    %v5757 = vadd.f32 %v5561, %v5636
    %v5758 = vadd.f32 %v5562, %v5641
    %v5759 = vadd.f32 %v5563, %v5646
    %v5760 = vadd.f32 %v5564, %v5631
    %v5761 = vadd.f32 %v5565, %v5636
    %v5762 = vadd.f32 %v5566, %v5641
    %v5763 = vadd.f32 %v5567, %v5646
    %v5764 = vadd.f32 %v5568, %v5631
    %v5765 = vadd.f32 %v5569, %v5636
    %v5766 = vadd.f32 %v5570, %v5641
    %v5767 = vadd.f32 %v5571, %v5646
    %v5768 = vadd.f32 %v5572, %v5631
    %v5769 = vadd.f32 %v5573, %v5636
    %v5770 = vadd.f32 %v5574, %v5641
    %v5771 = vadd.f32 %v5575, %v5646
    %v5772 = vadd.f32 %v5576, %v5631
    %v5773 = vadd.f32 %v5577, %v5636
    %v5774 = vadd.f32 %v5578, %v5641
    %v5775 = vadd.f32 %v5579, %v5646
    %v5776 = vadd.f32 %v5580, %v5631
    %v5777 = vadd.f32 %v5581, %v5636
    %v5778 = vadd.f32 %v5582, %v5641
    %v5779 = vadd.f32 %v5583, %v5646
    %v5780 = vadd.f32 %v5584, %v5631
    %v5781 = vadd.f32 %v5585, %v5636
    %v5782 = vadd.f32 %v5586, %v5641
    %v5783 = vadd.f32 %v5587, %v5646
    %v5784 = vadd.f32 %v5588, %v5631
    %v5785 = vadd.f32 %v5589, %v5636
    %v5786 = vadd.f32 %v5590, %v5641
    %v5787 = vadd.f32 %v5591, %v5646
    %v5788 = vadd.f32 %v5592, %v5631
    %v5789 = vadd.f32 %v5593, %v5636
    %v5790 = vadd.f32 %v5594, %v5641
    %v5791 = vadd.f32 %v5595, %v5646
    %v5792 = vadd.f32 %v5596, %v5631
    %v5793 = vadd.f32 %v5597, %v5636
    %v5794 = vadd.f32 %v5598, %v5641
    %v5795 = vadd.f32 %v5599, %v5646
    %v5796 = vadd.f32 %v5600, %v5631
    %v5797 = vadd.f32 %v5601, %v5636
    %v5798 = vadd.f32 %v5602, %v5641
    %v5799 = vadd.f32 %v5603, %v5646
    %v5800 = vadd.f32 %v5604, %v5631
    %v5801 = vadd.f32 %v5605, %v5636
    %v5802 = vadd.f32 %v5606, %v5641
    %v5803 = vadd.f32 %v5607, %v5646
    %v5804 = vadd.f32 %v5608, %v5631
    %v5805 = vadd.f32 %v5609, %v5636
    %v5806 = vadd.f32 %v5610, %v5641
    %v5807 = vadd.f32 %v5611, %v5646
    %v5808 = vadd.f32 %v5612, %v5631
    %v5809 = vadd.f32 %v5613, %v5636
    %v5810 = vadd.f32 %v5614, %v5641
    %v5811 = vadd.f32 %v5615, %v5646
    %v5812 = vadd.f32 %v5616, %v5631
    %v5813 = vadd.f32 %v5617, %v5636
    %v5814 = vadd.f32 %v5618, %v5641
    %v5815 = vadd.f32 %v5619, %v5646
    %v5816 = vadd.f32 %v5620, %v5631
    %v5817 = vadd.f32 %v5621, %v5636
    %v5818 = vadd.f32 %v5622, %v5641
    %v5819 = vadd.f32 %v5623, %v5646
    %v5820 = vmax.f32 %v5648, 0.0
    %v5821 = vmax.f32 %v5649, 0.0
    %v5822 = vmax.f32 %v5650, 0.0
    %v5823 = vmax.f32 %v5651, 0.0
    %v5824 = vmax.f32 %v5652, 0.0
    %v5825 = vmax.f32 %v5653, 0.0
    %v5826 = vmax.f32 %v5654, 0.0
    %v5827 = vmax.f32 %v5655, 0.0
    %v5828 = vmax.f32 %v5656, 0.0
    %v5829 = vmax.f32 %v5657, 0.0
    %v5830 = vmax.f32 %v5658, 0.0
    %v5831 = vmax.f32 %v5659, 0.0
    %v5832 = vmax.f32 %v5660, 0.0
    %v5833 = vmax.f32 %v5661, 0.0
    %v5834 = vmax.f32 %v5662, 0.0
    %v5835 = vmax.f32 %v5663, 0.0
    %v5836 = vmax.f32 %v5664, 0.0
    %v5837 = vmax.f32 %v5665, 0.0
    %v5838 = vmax.f32 %v5666, 0.0
    %v5839 = vmax.f32 %v5667, 0.0
    %v5840 = vmax.f32 %v5668, 0.0
    %v5841 = vmax.f32 %v5669, 0.0
    %v5842 = vmax.f32 %v5670, 0.0
    %v5843 = vmax.f32 %v5671, 0.0
    %v5844 = vmax.f32 %v5672, 0.0
    %v5845 = vmax.f32 %v5673, 0.0
    %v5846 = vmax.f32 %v5674, 0.0
    %v5847 = vmax.f32 %v5675, 0.0
    %v5848 = vmax.f32 %v5676, 0.0
    %v5849 = vmax.f32 %v5677, 0.0
    %v5850 = vmax.f32 %v5678, 0.0
    %v5851 = vmax.f32 %v5679, 0.0
    %v5852 = vmax.f32 %v5680, 0.0
    %v5853 = vmax.f32 %v5681, 0.0
    %v5854 = vmax.f32 %v5682, 0.0
    %v5855 = vmax.f32 %v5683, 0.0
    %v5856 = vmax.f32 %v5684, 0.0
    %v5857 = vmax.f32 %v5685, 0.0
    %v5858 = vmax.f32 %v5686, 0.0
    %v5859 = vmax.f32 %v5687, 0.0
    %v5860 = vmax.f32 %v5688, 0.0
    %v5861 = vmax.f32 %v5689, 0.0
    %v5862 = vmax.f32 %v5690, 0.0
    %v5863 = vmax.f32 %v5691, 0.0
    %v5864 = vmax.f32 %v5692, 0.0
    %v5865 = vmax.f32 %v5693, 0.0
    %v5866 = vmax.f32 %v5694, 0.0
    %v5867 = vmax.f32 %v5695, 0.0
    %v5868 = vmax.f32 %v5696, 0.0
    %v5869 = vmax.f32 %v5697, 0.0
    %v5870 = vmax.f32 %v5698, 0.0
    %v5871 = vmax.f32 %v5699, 0.0
    %v5872 = vmax.f32 %v5700, 0.0
    %v5873 = vmax.f32 %v5701, 0.0
    %v5874 = vmax.f32 %v5702, 0.0
    %v5875 = vmax.f32 %v5703, 0.0
    %v5876 = vmax.f32 %v5704, 0.0
    %v5877 = vmax.f32 %v5705, 0.0
    %v5878 = vmax.f32 %v5706, 0.0
    %v5879 = vmax.f32 %v5707, 0.0
    %v5880 = vmax.f32 %v5708, 0.0
    %v5881 = vmax.f32 %v5709, 0.0
    %v5882 = vmax.f32 %v5710, 0.0
    %v5883 = vmax.f32 %v5711, 0.0
    %v5884 = vmax.f32 %v5712, 0.0
    %v5885 = vmax.f32 %v5713, 0.0
    %v5886 = vmax.f32 %v5714, 0.0
    %v5887 = vmax.f32 %v5715, 0.0
    %v5888 = vmax.f32 %v5716, 0.0
    %v5889 = vmax.f32 %v5717, 0.0
    %v5890 = vmax.f32 %v5718, 0.0
    %v5891 = vmax.f32 %v5719, 0.0
    %v5892 = vmax.f32 %v5720, 0.0
    %v5893 = vmax.f32 %v5721, 0.0
    %v5894 = vmax.f32 %v5722, 0.0
    %v5895 = vmax.f32 %v5723, 0.0
    %v5896 = vmax.f32 %v5724, 0.0
    %v5897 = vmax.f32 %v5725, 0.0
    %v5898 = vmax.f32 %v5726, 0.0
    %v5899 = vmax.f32 %v5727, 0.0
    %v5900 = vmax.f32 %v5728, 0.0
    %v5901 = vmax.f32 %v5729, 0.0
    %v5902 = vmax.f32 %v5730, 0.0
    %v5903 = vmax.f32 %v5731, 0.0
    %v5904 = vmax.f32 %v5732, 0.0
    %v5905 = vmax.f32 %v5733, 0.0
    %v5906 = vmax.f32 %v5734, 0.0
    %v5907 = vmax.f32 %v5735, 0.0
    %v5908 = vmax.f32 %v5736, 0.0
    %v5909 = vmax.f32 %v5737, 0.0
    %v5910 = vmax.f32 %v5738, 0.0
    %v5911 = vmax.f32 %v5739, 0.0
    %v5912 = vmax.f32 %v5740, 0.0
    %v5913 = vmax.f32 %v5741, 0.0
    %v5914 = vmax.f32 %v5742, 0.0
    %v5915 = vmax.f32 %v5743, 0.0
    %v5916 = vmax.f32 %v5744, 0.0
    %v5917 = vmax.f32 %v5745, 0.0
    %v5918 = vmax.f32 %v5746, 0.0
    %v5919 = vmax.f32 %v5747, 0.0
    %v5920 = vmax.f32 %v5748, 0.0
    %v5921 = vmax.f32 %v5749, 0.0
    %v5922 = vmax.f32 %v5750, 0.0
    %v5923 = vmax.f32 %v5751, 0.0
    %v5924 = vmax.f32 %v5752, 0.0
    %v5925 = vmax.f32 %v5753, 0.0
    %v5926 = vmax.f32 %v5754, 0.0
    %v5927 = vmax.f32 %v5755, 0.0
    %v5928 = vmax.f32 %v5756, 0.0
    %v5929 = vmax.f32 %v5757, 0.0
    %v5930 = vmax.f32 %v5758, 0.0
    %v5931 = vmax.f32 %v5759, 0.0
    %v5932 = vmax.f32 %v5760, 0.0
    %v5933 = vmax.f32 %v5761, 0.0
    %v5934 = vmax.f32 %v5762, 0.0
    %v5935 = vmax.f32 %v5763, 0.0
    %v5936 = vmax.f32 %v5764, 0.0
    %v5937 = vmax.f32 %v5765, 0.0
    %v5938 = vmax.f32 %v5766, 0.0
    %v5939 = vmax.f32 %v5767, 0.0
    %v5940 = vmax.f32 %v5768, 0.0
    %v5941 = vmax.f32 %v5769, 0.0
    %v5942 = vmax.f32 %v5770, 0.0
    %v5943 = vmax.f32 %v5771, 0.0
    %v5944 = vmax.f32 %v5772, 0.0
    %v5945 = vmax.f32 %v5773, 0.0
    %v5946 = vmax.f32 %v5774, 0.0
    %v5947 = vmax.f32 %v5775, 0.0
    %v5948 = vmax.f32 %v5776, 0.0
    %v5949 = vmax.f32 %v5777, 0.0
    %v5950 = vmax.f32 %v5778, 0.0
    %v5951 = vmax.f32 %v5779, 0.0
    %v5952 = vmax.f32 %v5780, 0.0
    %v5953 = vmax.f32 %v5781, 0.0
    %v5954 = vmax.f32 %v5782, 0.0
    %v5955 = vmax.f32 %v5783, 0.0
    %v5956 = vmax.f32 %v5784, 0.0
    %v5957 = vmax.f32 %v5785, 0.0
    %v5958 = vmax.f32 %v5786, 0.0
    %v5959 = vmax.f32 %v5787, 0.0
    %v5960 = vmax.f32 %v5788, 0.0
    %v5961 = vmax.f32 %v5789, 0.0
    %v5962 = vmax.f32 %v5790, 0.0
    %v5963 = vmax.f32 %v5791, 0.0
    %v5964 = vmax.f32 %v5792, 0.0
    %v5965 = vmax.f32 %v5793, 0.0
    %v5966 = vmax.f32 %v5794, 0.0
    %v5967 = vmax.f32 %v5795, 0.0
    %v5968 = vmax.f32 %v5796, 0.0
    %v5969 = vmax.f32 %v5797, 0.0
    %v5970 = vmax.f32 %v5798, 0.0
    %v5971 = vmax.f32 %v5799, 0.0
    %v5972 = vmax.f32 %v5800, 0.0
    %v5973 = vmax.f32 %v5801, 0.0
    %v5974 = vmax.f32 %v5802, 0.0
    %v5975 = vmax.f32 %v5803, 0.0
    %v5976 = vmax.f32 %v5804, 0.0
    %v5977 = vmax.f32 %v5805, 0.0
    %v5978 = vmax.f32 %v5806, 0.0
    %v5979 = vmax.f32 %v5807, 0.0
    %v5980 = vmax.f32 %v5808, 0.0
    %v5981 = vmax.f32 %v5809, 0.0
    %v5982 = vmax.f32 %v5810, 0.0
    %v5983 = vmax.f32 %v5811, 0.0
    %v5984 = vmax.f32 %v5812, 0.0
    %v5985 = vmax.f32 %v5813, 0.0
    %v5986 = vmax.f32 %v5814, 0.0
    %v5987 = vmax.f32 %v5815, 0.0
    %v5988 = vmax.f32 %v5816, 0.0
    %v5989 = vmax.f32 %v5817, 0.0
    %v5990 = vmax.f32 %v5818, 0.0
    %v5991 = vmax.f32 %v5819, 0.0
    %v5992 = vld [vmem:[%s3] sm:$0xff]
    %v5993 = vld [vmem:[%s3 + $0x8] sm:$0xff]
    %v5994 = vld [vmem:[%s3 + $0x10] sm:$0xff]
    %v5995 = vld [vmem:[%s3 + $0x18] sm:$0xff]
    %v5996 = vld [vmem:[%s3 + $0x20] sm:$0xff]
    %v5997 = vld [vmem:[%s3 + $0x28] sm:$0xff]
    %v5998 = vld [vmem:[%s3 + $0x30] sm:$0xff]
    %v5999 = vld [vmem:[%s3 + $0x38] sm:$0xff]
    %v6000 = vld [vmem:[%s3 + $0x40] sm:$0xff]
    %v6001 = vld [vmem:[%s3 + $0x48] sm:$0xff]
    %v6002 = vld [vmem:[%s3 + $0x50] sm:$0xff]
    %v6003 = vld [vmem:[%s3 + $0x58] sm:$0xff]
    %v6004 = vld [vmem:[%s3 + $0x60] sm:$0xff]
    %v6005 = vld [vmem:[%s3 + $0x68] sm:$0xff]
    %v6006 = vld [vmem:[%s3 + $0x70] sm:$0xff]
    %v6007 = vld [vmem:[%s3 + $0x78] sm:$0xff]
    %v6008 = vld [vmem:[%s3 + $0x80] sm:$0xff]
    %v6009 = vld [vmem:[%s3 + $0x88] sm:$0xff]
    %v6010 = vld [vmem:[%s3 + $0x90] sm:$0xff]
    %v6011 = vld [vmem:[%s3 + $0x98] sm:$0xff]
    %v6012 = vld [vmem:[%s3 + $0xa0] sm:$0xff]
    %v6013 = vld [vmem:[%s3 + $0xa8] sm:$0xff]
    %v6014 = vld [vmem:[%s3 + $0xb0] sm:$0xff]
    %v6015 = vld [vmem:[%s3 + $0xb8] sm:$0xff]
    %v6016 = vld [vmem:[%s3 + $0xc0] sm:$0xff]
    %v6017 = vld [vmem:[%s3 + $0xc8] sm:$0xff]
    %v6018 = vld [vmem:[%s3 + $0xd0] sm:$0xff]
    %v6019 = vld [vmem:[%s3 + $0xd8] sm:$0xff]
    %v6020 = vld [vmem:[%s3 + $0xe0] sm:$0xff]
    %v6021 = vld [vmem:[%s3 + $0xe8] sm:$0xff]
    %v6022 = vld [vmem:[%s3 + $0xf0] sm:$0xff]
    %v6023 = vld [vmem:[%s3 + $0xf8] sm:$0xff]
    %v6024 = vld [vmem:[%s3 + $0x100] sm:$0xff]
    %v6025 = vld [vmem:[%s3 + $0x108] sm:$0xff]
    %v6026 = vld [vmem:[%s3 + $0x110] sm:$0xff]
    %v6027 = vld [vmem:[%s3 + $0x118] sm:$0xff]
    %v6028 = vld [vmem:[%s3 + $0x120] sm:$0xff]
    %v6029 = vld [vmem:[%s3 + $0x128] sm:$0xff]
    %v6030 = vld [vmem:[%s3 + $0x130] sm:$0xff]
    %v6031 = vld [vmem:[%s3 + $0x138] sm:$0xff]
    %v6032 = vld [vmem:[%s3 + $0x140] sm:$0xff]
    %v6033 = vld [vmem:[%s3 + $0x148] sm:$0xff]
    %v6034 = vld [vmem:[%s3 + $0x150] sm:$0xff]
    %v6035 = vld [vmem:[%s3 + $0x158] sm:$0xff]
    %v6036 = vld [vmem:[%s3 + $0x160] sm:$0xff]
    %v6037 = vld [vmem:[%s3 + $0x168] sm:$0xff]
    %v6038 = vld [vmem:[%s3 + $0x170] sm:$0xff]
    %v6039 = vld [vmem:[%s3 + $0x178] sm:$0xff]
    %v6040 = vld [vmem:[%s3 + $0x180] sm:$0xff]
    %v6041 = vld [vmem:[%s3 + $0x188] sm:$0xff]
    %v6042 = vld [vmem:[%s3 + $0x190] sm:$0xff]
    %v6043 = vld [vmem:[%s3 + $0x198] sm:$0xff]
    %v6044 = vld [vmem:[%s3 + $0x1a0] sm:$0xff]
    %v6045 = vld [vmem:[%s3 + $0x1a8] sm:$0xff]
    %v6046 = vld [vmem:[%s3 + $0x1b0] sm:$0xff]
    %v6047 = vld [vmem:[%s3 + $0x1b8] sm:$0xff]
    %v6048 = vld [vmem:[%s3 + $0x1c0] sm:$0xff]
    %v6049 = vld [vmem:[%s3 + $0x1c8] sm:$0xff]
    %v6050 = vld [vmem:[%s3 + $0x1d0] sm:$0xff]
    %v6051 = vld [vmem:[%s3 + $0x1d8] sm:$0xff]
    %v6052 = vld [vmem:[%s3 + $0x1e0] sm:$0xff]
    %v6053 = vld [vmem:[%s3 + $0x1e8] sm:$0xff]
    %v6054 = vld [vmem:[%s3 + $0x1f0] sm:$0xff]
    %v6055 = vld [vmem:[%s3 + $0x1f8] sm:$0xff]
    %v6056 = vld [vmem:[%s3 + $0x200] sm:$0xff]
    %v6057 = vld [vmem:[%s3 + $0x208] sm:$0xff]
    %v6058 = vld [vmem:[%s3 + $0x210] sm:$0xff]
    %v6059 = vld [vmem:[%s3 + $0x218] sm:$0xff]
    %v6060 = vld [vmem:[%s3 + $0x220] sm:$0xff]
    %v6061 = vld [vmem:[%s3 + $0x228] sm:$0xff]
    %v6062 = vld [vmem:[%s3 + $0x230] sm:$0xff]
    %v6063 = vld [vmem:[%s3 + $0x238] sm:$0xff]
    %v6064 = vld [vmem:[%s3 + $0x240] sm:$0xff]
    %v6065 = vld [vmem:[%s3 + $0x248] sm:$0xff]
    %v6066 = vld [vmem:[%s3 + $0x250] sm:$0xff]
    %v6067 = vld [vmem:[%s3 + $0x258] sm:$0xff]
    %v6068 = vld [vmem:[%s3 + $0x260] sm:$0xff]
    %v6069 = vld [vmem:[%s3 + $0x268] sm:$0xff]
    %v6070 = vld [vmem:[%s3 + $0x270] sm:$0xff]
    %v6071 = vld [vmem:[%s3 + $0x278] sm:$0xff]
    %v6072 = vld [vmem:[%s3 + $0x280] sm:$0xff]
    %v6073 = vld [vmem:[%s3 + $0x288] sm:$0xff]
    %v6074 = vld [vmem:[%s3 + $0x290] sm:$0xff]
    %v6075 = vld [vmem:[%s3 + $0x298] sm:$0xff]
    %v6076 = vld [vmem:[%s3 + $0x2a0] sm:$0xff]
    %v6077 = vld [vmem:[%s3 + $0x2a8] sm:$0xff]
    %v6078 = vld [vmem:[%s3 + $0x2b0] sm:$0xff]
    %v6079 = vld [vmem:[%s3 + $0x2b8] sm:$0xff]
    %v6080 = vld [vmem:[%s3 + $0x2c0] sm:$0xff]
    %v6081 = vld [vmem:[%s3 + $0x2c8] sm:$0xff]
    %v6082 = vld [vmem:[%s3 + $0x2d0] sm:$0xff]
    %v6083 = vld [vmem:[%s3 + $0x2d8] sm:$0xff]
    %v6084 = vld [vmem:[%s3 + $0x2e0] sm:$0xff]
    %v6085 = vld [vmem:[%s3 + $0x2e8] sm:$0xff]
    %v6086 = vld [vmem:[%s3 + $0x2f0] sm:$0xff]
    %v6087 = vld [vmem:[%s3 + $0x2f8] sm:$0xff]
    %v6088 = vld [vmem:[%s3 + $0x300] sm:$0xff]
    %v6089 = vld [vmem:[%s3 + $0x308] sm:$0xff]
    %v6090 = vld [vmem:[%s3 + $0x310] sm:$0xff]
    %v6091 = vld [vmem:[%s3 + $0x318] sm:$0xff]
    %v6092 = vld [vmem:[%s3 + $0x320] sm:$0xff]
    %v6093 = vld [vmem:[%s3 + $0x328] sm:$0xff]
    %v6094 = vld [vmem:[%s3 + $0x330] sm:$0xff]
    %v6095 = vld [vmem:[%s3 + $0x338] sm:$0xff]
    %v6096 = vld [vmem:[%s3 + $0x340] sm:$0xff]
    %v6097 = vld [vmem:[%s3 + $0x348] sm:$0xff]
    %v6098 = vld [vmem:[%s3 + $0x350] sm:$0xff]
    %v6099 = vld [vmem:[%s3 + $0x358] sm:$0xff]
    %v6100 = vld [vmem:[%s3 + $0x360] sm:$0xff]
    %v6101 = vld [vmem:[%s3 + $0x368] sm:$0xff]
    %v6102 = vld [vmem:[%s3 + $0x370] sm:$0xff]
    %v6103 = vld [vmem:[%s3 + $0x378] sm:$0xff]
    %v6104 = vld [vmem:[%s3 + $0x380] sm:$0xff]
    %v6105 = vld [vmem:[%s3 + $0x388] sm:$0xff]
    %v6106 = vld [vmem:[%s3 + $0x390] sm:$0xff]
    %v6107 = vld [vmem:[%s3 + $0x398] sm:$0xff]
    %v6108 = vld [vmem:[%s3 + $0x3a0] sm:$0xff]
    %v6109 = vld [vmem:[%s3 + $0x3a8] sm:$0xff]
    %v6110 = vld [vmem:[%s3 + $0x3b0] sm:$0xff]
    %v6111 = vld [vmem:[%s3 + $0x3b8] sm:$0xff]
    %v6112 = vld [vmem:[%s3 + $0x3c0] sm:$0xff]
    %v6113 = vld [vmem:[%s3 + $0x3c8] sm:$0xff]
    %v6114 = vld [vmem:[%s3 + $0x3d0] sm:$0xff]
    %v6115 = vld [vmem:[%s3 + $0x3d8] sm:$0xff]
    %v6116 = vld [vmem:[%s3 + $0x3e0] sm:$0xff]
    %v6117 = vld [vmem:[%s3 + $0x3e8] sm:$0xff]
    %v6118 = vld [vmem:[%s3 + $0x3f0] sm:$0xff]
    %v6119 = vld [vmem:[%s3 + $0x3f8] sm:$0xff]
    %v6120 = vld [vmem:[%s3 + $0x400] sm:$0xff]
    %v6121 = vld [vmem:[%s3 + $0x408] sm:$0xff]
    %v6122 = vld [vmem:[%s3 + $0x410] sm:$0xff]
    %v6123 = vld [vmem:[%s3 + $0x418] sm:$0xff]
    %v6124 = vld [vmem:[%s3 + $0x420] sm:$0xff]
    %v6125 = vld [vmem:[%s3 + $0x428] sm:$0xff]
    %v6126 = vld [vmem:[%s3 + $0x430] sm:$0xff]
    %v6127 = vld [vmem:[%s3 + $0x438] sm:$0xff]
    %v6128 = vld [vmem:[%s3 + $0x440] sm:$0xff]
    %v6129 = vld [vmem:[%s3 + $0x448] sm:$0xff]
    %v6130 = vld [vmem:[%s3 + $0x450] sm:$0xff]
    %v6131 = vld [vmem:[%s3 + $0x458] sm:$0xff]
    %v6132 = vld [vmem:[%s3 + $0x460] sm:$0xff]
    %v6133 = vld [vmem:[%s3 + $0x468] sm:$0xff]
    %v6134 = vld [vmem:[%s3 + $0x470] sm:$0xff]
    %v6135 = vld [vmem:[%s3 + $0x478] sm:$0xff]
    %v6136 = vld [vmem:[%s3 + $0x480] sm:$0xff]
    %v6137 = vld [vmem:[%s3 + $0x488] sm:$0xff]
    %v6138 = vld [vmem:[%s3 + $0x490] sm:$0xff]
    %v6139 = vld [vmem:[%s3 + $0x498] sm:$0xff]
    %v6140 = vld [vmem:[%s3 + $0x4a0] sm:$0xff]
    %v6141 = vld [vmem:[%s3 + $0x4a8] sm:$0xff]
    %v6142 = vld [vmem:[%s3 + $0x4b0] sm:$0xff]
    %v6143 = vld [vmem:[%s3 + $0x4b8] sm:$0xff]
    %v6144 = vld [vmem:[%s3 + $0x4c0] sm:$0xff]
    %v6145 = vld [vmem:[%s3 + $0x4c8] sm:$0xff]
    %v6146 = vld [vmem:[%s3 + $0x4d0] sm:$0xff]
    %v6147 = vld [vmem:[%s3 + $0x4d8] sm:$0xff]
    %v6148 = vld [vmem:[%s3 + $0x4e0] sm:$0xff]
    %v6149 = vld [vmem:[%s3 + $0x4e8] sm:$0xff]
    %v6150 = vld [vmem:[%s3 + $0x4f0] sm:$0xff]
    %v6151 = vld [vmem:[%s3 + $0x4f8] sm:$0xff]
    %v6152 = vld [vmem:[%s3 + $0x500] sm:$0xff]
    %v6153 = vld [vmem:[%s3 + $0x508] sm:$0xff]
    %v6154 = vld [vmem:[%s3 + $0x510] sm:$0xff]
    %v6155 = vld [vmem:[%s3 + $0x518] sm:$0xff]
    %v6156 = vld [vmem:[%s3 + $0x520] sm:$0xff]
    %v6157 = vld [vmem:[%s3 + $0x528] sm:$0xff]
    %v6158 = vld [vmem:[%s3 + $0x530] sm:$0xff]
    %v6159 = vld [vmem:[%s3 + $0x538] sm:$0xff]
    %v6160 = vld [vmem:[%s3 + $0x540] sm:$0xff]
    %v6161 = vld [vmem:[%s3 + $0x548] sm:$0xff]
    %v6162 = vld [vmem:[%s3 + $0x550] sm:$0xff]
    %v6163 = vld [vmem:[%s3 + $0x558] sm:$0xff]
    %v6164 = vld [vmem:[%s3 + $0x560] sm:$0xff]
    %v6165 = vld [vmem:[%s3 + $0x568] sm:$0xff]
    %v6166 = vld [vmem:[%s3 + $0x570] sm:$0xff]
    %v6167 = vld [vmem:[%s3 + $0x578] sm:$0xff]
    %v6168 = vld [vmem:[%s3 + $0x580] sm:$0xff]
    %v6169 = vld [vmem:[%s3 + $0x588] sm:$0xff]
    %v6170 = vld [vmem:[%s3 + $0x590] sm:$0xff]
    %v6171 = vld [vmem:[%s3 + $0x598] sm:$0xff]
    %v6172 = vld [vmem:[%s3 + $0x5a0] sm:$0xff]
    %v6173 = vld [vmem:[%s3 + $0x5a8] sm:$0xff]
    %v6174 = vld [vmem:[%s3 + $0x5b0] sm:$0xff]
    %v6175 = vld [vmem:[%s3 + $0x5b8] sm:$0xff]
    %v6176 = vld [vmem:[%s3 + $0x5c0] sm:$0xff]
    %v6177 = vld [vmem:[%s3 + $0x5c8] sm:$0xff]
    %v6178 = vld [vmem:[%s3 + $0x5d0] sm:$0xff]
    %v6179 = vld [vmem:[%s3 + $0x5d8] sm:$0xff]
    %v6180 = vld [vmem:[%s3 + $0x5e0] sm:$0xff]
    %v6181 = vld [vmem:[%s3 + $0x5e8] sm:$0xff]
    %v6182 = vld [vmem:[%s3 + $0x5f0] sm:$0xff]
    %v6183 = vld [vmem:[%s3 + $0x5f8] sm:$0xff]
    %v6184 = vld [vmem:[%s3 + $0x600] sm:$0xff]
    %v6185 = vld [vmem:[%s3 + $0x608] sm:$0xff]
    %v6186 = vld [vmem:[%s3 + $0x610] sm:$0xff]
    %v6187 = vld [vmem:[%s3 + $0x618] sm:$0xff]
    %v6188 = vld [vmem:[%s3 + $0x620] sm:$0xff]
    %v6189 = vld [vmem:[%s3 + $0x628] sm:$0xff]
    %v6190 = vld [vmem:[%s3 + $0x630] sm:$0xff]
    %v6191 = vld [vmem:[%s3 + $0x638] sm:$0xff]
    %v6192 = vld [vmem:[%s3 + $0x640] sm:$0xff]
    %v6193 = vld [vmem:[%s3 + $0x648] sm:$0xff]
    %v6194 = vld [vmem:[%s3 + $0x650] sm:$0xff]
    %v6195 = vld [vmem:[%s3 + $0x658] sm:$0xff]
    %v6196 = vld [vmem:[%s3 + $0x660] sm:$0xff]
    %v6197 = vld [vmem:[%s3 + $0x668] sm:$0xff]
    %v6198 = vld [vmem:[%s3 + $0x670] sm:$0xff]
    %v6199 = vld [vmem:[%s3 + $0x678] sm:$0xff]
    %v6200 = vld [vmem:[%s3 + $0x680] sm:$0xff]
    %v6201 = vld [vmem:[%s3 + $0x688] sm:$0xff]
    %v6202 = vld [vmem:[%s3 + $0x690] sm:$0xff]
    %v6203 = vld [vmem:[%s3 + $0x698] sm:$0xff]
    %v6204 = vld [vmem:[%s3 + $0x6a0] sm:$0xff]
    %v6205 = vld [vmem:[%s3 + $0x6a8] sm:$0xff]
    %v6206 = vld [vmem:[%s3 + $0x6b0] sm:$0xff]
    %v6207 = vld [vmem:[%s3 + $0x6b8] sm:$0xff]
    %v6208 = vld [vmem:[%s3 + $0x6c0] sm:$0xff]
    %v6209 = vld [vmem:[%s3 + $0x6c8] sm:$0xff]
    %v6210 = vld [vmem:[%s3 + $0x6d0] sm:$0xff]
    %v6211 = vld [vmem:[%s3 + $0x6d8] sm:$0xff]
    %v6212 = vld [vmem:[%s3 + $0x6e0] sm:$0xff]
    %v6213 = vld [vmem:[%s3 + $0x6e8] sm:$0xff]
    %v6214 = vld [vmem:[%s3 + $0x6f0] sm:$0xff]
    %v6215 = vld [vmem:[%s3 + $0x6f8] sm:$0xff]
    %v6216 = vld [vmem:[%s3 + $0x700] sm:$0xff]
    %v6217 = vld [vmem:[%s3 + $0x708] sm:$0xff]
    %v6218 = vld [vmem:[%s3 + $0x710] sm:$0xff]
    %v6219 = vld [vmem:[%s3 + $0x718] sm:$0xff]
    %v6220 = vld [vmem:[%s3 + $0x720] sm:$0xff]
    %v6221 = vld [vmem:[%s3 + $0x728] sm:$0xff]
    %v6222 = vld [vmem:[%s3 + $0x730] sm:$0xff]
    %v6223 = vld [vmem:[%s3 + $0x738] sm:$0xff]
    %v6224 = vld [vmem:[%s3 + $0x740] sm:$0xff]
    %v6225 = vld [vmem:[%s3 + $0x748] sm:$0xff]
    %v6226 = vld [vmem:[%s3 + $0x750] sm:$0xff]
    %v6227 = vld [vmem:[%s3 + $0x758] sm:$0xff]
    %v6228 = vld [vmem:[%s3 + $0x760] sm:$0xff]
    %v6229 = vld [vmem:[%s3 + $0x768] sm:$0xff]
    %v6230 = vld [vmem:[%s3 + $0x770] sm:$0xff]
    %v6231 = vld [vmem:[%s3 + $0x778] sm:$0xff]
    %v6232 = vld [vmem:[%s3 + $0x780] sm:$0xff]
    %v6233 = vld [vmem:[%s3 + $0x788] sm:$0xff]
    %v6234 = vld [vmem:[%s3 + $0x790] sm:$0xff]
    %v6235 = vld [vmem:[%s3 + $0x798] sm:$0xff]
    %v6236 = vld [vmem:[%s3 + $0x7a0] sm:$0xff]
    %v6237 = vld [vmem:[%s3 + $0x7a8] sm:$0xff]
    %v6238 = vld [vmem:[%s3 + $0x7b0] sm:$0xff]
    %v6239 = vld [vmem:[%s3 + $0x7b8] sm:$0xff]
    %v6240 = vld [vmem:[%s3 + $0x7c0] sm:$0xff]
    %v6241 = vld [vmem:[%s3 + $0x7c8] sm:$0xff]
    %v6242 = vld [vmem:[%s3 + $0x7d0] sm:$0xff]
    %v6243 = vld [vmem:[%s3 + $0x7d8] sm:$0xff]
    %v6244 = vld [vmem:[%s3 + $0x7e0] sm:$0xff]
    %v6245 = vld [vmem:[%s3 + $0x7e8] sm:$0xff]
    %v6246 = vld [vmem:[%s3 + $0x7f0] sm:$0xff]
    %v6247 = vld [vmem:[%s3 + $0x7f8] sm:$0xff]
    %v6248 = vld [vmem:[%s3 + $0x800] sm:$0xff]
    %v6249 = vld [vmem:[%s3 + $0x808] sm:$0xff]
    %v6250 = vld [vmem:[%s3 + $0x810] sm:$0xff]
    %v6251 = vld [vmem:[%s3 + $0x818] sm:$0xff]
    %v6252 = vld [vmem:[%s3 + $0x820] sm:$0xff]
    %v6253 = vld [vmem:[%s3 + $0x828] sm:$0xff]
    %v6254 = vld [vmem:[%s3 + $0x830] sm:$0xff]
    %v6255 = vld [vmem:[%s3 + $0x838] sm:$0xff]
    %v6256 = vld [vmem:[%s3 + $0x840] sm:$0xff]
    %v6257 = vld [vmem:[%s3 + $0x848] sm:$0xff]
    %v6258 = vld [vmem:[%s3 + $0x850] sm:$0xff]
    %v6259 = vld [vmem:[%s3 + $0x858] sm:$0xff]
    %v6260 = vld [vmem:[%s3 + $0x860] sm:$0xff]
    %v6261 = vld [vmem:[%s3 + $0x868] sm:$0xff]
    %v6262 = vld [vmem:[%s3 + $0x870] sm:$0xff]
    %v6263 = vld [vmem:[%s3 + $0x878] sm:$0xff]
    %v6264 = vld [vmem:[%s3 + $0x880] sm:$0xff]
    %v6265 = vld [vmem:[%s3 + $0x888] sm:$0xff]
    %v6266 = vld [vmem:[%s3 + $0x890] sm:$0xff]
    %v6267 = vld [vmem:[%s3 + $0x898] sm:$0xff]
    %v6268 = vld [vmem:[%s3 + $0x8a0] sm:$0xff]
    %v6269 = vld [vmem:[%s3 + $0x8a8] sm:$0xff]
    %v6270 = vld [vmem:[%s3 + $0x8b0] sm:$0xff]
    %v6271 = vld [vmem:[%s3 + $0x8b8] sm:$0xff]
    %v6272 = vld [vmem:[%s3 + $0x8c0] sm:$0xff]
    %v6273 = vld [vmem:[%s3 + $0x8c8] sm:$0xff]
    %v6274 = vld [vmem:[%s3 + $0x8d0] sm:$0xff]
    %v6275 = vld [vmem:[%s3 + $0x8d8] sm:$0xff]
    %v6276 = vld [vmem:[%s3 + $0x8e0] sm:$0xff]
    %v6277 = vld [vmem:[%s3 + $0x8e8] sm:$0xff]
    %v6278 = vld [vmem:[%s3 + $0x8f0] sm:$0xff]
    %v6279 = vld [vmem:[%s3 + $0x8f8] sm:$0xff]
    %v6280 = vld [vmem:[%s3 + $0x900] sm:$0xff]
    %v6281 = vld [vmem:[%s3 + $0x908] sm:$0xff]
    %v6282 = vld [vmem:[%s3 + $0x910] sm:$0xff]
    %v6283 = vld [vmem:[%s3 + $0x918] sm:$0xff]
    %v6284 = vld [vmem:[%s3 + $0x920] sm:$0xff]
    %v6285 = vld [vmem:[%s3 + $0x928] sm:$0xff]
    %v6286 = vld [vmem:[%s3 + $0x930] sm:$0xff]
    %v6287 = vld [vmem:[%s3 + $0x938] sm:$0xff]
    %v6288 = vld [vmem:[%s3 + $0x940] sm:$0xff]
    %v6289 = vld [vmem:[%s3 + $0x948] sm:$0xff]
    %v6290 = vld [vmem:[%s3 + $0x950] sm:$0xff]
    %v6291 = vld [vmem:[%s3 + $0x958] sm:$0xff]
    %v6292 = vld [vmem:[%s3 + $0x960] sm:$0xff]
    %v6293 = vld [vmem:[%s3 + $0x968] sm:$0xff]
    %v6294 = vld [vmem:[%s3 + $0x970] sm:$0xff]
    %v6295 = vld [vmem:[%s3 + $0x978] sm:$0xff]
    %v6296 = vld [vmem:[%s3 + $0x980] sm:$0xff]
    %v6297 = vld [vmem:[%s3 + $0x988] sm:$0xff]
    %v6298 = vld [vmem:[%s3 + $0x990] sm:$0xff]
    %v6299 = vld [vmem:[%s3 + $0x998] sm:$0xff]
    %v6300 = vld [vmem:[%s3 + $0x9a0] sm:$0xff]
    %v6301 = vld [vmem:[%s3 + $0x9a8] sm:$0xff]
    %v6302 = vld [vmem:[%s3 + $0x9b0] sm:$0xff]
    %v6303 = vld [vmem:[%s3 + $0x9b8] sm:$0xff]
    %v6304 = vld [vmem:[%s3 + $0x9c0] sm:$0xff]
    %v6305 = vld [vmem:[%s3 + $0x9c8] sm:$0xff]
    %v6306 = vld [vmem:[%s3 + $0x9d0] sm:$0xff]
    %v6307 = vld [vmem:[%s3 + $0x9d8] sm:$0xff]
    %v6308 = vld [vmem:[%s3 + $0x9e0] sm:$0xff]
    %v6309 = vld [vmem:[%s3 + $0x9e8] sm:$0xff]
    %v6310 = vld [vmem:[%s3 + $0x9f0] sm:$0xff]
    %v6311 = vld [vmem:[%s3 + $0x9f8] sm:$0xff]
    %v6312 = vld [vmem:[%s3 + $0xa00] sm:$0xff]
    %v6313 = vld [vmem:[%s3 + $0xa08] sm:$0xff]
    %v6314 = vld [vmem:[%s3 + $0xa10] sm:$0xff]
    %v6315 = vld [vmem:[%s3 + $0xa18] sm:$0xff]
    %v6316 = vld [vmem:[%s3 + $0xa20] sm:$0xff]
    %v6317 = vld [vmem:[%s3 + $0xa28] sm:$0xff]
    %v6318 = vld [vmem:[%s3 + $0xa30] sm:$0xff]
    %v6319 = vld [vmem:[%s3 + $0xa38] sm:$0xff]
    %v6320 = vld [vmem:[%s3 + $0xa40] sm:$0xff]
    %v6321 = vld [vmem:[%s3 + $0xa48] sm:$0xff]
    %v6322 = vld [vmem:[%s3 + $0xa50] sm:$0xff]
    %v6323 = vld [vmem:[%s3 + $0xa58] sm:$0xff]
    %v6324 = vld [vmem:[%s3 + $0xa60] sm:$0xff]
    %v6325 = vld [vmem:[%s3 + $0xa68] sm:$0xff]
    %v6326 = vld [vmem:[%s3 + $0xa70] sm:$0xff]
    %v6327 = vld [vmem:[%s3 + $0xa78] sm:$0xff]
    %v6328 = vld [vmem:[%s3 + $0xa80] sm:$0xff]
    %v6329 = vld [vmem:[%s3 + $0xa88] sm:$0xff]
    %v6330 = vld [vmem:[%s3 + $0xa90] sm:$0xff]
    %v6331 = vld [vmem:[%s3 + $0xa98] sm:$0xff]
    %v6332 = vld [vmem:[%s3 + $0xaa0] sm:$0xff]
    %v6333 = vld [vmem:[%s3 + $0xaa8] sm:$0xff]
    %v6334 = vld [vmem:[%s3 + $0xab0] sm:$0xff]
    %v6335 = vld [vmem:[%s3 + $0xab8] sm:$0xff]
    %v6336 = vld [vmem:[%s3 + $0xac0] sm:$0xff]
    %v6337 = vld [vmem:[%s3 + $0xac8] sm:$0xff]
    %v6338 = vld [vmem:[%s3 + $0xad0] sm:$0xff]
    %v6339 = vld [vmem:[%s3 + $0xad8] sm:$0xff]
    %v6340 = vld [vmem:[%s3 + $0xae0] sm:$0xff]
    %v6341 = vld [vmem:[%s3 + $0xae8] sm:$0xff]
    %v6342 = vld [vmem:[%s3 + $0xaf0] sm:$0xff]
    %v6343 = vld [vmem:[%s3 + $0xaf8] sm:$0xff]
    %v6344 = vld [vmem:[%s3 + $0xb00] sm:$0xff]
    %v6345 = vld [vmem:[%s3 + $0xb08] sm:$0xff]
    %v6346 = vld [vmem:[%s3 + $0xb10] sm:$0xff]
    %v6347 = vld [vmem:[%s3 + $0xb18] sm:$0xff]
    %v6348 = vld [vmem:[%s3 + $0xb20] sm:$0xff]
    %v6349 = vld [vmem:[%s3 + $0xb28] sm:$0xff]
    %v6350 = vld [vmem:[%s3 + $0xb30] sm:$0xff]
    %v6351 = vld [vmem:[%s3 + $0xb38] sm:$0xff]
    %v6352 = vld [vmem:[%s3 + $0xb40] sm:$0xff]
    %v6353 = vld [vmem:[%s3 + $0xb48] sm:$0xff]
    %v6354 = vld [vmem:[%s3 + $0xb50] sm:$0xff]
    %v6355 = vld [vmem:[%s3 + $0xb58] sm:$0xff]
    %v6356 = vld [vmem:[%s3 + $0xb60] sm:$0xff]
    %v6357 = vld [vmem:[%s3 + $0xb68] sm:$0xff]
    %v6358 = vld [vmem:[%s3 + $0xb70] sm:$0xff]
    %v6359 = vld [vmem:[%s3 + $0xb78] sm:$0xff]
    %v6360 = vld [vmem:[%s3 + $0xb80] sm:$0xff]
    %v6361 = vld [vmem:[%s3 + $0xb88] sm:$0xff]
    %v6362 = vld [vmem:[%s3 + $0xb90] sm:$0xff]
    %v6363 = vld [vmem:[%s3 + $0xb98] sm:$0xff]
    %v6364 = vld [vmem:[%s3 + $0xba0] sm:$0xff]
    %v6365 = vld [vmem:[%s3 + $0xba8] sm:$0xff]
    %v6366 = vld [vmem:[%s3 + $0xbb0] sm:$0xff]
    %v6367 = vld [vmem:[%s3 + $0xbb8] sm:$0xff]
    %v6368 = vld [vmem:[%s3 + $0xbc0] sm:$0xff]
    %v6369 = vld [vmem:[%s3 + $0xbc8] sm:$0xff]
    %v6370 = vld [vmem:[%s3 + $0xbd0] sm:$0xff]
    %v6371 = vld [vmem:[%s3 + $0xbd8] sm:$0xff]
    %v6372 = vld [vmem:[%s3 + $0xbe0] sm:$0xff]
    %v6373 = vld [vmem:[%s3 + $0xbe8] sm:$0xff]
    %v6374 = vld [vmem:[%s3 + $0xbf0] sm:$0xff]
    %v6375 = vld [vmem:[%s3 + $0xbf8] sm:$0xff]
    %v6376 = vld [vmem:[%s3 + $0xc00] sm:$0xff]
    %v6377 = vld [vmem:[%s3 + $0xc08] sm:$0xff]
    %v6378 = vld [vmem:[%s3 + $0xc10] sm:$0xff]
    %v6379 = vld [vmem:[%s3 + $0xc18] sm:$0xff]
    %v6380 = vld [vmem:[%s3 + $0xc20] sm:$0xff]
    %v6381 = vld [vmem:[%s3 + $0xc28] sm:$0xff]
    %v6382 = vld [vmem:[%s3 + $0xc30] sm:$0xff]
    %v6383 = vld [vmem:[%s3 + $0xc38] sm:$0xff]
    %v6384 = vld [vmem:[%s3 + $0xc40] sm:$0xff]
    %v6385 = vld [vmem:[%s3 + $0xc48] sm:$0xff]
    %v6386 = vld [vmem:[%s3 + $0xc50] sm:$0xff]
    %v6387 = vld [vmem:[%s3 + $0xc58] sm:$0xff]
    %v6388 = vld [vmem:[%s3 + $0xc60] sm:$0xff]
    %v6389 = vld [vmem:[%s3 + $0xc68] sm:$0xff]
    %v6390 = vld [vmem:[%s3 + $0xc70] sm:$0xff]
    %v6391 = vld [vmem:[%s3 + $0xc78] sm:$0xff]
    %v6392 = vld [vmem:[%s3 + $0xc80] sm:$0xff]
    %v6393 = vld [vmem:[%s3 + $0xc88] sm:$0xff]
    %v6394 = vld [vmem:[%s3 + $0xc90] sm:$0xff]
    %v6395 = vld [vmem:[%s3 + $0xc98] sm:$0xff]
    %v6396 = vld [vmem:[%s3 + $0xca0] sm:$0xff]
    %v6397 = vld [vmem:[%s3 + $0xca8] sm:$0xff]
    %v6398 = vld [vmem:[%s3 + $0xcb0] sm:$0xff]
    %v6399 = vld [vmem:[%s3 + $0xcb8] sm:$0xff]
    %v6400 = vld [vmem:[%s3 + $0xcc0] sm:$0xff]
    %v6401 = vld [vmem:[%s3 + $0xcc8] sm:$0xff]
    %v6402 = vld [vmem:[%s3 + $0xcd0] sm:$0xff]
    %v6403 = vld [vmem:[%s3 + $0xcd8] sm:$0xff]
    %v6404 = vld [vmem:[%s3 + $0xce0] sm:$0xff]
    %v6405 = vld [vmem:[%s3 + $0xce8] sm:$0xff]
    %v6406 = vld [vmem:[%s3 + $0xcf0] sm:$0xff]
    %v6407 = vld [vmem:[%s3 + $0xcf8] sm:$0xff]
    %v6408 = vld [vmem:[%s3 + $0xd00] sm:$0xff]
    %v6409 = vld [vmem:[%s3 + $0xd08] sm:$0xff]
    %v6410 = vld [vmem:[%s3 + $0xd10] sm:$0xff]
    %v6411 = vld [vmem:[%s3 + $0xd18] sm:$0xff]
    %v6412 = vld [vmem:[%s3 + $0xd20] sm:$0xff]
    %v6413 = vld [vmem:[%s3 + $0xd28] sm:$0xff]
    %v6414 = vld [vmem:[%s3 + $0xd30] sm:$0xff]
    %v6415 = vld [vmem:[%s3 + $0xd38] sm:$0xff]
    %v6416 = vld [vmem:[%s3 + $0xd40] sm:$0xff]
    %v6417 = vld [vmem:[%s3 + $0xd48] sm:$0xff]
    %v6418 = vld [vmem:[%s3 + $0xd50] sm:$0xff]
    %v6419 = vld [vmem:[%s3 + $0xd58] sm:$0xff]
    %v6420 = vld [vmem:[%s3 + $0xd60] sm:$0xff]
    %v6421 = vld [vmem:[%s3 + $0xd68] sm:$0xff]
    %v6422 = vld [vmem:[%s3 + $0xd70] sm:$0xff]
    %v6423 = vld [vmem:[%s3 + $0xd78] sm:$0xff]
    %v6424 = vld [vmem:[%s3 + $0xd80] sm:$0xff]
    %v6425 = vld [vmem:[%s3 + $0xd88] sm:$0xff]
    %v6426 = vld [vmem:[%s3 + $0xd90] sm:$0xff]
    %v6427 = vld [vmem:[%s3 + $0xd98] sm:$0xff]
    %v6428 = vld [vmem:[%s3 + $0xda0] sm:$0xff]
    %v6429 = vld [vmem:[%s3 + $0xda8] sm:$0xff]
    %v6430 = vld [vmem:[%s3 + $0xdb0] sm:$0xff]
    %v6431 = vld [vmem:[%s3 + $0xdb8] sm:$0xff]
    %v6432 = vld [vmem:[%s3 + $0xdc0] sm:$0xff]
    %v6433 = vld [vmem:[%s3 + $0xdc8] sm:$0xff]
    %v6434 = vld [vmem:[%s3 + $0xdd0] sm:$0xff]
    %v6435 = vld [vmem:[%s3 + $0xdd8] sm:$0xff]
    %v6436 = vld [vmem:[%s3 + $0xde0] sm:$0xff]
    %v6437 = vld [vmem:[%s3 + $0xde8] sm:$0xff]
    %v6438 = vld [vmem:[%s3 + $0xdf0] sm:$0xff]
    %v6439 = vld [vmem:[%s3 + $0xdf8] sm:$0xff]
    %v6440 = vld [vmem:[%s3 + $0xe00] sm:$0xff]
    %v6441 = vld [vmem:[%s3 + $0xe08] sm:$0xff]
    %v6442 = vld [vmem:[%s3 + $0xe10] sm:$0xff]
    %v6443 = vld [vmem:[%s3 + $0xe18] sm:$0xff]
    %v6444 = vld [vmem:[%s3 + $0xe20] sm:$0xff]
    %v6445 = vld [vmem:[%s3 + $0xe28] sm:$0xff]
    %v6446 = vld [vmem:[%s3 + $0xe30] sm:$0xff]
    %v6447 = vld [vmem:[%s3 + $0xe38] sm:$0xff]
    %v6448 = vld [vmem:[%s3 + $0xe40] sm:$0xff]
    %v6449 = vld [vmem:[%s3 + $0xe48] sm:$0xff]
    %v6450 = vld [vmem:[%s3 + $0xe50] sm:$0xff]
    %v6451 = vld [vmem:[%s3 + $0xe58] sm:$0xff]
    %v6452 = vld [vmem:[%s3 + $0xe60] sm:$0xff]
    %v6453 = vld [vmem:[%s3 + $0xe68] sm:$0xff]
    %v6454 = vld [vmem:[%s3 + $0xe70] sm:$0xff]
    %v6455 = vld [vmem:[%s3 + $0xe78] sm:$0xff]
    %v6456 = vld [vmem:[%s3 + $0xe80] sm:$0xff]
    %v6457 = vld [vmem:[%s3 + $0xe88] sm:$0xff]
    %v6458 = vld [vmem:[%s3 + $0xe90] sm:$0xff]
    %v6459 = vld [vmem:[%s3 + $0xe98] sm:$0xff]
    %v6460 = vld [vmem:[%s3 + $0xea0] sm:$0xff]
    %v6461 = vld [vmem:[%s3 + $0xea8] sm:$0xff]
    %v6462 = vld [vmem:[%s3 + $0xeb0] sm:$0xff]
    %v6463 = vld [vmem:[%s3 + $0xeb8] sm:$0xff]
    %v6464 = vld [vmem:[%s3 + $0xec0] sm:$0xff]
    %v6465 = vld [vmem:[%s3 + $0xec8] sm:$0xff]
    %v6466 = vld [vmem:[%s3 + $0xed0] sm:$0xff]
    %v6467 = vld [vmem:[%s3 + $0xed8] sm:$0xff]
    %v6468 = vld [vmem:[%s3 + $0xee0] sm:$0xff]
    %v6469 = vld [vmem:[%s3 + $0xee8] sm:$0xff]
    %v6470 = vld [vmem:[%s3 + $0xef0] sm:$0xff]
    %v6471 = vld [vmem:[%s3 + $0xef8] sm:$0xff]
    %v6472 = vld [vmem:[%s3 + $0xf00] sm:$0xff]
    %v6473 = vld [vmem:[%s3 + $0xf08] sm:$0xff]
    %v6474 = vld [vmem:[%s3 + $0xf10] sm:$0xff]
    %v6475 = vld [vmem:[%s3 + $0xf18] sm:$0xff]
    %v6476 = vld [vmem:[%s3 + $0xf20] sm:$0xff]
    %v6477 = vld [vmem:[%s3 + $0xf28] sm:$0xff]
    %v6478 = vld [vmem:[%s3 + $0xf30] sm:$0xff]
    %v6479 = vld [vmem:[%s3 + $0xf38] sm:$0xff]
    %v6480 = vld [vmem:[%s3 + $0xf40] sm:$0xff]
    %v6481 = vld [vmem:[%s3 + $0xf48] sm:$0xff]
    %v6482 = vld [vmem:[%s3 + $0xf50] sm:$0xff]
    %v6483 = vld [vmem:[%s3 + $0xf58] sm:$0xff]
    %v6484 = vld [vmem:[%s3 + $0xf60] sm:$0xff]
    %v6485 = vld [vmem:[%s3 + $0xf68] sm:$0xff]
    %v6486 = vld [vmem:[%s3 + $0xf70] sm:$0xff]
    %v6487 = vld [vmem:[%s3 + $0xf78] sm:$0xff]
    %v6488 = vld [vmem:[%s3 + $0xf80] sm:$0xff]
    %v6489 = vld [vmem:[%s3 + $0xf88] sm:$0xff]
    %v6490 = vld [vmem:[%s3 + $0xf90] sm:$0xff]
    %v6491 = vld [vmem:[%s3 + $0xf98] sm:$0xff]
    %v6492 = vld [vmem:[%s3 + $0xfa0] sm:$0xff]
    %v6493 = vld [vmem:[%s3 + $0xfa8] sm:$0xff]
    %v6494 = vld [vmem:[%s3 + $0xfb0] sm:$0xff]
    %v6495 = vld [vmem:[%s3 + $0xfb8] sm:$0xff]
    %v6496 = vld [vmem:[%s3 + $0xfc0] sm:$0xff]
    %v6497 = vld [vmem:[%s3 + $0xfc8] sm:$0xff]
    %v6498 = vld [vmem:[%s3 + $0xfd0] sm:$0xff]
    %v6499 = vld [vmem:[%s3 + $0xfd8] sm:$0xff]
    %v6500 = vld [vmem:[%s3 + $0xfe0] sm:$0xff]
    %v6501 = vld [vmem:[%s3 + $0xfe8] sm:$0xff]
    %v6502 = vld [vmem:[%s3 + $0xff0] sm:$0xff]
    %v6503 = vld [vmem:[%s3 + $0xff8] sm:$0xff]
    %v6504 = vld [vmem:[%s3 + $0x1000] sm:$0xff]
    %v6505 = vld [vmem:[%s3 + $0x1008] sm:$0xff]
    %v6506 = vld [vmem:[%s3 + $0x1010] sm:$0xff]
    %v6507 = vld [vmem:[%s3 + $0x1018] sm:$0xff]
    %v6508 = vld [vmem:[%s3 + $0x1020] sm:$0xff]
    %v6509 = vld [vmem:[%s3 + $0x1028] sm:$0xff]
    %v6510 = vld [vmem:[%s3 + $0x1030] sm:$0xff]
    %v6511 = vld [vmem:[%s3 + $0x1038] sm:$0xff]
    %v6512 = vld [vmem:[%s3 + $0x1040] sm:$0xff]
    %v6513 = vld [vmem:[%s3 + $0x1048] sm:$0xff]
    %v6514 = vld [vmem:[%s3 + $0x1050] sm:$0xff]
    %v6515 = vld [vmem:[%s3 + $0x1058] sm:$0xff]
    %v6516 = vld [vmem:[%s3 + $0x1060] sm:$0xff]
    %v6517 = vld [vmem:[%s3 + $0x1068] sm:$0xff]
    %v6518 = vld [vmem:[%s3 + $0x1070] sm:$0xff]
    %v6519 = vld [vmem:[%s3 + $0x1078] sm:$0xff]
    %v6520 = vld [vmem:[%s3 + $0x1080] sm:$0xff]
    %v6521 = vld [vmem:[%s3 + $0x1088] sm:$0xff]
    %v6522 = vld [vmem:[%s3 + $0x1090] sm:$0xff]
    %v6523 = vld [vmem:[%s3 + $0x1098] sm:$0xff]
    %v6524 = vld [vmem:[%s3 + $0x10a0] sm:$0xff]
    %v6525 = vld [vmem:[%s3 + $0x10a8] sm:$0xff]
    %v6526 = vld [vmem:[%s3 + $0x10b0] sm:$0xff]
    %v6527 = vld [vmem:[%s3 + $0x10b8] sm:$0xff]
    %v6528 = vld [vmem:[%s3 + $0x10c0] sm:$0xff]
    %v6529 = vld [vmem:[%s3 + $0x10c8] sm:$0xff]
    %v6530 = vld [vmem:[%s3 + $0x10d0] sm:$0xff]
    %v6531 = vld [vmem:[%s3 + $0x10d8] sm:$0xff]
    %v6532 = vld [vmem:[%s3 + $0x10e0] sm:$0xff]
    %v6533 = vld [vmem:[%s3 + $0x10e8] sm:$0xff]
    %v6534 = vld [vmem:[%s3 + $0x10f0] sm:$0xff]
    %v6535 = vld [vmem:[%s3 + $0x10f8] sm:$0xff]
    %v6536 = vld [vmem:[%s3 + $0x1100] sm:$0xff]
    %v6537 = vld [vmem:[%s3 + $0x1108] sm:$0xff]
    %v6538 = vld [vmem:[%s3 + $0x1110] sm:$0xff]
    %v6539 = vld [vmem:[%s3 + $0x1118] sm:$0xff]
    %v6540 = vld [vmem:[%s3 + $0x1120] sm:$0xff]
    %v6541 = vld [vmem:[%s3 + $0x1128] sm:$0xff]
    %v6542 = vld [vmem:[%s3 + $0x1130] sm:$0xff]
    %v6543 = vld [vmem:[%s3 + $0x1138] sm:$0xff]
    %v6544 = vld [vmem:[%s3 + $0x1140] sm:$0xff]
    %v6545 = vld [vmem:[%s3 + $0x1148] sm:$0xff]
    %v6546 = vld [vmem:[%s3 + $0x1150] sm:$0xff]
    %v6547 = vld [vmem:[%s3 + $0x1158] sm:$0xff]
    %v6548 = vld [vmem:[%s3 + $0x1160] sm:$0xff]
    %v6549 = vld [vmem:[%s3 + $0x1168] sm:$0xff]
    %v6550 = vld [vmem:[%s3 + $0x1170] sm:$0xff]
    %v6551 = vld [vmem:[%s3 + $0x1178] sm:$0xff]
    %v6552 = vld [vmem:[%s3 + $0x1180] sm:$0xff]
    %v6553 = vld [vmem:[%s3 + $0x1188] sm:$0xff]
    %v6554 = vld [vmem:[%s3 + $0x1190] sm:$0xff]
    %v6555 = vld [vmem:[%s3 + $0x1198] sm:$0xff]
    %v6556 = vld [vmem:[%s3 + $0x11a0] sm:$0xff]
    %v6557 = vld [vmem:[%s3 + $0x11a8] sm:$0xff]
    %v6558 = vld [vmem:[%s3 + $0x11b0] sm:$0xff]
    %v6559 = vld [vmem:[%s3 + $0x11b8] sm:$0xff]
    %v6560 = vld [vmem:[%s3 + $0x11c0] sm:$0xff]
    %v6561 = vld [vmem:[%s3 + $0x11c8] sm:$0xff]
    %v6562 = vld [vmem:[%s3 + $0x11d0] sm:$0xff]
    %v6563 = vld [vmem:[%s3 + $0x11d8] sm:$0xff]
    %v6564 = vld [vmem:[%s3 + $0x11e0] sm:$0xff]
    %v6565 = vld [vmem:[%s3 + $0x11e8] sm:$0xff]
    %v6566 = vld [vmem:[%s3 + $0x11f0] sm:$0xff]
    %v6567 = vld [vmem:[%s3 + $0x11f8] sm:$0xff]
    %v6568 = vld [vmem:[%s3 + $0x1200] sm:$0xff]
    %v6569 = vld [vmem:[%s3 + $0x1208] sm:$0xff]
    %v6570 = vld [vmem:[%s3 + $0x1210] sm:$0xff]
    %v6571 = vld [vmem:[%s3 + $0x1218] sm:$0xff]
    %v6572 = vld [vmem:[%s3 + $0x1220] sm:$0xff]
    %v6573 = vld [vmem:[%s3 + $0x1228] sm:$0xff]
    %v6574 = vld [vmem:[%s3 + $0x1230] sm:$0xff]
    %v6575 = vld [vmem:[%s3 + $0x1238] sm:$0xff]
    %v6576 = vld [vmem:[%s3 + $0x1240] sm:$0xff]
    %v6577 = vld [vmem:[%s3 + $0x1248] sm:$0xff]
    %v6578 = vld [vmem:[%s3 + $0x1250] sm:$0xff]
    %v6579 = vld [vmem:[%s3 + $0x1258] sm:$0xff]
    %v6580 = vld [vmem:[%s3 + $0x1260] sm:$0xff]
    %v6581 = vld [vmem:[%s3 + $0x1268] sm:$0xff]
    %v6582 = vld [vmem:[%s3 + $0x1270] sm:$0xff]
    %v6583 = vld [vmem:[%s3 + $0x1278] sm:$0xff]
    %v6584 = vld [vmem:[%s3 + $0x1280] sm:$0xff]
    %v6585 = vld [vmem:[%s3 + $0x1288] sm:$0xff]
    %v6586 = vld [vmem:[%s3 + $0x1290] sm:$0xff]
    %v6587 = vld [vmem:[%s3 + $0x1298] sm:$0xff]
    %v6588 = vld [vmem:[%s3 + $0x12a0] sm:$0xff]
    %v6589 = vld [vmem:[%s3 + $0x12a8] sm:$0xff]
    %v6590 = vld [vmem:[%s3 + $0x12b0] sm:$0xff]
    %v6591 = vld [vmem:[%s3 + $0x12b8] sm:$0xff]
    %v6592 = vld [vmem:[%s3 + $0x12c0] sm:$0xff]
    %v6593 = vld [vmem:[%s3 + $0x12c8] sm:$0xff]
    %v6594 = vld [vmem:[%s3 + $0x12d0] sm:$0xff]
    %v6595 = vld [vmem:[%s3 + $0x12d8] sm:$0xff]
    %v6596 = vld [vmem:[%s3 + $0x12e0] sm:$0xff]
    %v6597 = vld [vmem:[%s3 + $0x12e8] sm:$0xff]
    %v6598 = vld [vmem:[%s3 + $0x12f0] sm:$0xff]
    %v6599 = vld [vmem:[%s3 + $0x12f8] sm:$0xff]
    %v6600 = vld [vmem:[%s3 + $0x1300] sm:$0xff]
    %v6601 = vld [vmem:[%s3 + $0x1308] sm:$0xff]
    %v6602 = vld [vmem:[%s3 + $0x1310] sm:$0xff]
    %v6603 = vld [vmem:[%s3 + $0x1318] sm:$0xff]
    %v6604 = vld [vmem:[%s3 + $0x1320] sm:$0xff]
    %v6605 = vld [vmem:[%s3 + $0x1328] sm:$0xff]
    %v6606 = vld [vmem:[%s3 + $0x1330] sm:$0xff]
    %v6607 = vld [vmem:[%s3 + $0x1338] sm:$0xff]
    %v6608 = vld [vmem:[%s3 + $0x1340] sm:$0xff]
    %v6609 = vld [vmem:[%s3 + $0x1348] sm:$0xff]
    %v6610 = vld [vmem:[%s3 + $0x1350] sm:$0xff]
    %v6611 = vld [vmem:[%s3 + $0x1358] sm:$0xff]
    %v6612 = vld [vmem:[%s3 + $0x1360] sm:$0xff]
    %v6613 = vld [vmem:[%s3 + $0x1368] sm:$0xff]
    %v6614 = vld [vmem:[%s3 + $0x1370] sm:$0xff]
    %v6615 = vld [vmem:[%s3 + $0x1378] sm:$0xff]
    %v6616 = vld [vmem:[%s3 + $0x1380] sm:$0xff]
    %v6617 = vld [vmem:[%s3 + $0x1388] sm:$0xff]
    %v6618 = vld [vmem:[%s3 + $0x1390] sm:$0xff]
    %v6619 = vld [vmem:[%s3 + $0x1398] sm:$0xff]
    %v6620 = vld [vmem:[%s3 + $0x13a0] sm:$0xff]
    %v6621 = vld [vmem:[%s3 + $0x13a8] sm:$0xff]
    %v6622 = vld [vmem:[%s3 + $0x13b0] sm:$0xff]
    %v6623 = vld [vmem:[%s3 + $0x13b8] sm:$0xff]
    %v6624 = vld [vmem:[%s3 + $0x13c0] sm:$0xff]
    %v6625 = vld [vmem:[%s3 + $0x13c8] sm:$0xff]
    %v6626 = vld [vmem:[%s3 + $0x13d0] sm:$0xff]
    %v6627 = vld [vmem:[%s3 + $0x13d8] sm:$0xff]
    %v6628 = vld [vmem:[%s3 + $0x13e0] sm:$0xff]
    %v6629 = vld [vmem:[%s3 + $0x13e8] sm:$0xff]
    %v6630 = vld [vmem:[%s3 + $0x13f0] sm:$0xff]
    %v6631 = vld [vmem:[%s3 + $0x13f8] sm:$0xff]
    %v6632 = vld [vmem:[%s3 + $0x1400] sm:$0xff]
    %v6633 = vld [vmem:[%s3 + $0x1408] sm:$0xff]
    %v6634 = vld [vmem:[%s3 + $0x1410] sm:$0xff]
    %v6635 = vld [vmem:[%s3 + $0x1418] sm:$0xff]
    %v6636 = vld [vmem:[%s3 + $0x1420] sm:$0xff]
    %v6637 = vld [vmem:[%s3 + $0x1428] sm:$0xff]
    %v6638 = vld [vmem:[%s3 + $0x1430] sm:$0xff]
    %v6639 = vld [vmem:[%s3 + $0x1438] sm:$0xff]
    %v6640 = vld [vmem:[%s3 + $0x1440] sm:$0xff]
    %v6641 = vld [vmem:[%s3 + $0x1448] sm:$0xff]
    %v6642 = vld [vmem:[%s3 + $0x1450] sm:$0xff]
    %v6643 = vld [vmem:[%s3 + $0x1458] sm:$0xff]
    %v6644 = vld [vmem:[%s3 + $0x1460] sm:$0xff]
    %v6645 = vld [vmem:[%s3 + $0x1468] sm:$0xff]
    %v6646 = vld [vmem:[%s3 + $0x1470] sm:$0xff]
    %v6647 = vld [vmem:[%s3 + $0x1478] sm:$0xff]
    %v6648 = vld [vmem:[%s3 + $0x1480] sm:$0xff]
    %v6649 = vld [vmem:[%s3 + $0x1488] sm:$0xff]
    %v6650 = vld [vmem:[%s3 + $0x1490] sm:$0xff]
    %v6651 = vld [vmem:[%s3 + $0x1498] sm:$0xff]
    %v6652 = vld [vmem:[%s3 + $0x14a0] sm:$0xff]
    %v6653 = vld [vmem:[%s3 + $0x14a8] sm:$0xff]
    %v6654 = vld [vmem:[%s3 + $0x14b0] sm:$0xff]
    %v6655 = vld [vmem:[%s3 + $0x14b8] sm:$0xff]
    %v6656 = vld [vmem:[%s3 + $0x14c0] sm:$0xff]
    %v6657 = vld [vmem:[%s3 + $0x14c8] sm:$0xff]
    %v6658 = vld [vmem:[%s3 + $0x14d0] sm:$0xff]
    %v6659 = vld [vmem:[%s3 + $0x14d8] sm:$0xff]
    %v6660 = vld [vmem:[%s3 + $0x14e0] sm:$0xff]
    %v6661 = vld [vmem:[%s3 + $0x14e8] sm:$0xff]
    %v6662 = vld [vmem:[%s3 + $0x14f0] sm:$0xff]
    %v6663 = vld [vmem:[%s3 + $0x14f8] sm:$0xff]
    %v6664 = vld [vmem:[%s3 + $0x1500] sm:$0xff]
    %v6665 = vld [vmem:[%s3 + $0x1508] sm:$0xff]
    %v6666 = vld [vmem:[%s3 + $0x1510] sm:$0xff]
    %v6667 = vld [vmem:[%s3 + $0x1518] sm:$0xff]
    %v6668 = vld [vmem:[%s3 + $0x1520] sm:$0xff]
    %v6669 = vld [vmem:[%s3 + $0x1528] sm:$0xff]
    %v6670 = vld [vmem:[%s3 + $0x1530] sm:$0xff]
    %v6671 = vld [vmem:[%s3 + $0x1538] sm:$0xff]
    %v6672 = vld [vmem:[%s3 + $0x1540] sm:$0xff]
    %v6673 = vld [vmem:[%s3 + $0x1548] sm:$0xff]
    %v6674 = vld [vmem:[%s3 + $0x1550] sm:$0xff]
    %v6675 = vld [vmem:[%s3 + $0x1558] sm:$0xff]
    %v6676 = vld [vmem:[%s3 + $0x1560] sm:$0xff]
    %v6677 = vld [vmem:[%s3 + $0x1568] sm:$0xff]
    %v6678 = vld [vmem:[%s3 + $0x1570] sm:$0xff]
    %v6679 = vld [vmem:[%s3 + $0x1578] sm:$0xff]
    %v6680 = vld [vmem:[%s3 + $0x1580] sm:$0xff]
    %v6681 = vld [vmem:[%s3 + $0x1588] sm:$0xff]
    %v6682 = vld [vmem:[%s3 + $0x1590] sm:$0xff]
    %v6683 = vld [vmem:[%s3 + $0x1598] sm:$0xff]
    %v6684 = vld [vmem:[%s3 + $0x15a0] sm:$0xff]
    %v6685 = vld [vmem:[%s3 + $0x15a8] sm:$0xff]
    %v6686 = vld [vmem:[%s3 + $0x15b0] sm:$0xff]
    %v6687 = vld [vmem:[%s3 + $0x15b8] sm:$0xff]
    %v6688 = vld [vmem:[%s3 + $0x15c0] sm:$0xff]
    %v6689 = vld [vmem:[%s3 + $0x15c8] sm:$0xff]
    %v6690 = vld [vmem:[%s3 + $0x15d0] sm:$0xff]
    %v6691 = vld [vmem:[%s3 + $0x15d8] sm:$0xff]
    %v6692 = vld [vmem:[%s3 + $0x15e0] sm:$0xff]
    %v6693 = vld [vmem:[%s3 + $0x15e8] sm:$0xff]
    %v6694 = vld [vmem:[%s3 + $0x15f0] sm:$0xff]
    %v6695 = vld [vmem:[%s3 + $0x15f8] sm:$0xff]
    %v6696 = vld [vmem:[%s3 + $0x1600] sm:$0xff]
    %v6697 = vld [vmem:[%s3 + $0x1608] sm:$0xff]
    %v6698 = vld [vmem:[%s3 + $0x1610] sm:$0xff]
    %v6699 = vld [vmem:[%s3 + $0x1618] sm:$0xff]
    %v6700 = vld [vmem:[%s3 + $0x1620] sm:$0xff]
    %v6701 = vld [vmem:[%s3 + $0x1628] sm:$0xff]
    %v6702 = vld [vmem:[%s3 + $0x1630] sm:$0xff]
    %v6703 = vld [vmem:[%s3 + $0x1638] sm:$0xff]
    %v6704 = vld [vmem:[%s3 + $0x1640] sm:$0xff]
    %v6705 = vld [vmem:[%s3 + $0x1648] sm:$0xff]
    %v6706 = vld [vmem:[%s3 + $0x1650] sm:$0xff]
    %v6707 = vld [vmem:[%s3 + $0x1658] sm:$0xff]
    %v6708 = vld [vmem:[%s3 + $0x1660] sm:$0xff]
    %v6709 = vld [vmem:[%s3 + $0x1668] sm:$0xff]
    %v6710 = vld [vmem:[%s3 + $0x1670] sm:$0xff]
    %v6711 = vld [vmem:[%s3 + $0x1678] sm:$0xff]
    %v6712 = vld [vmem:[%s3 + $0x1680] sm:$0xff]
    %v6713 = vld [vmem:[%s3 + $0x1688] sm:$0xff]
    %v6714 = vld [vmem:[%s3 + $0x1690] sm:$0xff]
    %v6715 = vld [vmem:[%s3 + $0x1698] sm:$0xff]
    %v6716 = vld [vmem:[%s3 + $0x16a0] sm:$0xff]
    %v6717 = vld [vmem:[%s3 + $0x16a8] sm:$0xff]
    %v6718 = vld [vmem:[%s3 + $0x16b0] sm:$0xff]
    %v6719 = vld [vmem:[%s3 + $0x16b8] sm:$0xff]
    %v6720 = vld [vmem:[%s3 + $0x16c0] sm:$0xff]
    %v6721 = vld [vmem:[%s3 + $0x16c8] sm:$0xff]
    %v6722 = vld [vmem:[%s3 + $0x16d0] sm:$0xff]
    %v6723 = vld [vmem:[%s3 + $0x16d8] sm:$0xff]
    %v6724 = vld [vmem:[%s3 + $0x16e0] sm:$0xff]
    %v6725 = vld [vmem:[%s3 + $0x16e8] sm:$0xff]
    %v6726 = vld [vmem:[%s3 + $0x16f0] sm:$0xff]
    %v6727 = vld [vmem:[%s3 + $0x16f8] sm:$0xff]
    %v6728 = vld [vmem:[%s3 + $0x1700] sm:$0xff]
    %v6729 = vld [vmem:[%s3 + $0x1708] sm:$0xff]
    %v6730 = vld [vmem:[%s3 + $0x1710] sm:$0xff]
    %v6731 = vld [vmem:[%s3 + $0x1718] sm:$0xff]
    %v6732 = vld [vmem:[%s3 + $0x1720] sm:$0xff]
    %v6733 = vld [vmem:[%s3 + $0x1728] sm:$0xff]
    %v6734 = vld [vmem:[%s3 + $0x1730] sm:$0xff]
    %v6735 = vld [vmem:[%s3 + $0x1738] sm:$0xff]
    %v6736 = vld [vmem:[%s3 + $0x1740] sm:$0xff]
    %v6737 = vld [vmem:[%s3 + $0x1748] sm:$0xff]
    %v6738 = vld [vmem:[%s3 + $0x1750] sm:$0xff]
    %v6739 = vld [vmem:[%s3 + $0x1758] sm:$0xff]
    %v6740 = vld [vmem:[%s3 + $0x1760] sm:$0xff]
    %v6741 = vld [vmem:[%s3 + $0x1768] sm:$0xff]
    %v6742 = vld [vmem:[%s3 + $0x1770] sm:$0xff]
    %v6743 = vld [vmem:[%s3 + $0x1778] sm:$0xff]
    %v6744 = vld [vmem:[%s3 + $0x1780] sm:$0xff]
    %v6745 = vld [vmem:[%s3 + $0x1788] sm:$0xff]
    %v6746 = vld [vmem:[%s3 + $0x1790] sm:$0xff]
    %v6747 = vld [vmem:[%s3 + $0x1798] sm:$0xff]
    %v6748 = vld [vmem:[%s3 + $0x17a0] sm:$0xff]
    %v6749 = vld [vmem:[%s3 + $0x17a8] sm:$0xff]
    %v6750 = vld [vmem:[%s3 + $0x17b0] sm:$0xff]
    %v6751 = vld [vmem:[%s3 + $0x17b8] sm:$0xff]
    %v6752 = vld [vmem:[%s3 + $0x17c0] sm:$0xff]
    %v6753 = vld [vmem:[%s3 + $0x17c8] sm:$0xff]
    %v6754 = vld [vmem:[%s3 + $0x17d0] sm:$0xff]
    %v6755 = vld [vmem:[%s3 + $0x17d8] sm:$0xff]
    %v6756 = vld [vmem:[%s3 + $0x17e0] sm:$0xff]
    %v6757 = vld [vmem:[%s3 + $0x17e8] sm:$0xff]
    %v6758 = vld [vmem:[%s3 + $0x17f0] sm:$0xff]
    %v6759 = vld [vmem:[%s3 + $0x17f8] sm:$0xff]
    %v6760 = vld [vmem:[%s3 + $0x1800] sm:$0xff]
    %v6761 = vld [vmem:[%s3 + $0x1808] sm:$0xff]
    %v6762 = vld [vmem:[%s3 + $0x1810] sm:$0xff]
    %v6763 = vld [vmem:[%s3 + $0x1818] sm:$0xff]
    %v6764 = vld [vmem:[%s3 + $0x1820] sm:$0xff]
    %v6765 = vld [vmem:[%s3 + $0x1828] sm:$0xff]
    %v6766 = vld [vmem:[%s3 + $0x1830] sm:$0xff]
    %v6767 = vld [vmem:[%s3 + $0x1838] sm:$0xff]
    %v6768 = vld [vmem:[%s3 + $0x1840] sm:$0xff]
    %v6769 = vld [vmem:[%s3 + $0x1848] sm:$0xff]
    %v6770 = vld [vmem:[%s3 + $0x1850] sm:$0xff]
    %v6771 = vld [vmem:[%s3 + $0x1858] sm:$0xff]
    %v6772 = vld [vmem:[%s3 + $0x1860] sm:$0xff]
    %v6773 = vld [vmem:[%s3 + $0x1868] sm:$0xff]
    %v6774 = vld [vmem:[%s3 + $0x1870] sm:$0xff]
    %v6775 = vld [vmem:[%s3 + $0x1878] sm:$0xff]
    %v6776 = vld [vmem:[%s3 + $0x1880] sm:$0xff]
    %v6777 = vld [vmem:[%s3 + $0x1888] sm:$0xff]
    %v6778 = vld [vmem:[%s3 + $0x1890] sm:$0xff]
    %v6779 = vld [vmem:[%s3 + $0x1898] sm:$0xff]
    %v6780 = vld [vmem:[%s3 + $0x18a0] sm:$0xff]
    %v6781 = vld [vmem:[%s3 + $0x18a8] sm:$0xff]
    %v6782 = vld [vmem:[%s3 + $0x18b0] sm:$0xff]
    %v6783 = vld [vmem:[%s3 + $0x18b8] sm:$0xff]
    %v6784 = vld [vmem:[%s3 + $0x18c0] sm:$0xff]
    %v6785 = vld [vmem:[%s3 + $0x18c8] sm:$0xff]
    %v6786 = vld [vmem:[%s3 + $0x18d0] sm:$0xff]
    %v6787 = vld [vmem:[%s3 + $0x18d8] sm:$0xff]
    %v6788 = vld [vmem:[%s3 + $0x18e0] sm:$0xff]
    %v6789 = vld [vmem:[%s3 + $0x18e8] sm:$0xff]
    %v6790 = vld [vmem:[%s3 + $0x18f0] sm:$0xff]
    %v6791 = vld [vmem:[%s3 + $0x18f8] sm:$0xff]
    %v6792 = vld [vmem:[%s3 + $0x1900] sm:$0xff]
    %v6793 = vld [vmem:[%s3 + $0x1908] sm:$0xff]
    %v6794 = vld [vmem:[%s3 + $0x1910] sm:$0xff]
    %v6795 = vld [vmem:[%s3 + $0x1918] sm:$0xff]
    %v6796 = vld [vmem:[%s3 + $0x1920] sm:$0xff]
    %v6797 = vld [vmem:[%s3 + $0x1928] sm:$0xff]
    %v6798 = vld [vmem:[%s3 + $0x1930] sm:$0xff]
    %v6799 = vld [vmem:[%s3 + $0x1938] sm:$0xff]
    %v6800 = vld [vmem:[%s3 + $0x1940] sm:$0xff]
    %v6801 = vld [vmem:[%s3 + $0x1948] sm:$0xff]
    %v6802 = vld [vmem:[%s3 + $0x1950] sm:$0xff]
    %v6803 = vld [vmem:[%s3 + $0x1958] sm:$0xff]
    %v6804 = vld [vmem:[%s3 + $0x1960] sm:$0xff]
    %v6805 = vld [vmem:[%s3 + $0x1968] sm:$0xff]
    %v6806 = vld [vmem:[%s3 + $0x1970] sm:$0xff]
    %v6807 = vld [vmem:[%s3 + $0x1978] sm:$0xff]
    %v6808 = vld [vmem:[%s3 + $0x1980] sm:$0xff]
    %v6809 = vld [vmem:[%s3 + $0x1988] sm:$0xff]
    %v6810 = vld [vmem:[%s3 + $0x1990] sm:$0xff]
    %v6811 = vld [vmem:[%s3 + $0x1998] sm:$0xff]
    %v6812 = vld [vmem:[%s3 + $0x19a0] sm:$0xff]
    %v6813 = vld [vmem:[%s3 + $0x19a8] sm:$0xff]
    %v6814 = vld [vmem:[%s3 + $0x19b0] sm:$0xff]
    %v6815 = vld [vmem:[%s3 + $0x19b8] sm:$0xff]
    %v6816 = vld [vmem:[%s3 + $0x19c0] sm:$0xff]
    %v6817 = vld [vmem:[%s3 + $0x19c8] sm:$0xff]
    %v6818 = vld [vmem:[%s3 + $0x19d0] sm:$0xff]
    %v6819 = vld [vmem:[%s3 + $0x19d8] sm:$0xff]
    %v6820 = vld [vmem:[%s3 + $0x19e0] sm:$0xff]
    %v6821 = vld [vmem:[%s3 + $0x19e8] sm:$0xff]
    %v6822 = vld [vmem:[%s3 + $0x19f0] sm:$0xff]
    %v6823 = vld [vmem:[%s3 + $0x19f8] sm:$0xff]
    %v6824 = vld [vmem:[%s3 + $0x1a00] sm:$0xff]
    %v6825 = vld [vmem:[%s3 + $0x1a08] sm:$0xff]
    %v6826 = vld [vmem:[%s3 + $0x1a10] sm:$0xff]
    %v6827 = vld [vmem:[%s3 + $0x1a18] sm:$0xff]
    %v6828 = vld [vmem:[%s3 + $0x1a20] sm:$0xff]
    %v6829 = vld [vmem:[%s3 + $0x1a28] sm:$0xff]
    %v6830 = vld [vmem:[%s3 + $0x1a30] sm:$0xff]
    %v6831 = vld [vmem:[%s3 + $0x1a38] sm:$0xff]
    %v6832 = vld [vmem:[%s3 + $0x1a40] sm:$0xff]
    %v6833 = vld [vmem:[%s3 + $0x1a48] sm:$0xff]
    %v6834 = vld [vmem:[%s3 + $0x1a50] sm:$0xff]
    %v6835 = vld [vmem:[%s3 + $0x1a58] sm:$0xff]
    %v6836 = vld [vmem:[%s3 + $0x1a60] sm:$0xff]
    %v6837 = vld [vmem:[%s3 + $0x1a68] sm:$0xff]
    %v6838 = vld [vmem:[%s3 + $0x1a70] sm:$0xff]
    %v6839 = vld [vmem:[%s3 + $0x1a78] sm:$0xff]
    %v6840 = vld [vmem:[%s3 + $0x1a80] sm:$0xff]
    %v6841 = vld [vmem:[%s3 + $0x1a88] sm:$0xff]
    %v6842 = vld [vmem:[%s3 + $0x1a90] sm:$0xff]
    %v6843 = vld [vmem:[%s3 + $0x1a98] sm:$0xff]
    %v6844 = vld [vmem:[%s3 + $0x1aa0] sm:$0xff]
    %v6845 = vld [vmem:[%s3 + $0x1aa8] sm:$0xff]
    %v6846 = vld [vmem:[%s3 + $0x1ab0] sm:$0xff]
    %v6847 = vld [vmem:[%s3 + $0x1ab8] sm:$0xff]
    %v6848 = vld [vmem:[%s3 + $0x1ac0] sm:$0xff]
    %v6849 = vld [vmem:[%s3 + $0x1ac8] sm:$0xff]
    %v6850 = vld [vmem:[%s4] sm:$0xff]
    %v6851 = vld [vmem:[%s4 + $0x8] sm:$0xff]
    %v6852 = vld [vmem:[%s4 + $0x10] sm:$0xff]
    %v6853 = vld [vmem:[%s4 + $0x18] sm:$0xff]
    %v6854 = vld [vmem:[%s4 + $0x20] sm:$0xff]
    %v6855 = vld [vmem:[%s4 + $0x28] sm:$0xff]
    %v6856 = vld [vmem:[%s4 + $0x30] sm:$0xff]
    %v6857 = vld [vmem:[%s4 + $0x38] sm:$0xff]
    %v6858 = vld [vmem:[%s4 + $0x40] sm:$0xff]
    %v6859 = vld [vmem:[%s4 + $0x48] sm:$0xff]
    %v6860 = vld [vmem:[%s4 + $0x50] sm:$0xff]
    %v6861 = vld [vmem:[%s4 + $0x58] sm:$0xff]
    %v6862 = vld [vmem:[%s4 + $0x60] sm:$0xff]
    %v6863 = vld [vmem:[%s4 + $0x68] sm:$0xff]
    %v6864 = vld [vmem:[%s4 + $0x70] sm:$0xff]
    %v6865 = vld [vmem:[%s4 + $0x78] sm:$0xff]
    %v6866 = vld [vmem:[%s4 + $0x80] sm:$0xff]
    %v6867 = vld [vmem:[%s4 + $0x88] sm:$0xff]
    %v6868 = vld [vmem:[%s4 + $0x90] sm:$0xff]
    %v6869 = vld [vmem:[%s4 + $0x98] sm:$0xff]
    %v6870 = vld [vmem:[%s4 + $0xa0] sm:$0xff]
    %v6871 = vld [vmem:[%s4 + $0xa8] sm:$0xff]
    %v6872 = vld [vmem:[%s4 + $0xb0] sm:$0xff]
    %v6873 = vld [vmem:[%s4 + $0xb8] sm:$0xff]
    %v6874 = vld [vmem:[%s4 + $0xc0] sm:$0xff]
    %v6875 = vld [vmem:[%s4 + $0xc8] sm:$0xff]
    %v6876 = vld [vmem:[%s4 + $0xd0] sm:$0xff]
    %v6877 = vld [vmem:[%s4 + $0xd8] sm:$0xff]
    %v6878 = vld [vmem:[%s4 + $0xe0] sm:$0xff]
    %v6879 = vld [vmem:[%s4 + $0xe8] sm:$0xff]
    %v6880 = vld [vmem:[%s4 + $0xf0] sm:$0xff]
    %v6881 = vld [vmem:[%s4 + $0xf8] sm:$0xff]
    %v6882 = vld [vmem:[%s4 + $0x100] sm:$0xff]
    %v6883 = vld [vmem:[%s4 + $0x108] sm:$0xff]
    %v6884 = vld [vmem:[%s4 + $0x110] sm:$0xff]
    %v6885 = vld [vmem:[%s4 + $0x118] sm:$0xff]
    %v6886 = vld [vmem:[%s4 + $0x120] sm:$0xff]
    %v6887 = vld [vmem:[%s4 + $0x128] sm:$0xff]
    %v6888 = vld [vmem:[%s4 + $0x130] sm:$0xff]
    %v6889 = vld [vmem:[%s4 + $0x138] sm:$0xff]
    %v6890 = vld [vmem:[%s4 + $0x140] sm:$0xff]
    %v6891 = vld [vmem:[%s4 + $0x148] sm:$0xff]
    %v6892 = vld [vmem:[%s4 + $0x150] sm:$0xff]
    %v6893 = vld [vmem:[%s4 + $0x158] sm:$0xff]
    %v6894 = vld [vmem:[%s4 + $0x160] sm:$0xff]
    %v6895 = vld [vmem:[%s4 + $0x168] sm:$0xff]
    %v6896 = vld [vmem:[%s4 + $0x170] sm:$0xff]
    %v6897 = vld [vmem:[%s4 + $0x178] sm:$0xff]
    %v6898 = vld [vmem:[%s4 + $0x180] sm:$0xff]
    %v6899 = vld [vmem:[%s4 + $0x188] sm:$0xff]
    %v6900 = vld [vmem:[%s4 + $0x190] sm:$0xff]
    %v6901 = vld [vmem:[%s4 + $0x198] sm:$0xff]
    %v6902 = vld [vmem:[%s4 + $0x1a0] sm:$0xff]
    %v6903 = vld [vmem:[%s4 + $0x1a8] sm:$0xff]
    %v6904 = vld [vmem:[%s4 + $0x1b0] sm:$0xff]
    %v6905 = vld [vmem:[%s4 + $0x1b8] sm:$0xff]
    %v6906 = vld [vmem:[%s4 + $0x1c0] sm:$0xff]
    %v6907 = vld [vmem:[%s4 + $0x1c8] sm:$0xff]
    %v6908 = vld [vmem:[%s4 + $0x1d0] sm:$0xff]
    %v6909 = vld [vmem:[%s4 + $0x1d8] sm:$0xff]
    %v6910 = vld [vmem:[%s4 + $0x1e0] sm:$0xff]
    %v6911 = vld [vmem:[%s4 + $0x1e8] sm:$0xff]
    %v6912 = vld [vmem:[%s4 + $0x1f0] sm:$0xff]
    %v6913 = vld [vmem:[%s4 + $0x1f8] sm:$0xff]
    %v6914 = vld [vmem:[%s4 + $0x200] sm:$0xff]
    %v6915 = vld [vmem:[%s4 + $0x208] sm:$0xff]
    %v6916 = vld [vmem:[%s4 + $0x210] sm:$0xff]
    %v6917 = vld [vmem:[%s4 + $0x218] sm:$0xff]
    %v6918 = vld [vmem:[%s4 + $0x220] sm:$0xff]
    %v6919 = vld [vmem:[%s4 + $0x228] sm:$0xff]
    %v6920 = vld [vmem:[%s4 + $0x230] sm:$0xff]
    %v6921 = vld [vmem:[%s4 + $0x238] sm:$0xff]
    %v6922 = vld [vmem:[%s4 + $0x240] sm:$0xff]
    %v6923 = vld [vmem:[%s4 + $0x248] sm:$0xff]
    %v6924 = vld [vmem:[%s4 + $0x250] sm:$0xff]
    %v6925 = vld [vmem:[%s4 + $0x258] sm:$0xff]
    %v6926 = vld [vmem:[%s4 + $0x260] sm:$0xff]
    %v6927 = vld [vmem:[%s4 + $0x268] sm:$0xff]
    %6929 = vset.pattern.permute.xlu0 0
    %6930 = vperm.xlu0 %6929, %v6850
    %v6931 = vpop.permute.xlu0 %6930
    %6934 = vset.pattern.permute.xlu0 0
    %6935 = vperm.xlu0 %6934, %v6851
    %v6936 = vpop.permute.xlu0 %6935
    %6939 = vset.pattern.permute.xlu0 0
    %6940 = vperm.xlu0 %6939, %v6852
    %v6941 = vpop.permute.xlu0 %6940
    %6944 = vset.pattern.permute.xlu0 0
    %6945 = vperm.xlu0 %6944, %v6853
    %v6946 = vpop.permute.xlu0 %6945
    %6949 = vset.pattern.permute.xlu0 0
    %6950 = vperm.xlu0 %6949, %v6854
    %v6951 = vpop.permute.xlu0 %6950
    %6954 = vset.pattern.permute.xlu0 0
    %6955 = vperm.xlu0 %6954, %v6855
    %v6956 = vpop.permute.xlu0 %6955
    %6959 = vset.pattern.permute.xlu0 0
    %6960 = vperm.xlu0 %6959, %v6856
    %v6961 = vpop.permute.xlu0 %6960
    %6964 = vset.pattern.permute.xlu0 0
    %6965 = vperm.xlu0 %6964, %v6857
    %v6966 = vpop.permute.xlu0 %6965
    %6969 = vset.pattern.permute.xlu0 0
    %6970 = vperm.xlu0 %6969, %v6858
    %v6971 = vpop.permute.xlu0 %6970
    %6974 = vset.pattern.permute.xlu0 0
    %6975 = vperm.xlu0 %6974, %v6859
    %v6976 = vpop.permute.xlu0 %6975
    %6979 = vset.pattern.permute.xlu0 0
    %6980 = vperm.xlu0 %6979, %v6860
    %v6981 = vpop.permute.xlu0 %6980
    %6984 = vset.pattern.permute.xlu0 0
    %6985 = vperm.xlu0 %6984, %v6861
    %v6986 = vpop.permute.xlu0 %6985
    %6989 = vset.pattern.permute.xlu0 0
    %6990 = vperm.xlu0 %6989, %v6862
    %v6991 = vpop.permute.xlu0 %6990
    %6994 = vset.pattern.permute.xlu0 0
    %6995 = vperm.xlu0 %6994, %v6863
    %v6996 = vpop.permute.xlu0 %6995
    %6999 = vset.pattern.permute.xlu0 0
    %7000 = vperm.xlu0 %6999, %v6864
    %v7001 = vpop.permute.xlu0 %7000
    %7004 = vset.pattern.permute.xlu0 0
    %7005 = vperm.xlu0 %7004, %v6865
    %v7006 = vpop.permute.xlu0 %7005
    %7009 = vset.pattern.permute.xlu0 0
    %7010 = vperm.xlu0 %7009, %v6866
    %v7011 = vpop.permute.xlu0 %7010
    %7014 = vset.pattern.permute.xlu0 0
    %7015 = vperm.xlu0 %7014, %v6867
    %v7016 = vpop.permute.xlu0 %7015
    %7019 = vset.pattern.permute.xlu0 0
    %7020 = vperm.xlu0 %7019, %v6868
    %v7021 = vpop.permute.xlu0 %7020
    %7024 = vset.pattern.permute.xlu0 0
    %7025 = vperm.xlu0 %7024, %v6869
    %v7026 = vpop.permute.xlu0 %7025
    %7029 = vset.pattern.permute.xlu0 0
    %7030 = vperm.xlu0 %7029, %v6870
    %v7031 = vpop.permute.xlu0 %7030
    %7034 = vset.pattern.permute.xlu0 0
    %7035 = vperm.xlu0 %7034, %v6871
    %v7036 = vpop.permute.xlu0 %7035
    %7039 = vset.pattern.permute.xlu0 0
    %7040 = vperm.xlu0 %7039, %v6872
    %v7041 = vpop.permute.xlu0 %7040
    %7044 = vset.pattern.permute.xlu0 0
    %7045 = vperm.xlu0 %7044, %v6873
    %v7046 = vpop.permute.xlu0 %7045
    %7049 = vset.pattern.permute.xlu0 0
    %7050 = vperm.xlu0 %7049, %v6874
    %v7051 = vpop.permute.xlu0 %7050
    %7054 = vset.pattern.permute.xlu0 0
    %7055 = vperm.xlu0 %7054, %v6875
    %v7056 = vpop.permute.xlu0 %7055
    %7059 = vset.pattern.permute.xlu0 0
    %7060 = vperm.xlu0 %7059, %v6876
    %v7061 = vpop.permute.xlu0 %7060
    %7064 = vset.pattern.permute.xlu0 0
    %7065 = vperm.xlu0 %7064, %v6877
    %v7066 = vpop.permute.xlu0 %7065
    %7069 = vset.pattern.permute.xlu0 0
    %7070 = vperm.xlu0 %7069, %v6878
    %v7071 = vpop.permute.xlu0 %7070
    %7074 = vset.pattern.permute.xlu0 0
    %7075 = vperm.xlu0 %7074, %v6879
    %v7076 = vpop.permute.xlu0 %7075
    %7079 = vset.pattern.permute.xlu0 0
    %7080 = vperm.xlu0 %7079, %v6880
    %v7081 = vpop.permute.xlu0 %7080
    %7084 = vset.pattern.permute.xlu0 0
    %7085 = vperm.xlu0 %7084, %v6881
    %v7086 = vpop.permute.xlu0 %7085
    %7089 = vset.pattern.permute.xlu0 0
    %7090 = vperm.xlu0 %7089, %v6882
    %v7091 = vpop.permute.xlu0 %7090
    %7094 = vset.pattern.permute.xlu0 0
    %7095 = vperm.xlu0 %7094, %v6883
    %v7096 = vpop.permute.xlu0 %7095
    %7099 = vset.pattern.permute.xlu0 0
    %7100 = vperm.xlu0 %7099, %v6884
    %v7101 = vpop.permute.xlu0 %7100
    %7104 = vset.pattern.permute.xlu0 0
    %7105 = vperm.xlu0 %7104, %v6885
    %v7106 = vpop.permute.xlu0 %7105
    %7109 = vset.pattern.permute.xlu0 0
    %7110 = vperm.xlu0 %7109, %v6886
    %v7111 = vpop.permute.xlu0 %7110
    %7114 = vset.pattern.permute.xlu0 0
    %7115 = vperm.xlu0 %7114, %v6887
    %v7116 = vpop.permute.xlu0 %7115
    %7119 = vset.pattern.permute.xlu0 0
    %7120 = vperm.xlu0 %7119, %v6888
    %v7121 = vpop.permute.xlu0 %7120
    %7124 = vset.pattern.permute.xlu0 0
    %7125 = vperm.xlu0 %7124, %v6889
    %v7126 = vpop.permute.xlu0 %7125
    %7129 = vset.pattern.permute.xlu0 0
    %7130 = vperm.xlu0 %7129, %v6890
    %v7131 = vpop.permute.xlu0 %7130
    %7134 = vset.pattern.permute.xlu0 0
    %7135 = vperm.xlu0 %7134, %v6891
    %v7136 = vpop.permute.xlu0 %7135
    %7139 = vset.pattern.permute.xlu0 0
    %7140 = vperm.xlu0 %7139, %v6892
    %v7141 = vpop.permute.xlu0 %7140
    %7144 = vset.pattern.permute.xlu0 0
    %7145 = vperm.xlu0 %7144, %v6893
    %v7146 = vpop.permute.xlu0 %7145
    %7149 = vset.pattern.permute.xlu0 0
    %7150 = vperm.xlu0 %7149, %v6894
    %v7151 = vpop.permute.xlu0 %7150
    %7154 = vset.pattern.permute.xlu0 0
    %7155 = vperm.xlu0 %7154, %v6895
    %v7156 = vpop.permute.xlu0 %7155
    %7159 = vset.pattern.permute.xlu0 0
    %7160 = vperm.xlu0 %7159, %v6896
    %v7161 = vpop.permute.xlu0 %7160
    %7164 = vset.pattern.permute.xlu0 0
    %7165 = vperm.xlu0 %7164, %v6897
    %v7166 = vpop.permute.xlu0 %7165
    %7169 = vset.pattern.permute.xlu0 0
    %7170 = vperm.xlu0 %7169, %v6898
    %v7171 = vpop.permute.xlu0 %7170
    %7174 = vset.pattern.permute.xlu0 0
    %7175 = vperm.xlu0 %7174, %v6899
    %v7176 = vpop.permute.xlu0 %7175
    %7179 = vset.pattern.permute.xlu0 0
    %7180 = vperm.xlu0 %7179, %v6900
    %v7181 = vpop.permute.xlu0 %7180
    %7184 = vset.pattern.permute.xlu0 0
    %7185 = vperm.xlu0 %7184, %v6901
    %v7186 = vpop.permute.xlu0 %7185
    %7189 = vset.pattern.permute.xlu0 0
    %7190 = vperm.xlu0 %7189, %v6902
    %v7191 = vpop.permute.xlu0 %7190
    %7194 = vset.pattern.permute.xlu0 0
    %7195 = vperm.xlu0 %7194, %v6903
    %v7196 = vpop.permute.xlu0 %7195
    %7199 = vset.pattern.permute.xlu0 0
    %7200 = vperm.xlu0 %7199, %v6904
    %v7201 = vpop.permute.xlu0 %7200
    %7204 = vset.pattern.permute.xlu0 0
    %7205 = vperm.xlu0 %7204, %v6905
    %v7206 = vpop.permute.xlu0 %7205
    %7209 = vset.pattern.permute.xlu0 0
    %7210 = vperm.xlu0 %7209, %v6906
    %v7211 = vpop.permute.xlu0 %7210
    %7214 = vset.pattern.permute.xlu0 0
    %7215 = vperm.xlu0 %7214, %v6907
    %v7216 = vpop.permute.xlu0 %7215
    %7219 = vset.pattern.permute.xlu0 0
    %7220 = vperm.xlu0 %7219, %v6908
    %v7221 = vpop.permute.xlu0 %7220
    %7224 = vset.pattern.permute.xlu0 0
    %7225 = vperm.xlu0 %7224, %v6909
    %v7226 = vpop.permute.xlu0 %7225
    %7229 = vset.pattern.permute.xlu0 0
    %7230 = vperm.xlu0 %7229, %v6910
    %v7231 = vpop.permute.xlu0 %7230
    %7234 = vset.pattern.permute.xlu0 0
    %7235 = vperm.xlu0 %7234, %v6911
    %v7236 = vpop.permute.xlu0 %7235
    %7239 = vset.pattern.permute.xlu0 0
    %7240 = vperm.xlu0 %7239, %v6912
    %v7241 = vpop.permute.xlu0 %7240
    %7244 = vset.pattern.permute.xlu0 0
    %7245 = vperm.xlu0 %7244, %v6913
    %v7246 = vpop.permute.xlu0 %7245
    %7249 = vset.pattern.permute.xlu0 0
    %7250 = vperm.xlu0 %7249, %v6914
    %v7251 = vpop.permute.xlu0 %7250
    %7254 = vset.pattern.permute.xlu0 0
    %7255 = vperm.xlu0 %7254, %v6915
    %v7256 = vpop.permute.xlu0 %7255
    %7259 = vset.pattern.permute.xlu0 0
    %7260 = vperm.xlu0 %7259, %v6916
    %v7261 = vpop.permute.xlu0 %7260
    %7264 = vset.pattern.permute.xlu0 0
    %7265 = vperm.xlu0 %7264, %v6917
    %v7266 = vpop.permute.xlu0 %7265
    %7269 = vset.pattern.permute.xlu0 0
    %7270 = vperm.xlu0 %7269, %v6918
    %v7271 = vpop.permute.xlu0 %7270
    %7274 = vset.pattern.permute.xlu0 0
    %7275 = vperm.xlu0 %7274, %v6919
    %v7276 = vpop.permute.xlu0 %7275
    %7279 = vset.pattern.permute.xlu0 0
    %7280 = vperm.xlu0 %7279, %v6920
    %v7281 = vpop.permute.xlu0 %7280
    %7284 = vset.pattern.permute.xlu0 0
    %7285 = vperm.xlu0 %7284, %v6921
    %v7286 = vpop.permute.xlu0 %7285
    %7289 = vset.pattern.permute.xlu0 0
    %7290 = vperm.xlu0 %7289, %v6922
    %v7291 = vpop.permute.xlu0 %7290
    %7294 = vset.pattern.permute.xlu0 0
    %7295 = vperm.xlu0 %7294, %v6923
    %v7296 = vpop.permute.xlu0 %7295
    %7299 = vset.pattern.permute.xlu0 0
    %7300 = vperm.xlu0 %7299, %v6924
    %v7301 = vpop.permute.xlu0 %7300
    %7304 = vset.pattern.permute.xlu0 0
    %7305 = vperm.xlu0 %7304, %v6925
    %v7306 = vpop.permute.xlu0 %7305
    %7309 = vset.pattern.permute.xlu0 0
    %7310 = vperm.xlu0 %7309, %v6926
    %v7311 = vpop.permute.xlu0 %7310
    %7314 = vset.pattern.permute.xlu0 0
    %7315 = vperm.xlu0 %7314, %v6927
    %v7316 = vpop.permute.xlu0 %7315
    %vm7318 = vcmask 785408
    %v7320 = vsel %vm7318, %v6002, 0
    %v7323 = vsel %vm7318, %v6013, 0
    %v7326 = vsel %vm7318, %v6024, 0
    %v7329 = vsel %vm7318, %v6035, 0
    %v7332 = vsel %vm7318, %v6046, 0
    %v7335 = vsel %vm7318, %v6057, 0
    %v7338 = vsel %vm7318, %v6068, 0
    %v7341 = vsel %vm7318, %v6079, 0
    %v7344 = vsel %vm7318, %v6090, 0
    %v7347 = vsel %vm7318, %v6101, 0
    %v7350 = vsel %vm7318, %v6112, 0
    %v7353 = vsel %vm7318, %v6123, 0
    %v7356 = vsel %vm7318, %v6134, 0
    %v7359 = vsel %vm7318, %v6145, 0
    %v7362 = vsel %vm7318, %v6156, 0
    %v7365 = vsel %vm7318, %v6167, 0
    %v7368 = vsel %vm7318, %v6178, 0
    %v7371 = vsel %vm7318, %v6189, 0
    %v7374 = vsel %vm7318, %v6200, 0
    %v7377 = vsel %vm7318, %v6211, 0
    %v7380 = vsel %vm7318, %v6222, 0
    %v7383 = vsel %vm7318, %v6233, 0
    %v7386 = vsel %vm7318, %v6244, 0
    %v7389 = vsel %vm7318, %v6255, 0
    %v7392 = vsel %vm7318, %v6266, 0
    %v7395 = vsel %vm7318, %v6277, 0
    %v7398 = vsel %vm7318, %v6288, 0
    %v7401 = vsel %vm7318, %v6299, 0
    %v7404 = vsel %vm7318, %v6310, 0
    %v7407 = vsel %vm7318, %v6321, 0
    %v7410 = vsel %vm7318, %v6332, 0
    %v7413 = vsel %vm7318, %v6343, 0
    %v7416 = vsel %vm7318, %v6354, 0
    %v7419 = vsel %vm7318, %v6365, 0
    %v7422 = vsel %vm7318, %v6376, 0
    %v7425 = vsel %vm7318, %v6387, 0
    %v7428 = vsel %vm7318, %v6398, 0
    %v7431 = vsel %vm7318, %v6409, 0
    %v7434 = vsel %vm7318, %v6420, 0
    %v7437 = vsel %vm7318, %v6431, 0
    %v7440 = vsel %vm7318, %v6442, 0
    %v7443 = vsel %vm7318, %v6453, 0
    %v7446 = vsel %vm7318, %v6464, 0
    %v7449 = vsel %vm7318, %v6475, 0
    %v7452 = vsel %vm7318, %v6486, 0
    %v7455 = vsel %vm7318, %v6497, 0
    %v7458 = vsel %vm7318, %v6508, 0
    %v7461 = vsel %vm7318, %v6519, 0
    %v7464 = vsel %vm7318, %v6530, 0
    %v7467 = vsel %vm7318, %v6541, 0
    %v7470 = vsel %vm7318, %v6552, 0
    %v7473 = vsel %vm7318, %v6563, 0
    %v7476 = vsel %vm7318, %v6574, 0
    %v7479 = vsel %vm7318, %v6585, 0
    %v7482 = vsel %vm7318, %v6596, 0
    %v7485 = vsel %vm7318, %v6607, 0
    %v7488 = vsel %vm7318, %v6618, 0
    %v7491 = vsel %vm7318, %v6629, 0
    %v7494 = vsel %vm7318, %v6640, 0
    %v7497 = vsel %vm7318, %v6651, 0
    %v7500 = vsel %vm7318, %v6662, 0
    %v7503 = vsel %vm7318, %v6673, 0
    %v7506 = vsel %vm7318, %v6684, 0
    %v7509 = vsel %vm7318, %v6695, 0
    %v7512 = vsel %vm7318, %v6706, 0
    %v7515 = vsel %vm7318, %v6717, 0
    %v7518 = vsel %vm7318, %v6728, 0
    %v7521 = vsel %vm7318, %v6739, 0
    %v7524 = vsel %vm7318, %v6750, 0
    %v7527 = vsel %vm7318, %v6761, 0
    %v7530 = vsel %vm7318, %v6772, 0
    %v7533 = vsel %vm7318, %v6783, 0
    %v7536 = vsel %vm7318, %v6794, 0
    %v7539 = vsel %vm7318, %v6805, 0
    %v7542 = vsel %vm7318, %v6816, 0
    %v7545 = vsel %vm7318, %v6827, 0
    %v7548 = vsel %vm7318, %v6838, 0
    %v7551 = vsel %vm7318, %v6849, 0
    %7553 = vmatprep.subr.mxu0 0.0
    %7554 = vmatpush1.msra.mxu0 %v5820
    %7555 = vmatprep.subr.mxu0 0.0
    %7556 = vmatpush1.msra.mxu0 %v5821
    %7557 = vmatprep.subr.mxu0 0.0
    %7558 = vmatpush1.msra.mxu0 %v5822
    %7559 = vmatprep.subr.mxu0 0.0
    %7560 = vmatpush1.msra.mxu0 %v5823
    %7561 = vmatprep.subr.mxu0 0.0
    %7562 = vmatpush1.msra.mxu0 %v5824
    %7563 = vmatprep.subr.mxu0 0.0
    %7564 = vmatpush1.msra.mxu0 %v5825
    %7565 = vmatprep.subr.mxu0 0.0
    %7566 = vmatpush1.msra.mxu0 %v5826
    %7567 = vmatprep.subr.mxu0 0.0
    %7568 = vmatpush1.msra.mxu0 %v5827
    %7569 = vmatprep.subr.mxu0 0.0
    %7570 = vmatpush1.msra.mxu0 %v5828
    %7571 = vmatprep.subr.mxu0 0.0
    %7572 = vmatpush1.msra.mxu0 %v5829
    %7573 = vmatprep.subr.mxu0 0.0
    %7574 = vmatpush1.msra.mxu0 %v5830
    %7575 = vmatprep.subr.mxu0 0.0
    %7576 = vmatpush1.msra.mxu0 %v5831
    %7577 = vmatprep.subr.mxu0 0.0
    %7578 = vmatpush1.msra.mxu0 %v5832
    %7579 = vmatprep.subr.mxu0 0.0
    %7580 = vmatpush1.msra.mxu0 %v5833
    %7581 = vmatprep.subr.mxu0 0.0
    %7582 = vmatpush1.msra.mxu0 %v5834
    %7583 = vmatprep.subr.mxu0 0.0
    %7584 = vmatpush1.msra.mxu0 %v5835
    %7585 = vmatprep.subr.mxu0 0.0
    %7586 = vmatpush1.msra.mxu0 %v5836
    %7587 = vmatprep.subr.mxu0 0.0
    %7588 = vmatpush1.msra.mxu0 %v5837
    %7589 = vmatprep.subr.mxu0 0.0
    %7590 = vmatpush1.msra.mxu0 %v5838
    %7591 = vmatprep.subr.mxu0 0.0
    %7592 = vmatpush1.msra.mxu0 %v5839
    %7593 = vmatprep.subr.mxu0 0.0
    %7594 = vmatpush1.msra.mxu0 %v5840
    %7595 = vmatprep.subr.mxu0 0.0
    %7596 = vmatpush1.msra.mxu0 %v5841
    %7597 = vmatprep.subr.mxu0 0.0
    %7598 = vmatpush1.msra.mxu0 %v5842
    %7599 = vmatprep.subr.mxu0 0.0
    %7600 = vmatpush1.msra.mxu0 %v5843
    %7601 = vmatprep.subr.mxu0 0.0
    %7602 = vmatpush1.msra.mxu0 %v5844
    %7603 = vmatprep.subr.mxu0 0.0
    %7604 = vmatpush1.msra.mxu0 %v5845
    %7605 = vmatprep.subr.mxu0 0.0
    %7606 = vmatpush1.msra.mxu0 %v5846
    %7607 = vmatprep.subr.mxu0 0.0
    %7608 = vmatpush1.msra.mxu0 %v5847
    %7609 = vmatprep.subr.mxu0 0.0
    %7610 = vmatpush1.msra.mxu0 %v5848
    %7611 = vmatprep.subr.mxu0 0.0
    %7612 = vmatpush1.msra.mxu0 %v5849
    %7613 = vmatprep.subr.mxu0 0.0
    %7614 = vmatpush1.msra.mxu0 %v5850
    %7615 = vmatprep.subr.mxu0 0.0
    %7616 = vmatpush1.msra.mxu0 %v5851
    %7617 = vmatprep.mubr.f32.mxu0 %v5993
    %7618 = vmatmul.mubr.f32.gmra.mrb[0].mxu0 %v5992
    %v7619 = vpop.f32.mrb[0].mxu0
    %v7620 = vadd.f32 %v6931, %v7619
    %v7621 = vpop.f32.mrb[0].mxu0
    %7622 = vmatprep.mubr.f32.mxu0 %v6004
    %7623 = vmatmul.mubr.f32.gmra.mrb[0].mxu0 %v6003
    %v7624 = vpop.f32.mrb[0].mxu0
    %v7625 = vadd.f32 %v6936, %v7624
    %v7626 = vpop.f32.mrb[0].mxu0
    %7627 = vmatprep.mubr.f32.mxu0 %v6015
    %7628 = vmatmul.mubr.f32.gmra.mrb[0].mxu0 %v6014
    %v7629 = vpop.f32.mrb[0].mxu0
    %v7630 = vadd.f32 %v6941, %v7629
    %v7631 = vpop.f32.mrb[0].mxu0
    %7632 = vmatprep.mubr.f32.mxu0 %v6026
    %7633 = vmatmul.mubr.f32.gmra.mrb[0].mxu0 %v6025
    %v7634 = vpop.f32.mrb[0].mxu0
    %v7635 = vadd.f32 %v6946, %v7634
    %v7636 = vpop.f32.mrb[0].mxu0
    %7637 = vmatprep.mubr.f32.mxu0 %v6037
    %7638 = vmatmul.mubr.f32.gmra.mrb[0].mxu0 %v6036
    %v7639 = vpop.f32.mrb[0].mxu0
    %v7640 = vadd.f32 %v6951, %v7639
    %v7641 = vpop.f32.mrb[0].mxu0
    %7642 = vmatprep.mubr.f32.mxu0 %v6048
    %7643 = vmatmul.mubr.f32.gmra.mrb[0].mxu0 %v6047
    %v7644 = vpop.f32.mrb[0].mxu0
    %v7645 = vadd.f32 %v6956, %v7644
    %v7646 = vpop.f32.mrb[0].mxu0
    %7647 = vmatprep.mubr.f32.mxu0 %v6059
    %7648 = vmatmul.mubr.f32.gmra.mrb[0].mxu0 %v6058
    %v7649 = vpop.f32.mrb[0].mxu0
    %v7650 = vadd.f32 %v6961, %v7649
    %v7651 = vpop.f32.mrb[0].mxu0
    %7652 = vmatprep.mubr.f32.mxu0 %v6070
    %7653 = vmatmul.mubr.f32.gmra.mrb[0].mxu0 %v6069
    %v7654 = vpop.f32.mrb[0].mxu0
    %v7655 = vadd.f32 %v6966, %v7654
    %v7656 = vpop.f32.mrb[0].mxu0
    %7657 = vmatprep.mubr.f32.mxu0 %v6081
    %7658 = vmatmul.mubr.f32.gmra.mrb[0].mxu0 %v6080
    %v7659 = vpop.f32.mrb[0].mxu0
    %v7660 = vadd.f32 %v6971, %v7659
    %v7661 = vpop.f32.mrb[0].mxu0
    %7662 = vmatprep.mubr.f32.mxu0 %v6092
    %7663 = vmatmul.mubr.f32.gmra.mrb[0].mxu0 %v6091
    %v7664 = vpop.f32.mrb[0].mxu0
    %v7665 = vadd.f32 %v6976, %v7664
    %v7666 = vpop.f32.mrb[0].mxu0
    %7667 = vmatprep.mubr.f32.mxu0 %v6103
    %7668 = vmatmul.mubr.f32.gmra.mrb[0].mxu0 %v6102
    %v7669 = vpop.f32.mrb[0].mxu0
    %v7670 = vadd.f32 %v6981, %v7669
    %v7671 = vpop.f32.mrb[0].mxu0
    %7672 = vmatprep.mubr.f32.mxu0 %v6114
    %7673 = vmatmul.mubr.f32.gmra.mrb[0].mxu0 %v6113
    %v7674 = vpop.f32.mrb[0].mxu0
    %v7675 = vadd.f32 %v6986, %v7674
    %v7676 = vpop.f32.mrb[0].mxu0
    %7677 = vmatprep.mubr.f32.mxu0 %v6125
    %7678 = vmatmul.mubr.f32.gmra.mrb[0].mxu0 %v6124
    %v7679 = vpop.f32.mrb[0].mxu0
    %v7680 = vadd.f32 %v6991, %v7679
    %v7681 = vpop.f32.mrb[0].mxu0
    %7682 = vmatprep.mubr.f32.mxu0 %v6136
    %7683 = vmatmul.mubr.f32.gmra.mrb[0].mxu0 %v6135
    %v7684 = vpop.f32.mrb[0].mxu0
    %v7685 = vadd.f32 %v6996, %v7684
    %v7686 = vpop.f32.mrb[0].mxu0
    %7687 = vmatprep.mubr.f32.mxu0 %v6147
    %7688 = vmatmul.mubr.f32.gmra.mrb[0].mxu0 %v6146
    %v7689 = vpop.f32.mrb[0].mxu0
    %v7690 = vadd.f32 %v7001, %v7689
    %v7691 = vpop.f32.mrb[0].mxu0
    %7692 = vmatprep.mubr.f32.mxu0 %v6158
    %7693 = vmatmul.mubr.f32.gmra.mrb[0].mxu0 %v6157
    %v7694 = vpop.f32.mrb[0].mxu0
    %v7695 = vadd.f32 %v7006, %v7694
    %v7696 = vpop.f32.mrb[0].mxu0
    %7697 = vmatprep.mubr.f32.mxu0 %v6169
    %7698 = vmatmul.mubr.f32.gmra.mrb[0].mxu0 %v6168
    %v7699 = vpop.f32.mrb[0].mxu0
    %v7700 = vadd.f32 %v7011, %v7699
    %v7701 = vpop.f32.mrb[0].mxu0
    %7702 = vmatprep.mubr.f32.mxu0 %v6180
    %7703 = vmatmul.mubr.f32.gmra.mrb[0].mxu0 %v6179
    %v7704 = vpop.f32.mrb[0].mxu0
    %v7705 = vadd.f32 %v7016, %v7704
    %v7706 = vpop.f32.mrb[0].mxu0
    %7707 = vmatprep.mubr.f32.mxu0 %v6191
    %7708 = vmatmul.mubr.f32.gmra.mrb[0].mxu0 %v6190
    %v7709 = vpop.f32.mrb[0].mxu0
    %v7710 = vadd.f32 %v7021, %v7709
    %v7711 = vpop.f32.mrb[0].mxu0
    %7712 = vmatprep.mubr.f32.mxu0 %v6202
    %7713 = vmatmul.mubr.f32.gmra.mrb[0].mxu0 %v6201
    %v7714 = vpop.f32.mrb[0].mxu0
    %v7715 = vadd.f32 %v7026, %v7714
    %v7716 = vpop.f32.mrb[0].mxu0
    %7717 = vmatprep.mubr.f32.mxu0 %v6213
    %7718 = vmatmul.mubr.f32.gmra.mrb[0].mxu0 %v6212
    %v7719 = vpop.f32.mrb[0].mxu0
    %v7720 = vadd.f32 %v7031, %v7719
    %v7721 = vpop.f32.mrb[0].mxu0
    %7722 = vmatprep.mubr.f32.mxu0 %v6224
    %7723 = vmatmul.mubr.f32.gmra.mrb[0].mxu0 %v6223
    %v7724 = vpop.f32.mrb[0].mxu0
    %v7725 = vadd.f32 %v7036, %v7724
    %v7726 = vpop.f32.mrb[0].mxu0
    %7727 = vmatprep.mubr.f32.mxu0 %v6235
    %7728 = vmatmul.mubr.f32.gmra.mrb[0].mxu0 %v6234
    %v7729 = vpop.f32.mrb[0].mxu0
    %v7730 = vadd.f32 %v7041, %v7729
    %v7731 = vpop.f32.mrb[0].mxu0
    %7732 = vmatprep.mubr.f32.mxu0 %v6246
    %7733 = vmatmul.mubr.f32.gmra.mrb[0].mxu0 %v6245
    %v7734 = vpop.f32.mrb[0].mxu0
    %v7735 = vadd.f32 %v7046, %v7734
    %v7736 = vpop.f32.mrb[0].mxu0
    %7737 = vmatprep.mubr.f32.mxu0 %v6257
    %7738 = vmatmul.mubr.f32.gmra.mrb[0].mxu0 %v6256
    %v7739 = vpop.f32.mrb[0].mxu0
    %v7740 = vadd.f32 %v7051, %v7739
    %v7741 = vpop.f32.mrb[0].mxu0
    %7742 = vmatprep.mubr.f32.mxu0 %v6268
    %7743 = vmatmul.mubr.f32.gmra.mrb[0].mxu0 %v6267
    %v7744 = vpop.f32.mrb[0].mxu0
    %v7745 = vadd.f32 %v7056, %v7744
    %v7746 = vpop.f32.mrb[0].mxu0
    %7747 = vmatprep.mubr.f32.mxu0 %v6279
    %7748 = vmatmul.mubr.f32.gmra.mrb[0].mxu0 %v6278
    %v7749 = vpop.f32.mrb[0].mxu0
    %v7750 = vadd.f32 %v7061, %v7749
    %v7751 = vpop.f32.mrb[0].mxu0
    %7752 = vmatprep.mubr.f32.mxu0 %v6290
    %7753 = vmatmul.mubr.f32.gmra.mrb[0].mxu0 %v6289
    %v7754 = vpop.f32.mrb[0].mxu0
    %v7755 = vadd.f32 %v7066, %v7754
    %v7756 = vpop.f32.mrb[0].mxu0
    %7757 = vmatprep.mubr.f32.mxu0 %v6301
    %7758 = vmatmul.mubr.f32.gmra.mrb[0].mxu0 %v6300
    %v7759 = vpop.f32.mrb[0].mxu0
    %v7760 = vadd.f32 %v7071, %v7759
    %v7761 = vpop.f32.mrb[0].mxu0
    %7762 = vmatprep.mubr.f32.mxu0 %v6312
    %7763 = vmatmul.mubr.f32.gmra.mrb[0].mxu0 %v6311
    %v7764 = vpop.f32.mrb[0].mxu0
    %v7765 = vadd.f32 %v7076, %v7764
    %v7766 = vpop.f32.mrb[0].mxu0
    %7767 = vmatprep.mubr.f32.mxu0 %v6323
    %7768 = vmatmul.mubr.f32.gmra.mrb[0].mxu0 %v6322
    %v7769 = vpop.f32.mrb[0].mxu0
    %v7770 = vadd.f32 %v7081, %v7769
    %v7771 = vpop.f32.mrb[0].mxu0
    %7772 = vmatprep.mubr.f32.mxu0 %v6334
    %7773 = vmatmul.mubr.f32.gmra.mrb[0].mxu0 %v6333
    %v7774 = vpop.f32.mrb[0].mxu0
    %v7775 = vadd.f32 %v7086, %v7774
    %v7776 = vpop.f32.mrb[0].mxu0
    %7777 = vmatprep.mubr.f32.mxu0 %v6345
    %7778 = vmatmul.mubr.f32.gmra.mrb[0].mxu0 %v6344
    %v7779 = vpop.f32.mrb[0].mxu0
    %v7780 = vadd.f32 %v7091, %v7779
    %v7781 = vpop.f32.mrb[0].mxu0
    %7782 = vmatprep.mubr.f32.mxu0 %v6356
    %7783 = vmatmul.mubr.f32.gmra.mrb[0].mxu0 %v6355
    %v7784 = vpop.f32.mrb[0].mxu0
    %v7785 = vadd.f32 %v7096, %v7784
    %v7786 = vpop.f32.mrb[0].mxu0
    %7787 = vmatprep.mubr.f32.mxu0 %v6367
    %7788 = vmatmul.mubr.f32.gmra.mrb[0].mxu0 %v6366
    %v7789 = vpop.f32.mrb[0].mxu0
    %v7790 = vadd.f32 %v7101, %v7789
    %v7791 = vpop.f32.mrb[0].mxu0
    %7792 = vmatprep.mubr.f32.mxu0 %v6378
    %7793 = vmatmul.mubr.f32.gmra.mrb[0].mxu0 %v6377
    %v7794 = vpop.f32.mrb[0].mxu0
    %v7795 = vadd.f32 %v7106, %v7794
    %v7796 = vpop.f32.mrb[0].mxu0
    %7797 = vmatprep.mubr.f32.mxu0 %v6389
    %7798 = vmatmul.mubr.f32.gmra.mrb[0].mxu0 %v6388
    %v7799 = vpop.f32.mrb[0].mxu0
    %v7800 = vadd.f32 %v7111, %v7799
    %v7801 = vpop.f32.mrb[0].mxu0
    %7802 = vmatprep.mubr.f32.mxu0 %v6400
    %7803 = vmatmul.mubr.f32.gmra.mrb[0].mxu0 %v6399
    %v7804 = vpop.f32.mrb[0].mxu0
    %v7805 = vadd.f32 %v7116, %v7804
    %v7806 = vpop.f32.mrb[0].mxu0
    %7807 = vmatprep.mubr.f32.mxu0 %v6411
    %7808 = vmatmul.mubr.f32.gmra.mrb[0].mxu0 %v6410
    %v7809 = vpop.f32.mrb[0].mxu0
    %v7810 = vadd.f32 %v7121, %v7809
    %v7811 = vpop.f32.mrb[0].mxu0
    %7812 = vmatprep.mubr.f32.mxu0 %v6422
    %7813 = vmatmul.mubr.f32.gmra.mrb[0].mxu0 %v6421
    %v7814 = vpop.f32.mrb[0].mxu0
    %v7815 = vadd.f32 %v7126, %v7814
    %v7816 = vpop.f32.mrb[0].mxu0
    %7817 = vmatprep.mubr.f32.mxu0 %v6433
    %7818 = vmatmul.mubr.f32.gmra.mrb[0].mxu0 %v6432
    %v7819 = vpop.f32.mrb[0].mxu0
    %v7820 = vadd.f32 %v7131, %v7819
    %v7821 = vpop.f32.mrb[0].mxu0
    %7822 = vmatprep.mubr.f32.mxu0 %v6444
    %7823 = vmatmul.mubr.f32.gmra.mrb[0].mxu0 %v6443
    %v7824 = vpop.f32.mrb[0].mxu0
    %v7825 = vadd.f32 %v7136, %v7824
    %v7826 = vpop.f32.mrb[0].mxu0
    %7827 = vmatprep.mubr.f32.mxu0 %v6455
    %7828 = vmatmul.mubr.f32.gmra.mrb[0].mxu0 %v6454
    %v7829 = vpop.f32.mrb[0].mxu0
    %v7830 = vadd.f32 %v7141, %v7829
    %v7831 = vpop.f32.mrb[0].mxu0
    %7832 = vmatprep.mubr.f32.mxu0 %v6466
    %7833 = vmatmul.mubr.f32.gmra.mrb[0].mxu0 %v6465
    %v7834 = vpop.f32.mrb[0].mxu0
    %v7835 = vadd.f32 %v7146, %v7834
    %v7836 = vpop.f32.mrb[0].mxu0
    %7837 = vmatprep.mubr.f32.mxu0 %v6477
    %7838 = vmatmul.mubr.f32.gmra.mrb[0].mxu0 %v6476
    %v7839 = vpop.f32.mrb[0].mxu0
    %v7840 = vadd.f32 %v7151, %v7839
    %v7841 = vpop.f32.mrb[0].mxu0
    %7842 = vmatprep.mubr.f32.mxu0 %v6488
    %7843 = vmatmul.mubr.f32.gmra.mrb[0].mxu0 %v6487
    %v7844 = vpop.f32.mrb[0].mxu0
    %v7845 = vadd.f32 %v7156, %v7844
    %v7846 = vpop.f32.mrb[0].mxu0
    %7847 = vmatprep.mubr.f32.mxu0 %v6499
    %7848 = vmatmul.mubr.f32.gmra.mrb[0].mxu0 %v6498
    %v7849 = vpop.f32.mrb[0].mxu0
    %v7850 = vadd.f32 %v7161, %v7849
    %v7851 = vpop.f32.mrb[0].mxu0
    %7852 = vmatprep.mubr.f32.mxu0 %v6510
    %7853 = vmatmul.mubr.f32.gmra.mrb[0].mxu0 %v6509
    %v7854 = vpop.f32.mrb[0].mxu0
    %v7855 = vadd.f32 %v7166, %v7854
    %v7856 = vpop.f32.mrb[0].mxu0
    %7857 = vmatprep.mubr.f32.mxu0 %v6521
    %7858 = vmatmul.mubr.f32.gmra.mrb[0].mxu0 %v6520
    %v7859 = vpop.f32.mrb[0].mxu0
    %v7860 = vadd.f32 %v7171, %v7859
    %v7861 = vpop.f32.mrb[0].mxu0
    %7862 = vmatprep.mubr.f32.mxu0 %v6532
    %7863 = vmatmul.mubr.f32.gmra.mrb[0].mxu0 %v6531
    %v7864 = vpop.f32.mrb[0].mxu0
    %v7865 = vadd.f32 %v7176, %v7864
    %v7866 = vpop.f32.mrb[0].mxu0
    %7867 = vmatprep.mubr.f32.mxu0 %v6543
    %7868 = vmatmul.mubr.f32.gmra.mrb[0].mxu0 %v6542
    %v7869 = vpop.f32.mrb[0].mxu0
    %v7870 = vadd.f32 %v7181, %v7869
    %v7871 = vpop.f32.mrb[0].mxu0
    %7872 = vmatprep.mubr.f32.mxu0 %v6554
    %7873 = vmatmul.mubr.f32.gmra.mrb[0].mxu0 %v6553
    %v7874 = vpop.f32.mrb[0].mxu0
    %v7875 = vadd.f32 %v7186, %v7874
    %v7876 = vpop.f32.mrb[0].mxu0
    %7877 = vmatprep.mubr.f32.mxu0 %v6565
    %7878 = vmatmul.mubr.f32.gmra.mrb[0].mxu0 %v6564
    %v7879 = vpop.f32.mrb[0].mxu0
    %v7880 = vadd.f32 %v7191, %v7879
    %v7881 = vpop.f32.mrb[0].mxu0
    %7882 = vmatprep.mubr.f32.mxu0 %v6576
    %7883 = vmatmul.mubr.f32.gmra.mrb[0].mxu0 %v6575
    %v7884 = vpop.f32.mrb[0].mxu0
    %v7885 = vadd.f32 %v7196, %v7884
    %v7886 = vpop.f32.mrb[0].mxu0
    %7887 = vmatprep.mubr.f32.mxu0 %v6587
    %7888 = vmatmul.mubr.f32.gmra.mrb[0].mxu0 %v6586
    %v7889 = vpop.f32.mrb[0].mxu0
    %v7890 = vadd.f32 %v7201, %v7889
    %v7891 = vpop.f32.mrb[0].mxu0
    %7892 = vmatprep.mubr.f32.mxu0 %v6598
    %7893 = vmatmul.mubr.f32.gmra.mrb[0].mxu0 %v6597
    %v7894 = vpop.f32.mrb[0].mxu0
    %v7895 = vadd.f32 %v7206, %v7894
    %v7896 = vpop.f32.mrb[0].mxu0
    %7897 = vmatprep.mubr.f32.mxu0 %v6609
    %7898 = vmatmul.mubr.f32.gmra.mrb[0].mxu0 %v6608
    %v7899 = vpop.f32.mrb[0].mxu0
    %v7900 = vadd.f32 %v7211, %v7899
    %v7901 = vpop.f32.mrb[0].mxu0
    %7902 = vmatprep.mubr.f32.mxu0 %v6620
    %7903 = vmatmul.mubr.f32.gmra.mrb[0].mxu0 %v6619
    %v7904 = vpop.f32.mrb[0].mxu0
    %v7905 = vadd.f32 %v7216, %v7904
    %v7906 = vpop.f32.mrb[0].mxu0
    %7907 = vmatprep.mubr.f32.mxu0 %v6631
    %7908 = vmatmul.mubr.f32.gmra.mrb[0].mxu0 %v6630
    %v7909 = vpop.f32.mrb[0].mxu0
    %v7910 = vadd.f32 %v7221, %v7909
    %v7911 = vpop.f32.mrb[0].mxu0
    %7912 = vmatprep.mubr.f32.mxu0 %v6642
    %7913 = vmatmul.mubr.f32.gmra.mrb[0].mxu0 %v6641
    %v7914 = vpop.f32.mrb[0].mxu0
    %v7915 = vadd.f32 %v7226, %v7914
    %v7916 = vpop.f32.mrb[0].mxu0
    %7917 = vmatprep.mubr.f32.mxu0 %v6653
    %7918 = vmatmul.mubr.f32.gmra.mrb[0].mxu0 %v6652
    %v7919 = vpop.f32.mrb[0].mxu0
    %v7920 = vadd.f32 %v7231, %v7919
    %v7921 = vpop.f32.mrb[0].mxu0
    %7922 = vmatprep.mubr.f32.mxu0 %v6664
    %7923 = vmatmul.mubr.f32.gmra.mrb[0].mxu0 %v6663
    %v7924 = vpop.f32.mrb[0].mxu0
    %v7925 = vadd.f32 %v7236, %v7924
    %v7926 = vpop.f32.mrb[0].mxu0
    %7927 = vmatprep.mubr.f32.mxu0 %v6675
    %7928 = vmatmul.mubr.f32.gmra.mrb[0].mxu0 %v6674
    %v7929 = vpop.f32.mrb[0].mxu0
    %v7930 = vadd.f32 %v7241, %v7929
    %v7931 = vpop.f32.mrb[0].mxu0
    %7932 = vmatprep.mubr.f32.mxu0 %v6686
    %7933 = vmatmul.mubr.f32.gmra.mrb[0].mxu0 %v6685
    %v7934 = vpop.f32.mrb[0].mxu0
    %v7935 = vadd.f32 %v7246, %v7934
    %v7936 = vpop.f32.mrb[0].mxu0
    %7937 = vmatprep.mubr.f32.mxu0 %v6697
    %7938 = vmatmul.mubr.f32.gmra.mrb[0].mxu0 %v6696
    %v7939 = vpop.f32.mrb[0].mxu0
    %v7940 = vadd.f32 %v7251, %v7939
    %v7941 = vpop.f32.mrb[0].mxu0
    %7942 = vmatprep.mubr.f32.mxu0 %v6708
    %7943 = vmatmul.mubr.f32.gmra.mrb[0].mxu0 %v6707
    %v7944 = vpop.f32.mrb[0].mxu0
    %v7945 = vadd.f32 %v7256, %v7944
    %v7946 = vpop.f32.mrb[0].mxu0
    %7947 = vmatprep.mubr.f32.mxu0 %v6719
    %7948 = vmatmul.mubr.f32.gmra.mrb[0].mxu0 %v6718
    %v7949 = vpop.f32.mrb[0].mxu0
    %v7950 = vadd.f32 %v7261, %v7949
    %v7951 = vpop.f32.mrb[0].mxu0
    %7952 = vmatprep.mubr.f32.mxu0 %v6730
    %7953 = vmatmul.mubr.f32.gmra.mrb[0].mxu0 %v6729
    %v7954 = vpop.f32.mrb[0].mxu0
    %v7955 = vadd.f32 %v7266, %v7954
    %v7956 = vpop.f32.mrb[0].mxu0
    %7957 = vmatprep.mubr.f32.mxu0 %v6741
    %7958 = vmatmul.mubr.f32.gmra.mrb[0].mxu0 %v6740
    %v7959 = vpop.f32.mrb[0].mxu0
    %v7960 = vadd.f32 %v7271, %v7959
    %v7961 = vpop.f32.mrb[0].mxu0
    %7962 = vmatprep.mubr.f32.mxu0 %v6752
    %7963 = vmatmul.mubr.f32.gmra.mrb[0].mxu0 %v6751
    %v7964 = vpop.f32.mrb[0].mxu0
    %v7965 = vadd.f32 %v7276, %v7964
    %v7966 = vpop.f32.mrb[0].mxu0
    %7967 = vmatprep.mubr.f32.mxu0 %v6763
    %7968 = vmatmul.mubr.f32.gmra.mrb[0].mxu0 %v6762
    %v7969 = vpop.f32.mrb[0].mxu0
    %v7970 = vadd.f32 %v7281, %v7969
    %v7971 = vpop.f32.mrb[0].mxu0
    %7972 = vmatprep.mubr.f32.mxu0 %v6774
    %7973 = vmatmul.mubr.f32.gmra.mrb[0].mxu0 %v6773
    %v7974 = vpop.f32.mrb[0].mxu0
    %v7975 = vadd.f32 %v7286, %v7974
    %v7976 = vpop.f32.mrb[0].mxu0
    %7977 = vmatprep.mubr.f32.mxu0 %v6785
    %7978 = vmatmul.mubr.f32.gmra.mrb[0].mxu0 %v6784
    %v7979 = vpop.f32.mrb[0].mxu0
    %v7980 = vadd.f32 %v7291, %v7979
    %v7981 = vpop.f32.mrb[0].mxu0
    %7982 = vmatprep.mubr.f32.mxu0 %v6796
    %7983 = vmatmul.mubr.f32.gmra.mrb[0].mxu0 %v6795
    %v7984 = vpop.f32.mrb[0].mxu0
    %v7985 = vadd.f32 %v7296, %v7984
    %v7986 = vpop.f32.mrb[0].mxu0
    %7987 = vmatprep.mubr.f32.mxu0 %v6807
    %7988 = vmatmul.mubr.f32.gmra.mrb[0].mxu0 %v6806
    %v7989 = vpop.f32.mrb[0].mxu0
    %v7990 = vadd.f32 %v7301, %v7989
    %v7991 = vpop.f32.mrb[0].mxu0
    %7992 = vmatprep.mubr.f32.mxu0 %v6818
    %7993 = vmatmul.mubr.f32.gmra.mrb[0].mxu0 %v6817
    %v7994 = vpop.f32.mrb[0].mxu0
    %v7995 = vadd.f32 %v7306, %v7994
    %v7996 = vpop.f32.mrb[0].mxu0
    %7997 = vmatprep.mubr.f32.mxu0 %v6829
    %7998 = vmatmul.mubr.f32.gmra.mrb[0].mxu0 %v6828
    %v7999 = vpop.f32.mrb[0].mxu0
    %v8000 = vadd.f32 %v7311, %v7999
    %v8001 = vpop.f32.mrb[0].mxu0
    %8002 = vmatprep.mubr.f32.mxu0 %v6840
    %8003 = vmatmul.mubr.f32.gmra.mrb[0].mxu0 %v6839
    %v8004 = vpop.f32.mrb[0].mxu0
    %v8005 = vadd.f32 %v7316, %v8004
    %v8006 = vpop.f32.mrb[0].mxu0
    %8007 = vdwg.mxu0
    %8008 = vmatprep.subr.mxu0 0.0
    %8009 = vmatpush1.msra.mxu0 %v5852
    %8010 = vmatprep.subr.mxu0 0.0
    %8011 = vmatpush1.msra.mxu0 %v5853
    %8012 = vmatprep.subr.mxu0 0.0
    %8013 = vmatpush1.msra.mxu0 %v5854
    %8014 = vmatprep.subr.mxu0 0.0
    %8015 = vmatpush1.msra.mxu0 %v5855
    %8016 = vmatprep.subr.mxu0 0.0
    %8017 = vmatpush1.msra.mxu0 %v5856
    %8018 = vmatprep.subr.mxu0 0.0
    %8019 = vmatpush1.msra.mxu0 %v5857
    %8020 = vmatprep.subr.mxu0 0.0
    %8021 = vmatpush1.msra.mxu0 %v5858
    %8022 = vmatprep.subr.mxu0 0.0
    %8023 = vmatpush1.msra.mxu0 %v5859
    %8024 = vmatprep.subr.mxu0 0.0
    %8025 = vmatpush1.msra.mxu0 %v5860
    %8026 = vmatprep.subr.mxu0 0.0
    %8027 = vmatpush1.msra.mxu0 %v5861
    %8028 = vmatprep.subr.mxu0 0.0
    %8029 = vmatpush1.msra.mxu0 %v5862
    %8030 = vmatprep.subr.mxu0 0.0
    %8031 = vmatpush1.msra.mxu0 %v5863
    %8032 = vmatprep.subr.mxu0 0.0
    %8033 = vmatpush1.msra.mxu0 %v5864
    %8034 = vmatprep.subr.mxu0 0.0
    %8035 = vmatpush1.msra.mxu0 %v5865
    %8036 = vmatprep.subr.mxu0 0.0
    %8037 = vmatpush1.msra.mxu0 %v5866
    %8038 = vmatprep.subr.mxu0 0.0
    %8039 = vmatpush1.msra.mxu0 %v5867
    %8040 = vmatprep.subr.mxu0 0.0
    %8041 = vmatpush1.msra.mxu0 %v5868
    %8042 = vmatprep.subr.mxu0 0.0
    %8043 = vmatpush1.msra.mxu0 %v5869
    %8044 = vmatprep.subr.mxu0 0.0
    %8045 = vmatpush1.msra.mxu0 %v5870
    %8046 = vmatprep.subr.mxu0 0.0
    %8047 = vmatpush1.msra.mxu0 %v5871
    %8048 = vmatprep.subr.mxu0 0.0
    %8049 = vmatpush1.msra.mxu0 %v5872
    %8050 = vmatprep.subr.mxu0 0.0
    %8051 = vmatpush1.msra.mxu0 %v5873
    %8052 = vmatprep.subr.mxu0 0.0
    %8053 = vmatpush1.msra.mxu0 %v5874
    %8054 = vmatprep.subr.mxu0 0.0
    %8055 = vmatpush1.msra.mxu0 %v5875
    %8056 = vmatprep.subr.mxu0 0.0
    %8057 = vmatpush1.msra.mxu0 %v5876
    %8058 = vmatprep.subr.mxu0 0.0
    %8059 = vmatpush1.msra.mxu0 %v5877
    %8060 = vmatprep.subr.mxu0 0.0
    %8061 = vmatpush1.msra.mxu0 %v5878
    %8062 = vmatprep.subr.mxu0 0.0
    %8063 = vmatpush1.msra.mxu0 %v5879
    %8064 = vmatprep.subr.mxu0 0.0
    %8065 = vmatpush1.msra.mxu0 %v5880
    %8066 = vmatprep.subr.mxu0 0.0
    %8067 = vmatpush1.msra.mxu0 %v5881
    %8068 = vmatprep.subr.mxu0 0.0
    %8069 = vmatpush1.msra.mxu0 %v5882
    %8070 = vmatprep.subr.mxu0 0.0
    %8071 = vmatpush1.msra.mxu0 %v5883
    %8072 = vmatprep.mubr.f32.mxu0 %v5995
    %8073 = vmatmul.mubr.f32.gmra.mrb[0].mxu0 %v5994
    %v8074 = vpop.f32.mrb[0].mxu0
    %v8075 = vadd.f32 %v7620, %v8074
    %v8076 = vpop.f32.mrb[0].mxu0
    %8077 = vmatprep.mubr.f32.mxu0 %v6006
    %8078 = vmatmul.mubr.f32.gmra.mrb[0].mxu0 %v6005
    %v8079 = vpop.f32.mrb[0].mxu0
    %v8080 = vadd.f32 %v7625, %v8079
    %v8081 = vpop.f32.mrb[0].mxu0
    %8082 = vmatprep.mubr.f32.mxu0 %v6017
    %8083 = vmatmul.mubr.f32.gmra.mrb[0].mxu0 %v6016
    %v8084 = vpop.f32.mrb[0].mxu0
    %v8085 = vadd.f32 %v7630, %v8084
    %v8086 = vpop.f32.mrb[0].mxu0
    %8087 = vmatprep.mubr.f32.mxu0 %v6028
    %8088 = vmatmul.mubr.f32.gmra.mrb[0].mxu0 %v6027
    %v8089 = vpop.f32.mrb[0].mxu0
    %v8090 = vadd.f32 %v7635, %v8089
    %v8091 = vpop.f32.mrb[0].mxu0
    %8092 = vmatprep.mubr.f32.mxu0 %v6039
    %8093 = vmatmul.mubr.f32.gmra.mrb[0].mxu0 %v6038
    %v8094 = vpop.f32.mrb[0].mxu0
    %v8095 = vadd.f32 %v7640, %v8094
    %v8096 = vpop.f32.mrb[0].mxu0
    %8097 = vmatprep.mubr.f32.mxu0 %v6050
    %8098 = vmatmul.mubr.f32.gmra.mrb[0].mxu0 %v6049
    %v8099 = vpop.f32.mrb[0].mxu0
    %v8100 = vadd.f32 %v7645, %v8099
    %v8101 = vpop.f32.mrb[0].mxu0
    %8102 = vmatprep.mubr.f32.mxu0 %v6061
    %8103 = vmatmul.mubr.f32.gmra.mrb[0].mxu0 %v6060
    %v8104 = vpop.f32.mrb[0].mxu0
    %v8105 = vadd.f32 %v7650, %v8104
    %v8106 = vpop.f32.mrb[0].mxu0
    %8107 = vmatprep.mubr.f32.mxu0 %v6072
    %8108 = vmatmul.mubr.f32.gmra.mrb[0].mxu0 %v6071
    %v8109 = vpop.f32.mrb[0].mxu0
    %v8110 = vadd.f32 %v7655, %v8109
    %v8111 = vpop.f32.mrb[0].mxu0
    %8112 = vmatprep.mubr.f32.mxu0 %v6083
    %8113 = vmatmul.mubr.f32.gmra.mrb[0].mxu0 %v6082
    %v8114 = vpop.f32.mrb[0].mxu0
    %v8115 = vadd.f32 %v7660, %v8114
    %v8116 = vpop.f32.mrb[0].mxu0
    %8117 = vmatprep.mubr.f32.mxu0 %v6094
    %8118 = vmatmul.mubr.f32.gmra.mrb[0].mxu0 %v6093
    %v8119 = vpop.f32.mrb[0].mxu0
    %v8120 = vadd.f32 %v7665, %v8119
    %v8121 = vpop.f32.mrb[0].mxu0
    %8122 = vmatprep.mubr.f32.mxu0 %v6105
    %8123 = vmatmul.mubr.f32.gmra.mrb[0].mxu0 %v6104
    %v8124 = vpop.f32.mrb[0].mxu0
    %v8125 = vadd.f32 %v7670, %v8124
    %v8126 = vpop.f32.mrb[0].mxu0
    %8127 = vmatprep.mubr.f32.mxu0 %v6116
    %8128 = vmatmul.mubr.f32.gmra.mrb[0].mxu0 %v6115
    %v8129 = vpop.f32.mrb[0].mxu0
    %v8130 = vadd.f32 %v7675, %v8129
    %v8131 = vpop.f32.mrb[0].mxu0
    %8132 = vmatprep.mubr.f32.mxu0 %v6127
    %8133 = vmatmul.mubr.f32.gmra.mrb[0].mxu0 %v6126
    %v8134 = vpop.f32.mrb[0].mxu0
    %v8135 = vadd.f32 %v7680, %v8134
    %v8136 = vpop.f32.mrb[0].mxu0
    %8137 = vmatprep.mubr.f32.mxu0 %v6138
    %8138 = vmatmul.mubr.f32.gmra.mrb[0].mxu0 %v6137
    %v8139 = vpop.f32.mrb[0].mxu0
    %v8140 = vadd.f32 %v7685, %v8139
    %v8141 = vpop.f32.mrb[0].mxu0
    %8142 = vmatprep.mubr.f32.mxu0 %v6149
    %8143 = vmatmul.mubr.f32.gmra.mrb[0].mxu0 %v6148
    %v8144 = vpop.f32.mrb[0].mxu0
    %v8145 = vadd.f32 %v7690, %v8144
    %v8146 = vpop.f32.mrb[0].mxu0
    %8147 = vmatprep.mubr.f32.mxu0 %v6160
    %8148 = vmatmul.mubr.f32.gmra.mrb[0].mxu0 %v6159
    %v8149 = vpop.f32.mrb[0].mxu0
    %v8150 = vadd.f32 %v7695, %v8149
    %v8151 = vpop.f32.mrb[0].mxu0
    %8152 = vmatprep.mubr.f32.mxu0 %v6171
    %8153 = vmatmul.mubr.f32.gmra.mrb[0].mxu0 %v6170
    %v8154 = vpop.f32.mrb[0].mxu0
    %v8155 = vadd.f32 %v7700, %v8154
    %v8156 = vpop.f32.mrb[0].mxu0
    %8157 = vmatprep.mubr.f32.mxu0 %v6182
    %8158 = vmatmul.mubr.f32.gmra.mrb[0].mxu0 %v6181
    %v8159 = vpop.f32.mrb[0].mxu0
    %v8160 = vadd.f32 %v7705, %v8159
    %v8161 = vpop.f32.mrb[0].mxu0
    %8162 = vmatprep.mubr.f32.mxu0 %v6193
    %8163 = vmatmul.mubr.f32.gmra.mrb[0].mxu0 %v6192
    %v8164 = vpop.f32.mrb[0].mxu0
    %v8165 = vadd.f32 %v7710, %v8164
    %v8166 = vpop.f32.mrb[0].mxu0
    %8167 = vmatprep.mubr.f32.mxu0 %v6204
    %8168 = vmatmul.mubr.f32.gmra.mrb[0].mxu0 %v6203
    %v8169 = vpop.f32.mrb[0].mxu0
    %v8170 = vadd.f32 %v7715, %v8169
    %v8171 = vpop.f32.mrb[0].mxu0
    %8172 = vmatprep.mubr.f32.mxu0 %v6215
    %8173 = vmatmul.mubr.f32.gmra.mrb[0].mxu0 %v6214
    %v8174 = vpop.f32.mrb[0].mxu0
    %v8175 = vadd.f32 %v7720, %v8174
    %v8176 = vpop.f32.mrb[0].mxu0
    %8177 = vmatprep.mubr.f32.mxu0 %v6226
    %8178 = vmatmul.mubr.f32.gmra.mrb[0].mxu0 %v6225
    %v8179 = vpop.f32.mrb[0].mxu0
    %v8180 = vadd.f32 %v7725, %v8179
    %v8181 = vpop.f32.mrb[0].mxu0
    %8182 = vmatprep.mubr.f32.mxu0 %v6237
    %8183 = vmatmul.mubr.f32.gmra.mrb[0].mxu0 %v6236
    %v8184 = vpop.f32.mrb[0].mxu0
    %v8185 = vadd.f32 %v7730, %v8184
    %v8186 = vpop.f32.mrb[0].mxu0
    %8187 = vmatprep.mubr.f32.mxu0 %v6248
    %8188 = vmatmul.mubr.f32.gmra.mrb[0].mxu0 %v6247
    %v8189 = vpop.f32.mrb[0].mxu0
    %v8190 = vadd.f32 %v7735, %v8189
    %v8191 = vpop.f32.mrb[0].mxu0
    %8192 = vmatprep.mubr.f32.mxu0 %v6259
    %8193 = vmatmul.mubr.f32.gmra.mrb[0].mxu0 %v6258
    %v8194 = vpop.f32.mrb[0].mxu0
    %v8195 = vadd.f32 %v7740, %v8194
    %v8196 = vpop.f32.mrb[0].mxu0
    %8197 = vmatprep.mubr.f32.mxu0 %v6270
    %8198 = vmatmul.mubr.f32.gmra.mrb[0].mxu0 %v6269
    %v8199 = vpop.f32.mrb[0].mxu0
    %v8200 = vadd.f32 %v7745, %v8199
    %v8201 = vpop.f32.mrb[0].mxu0
    %8202 = vmatprep.mubr.f32.mxu0 %v6281
    %8203 = vmatmul.mubr.f32.gmra.mrb[0].mxu0 %v6280
    %v8204 = vpop.f32.mrb[0].mxu0
    %v8205 = vadd.f32 %v7750, %v8204
    %v8206 = vpop.f32.mrb[0].mxu0
    %8207 = vmatprep.mubr.f32.mxu0 %v6292
    %8208 = vmatmul.mubr.f32.gmra.mrb[0].mxu0 %v6291
    %v8209 = vpop.f32.mrb[0].mxu0
    %v8210 = vadd.f32 %v7755, %v8209
    %v8211 = vpop.f32.mrb[0].mxu0
    %8212 = vmatprep.mubr.f32.mxu0 %v6303
    %8213 = vmatmul.mubr.f32.gmra.mrb[0].mxu0 %v6302
    %v8214 = vpop.f32.mrb[0].mxu0
    %v8215 = vadd.f32 %v7760, %v8214
    %v8216 = vpop.f32.mrb[0].mxu0
    %8217 = vmatprep.mubr.f32.mxu0 %v6314
    %8218 = vmatmul.mubr.f32.gmra.mrb[0].mxu0 %v6313
    %v8219 = vpop.f32.mrb[0].mxu0
    %v8220 = vadd.f32 %v7765, %v8219
    %v8221 = vpop.f32.mrb[0].mxu0
    %8222 = vmatprep.mubr.f32.mxu0 %v6325
    %8223 = vmatmul.mubr.f32.gmra.mrb[0].mxu0 %v6324
    %v8224 = vpop.f32.mrb[0].mxu0
    %v8225 = vadd.f32 %v7770, %v8224
    %v8226 = vpop.f32.mrb[0].mxu0
    %8227 = vmatprep.mubr.f32.mxu0 %v6336
    %8228 = vmatmul.mubr.f32.gmra.mrb[0].mxu0 %v6335
    %v8229 = vpop.f32.mrb[0].mxu0
    %v8230 = vadd.f32 %v7775, %v8229
    %v8231 = vpop.f32.mrb[0].mxu0
    %8232 = vmatprep.mubr.f32.mxu0 %v6347
    %8233 = vmatmul.mubr.f32.gmra.mrb[0].mxu0 %v6346
    %v8234 = vpop.f32.mrb[0].mxu0
    %v8235 = vadd.f32 %v7780, %v8234
    %v8236 = vpop.f32.mrb[0].mxu0
    %8237 = vmatprep.mubr.f32.mxu0 %v6358
    %8238 = vmatmul.mubr.f32.gmra.mrb[0].mxu0 %v6357
    %v8239 = vpop.f32.mrb[0].mxu0
    %v8240 = vadd.f32 %v7785, %v8239
    %v8241 = vpop.f32.mrb[0].mxu0
    %8242 = vmatprep.mubr.f32.mxu0 %v6369
    %8243 = vmatmul.mubr.f32.gmra.mrb[0].mxu0 %v6368
    %v8244 = vpop.f32.mrb[0].mxu0
    %v8245 = vadd.f32 %v7790, %v8244
    %v8246 = vpop.f32.mrb[0].mxu0
    %8247 = vmatprep.mubr.f32.mxu0 %v6380
    %8248 = vmatmul.mubr.f32.gmra.mrb[0].mxu0 %v6379
    %v8249 = vpop.f32.mrb[0].mxu0
    %v8250 = vadd.f32 %v7795, %v8249
    %v8251 = vpop.f32.mrb[0].mxu0
    %8252 = vmatprep.mubr.f32.mxu0 %v6391
    %8253 = vmatmul.mubr.f32.gmra.mrb[0].mxu0 %v6390
    %v8254 = vpop.f32.mrb[0].mxu0
    %v8255 = vadd.f32 %v7800, %v8254
    %v8256 = vpop.f32.mrb[0].mxu0
    %8257 = vmatprep.mubr.f32.mxu0 %v6402
    %8258 = vmatmul.mubr.f32.gmra.mrb[0].mxu0 %v6401
    %v8259 = vpop.f32.mrb[0].mxu0
    %v8260 = vadd.f32 %v7805, %v8259
    %v8261 = vpop.f32.mrb[0].mxu0
    %8262 = vmatprep.mubr.f32.mxu0 %v6413
    %8263 = vmatmul.mubr.f32.gmra.mrb[0].mxu0 %v6412
    %v8264 = vpop.f32.mrb[0].mxu0
    %v8265 = vadd.f32 %v7810, %v8264
    %v8266 = vpop.f32.mrb[0].mxu0
    %8267 = vmatprep.mubr.f32.mxu0 %v6424
    %8268 = vmatmul.mubr.f32.gmra.mrb[0].mxu0 %v6423
    %v8269 = vpop.f32.mrb[0].mxu0
    %v8270 = vadd.f32 %v7815, %v8269
    %v8271 = vpop.f32.mrb[0].mxu0
    %8272 = vmatprep.mubr.f32.mxu0 %v6435
    %8273 = vmatmul.mubr.f32.gmra.mrb[0].mxu0 %v6434
    %v8274 = vpop.f32.mrb[0].mxu0
    %v8275 = vadd.f32 %v7820, %v8274
    %v8276 = vpop.f32.mrb[0].mxu0
    %8277 = vmatprep.mubr.f32.mxu0 %v6446
    %8278 = vmatmul.mubr.f32.gmra.mrb[0].mxu0 %v6445
    %v8279 = vpop.f32.mrb[0].mxu0
    %v8280 = vadd.f32 %v7825, %v8279
    %v8281 = vpop.f32.mrb[0].mxu0
    %8282 = vmatprep.mubr.f32.mxu0 %v6457
    %8283 = vmatmul.mubr.f32.gmra.mrb[0].mxu0 %v6456
    %v8284 = vpop.f32.mrb[0].mxu0
    %v8285 = vadd.f32 %v7830, %v8284
    %v8286 = vpop.f32.mrb[0].mxu0
    %8287 = vmatprep.mubr.f32.mxu0 %v6468
    %8288 = vmatmul.mubr.f32.gmra.mrb[0].mxu0 %v6467
    %v8289 = vpop.f32.mrb[0].mxu0
    %v8290 = vadd.f32 %v7835, %v8289
    %v8291 = vpop.f32.mrb[0].mxu0
    %8292 = vmatprep.mubr.f32.mxu0 %v6479
    %8293 = vmatmul.mubr.f32.gmra.mrb[0].mxu0 %v6478
    %v8294 = vpop.f32.mrb[0].mxu0
    %v8295 = vadd.f32 %v7840, %v8294
    %v8296 = vpop.f32.mrb[0].mxu0
    %8297 = vmatprep.mubr.f32.mxu0 %v6490
    %8298 = vmatmul.mubr.f32.gmra.mrb[0].mxu0 %v6489
    %v8299 = vpop.f32.mrb[0].mxu0
    %v8300 = vadd.f32 %v7845, %v8299
    %v8301 = vpop.f32.mrb[0].mxu0
    %8302 = vmatprep.mubr.f32.mxu0 %v6501
    %8303 = vmatmul.mubr.f32.gmra.mrb[0].mxu0 %v6500
    %v8304 = vpop.f32.mrb[0].mxu0
    %v8305 = vadd.f32 %v7850, %v8304
    %v8306 = vpop.f32.mrb[0].mxu0
    %8307 = vmatprep.mubr.f32.mxu0 %v6512
    %8308 = vmatmul.mubr.f32.gmra.mrb[0].mxu0 %v6511
    %v8309 = vpop.f32.mrb[0].mxu0
    %v8310 = vadd.f32 %v7855, %v8309
    %v8311 = vpop.f32.mrb[0].mxu0
    %8312 = vmatprep.mubr.f32.mxu0 %v6523
    %8313 = vmatmul.mubr.f32.gmra.mrb[0].mxu0 %v6522
    %v8314 = vpop.f32.mrb[0].mxu0
    %v8315 = vadd.f32 %v7860, %v8314
    %v8316 = vpop.f32.mrb[0].mxu0
    %8317 = vmatprep.mubr.f32.mxu0 %v6534
    %8318 = vmatmul.mubr.f32.gmra.mrb[0].mxu0 %v6533
    %v8319 = vpop.f32.mrb[0].mxu0
    %v8320 = vadd.f32 %v7865, %v8319
    %v8321 = vpop.f32.mrb[0].mxu0
    %8322 = vmatprep.mubr.f32.mxu0 %v6545
    %8323 = vmatmul.mubr.f32.gmra.mrb[0].mxu0 %v6544
    %v8324 = vpop.f32.mrb[0].mxu0
    %v8325 = vadd.f32 %v7870, %v8324
    %v8326 = vpop.f32.mrb[0].mxu0
    %8327 = vmatprep.mubr.f32.mxu0 %v6556
    %8328 = vmatmul.mubr.f32.gmra.mrb[0].mxu0 %v6555
    %v8329 = vpop.f32.mrb[0].mxu0
    %v8330 = vadd.f32 %v7875, %v8329
    %v8331 = vpop.f32.mrb[0].mxu0
    %8332 = vmatprep.mubr.f32.mxu0 %v6567
    %8333 = vmatmul.mubr.f32.gmra.mrb[0].mxu0 %v6566
    %v8334 = vpop.f32.mrb[0].mxu0
    %v8335 = vadd.f32 %v7880, %v8334
    %v8336 = vpop.f32.mrb[0].mxu0
    %8337 = vmatprep.mubr.f32.mxu0 %v6578
    %8338 = vmatmul.mubr.f32.gmra.mrb[0].mxu0 %v6577
    %v8339 = vpop.f32.mrb[0].mxu0
    %v8340 = vadd.f32 %v7885, %v8339
    %v8341 = vpop.f32.mrb[0].mxu0
    %8342 = vmatprep.mubr.f32.mxu0 %v6589
    %8343 = vmatmul.mubr.f32.gmra.mrb[0].mxu0 %v6588
    %v8344 = vpop.f32.mrb[0].mxu0
    %v8345 = vadd.f32 %v7890, %v8344
    %v8346 = vpop.f32.mrb[0].mxu0
    %8347 = vmatprep.mubr.f32.mxu0 %v6600
    %8348 = vmatmul.mubr.f32.gmra.mrb[0].mxu0 %v6599
    %v8349 = vpop.f32.mrb[0].mxu0
    %v8350 = vadd.f32 %v7895, %v8349
    %v8351 = vpop.f32.mrb[0].mxu0
    %8352 = vmatprep.mubr.f32.mxu0 %v6611
    %8353 = vmatmul.mubr.f32.gmra.mrb[0].mxu0 %v6610
    %v8354 = vpop.f32.mrb[0].mxu0
    %v8355 = vadd.f32 %v7900, %v8354
    %v8356 = vpop.f32.mrb[0].mxu0
    %8357 = vmatprep.mubr.f32.mxu0 %v6622
    %8358 = vmatmul.mubr.f32.gmra.mrb[0].mxu0 %v6621
    %v8359 = vpop.f32.mrb[0].mxu0
    %v8360 = vadd.f32 %v7905, %v8359
    %v8361 = vpop.f32.mrb[0].mxu0
    %8362 = vmatprep.mubr.f32.mxu0 %v6633
    %8363 = vmatmul.mubr.f32.gmra.mrb[0].mxu0 %v6632
    %v8364 = vpop.f32.mrb[0].mxu0
    %v8365 = vadd.f32 %v7910, %v8364
    %v8366 = vpop.f32.mrb[0].mxu0
    %8367 = vmatprep.mubr.f32.mxu0 %v6644
    %8368 = vmatmul.mubr.f32.gmra.mrb[0].mxu0 %v6643
    %v8369 = vpop.f32.mrb[0].mxu0
    %v8370 = vadd.f32 %v7915, %v8369
    %v8371 = vpop.f32.mrb[0].mxu0
    %8372 = vmatprep.mubr.f32.mxu0 %v6655
    %8373 = vmatmul.mubr.f32.gmra.mrb[0].mxu0 %v6654
    %v8374 = vpop.f32.mrb[0].mxu0
    %v8375 = vadd.f32 %v7920, %v8374
    %v8376 = vpop.f32.mrb[0].mxu0
    %8377 = vmatprep.mubr.f32.mxu0 %v6666
    %8378 = vmatmul.mubr.f32.gmra.mrb[0].mxu0 %v6665
    %v8379 = vpop.f32.mrb[0].mxu0
    %v8380 = vadd.f32 %v7925, %v8379
    %v8381 = vpop.f32.mrb[0].mxu0
    %8382 = vmatprep.mubr.f32.mxu0 %v6677
    %8383 = vmatmul.mubr.f32.gmra.mrb[0].mxu0 %v6676
    %v8384 = vpop.f32.mrb[0].mxu0
    %v8385 = vadd.f32 %v7930, %v8384
    %v8386 = vpop.f32.mrb[0].mxu0
    %8387 = vmatprep.mubr.f32.mxu0 %v6688
    %8388 = vmatmul.mubr.f32.gmra.mrb[0].mxu0 %v6687
    %v8389 = vpop.f32.mrb[0].mxu0
    %v8390 = vadd.f32 %v7935, %v8389
    %v8391 = vpop.f32.mrb[0].mxu0
    %8392 = vmatprep.mubr.f32.mxu0 %v6699
    %8393 = vmatmul.mubr.f32.gmra.mrb[0].mxu0 %v6698
    %v8394 = vpop.f32.mrb[0].mxu0
    %v8395 = vadd.f32 %v7940, %v8394
    %v8396 = vpop.f32.mrb[0].mxu0
    %8397 = vmatprep.mubr.f32.mxu0 %v6710
    %8398 = vmatmul.mubr.f32.gmra.mrb[0].mxu0 %v6709
    %v8399 = vpop.f32.mrb[0].mxu0
    %v8400 = vadd.f32 %v7945, %v8399
    %v8401 = vpop.f32.mrb[0].mxu0
    %8402 = vmatprep.mubr.f32.mxu0 %v6721
    %8403 = vmatmul.mubr.f32.gmra.mrb[0].mxu0 %v6720
    %v8404 = vpop.f32.mrb[0].mxu0
    %v8405 = vadd.f32 %v7950, %v8404
    %v8406 = vpop.f32.mrb[0].mxu0
    %8407 = vmatprep.mubr.f32.mxu0 %v6732
    %8408 = vmatmul.mubr.f32.gmra.mrb[0].mxu0 %v6731
    %v8409 = vpop.f32.mrb[0].mxu0
    %v8410 = vadd.f32 %v7955, %v8409
    %v8411 = vpop.f32.mrb[0].mxu0
    %8412 = vmatprep.mubr.f32.mxu0 %v6743
    %8413 = vmatmul.mubr.f32.gmra.mrb[0].mxu0 %v6742
    %v8414 = vpop.f32.mrb[0].mxu0
    %v8415 = vadd.f32 %v7960, %v8414
    %v8416 = vpop.f32.mrb[0].mxu0
    %8417 = vmatprep.mubr.f32.mxu0 %v6754
    %8418 = vmatmul.mubr.f32.gmra.mrb[0].mxu0 %v6753
    %v8419 = vpop.f32.mrb[0].mxu0
    %v8420 = vadd.f32 %v7965, %v8419
    %v8421 = vpop.f32.mrb[0].mxu0
    %8422 = vmatprep.mubr.f32.mxu0 %v6765
    %8423 = vmatmul.mubr.f32.gmra.mrb[0].mxu0 %v6764
    %v8424 = vpop.f32.mrb[0].mxu0
    %v8425 = vadd.f32 %v7970, %v8424
    %v8426 = vpop.f32.mrb[0].mxu0
    %8427 = vmatprep.mubr.f32.mxu0 %v6776
    %8428 = vmatmul.mubr.f32.gmra.mrb[0].mxu0 %v6775
    %v8429 = vpop.f32.mrb[0].mxu0
    %v8430 = vadd.f32 %v7975, %v8429
    %v8431 = vpop.f32.mrb[0].mxu0
    %8432 = vmatprep.mubr.f32.mxu0 %v6787
    %8433 = vmatmul.mubr.f32.gmra.mrb[0].mxu0 %v6786
    %v8434 = vpop.f32.mrb[0].mxu0
    %v8435 = vadd.f32 %v7980, %v8434
    %v8436 = vpop.f32.mrb[0].mxu0
    %8437 = vmatprep.mubr.f32.mxu0 %v6798
    %8438 = vmatmul.mubr.f32.gmra.mrb[0].mxu0 %v6797
    %v8439 = vpop.f32.mrb[0].mxu0
    %v8440 = vadd.f32 %v7985, %v8439
    %v8441 = vpop.f32.mrb[0].mxu0
    %8442 = vmatprep.mubr.f32.mxu0 %v6809
    %8443 = vmatmul.mubr.f32.gmra.mrb[0].mxu0 %v6808
    %v8444 = vpop.f32.mrb[0].mxu0
    %v8445 = vadd.f32 %v7990, %v8444
    %v8446 = vpop.f32.mrb[0].mxu0
    %8447 = vmatprep.mubr.f32.mxu0 %v6820
    %8448 = vmatmul.mubr.f32.gmra.mrb[0].mxu0 %v6819
    %v8449 = vpop.f32.mrb[0].mxu0
    %v8450 = vadd.f32 %v7995, %v8449
    %v8451 = vpop.f32.mrb[0].mxu0
    %8452 = vmatprep.mubr.f32.mxu0 %v6831
    %8453 = vmatmul.mubr.f32.gmra.mrb[0].mxu0 %v6830
    %v8454 = vpop.f32.mrb[0].mxu0
    %v8455 = vadd.f32 %v8000, %v8454
    %v8456 = vpop.f32.mrb[0].mxu0
    %8457 = vmatprep.mubr.f32.mxu0 %v6842
    %8458 = vmatmul.mubr.f32.gmra.mrb[0].mxu0 %v6841
    %v8459 = vpop.f32.mrb[0].mxu0
    %v8460 = vadd.f32 %v8005, %v8459
    %v8461 = vpop.f32.mrb[0].mxu0
    %8462 = vdwg.mxu0
    %8463 = vmatprep.subr.mxu0 0.0
    %8464 = vmatpush1.msra.mxu0 %v5884
    %8465 = vmatprep.subr.mxu0 0.0
    %8466 = vmatpush1.msra.mxu0 %v5885
    %8467 = vmatprep.subr.mxu0 0.0
    %8468 = vmatpush1.msra.mxu0 %v5886
    %8469 = vmatprep.subr.mxu0 0.0
    %8470 = vmatpush1.msra.mxu0 %v5887
    %8471 = vmatprep.subr.mxu0 0.0
    %8472 = vmatpush1.msra.mxu0 %v5888
    %8473 = vmatprep.subr.mxu0 0.0
    %8474 = vmatpush1.msra.mxu0 %v5889
    %8475 = vmatprep.subr.mxu0 0.0
    %8476 = vmatpush1.msra.mxu0 %v5890
    %8477 = vmatprep.subr.mxu0 0.0
    %8478 = vmatpush1.msra.mxu0 %v5891
    %8479 = vmatprep.subr.mxu0 0.0
    %8480 = vmatpush1.msra.mxu0 %v5892
    %8481 = vmatprep.subr.mxu0 0.0
    %8482 = vmatpush1.msra.mxu0 %v5893
    %8483 = vmatprep.subr.mxu0 0.0
    %8484 = vmatpush1.msra.mxu0 %v5894
    %8485 = vmatprep.subr.mxu0 0.0
    %8486 = vmatpush1.msra.mxu0 %v5895
    %8487 = vmatprep.subr.mxu0 0.0
    %8488 = vmatpush1.msra.mxu0 %v5896
    %8489 = vmatprep.subr.mxu0 0.0
    %8490 = vmatpush1.msra.mxu0 %v5897
    %8491 = vmatprep.subr.mxu0 0.0
    %8492 = vmatpush1.msra.mxu0 %v5898
    %8493 = vmatprep.subr.mxu0 0.0
    %8494 = vmatpush1.msra.mxu0 %v5899
    %8495 = vmatprep.subr.mxu0 0.0
    %8496 = vmatpush1.msra.mxu0 %v5900
    %8497 = vmatprep.subr.mxu0 0.0
    %8498 = vmatpush1.msra.mxu0 %v5901
    %8499 = vmatprep.subr.mxu0 0.0
    %8500 = vmatpush1.msra.mxu0 %v5902
    %8501 = vmatprep.subr.mxu0 0.0
    %8502 = vmatpush1.msra.mxu0 %v5903
    %8503 = vmatprep.subr.mxu0 0.0
    %8504 = vmatpush1.msra.mxu0 %v5904
    %8505 = vmatprep.subr.mxu0 0.0
    %8506 = vmatpush1.msra.mxu0 %v5905
    %8507 = vmatprep.subr.mxu0 0.0
    %8508 = vmatpush1.msra.mxu0 %v5906
    %8509 = vmatprep.subr.mxu0 0.0
    %8510 = vmatpush1.msra.mxu0 %v5907
    %8511 = vmatprep.subr.mxu0 0.0
    %8512 = vmatpush1.msra.mxu0 %v5908
    %8513 = vmatprep.subr.mxu0 0.0
    %8514 = vmatpush1.msra.mxu0 %v5909
    %8515 = vmatprep.subr.mxu0 0.0
    %8516 = vmatpush1.msra.mxu0 %v5910
    %8517 = vmatprep.subr.mxu0 0.0
    %8518 = vmatpush1.msra.mxu0 %v5911
    %8519 = vmatprep.subr.mxu0 0.0
    %8520 = vmatpush1.msra.mxu0 %v5912
    %8521 = vmatprep.subr.mxu0 0.0
    %8522 = vmatpush1.msra.mxu0 %v5913
    %8523 = vmatprep.subr.mxu0 0.0
    %8524 = vmatpush1.msra.mxu0 %v5914
    %8525 = vmatprep.subr.mxu0 0.0
    %8526 = vmatpush1.msra.mxu0 %v5915
    %8527 = vmatprep.mubr.f32.mxu0 %v5997
    %8528 = vmatmul.mubr.f32.gmra.mrb[0].mxu0 %v5996
    %v8529 = vpop.f32.mrb[0].mxu0
    %v8530 = vadd.f32 %v8075, %v8529
    %v8531 = vpop.f32.mrb[0].mxu0
    %8532 = vmatprep.mubr.f32.mxu0 %v6008
    %8533 = vmatmul.mubr.f32.gmra.mrb[0].mxu0 %v6007
    %v8534 = vpop.f32.mrb[0].mxu0
    %v8535 = vadd.f32 %v8080, %v8534
    %v8536 = vpop.f32.mrb[0].mxu0
    %8537 = vmatprep.mubr.f32.mxu0 %v6019
    %8538 = vmatmul.mubr.f32.gmra.mrb[0].mxu0 %v6018
    %v8539 = vpop.f32.mrb[0].mxu0
    %v8540 = vadd.f32 %v8085, %v8539
    %v8541 = vpop.f32.mrb[0].mxu0
    %8542 = vmatprep.mubr.f32.mxu0 %v6030
    %8543 = vmatmul.mubr.f32.gmra.mrb[0].mxu0 %v6029
    %v8544 = vpop.f32.mrb[0].mxu0
    %v8545 = vadd.f32 %v8090, %v8544
    %v8546 = vpop.f32.mrb[0].mxu0
    %8547 = vmatprep.mubr.f32.mxu0 %v6041
    %8548 = vmatmul.mubr.f32.gmra.mrb[0].mxu0 %v6040
    %v8549 = vpop.f32.mrb[0].mxu0
    %v8550 = vadd.f32 %v8095, %v8549
    %v8551 = vpop.f32.mrb[0].mxu0
    %8552 = vmatprep.mubr.f32.mxu0 %v6052
    %8553 = vmatmul.mubr.f32.gmra.mrb[0].mxu0 %v6051
    %v8554 = vpop.f32.mrb[0].mxu0
    %v8555 = vadd.f32 %v8100, %v8554
    %v8556 = vpop.f32.mrb[0].mxu0
    %8557 = vmatprep.mubr.f32.mxu0 %v6063
    %8558 = vmatmul.mubr.f32.gmra.mrb[0].mxu0 %v6062
    %v8559 = vpop.f32.mrb[0].mxu0
    %v8560 = vadd.f32 %v8105, %v8559
    %v8561 = vpop.f32.mrb[0].mxu0
    %8562 = vmatprep.mubr.f32.mxu0 %v6074
    %8563 = vmatmul.mubr.f32.gmra.mrb[0].mxu0 %v6073
    %v8564 = vpop.f32.mrb[0].mxu0
    %v8565 = vadd.f32 %v8110, %v8564
    %v8566 = vpop.f32.mrb[0].mxu0
    %8567 = vmatprep.mubr.f32.mxu0 %v6085
    %8568 = vmatmul.mubr.f32.gmra.mrb[0].mxu0 %v6084
    %v8569 = vpop.f32.mrb[0].mxu0
    %v8570 = vadd.f32 %v8115, %v8569
    %v8571 = vpop.f32.mrb[0].mxu0
    %8572 = vmatprep.mubr.f32.mxu0 %v6096
    %8573 = vmatmul.mubr.f32.gmra.mrb[0].mxu0 %v6095
    %v8574 = vpop.f32.mrb[0].mxu0
    %v8575 = vadd.f32 %v8120, %v8574
    %v8576 = vpop.f32.mrb[0].mxu0
    %8577 = vmatprep.mubr.f32.mxu0 %v6107
    %8578 = vmatmul.mubr.f32.gmra.mrb[0].mxu0 %v6106
    %v8579 = vpop.f32.mrb[0].mxu0
    %v8580 = vadd.f32 %v8125, %v8579
    %v8581 = vpop.f32.mrb[0].mxu0
    %8582 = vmatprep.mubr.f32.mxu0 %v6118
    %8583 = vmatmul.mubr.f32.gmra.mrb[0].mxu0 %v6117
    %v8584 = vpop.f32.mrb[0].mxu0
    %v8585 = vadd.f32 %v8130, %v8584
    %v8586 = vpop.f32.mrb[0].mxu0
    %8587 = vmatprep.mubr.f32.mxu0 %v6129
    %8588 = vmatmul.mubr.f32.gmra.mrb[0].mxu0 %v6128
    %v8589 = vpop.f32.mrb[0].mxu0
    %v8590 = vadd.f32 %v8135, %v8589
    %v8591 = vpop.f32.mrb[0].mxu0
    %8592 = vmatprep.mubr.f32.mxu0 %v6140
    %8593 = vmatmul.mubr.f32.gmra.mrb[0].mxu0 %v6139
    %v8594 = vpop.f32.mrb[0].mxu0
    %v8595 = vadd.f32 %v8140, %v8594
    %v8596 = vpop.f32.mrb[0].mxu0
    %8597 = vmatprep.mubr.f32.mxu0 %v6151
    %8598 = vmatmul.mubr.f32.gmra.mrb[0].mxu0 %v6150
    %v8599 = vpop.f32.mrb[0].mxu0
    %v8600 = vadd.f32 %v8145, %v8599
    %v8601 = vpop.f32.mrb[0].mxu0
    %8602 = vmatprep.mubr.f32.mxu0 %v6162
    %8603 = vmatmul.mubr.f32.gmra.mrb[0].mxu0 %v6161
    %v8604 = vpop.f32.mrb[0].mxu0
    %v8605 = vadd.f32 %v8150, %v8604
    %v8606 = vpop.f32.mrb[0].mxu0
    %8607 = vmatprep.mubr.f32.mxu0 %v6173
    %8608 = vmatmul.mubr.f32.gmra.mrb[0].mxu0 %v6172
    %v8609 = vpop.f32.mrb[0].mxu0
    %v8610 = vadd.f32 %v8155, %v8609
    %v8611 = vpop.f32.mrb[0].mxu0
    %8612 = vmatprep.mubr.f32.mxu0 %v6184
    %8613 = vmatmul.mubr.f32.gmra.mrb[0].mxu0 %v6183
    %v8614 = vpop.f32.mrb[0].mxu0
    %v8615 = vadd.f32 %v8160, %v8614
    %v8616 = vpop.f32.mrb[0].mxu0
    %8617 = vmatprep.mubr.f32.mxu0 %v6195
    %8618 = vmatmul.mubr.f32.gmra.mrb[0].mxu0 %v6194
    %v8619 = vpop.f32.mrb[0].mxu0
    %v8620 = vadd.f32 %v8165, %v8619
    %v8621 = vpop.f32.mrb[0].mxu0
    %8622 = vmatprep.mubr.f32.mxu0 %v6206
    %8623 = vmatmul.mubr.f32.gmra.mrb[0].mxu0 %v6205
    %v8624 = vpop.f32.mrb[0].mxu0
    %v8625 = vadd.f32 %v8170, %v8624
    %v8626 = vpop.f32.mrb[0].mxu0
    %8627 = vmatprep.mubr.f32.mxu0 %v6217
    %8628 = vmatmul.mubr.f32.gmra.mrb[0].mxu0 %v6216
    %v8629 = vpop.f32.mrb[0].mxu0
    %v8630 = vadd.f32 %v8175, %v8629
    %v8631 = vpop.f32.mrb[0].mxu0
    %8632 = vmatprep.mubr.f32.mxu0 %v6228
    %8633 = vmatmul.mubr.f32.gmra.mrb[0].mxu0 %v6227
    %v8634 = vpop.f32.mrb[0].mxu0
    %v8635 = vadd.f32 %v8180, %v8634
    %v8636 = vpop.f32.mrb[0].mxu0
    %8637 = vmatprep.mubr.f32.mxu0 %v6239
    %8638 = vmatmul.mubr.f32.gmra.mrb[0].mxu0 %v6238
    %v8639 = vpop.f32.mrb[0].mxu0
    %v8640 = vadd.f32 %v8185, %v8639
    %v8641 = vpop.f32.mrb[0].mxu0
    %8642 = vmatprep.mubr.f32.mxu0 %v6250
    %8643 = vmatmul.mubr.f32.gmra.mrb[0].mxu0 %v6249
    %v8644 = vpop.f32.mrb[0].mxu0
    %v8645 = vadd.f32 %v8190, %v8644
    %v8646 = vpop.f32.mrb[0].mxu0
    %8647 = vmatprep.mubr.f32.mxu0 %v6261
    %8648 = vmatmul.mubr.f32.gmra.mrb[0].mxu0 %v6260
    %v8649 = vpop.f32.mrb[0].mxu0
    %v8650 = vadd.f32 %v8195, %v8649
    %v8651 = vpop.f32.mrb[0].mxu0
    %8652 = vmatprep.mubr.f32.mxu0 %v6272
    %8653 = vmatmul.mubr.f32.gmra.mrb[0].mxu0 %v6271
    %v8654 = vpop.f32.mrb[0].mxu0
    %v8655 = vadd.f32 %v8200, %v8654
    %v8656 = vpop.f32.mrb[0].mxu0
    %8657 = vmatprep.mubr.f32.mxu0 %v6283
    %8658 = vmatmul.mubr.f32.gmra.mrb[0].mxu0 %v6282
    %v8659 = vpop.f32.mrb[0].mxu0
    %v8660 = vadd.f32 %v8205, %v8659
    %v8661 = vpop.f32.mrb[0].mxu0
    %8662 = vmatprep.mubr.f32.mxu0 %v6294
    %8663 = vmatmul.mubr.f32.gmra.mrb[0].mxu0 %v6293
    %v8664 = vpop.f32.mrb[0].mxu0
    %v8665 = vadd.f32 %v8210, %v8664
    %v8666 = vpop.f32.mrb[0].mxu0
    %8667 = vmatprep.mubr.f32.mxu0 %v6305
    %8668 = vmatmul.mubr.f32.gmra.mrb[0].mxu0 %v6304
    %v8669 = vpop.f32.mrb[0].mxu0
    %v8670 = vadd.f32 %v8215, %v8669
    %v8671 = vpop.f32.mrb[0].mxu0
    %8672 = vmatprep.mubr.f32.mxu0 %v6316
    %8673 = vmatmul.mubr.f32.gmra.mrb[0].mxu0 %v6315
    %v8674 = vpop.f32.mrb[0].mxu0
    %v8675 = vadd.f32 %v8220, %v8674
    %v8676 = vpop.f32.mrb[0].mxu0
    %8677 = vmatprep.mubr.f32.mxu0 %v6327
    %8678 = vmatmul.mubr.f32.gmra.mrb[0].mxu0 %v6326
    %v8679 = vpop.f32.mrb[0].mxu0
    %v8680 = vadd.f32 %v8225, %v8679
    %v8681 = vpop.f32.mrb[0].mxu0
    %8682 = vmatprep.mubr.f32.mxu0 %v6338
    %8683 = vmatmul.mubr.f32.gmra.mrb[0].mxu0 %v6337
    %v8684 = vpop.f32.mrb[0].mxu0
    %v8685 = vadd.f32 %v8230, %v8684
    %v8686 = vpop.f32.mrb[0].mxu0
    %8687 = vmatprep.mubr.f32.mxu0 %v6349
    %8688 = vmatmul.mubr.f32.gmra.mrb[0].mxu0 %v6348
    %v8689 = vpop.f32.mrb[0].mxu0
    %v8690 = vadd.f32 %v8235, %v8689
    %v8691 = vpop.f32.mrb[0].mxu0
    %8692 = vmatprep.mubr.f32.mxu0 %v6360
    %8693 = vmatmul.mubr.f32.gmra.mrb[0].mxu0 %v6359
    %v8694 = vpop.f32.mrb[0].mxu0
    %v8695 = vadd.f32 %v8240, %v8694
    %v8696 = vpop.f32.mrb[0].mxu0
    %8697 = vmatprep.mubr.f32.mxu0 %v6371
    %8698 = vmatmul.mubr.f32.gmra.mrb[0].mxu0 %v6370
    %v8699 = vpop.f32.mrb[0].mxu0
    %v8700 = vadd.f32 %v8245, %v8699
    %v8701 = vpop.f32.mrb[0].mxu0
    %8702 = vmatprep.mubr.f32.mxu0 %v6382
    %8703 = vmatmul.mubr.f32.gmra.mrb[0].mxu0 %v6381
    %v8704 = vpop.f32.mrb[0].mxu0
    %v8705 = vadd.f32 %v8250, %v8704
    %v8706 = vpop.f32.mrb[0].mxu0
    %8707 = vmatprep.mubr.f32.mxu0 %v6393
    %8708 = vmatmul.mubr.f32.gmra.mrb[0].mxu0 %v6392
    %v8709 = vpop.f32.mrb[0].mxu0
    %v8710 = vadd.f32 %v8255, %v8709
    %v8711 = vpop.f32.mrb[0].mxu0
    %8712 = vmatprep.mubr.f32.mxu0 %v6404
    %8713 = vmatmul.mubr.f32.gmra.mrb[0].mxu0 %v6403
    %v8714 = vpop.f32.mrb[0].mxu0
    %v8715 = vadd.f32 %v8260, %v8714
    %v8716 = vpop.f32.mrb[0].mxu0
    %8717 = vmatprep.mubr.f32.mxu0 %v6415
    %8718 = vmatmul.mubr.f32.gmra.mrb[0].mxu0 %v6414
    %v8719 = vpop.f32.mrb[0].mxu0
    %v8720 = vadd.f32 %v8265, %v8719
    %v8721 = vpop.f32.mrb[0].mxu0
    %8722 = vmatprep.mubr.f32.mxu0 %v6426
    %8723 = vmatmul.mubr.f32.gmra.mrb[0].mxu0 %v6425
    %v8724 = vpop.f32.mrb[0].mxu0
    %v8725 = vadd.f32 %v8270, %v8724
    %v8726 = vpop.f32.mrb[0].mxu0
    %8727 = vmatprep.mubr.f32.mxu0 %v6437
    %8728 = vmatmul.mubr.f32.gmra.mrb[0].mxu0 %v6436
    %v8729 = vpop.f32.mrb[0].mxu0
    %v8730 = vadd.f32 %v8275, %v8729
    %v8731 = vpop.f32.mrb[0].mxu0
    %8732 = vmatprep.mubr.f32.mxu0 %v6448
    %8733 = vmatmul.mubr.f32.gmra.mrb[0].mxu0 %v6447
    %v8734 = vpop.f32.mrb[0].mxu0
    %v8735 = vadd.f32 %v8280, %v8734
    %v8736 = vpop.f32.mrb[0].mxu0
    %8737 = vmatprep.mubr.f32.mxu0 %v6459
    %8738 = vmatmul.mubr.f32.gmra.mrb[0].mxu0 %v6458
    %v8739 = vpop.f32.mrb[0].mxu0
    %v8740 = vadd.f32 %v8285, %v8739
    %v8741 = vpop.f32.mrb[0].mxu0
    %8742 = vmatprep.mubr.f32.mxu0 %v6470
    %8743 = vmatmul.mubr.f32.gmra.mrb[0].mxu0 %v6469
    %v8744 = vpop.f32.mrb[0].mxu0
    %v8745 = vadd.f32 %v8290, %v8744
    %v8746 = vpop.f32.mrb[0].mxu0
    %8747 = vmatprep.mubr.f32.mxu0 %v6481
    %8748 = vmatmul.mubr.f32.gmra.mrb[0].mxu0 %v6480
    %v8749 = vpop.f32.mrb[0].mxu0
    %v8750 = vadd.f32 %v8295, %v8749
    %v8751 = vpop.f32.mrb[0].mxu0
    %8752 = vmatprep.mubr.f32.mxu0 %v6492
    %8753 = vmatmul.mubr.f32.gmra.mrb[0].mxu0 %v6491
    %v8754 = vpop.f32.mrb[0].mxu0
    %v8755 = vadd.f32 %v8300, %v8754
    %v8756 = vpop.f32.mrb[0].mxu0
    %8757 = vmatprep.mubr.f32.mxu0 %v6503
    %8758 = vmatmul.mubr.f32.gmra.mrb[0].mxu0 %v6502
    %v8759 = vpop.f32.mrb[0].mxu0
    %v8760 = vadd.f32 %v8305, %v8759
    %v8761 = vpop.f32.mrb[0].mxu0
    %8762 = vmatprep.mubr.f32.mxu0 %v6514
    %8763 = vmatmul.mubr.f32.gmra.mrb[0].mxu0 %v6513
    %v8764 = vpop.f32.mrb[0].mxu0
    %v8765 = vadd.f32 %v8310, %v8764
    %v8766 = vpop.f32.mrb[0].mxu0
    %8767 = vmatprep.mubr.f32.mxu0 %v6525
    %8768 = vmatmul.mubr.f32.gmra.mrb[0].mxu0 %v6524
    %v8769 = vpop.f32.mrb[0].mxu0
    %v8770 = vadd.f32 %v8315, %v8769
    %v8771 = vpop.f32.mrb[0].mxu0
    %8772 = vmatprep.mubr.f32.mxu0 %v6536
    %8773 = vmatmul.mubr.f32.gmra.mrb[0].mxu0 %v6535
    %v8774 = vpop.f32.mrb[0].mxu0
    %v8775 = vadd.f32 %v8320, %v8774
    %v8776 = vpop.f32.mrb[0].mxu0
    %8777 = vmatprep.mubr.f32.mxu0 %v6547
    %8778 = vmatmul.mubr.f32.gmra.mrb[0].mxu0 %v6546
    %v8779 = vpop.f32.mrb[0].mxu0
    %v8780 = vadd.f32 %v8325, %v8779
    %v8781 = vpop.f32.mrb[0].mxu0
    %8782 = vmatprep.mubr.f32.mxu0 %v6558
    %8783 = vmatmul.mubr.f32.gmra.mrb[0].mxu0 %v6557
    %v8784 = vpop.f32.mrb[0].mxu0
    %v8785 = vadd.f32 %v8330, %v8784
    %v8786 = vpop.f32.mrb[0].mxu0
    %8787 = vmatprep.mubr.f32.mxu0 %v6569
    %8788 = vmatmul.mubr.f32.gmra.mrb[0].mxu0 %v6568
    %v8789 = vpop.f32.mrb[0].mxu0
    %v8790 = vadd.f32 %v8335, %v8789
    %v8791 = vpop.f32.mrb[0].mxu0
    %8792 = vmatprep.mubr.f32.mxu0 %v6580
    %8793 = vmatmul.mubr.f32.gmra.mrb[0].mxu0 %v6579
    %v8794 = vpop.f32.mrb[0].mxu0
    %v8795 = vadd.f32 %v8340, %v8794
    %v8796 = vpop.f32.mrb[0].mxu0
    %8797 = vmatprep.mubr.f32.mxu0 %v6591
    %8798 = vmatmul.mubr.f32.gmra.mrb[0].mxu0 %v6590
    %v8799 = vpop.f32.mrb[0].mxu0
    %v8800 = vadd.f32 %v8345, %v8799
    %v8801 = vpop.f32.mrb[0].mxu0
    %8802 = vmatprep.mubr.f32.mxu0 %v6602
    %8803 = vmatmul.mubr.f32.gmra.mrb[0].mxu0 %v6601
    %v8804 = vpop.f32.mrb[0].mxu0
    %v8805 = vadd.f32 %v8350, %v8804
    %v8806 = vpop.f32.mrb[0].mxu0
    %8807 = vmatprep.mubr.f32.mxu0 %v6613
    %8808 = vmatmul.mubr.f32.gmra.mrb[0].mxu0 %v6612
    %v8809 = vpop.f32.mrb[0].mxu0
    %v8810 = vadd.f32 %v8355, %v8809
    %v8811 = vpop.f32.mrb[0].mxu0
    %8812 = vmatprep.mubr.f32.mxu0 %v6624
    %8813 = vmatmul.mubr.f32.gmra.mrb[0].mxu0 %v6623
    %v8814 = vpop.f32.mrb[0].mxu0
    %v8815 = vadd.f32 %v8360, %v8814
    %v8816 = vpop.f32.mrb[0].mxu0
    %8817 = vmatprep.mubr.f32.mxu0 %v6635
    %8818 = vmatmul.mubr.f32.gmra.mrb[0].mxu0 %v6634
    %v8819 = vpop.f32.mrb[0].mxu0
    %v8820 = vadd.f32 %v8365, %v8819
    %v8821 = vpop.f32.mrb[0].mxu0
    %8822 = vmatprep.mubr.f32.mxu0 %v6646
    %8823 = vmatmul.mubr.f32.gmra.mrb[0].mxu0 %v6645
    %v8824 = vpop.f32.mrb[0].mxu0
    %v8825 = vadd.f32 %v8370, %v8824
    %v8826 = vpop.f32.mrb[0].mxu0
    %8827 = vmatprep.mubr.f32.mxu0 %v6657
    %8828 = vmatmul.mubr.f32.gmra.mrb[0].mxu0 %v6656
    %v8829 = vpop.f32.mrb[0].mxu0
    %v8830 = vadd.f32 %v8375, %v8829
    %v8831 = vpop.f32.mrb[0].mxu0
    %8832 = vmatprep.mubr.f32.mxu0 %v6668
    %8833 = vmatmul.mubr.f32.gmra.mrb[0].mxu0 %v6667
    %v8834 = vpop.f32.mrb[0].mxu0
    %v8835 = vadd.f32 %v8380, %v8834
    %v8836 = vpop.f32.mrb[0].mxu0
    %8837 = vmatprep.mubr.f32.mxu0 %v6679
    %8838 = vmatmul.mubr.f32.gmra.mrb[0].mxu0 %v6678
    %v8839 = vpop.f32.mrb[0].mxu0
    %v8840 = vadd.f32 %v8385, %v8839
    %v8841 = vpop.f32.mrb[0].mxu0
    %8842 = vmatprep.mubr.f32.mxu0 %v6690
    %8843 = vmatmul.mubr.f32.gmra.mrb[0].mxu0 %v6689
    %v8844 = vpop.f32.mrb[0].mxu0
    %v8845 = vadd.f32 %v8390, %v8844
    %v8846 = vpop.f32.mrb[0].mxu0
    %8847 = vmatprep.mubr.f32.mxu0 %v6701
    %8848 = vmatmul.mubr.f32.gmra.mrb[0].mxu0 %v6700
    %v8849 = vpop.f32.mrb[0].mxu0
    %v8850 = vadd.f32 %v8395, %v8849
    %v8851 = vpop.f32.mrb[0].mxu0
    %8852 = vmatprep.mubr.f32.mxu0 %v6712
    %8853 = vmatmul.mubr.f32.gmra.mrb[0].mxu0 %v6711
    %v8854 = vpop.f32.mrb[0].mxu0
    %v8855 = vadd.f32 %v8400, %v8854
    %v8856 = vpop.f32.mrb[0].mxu0
    %8857 = vmatprep.mubr.f32.mxu0 %v6723
    %8858 = vmatmul.mubr.f32.gmra.mrb[0].mxu0 %v6722
    %v8859 = vpop.f32.mrb[0].mxu0
    %v8860 = vadd.f32 %v8405, %v8859
    %v8861 = vpop.f32.mrb[0].mxu0
    %8862 = vmatprep.mubr.f32.mxu0 %v6734
    %8863 = vmatmul.mubr.f32.gmra.mrb[0].mxu0 %v6733
    %v8864 = vpop.f32.mrb[0].mxu0
    %v8865 = vadd.f32 %v8410, %v8864
    %v8866 = vpop.f32.mrb[0].mxu0
    %8867 = vmatprep.mubr.f32.mxu0 %v6745
    %8868 = vmatmul.mubr.f32.gmra.mrb[0].mxu0 %v6744
    %v8869 = vpop.f32.mrb[0].mxu0
    %v8870 = vadd.f32 %v8415, %v8869
    %v8871 = vpop.f32.mrb[0].mxu0
    %8872 = vmatprep.mubr.f32.mxu0 %v6756
    %8873 = vmatmul.mubr.f32.gmra.mrb[0].mxu0 %v6755
    %v8874 = vpop.f32.mrb[0].mxu0
    %v8875 = vadd.f32 %v8420, %v8874
    %v8876 = vpop.f32.mrb[0].mxu0
    %8877 = vmatprep.mubr.f32.mxu0 %v6767
    %8878 = vmatmul.mubr.f32.gmra.mrb[0].mxu0 %v6766
    %v8879 = vpop.f32.mrb[0].mxu0
    %v8880 = vadd.f32 %v8425, %v8879
    %v8881 = vpop.f32.mrb[0].mxu0
    %8882 = vmatprep.mubr.f32.mxu0 %v6778
    %8883 = vmatmul.mubr.f32.gmra.mrb[0].mxu0 %v6777
    %v8884 = vpop.f32.mrb[0].mxu0
    %v8885 = vadd.f32 %v8430, %v8884
    %v8886 = vpop.f32.mrb[0].mxu0
    %8887 = vmatprep.mubr.f32.mxu0 %v6789
    %8888 = vmatmul.mubr.f32.gmra.mrb[0].mxu0 %v6788
    %v8889 = vpop.f32.mrb[0].mxu0
    %v8890 = vadd.f32 %v8435, %v8889
    %v8891 = vpop.f32.mrb[0].mxu0
    %8892 = vmatprep.mubr.f32.mxu0 %v6800
    %8893 = vmatmul.mubr.f32.gmra.mrb[0].mxu0 %v6799
    %v8894 = vpop.f32.mrb[0].mxu0
    %v8895 = vadd.f32 %v8440, %v8894
    %v8896 = vpop.f32.mrb[0].mxu0
    %8897 = vmatprep.mubr.f32.mxu0 %v6811
    %8898 = vmatmul.mubr.f32.gmra.mrb[0].mxu0 %v6810
    %v8899 = vpop.f32.mrb[0].mxu0
    %v8900 = vadd.f32 %v8445, %v8899
    %v8901 = vpop.f32.mrb[0].mxu0
    %8902 = vmatprep.mubr.f32.mxu0 %v6822
    %8903 = vmatmul.mubr.f32.gmra.mrb[0].mxu0 %v6821
    %v8904 = vpop.f32.mrb[0].mxu0
    %v8905 = vadd.f32 %v8450, %v8904
    %v8906 = vpop.f32.mrb[0].mxu0
    %8907 = vmatprep.mubr.f32.mxu0 %v6833
    %8908 = vmatmul.mubr.f32.gmra.mrb[0].mxu0 %v6832
    %v8909 = vpop.f32.mrb[0].mxu0
    %v8910 = vadd.f32 %v8455, %v8909
    %v8911 = vpop.f32.mrb[0].mxu0
    %8912 = vmatprep.mubr.f32.mxu0 %v6844
    %8913 = vmatmul.mubr.f32.gmra.mrb[0].mxu0 %v6843
    %v8914 = vpop.f32.mrb[0].mxu0
    %v8915 = vadd.f32 %v8460, %v8914
    %v8916 = vpop.f32.mrb[0].mxu0
    %8917 = vdwg.mxu0
    %8918 = vmatprep.subr.mxu0 0.0
    %8919 = vmatpush1.msra.mxu0 %v5916
    %8920 = vmatprep.subr.mxu0 0.0
    %8921 = vmatpush1.msra.mxu0 %v5917
    %8922 = vmatprep.subr.mxu0 0.0
    %8923 = vmatpush1.msra.mxu0 %v5918
    %8924 = vmatprep.subr.mxu0 0.0
    %8925 = vmatpush1.msra.mxu0 %v5919
    %8926 = vmatprep.subr.mxu0 0.0
    %8927 = vmatpush1.msra.mxu0 %v5920
    %8928 = vmatprep.subr.mxu0 0.0
    %8929 = vmatpush1.msra.mxu0 %v5921
    %8930 = vmatprep.subr.mxu0 0.0
    %8931 = vmatpush1.msra.mxu0 %v5922
    %8932 = vmatprep.subr.mxu0 0.0
    %8933 = vmatpush1.msra.mxu0 %v5923
    %8934 = vmatprep.subr.mxu0 0.0
    %8935 = vmatpush1.msra.mxu0 %v5924
    %8936 = vmatprep.subr.mxu0 0.0
    %8937 = vmatpush1.msra.mxu0 %v5925
    %8938 = vmatprep.subr.mxu0 0.0
    %8939 = vmatpush1.msra.mxu0 %v5926
    %8940 = vmatprep.subr.mxu0 0.0
    %8941 = vmatpush1.msra.mxu0 %v5927
    %8942 = vmatprep.subr.mxu0 0.0
    %8943 = vmatpush1.msra.mxu0 %v5928
    %8944 = vmatprep.subr.mxu0 0.0
    %8945 = vmatpush1.msra.mxu0 %v5929
    %8946 = vmatprep.subr.mxu0 0.0
    %8947 = vmatpush1.msra.mxu0 %v5930
    %8948 = vmatprep.subr.mxu0 0.0
    %8949 = vmatpush1.msra.mxu0 %v5931
    %8950 = vmatprep.subr.mxu0 0.0
    %8951 = vmatpush1.msra.mxu0 %v5932
    %8952 = vmatprep.subr.mxu0 0.0
    %8953 = vmatpush1.msra.mxu0 %v5933
    %8954 = vmatprep.subr.mxu0 0.0
    %8955 = vmatpush1.msra.mxu0 %v5934
    %8956 = vmatprep.subr.mxu0 0.0
    %8957 = vmatpush1.msra.mxu0 %v5935
    %8958 = vmatprep.subr.mxu0 0.0
    %8959 = vmatpush1.msra.mxu0 %v5936
    %8960 = vmatprep.subr.mxu0 0.0
    %8961 = vmatpush1.msra.mxu0 %v5937
    %8962 = vmatprep.subr.mxu0 0.0
    %8963 = vmatpush1.msra.mxu0 %v5938
    %8964 = vmatprep.subr.mxu0 0.0
    %8965 = vmatpush1.msra.mxu0 %v5939
    %8966 = vmatprep.subr.mxu0 0.0
    %8967 = vmatpush1.msra.mxu0 %v5940
    %8968 = vmatprep.subr.mxu0 0.0
    %8969 = vmatpush1.msra.mxu0 %v5941
    %8970 = vmatprep.subr.mxu0 0.0
    %8971 = vmatpush1.msra.mxu0 %v5942
    %8972 = vmatprep.subr.mxu0 0.0
    %8973 = vmatpush1.msra.mxu0 %v5943
    %8974 = vmatprep.subr.mxu0 0.0
    %8975 = vmatpush1.msra.mxu0 %v5944
    %8976 = vmatprep.subr.mxu0 0.0
    %8977 = vmatpush1.msra.mxu0 %v5945
    %8978 = vmatprep.subr.mxu0 0.0
    %8979 = vmatpush1.msra.mxu0 %v5946
    %8980 = vmatprep.subr.mxu0 0.0
    %8981 = vmatpush1.msra.mxu0 %v5947
    %8982 = vmatprep.mubr.f32.mxu0 %v5999
    %8983 = vmatmul.mubr.f32.gmra.mrb[0].mxu0 %v5998
    %v8984 = vpop.f32.mrb[0].mxu0
    %v8985 = vadd.f32 %v8530, %v8984
    %v8986 = vpop.f32.mrb[0].mxu0
    %8987 = vmatprep.mubr.f32.mxu0 %v6010
    %8988 = vmatmul.mubr.f32.gmra.mrb[0].mxu0 %v6009
    %v8989 = vpop.f32.mrb[0].mxu0
    %v8990 = vadd.f32 %v8535, %v8989
    %v8991 = vpop.f32.mrb[0].mxu0
    %8992 = vmatprep.mubr.f32.mxu0 %v6021
    %8993 = vmatmul.mubr.f32.gmra.mrb[0].mxu0 %v6020
    %v8994 = vpop.f32.mrb[0].mxu0
    %v8995 = vadd.f32 %v8540, %v8994
    %v8996 = vpop.f32.mrb[0].mxu0
    %8997 = vmatprep.mubr.f32.mxu0 %v6032
    %8998 = vmatmul.mubr.f32.gmra.mrb[0].mxu0 %v6031
    %v8999 = vpop.f32.mrb[0].mxu0
    %v9000 = vadd.f32 %v8545, %v8999
    %v9001 = vpop.f32.mrb[0].mxu0
    %9002 = vmatprep.mubr.f32.mxu0 %v6043
    %9003 = vmatmul.mubr.f32.gmra.mrb[0].mxu0 %v6042
    %v9004 = vpop.f32.mrb[0].mxu0
    %v9005 = vadd.f32 %v8550, %v9004
    %v9006 = vpop.f32.mrb[0].mxu0
    %9007 = vmatprep.mubr.f32.mxu0 %v6054
    %9008 = vmatmul.mubr.f32.gmra.mrb[0].mxu0 %v6053
    %v9009 = vpop.f32.mrb[0].mxu0
    %v9010 = vadd.f32 %v8555, %v9009
    %v9011 = vpop.f32.mrb[0].mxu0
    %9012 = vmatprep.mubr.f32.mxu0 %v6065
    %9013 = vmatmul.mubr.f32.gmra.mrb[0].mxu0 %v6064
    %v9014 = vpop.f32.mrb[0].mxu0
    %v9015 = vadd.f32 %v8560, %v9014
    %v9016 = vpop.f32.mrb[0].mxu0
    %9017 = vmatprep.mubr.f32.mxu0 %v6076
    %9018 = vmatmul.mubr.f32.gmra.mrb[0].mxu0 %v6075
    %v9019 = vpop.f32.mrb[0].mxu0
    %v9020 = vadd.f32 %v8565, %v9019
    %v9021 = vpop.f32.mrb[0].mxu0
    %9022 = vmatprep.mubr.f32.mxu0 %v6087
    %9023 = vmatmul.mubr.f32.gmra.mrb[0].mxu0 %v6086
    %v9024 = vpop.f32.mrb[0].mxu0
    %v9025 = vadd.f32 %v8570, %v9024
    %v9026 = vpop.f32.mrb[0].mxu0
    %9027 = vmatprep.mubr.f32.mxu0 %v6098
    %9028 = vmatmul.mubr.f32.gmra.mrb[0].mxu0 %v6097
    %v9029 = vpop.f32.mrb[0].mxu0
    %v9030 = vadd.f32 %v8575, %v9029
    %v9031 = vpop.f32.mrb[0].mxu0
    %9032 = vmatprep.mubr.f32.mxu0 %v6109
    %9033 = vmatmul.mubr.f32.gmra.mrb[0].mxu0 %v6108
    %v9034 = vpop.f32.mrb[0].mxu0
    %v9035 = vadd.f32 %v8580, %v9034
    %v9036 = vpop.f32.mrb[0].mxu0
    %9037 = vmatprep.mubr.f32.mxu0 %v6120
    %9038 = vmatmul.mubr.f32.gmra.mrb[0].mxu0 %v6119
    %v9039 = vpop.f32.mrb[0].mxu0
    %v9040 = vadd.f32 %v8585, %v9039
    %v9041 = vpop.f32.mrb[0].mxu0
    %9042 = vmatprep.mubr.f32.mxu0 %v6131
    %9043 = vmatmul.mubr.f32.gmra.mrb[0].mxu0 %v6130
    %v9044 = vpop.f32.mrb[0].mxu0
    %v9045 = vadd.f32 %v8590, %v9044
    %v9046 = vpop.f32.mrb[0].mxu0
    %9047 = vmatprep.mubr.f32.mxu0 %v6142
    %9048 = vmatmul.mubr.f32.gmra.mrb[0].mxu0 %v6141
    %v9049 = vpop.f32.mrb[0].mxu0
    %v9050 = vadd.f32 %v8595, %v9049
    %v9051 = vpop.f32.mrb[0].mxu0
    %9052 = vmatprep.mubr.f32.mxu0 %v6153
    %9053 = vmatmul.mubr.f32.gmra.mrb[0].mxu0 %v6152
    %v9054 = vpop.f32.mrb[0].mxu0
    %v9055 = vadd.f32 %v8600, %v9054
    %v9056 = vpop.f32.mrb[0].mxu0
    %9057 = vmatprep.mubr.f32.mxu0 %v6164
    %9058 = vmatmul.mubr.f32.gmra.mrb[0].mxu0 %v6163
    %v9059 = vpop.f32.mrb[0].mxu0
    %v9060 = vadd.f32 %v8605, %v9059
    %v9061 = vpop.f32.mrb[0].mxu0
    %9062 = vmatprep.mubr.f32.mxu0 %v6175
    %9063 = vmatmul.mubr.f32.gmra.mrb[0].mxu0 %v6174
    %v9064 = vpop.f32.mrb[0].mxu0
    %v9065 = vadd.f32 %v8610, %v9064
    %v9066 = vpop.f32.mrb[0].mxu0
    %9067 = vmatprep.mubr.f32.mxu0 %v6186
    %9068 = vmatmul.mubr.f32.gmra.mrb[0].mxu0 %v6185
    %v9069 = vpop.f32.mrb[0].mxu0
    %v9070 = vadd.f32 %v8615, %v9069
    %v9071 = vpop.f32.mrb[0].mxu0
    %9072 = vmatprep.mubr.f32.mxu0 %v6197
    %9073 = vmatmul.mubr.f32.gmra.mrb[0].mxu0 %v6196
    %v9074 = vpop.f32.mrb[0].mxu0
    %v9075 = vadd.f32 %v8620, %v9074
    %v9076 = vpop.f32.mrb[0].mxu0
    %9077 = vmatprep.mubr.f32.mxu0 %v6208
    %9078 = vmatmul.mubr.f32.gmra.mrb[0].mxu0 %v6207
    %v9079 = vpop.f32.mrb[0].mxu0
    %v9080 = vadd.f32 %v8625, %v9079
    %v9081 = vpop.f32.mrb[0].mxu0
    %9082 = vmatprep.mubr.f32.mxu0 %v6219
    %9083 = vmatmul.mubr.f32.gmra.mrb[0].mxu0 %v6218
    %v9084 = vpop.f32.mrb[0].mxu0
    %v9085 = vadd.f32 %v8630, %v9084
    %v9086 = vpop.f32.mrb[0].mxu0
    %9087 = vmatprep.mubr.f32.mxu0 %v6230
    %9088 = vmatmul.mubr.f32.gmra.mrb[0].mxu0 %v6229
    %v9089 = vpop.f32.mrb[0].mxu0
    %v9090 = vadd.f32 %v8635, %v9089
    %v9091 = vpop.f32.mrb[0].mxu0
    %9092 = vmatprep.mubr.f32.mxu0 %v6241
    %9093 = vmatmul.mubr.f32.gmra.mrb[0].mxu0 %v6240
    %v9094 = vpop.f32.mrb[0].mxu0
    %v9095 = vadd.f32 %v8640, %v9094
    %v9096 = vpop.f32.mrb[0].mxu0
    %9097 = vmatprep.mubr.f32.mxu0 %v6252
    %9098 = vmatmul.mubr.f32.gmra.mrb[0].mxu0 %v6251
    %v9099 = vpop.f32.mrb[0].mxu0
    %v9100 = vadd.f32 %v8645, %v9099
    %v9101 = vpop.f32.mrb[0].mxu0
    %9102 = vmatprep.mubr.f32.mxu0 %v6263
    %9103 = vmatmul.mubr.f32.gmra.mrb[0].mxu0 %v6262
    %v9104 = vpop.f32.mrb[0].mxu0
    %v9105 = vadd.f32 %v8650, %v9104
    %v9106 = vpop.f32.mrb[0].mxu0
    %9107 = vmatprep.mubr.f32.mxu0 %v6274
    %9108 = vmatmul.mubr.f32.gmra.mrb[0].mxu0 %v6273
    %v9109 = vpop.f32.mrb[0].mxu0
    %v9110 = vadd.f32 %v8655, %v9109
    %v9111 = vpop.f32.mrb[0].mxu0
    %9112 = vmatprep.mubr.f32.mxu0 %v6285
    %9113 = vmatmul.mubr.f32.gmra.mrb[0].mxu0 %v6284
    %v9114 = vpop.f32.mrb[0].mxu0
    %v9115 = vadd.f32 %v8660, %v9114
    %v9116 = vpop.f32.mrb[0].mxu0
    %9117 = vmatprep.mubr.f32.mxu0 %v6296
    %9118 = vmatmul.mubr.f32.gmra.mrb[0].mxu0 %v6295
    %v9119 = vpop.f32.mrb[0].mxu0
    %v9120 = vadd.f32 %v8665, %v9119
    %v9121 = vpop.f32.mrb[0].mxu0
    %9122 = vmatprep.mubr.f32.mxu0 %v6307
    %9123 = vmatmul.mubr.f32.gmra.mrb[0].mxu0 %v6306
    %v9124 = vpop.f32.mrb[0].mxu0
    %v9125 = vadd.f32 %v8670, %v9124
    %v9126 = vpop.f32.mrb[0].mxu0
    %9127 = vmatprep.mubr.f32.mxu0 %v6318
    %9128 = vmatmul.mubr.f32.gmra.mrb[0].mxu0 %v6317
    %v9129 = vpop.f32.mrb[0].mxu0
    %v9130 = vadd.f32 %v8675, %v9129
    %v9131 = vpop.f32.mrb[0].mxu0
    %9132 = vmatprep.mubr.f32.mxu0 %v6329
    %9133 = vmatmul.mubr.f32.gmra.mrb[0].mxu0 %v6328
    %v9134 = vpop.f32.mrb[0].mxu0
    %v9135 = vadd.f32 %v8680, %v9134
    %v9136 = vpop.f32.mrb[0].mxu0
    %9137 = vmatprep.mubr.f32.mxu0 %v6340
    %9138 = vmatmul.mubr.f32.gmra.mrb[0].mxu0 %v6339
    %v9139 = vpop.f32.mrb[0].mxu0
    %v9140 = vadd.f32 %v8685, %v9139
    %v9141 = vpop.f32.mrb[0].mxu0
    %9142 = vmatprep.mubr.f32.mxu0 %v6351
    %9143 = vmatmul.mubr.f32.gmra.mrb[0].mxu0 %v6350
    %v9144 = vpop.f32.mrb[0].mxu0
    %v9145 = vadd.f32 %v8690, %v9144
    %v9146 = vpop.f32.mrb[0].mxu0
    %9147 = vmatprep.mubr.f32.mxu0 %v6362
    %9148 = vmatmul.mubr.f32.gmra.mrb[0].mxu0 %v6361
    %v9149 = vpop.f32.mrb[0].mxu0
    %v9150 = vadd.f32 %v8695, %v9149
    %v9151 = vpop.f32.mrb[0].mxu0
    %9152 = vmatprep.mubr.f32.mxu0 %v6373
    %9153 = vmatmul.mubr.f32.gmra.mrb[0].mxu0 %v6372
    %v9154 = vpop.f32.mrb[0].mxu0
    %v9155 = vadd.f32 %v8700, %v9154
    %v9156 = vpop.f32.mrb[0].mxu0
    %9157 = vmatprep.mubr.f32.mxu0 %v6384
    %9158 = vmatmul.mubr.f32.gmra.mrb[0].mxu0 %v6383
    %v9159 = vpop.f32.mrb[0].mxu0
    %v9160 = vadd.f32 %v8705, %v9159
    %v9161 = vpop.f32.mrb[0].mxu0
    %9162 = vmatprep.mubr.f32.mxu0 %v6395
    %9163 = vmatmul.mubr.f32.gmra.mrb[0].mxu0 %v6394
    %v9164 = vpop.f32.mrb[0].mxu0
    %v9165 = vadd.f32 %v8710, %v9164
    %v9166 = vpop.f32.mrb[0].mxu0
    %9167 = vmatprep.mubr.f32.mxu0 %v6406
    %9168 = vmatmul.mubr.f32.gmra.mrb[0].mxu0 %v6405
    %v9169 = vpop.f32.mrb[0].mxu0
    %v9170 = vadd.f32 %v8715, %v9169
    %v9171 = vpop.f32.mrb[0].mxu0
    %9172 = vmatprep.mubr.f32.mxu0 %v6417
    %9173 = vmatmul.mubr.f32.gmra.mrb[0].mxu0 %v6416
    %v9174 = vpop.f32.mrb[0].mxu0
    %v9175 = vadd.f32 %v8720, %v9174
    %v9176 = vpop.f32.mrb[0].mxu0
    %9177 = vmatprep.mubr.f32.mxu0 %v6428
    %9178 = vmatmul.mubr.f32.gmra.mrb[0].mxu0 %v6427
    %v9179 = vpop.f32.mrb[0].mxu0
    %v9180 = vadd.f32 %v8725, %v9179
    %v9181 = vpop.f32.mrb[0].mxu0
    %9182 = vmatprep.mubr.f32.mxu0 %v6439
    %9183 = vmatmul.mubr.f32.gmra.mrb[0].mxu0 %v6438
    %v9184 = vpop.f32.mrb[0].mxu0
    %v9185 = vadd.f32 %v8730, %v9184
    %v9186 = vpop.f32.mrb[0].mxu0
    %9187 = vmatprep.mubr.f32.mxu0 %v6450
    %9188 = vmatmul.mubr.f32.gmra.mrb[0].mxu0 %v6449
    %v9189 = vpop.f32.mrb[0].mxu0
    %v9190 = vadd.f32 %v8735, %v9189
    %v9191 = vpop.f32.mrb[0].mxu0
    %9192 = vmatprep.mubr.f32.mxu0 %v6461
    %9193 = vmatmul.mubr.f32.gmra.mrb[0].mxu0 %v6460
    %v9194 = vpop.f32.mrb[0].mxu0
    %v9195 = vadd.f32 %v8740, %v9194
    %v9196 = vpop.f32.mrb[0].mxu0
    %9197 = vmatprep.mubr.f32.mxu0 %v6472
    %9198 = vmatmul.mubr.f32.gmra.mrb[0].mxu0 %v6471
    %v9199 = vpop.f32.mrb[0].mxu0
    %v9200 = vadd.f32 %v8745, %v9199
    %v9201 = vpop.f32.mrb[0].mxu0
    %9202 = vmatprep.mubr.f32.mxu0 %v6483
    %9203 = vmatmul.mubr.f32.gmra.mrb[0].mxu0 %v6482
    %v9204 = vpop.f32.mrb[0].mxu0
    %v9205 = vadd.f32 %v8750, %v9204
    %v9206 = vpop.f32.mrb[0].mxu0
    %9207 = vmatprep.mubr.f32.mxu0 %v6494
    %9208 = vmatmul.mubr.f32.gmra.mrb[0].mxu0 %v6493
    %v9209 = vpop.f32.mrb[0].mxu0
    %v9210 = vadd.f32 %v8755, %v9209
    %v9211 = vpop.f32.mrb[0].mxu0
    %9212 = vmatprep.mubr.f32.mxu0 %v6505
    %9213 = vmatmul.mubr.f32.gmra.mrb[0].mxu0 %v6504
    %v9214 = vpop.f32.mrb[0].mxu0
    %v9215 = vadd.f32 %v8760, %v9214
    %v9216 = vpop.f32.mrb[0].mxu0
    %9217 = vmatprep.mubr.f32.mxu0 %v6516
    %9218 = vmatmul.mubr.f32.gmra.mrb[0].mxu0 %v6515
    %v9219 = vpop.f32.mrb[0].mxu0
    %v9220 = vadd.f32 %v8765, %v9219
    %v9221 = vpop.f32.mrb[0].mxu0
    %9222 = vmatprep.mubr.f32.mxu0 %v6527
    %9223 = vmatmul.mubr.f32.gmra.mrb[0].mxu0 %v6526
    %v9224 = vpop.f32.mrb[0].mxu0
    %v9225 = vadd.f32 %v8770, %v9224
    %v9226 = vpop.f32.mrb[0].mxu0
    %9227 = vmatprep.mubr.f32.mxu0 %v6538
    %9228 = vmatmul.mubr.f32.gmra.mrb[0].mxu0 %v6537
    %v9229 = vpop.f32.mrb[0].mxu0
    %v9230 = vadd.f32 %v8775, %v9229
    %v9231 = vpop.f32.mrb[0].mxu0
    %9232 = vmatprep.mubr.f32.mxu0 %v6549
    %9233 = vmatmul.mubr.f32.gmra.mrb[0].mxu0 %v6548
    %v9234 = vpop.f32.mrb[0].mxu0
    %v9235 = vadd.f32 %v8780, %v9234
    %v9236 = vpop.f32.mrb[0].mxu0
    %9237 = vmatprep.mubr.f32.mxu0 %v6560
    %9238 = vmatmul.mubr.f32.gmra.mrb[0].mxu0 %v6559
    %v9239 = vpop.f32.mrb[0].mxu0
    %v9240 = vadd.f32 %v8785, %v9239
    %v9241 = vpop.f32.mrb[0].mxu0
    %9242 = vmatprep.mubr.f32.mxu0 %v6571
    %9243 = vmatmul.mubr.f32.gmra.mrb[0].mxu0 %v6570
    %v9244 = vpop.f32.mrb[0].mxu0
    %v9245 = vadd.f32 %v8790, %v9244
    %v9246 = vpop.f32.mrb[0].mxu0
    %9247 = vmatprep.mubr.f32.mxu0 %v6582
    %9248 = vmatmul.mubr.f32.gmra.mrb[0].mxu0 %v6581
    %v9249 = vpop.f32.mrb[0].mxu0
    %v9250 = vadd.f32 %v8795, %v9249
    %v9251 = vpop.f32.mrb[0].mxu0
    %9252 = vmatprep.mubr.f32.mxu0 %v6593
    %9253 = vmatmul.mubr.f32.gmra.mrb[0].mxu0 %v6592
    %v9254 = vpop.f32.mrb[0].mxu0
    %v9255 = vadd.f32 %v8800, %v9254
    %v9256 = vpop.f32.mrb[0].mxu0
    %9257 = vmatprep.mubr.f32.mxu0 %v6604
    %9258 = vmatmul.mubr.f32.gmra.mrb[0].mxu0 %v6603
    %v9259 = vpop.f32.mrb[0].mxu0
    %v9260 = vadd.f32 %v8805, %v9259
    %v9261 = vpop.f32.mrb[0].mxu0
    %9262 = vmatprep.mubr.f32.mxu0 %v6615
    %9263 = vmatmul.mubr.f32.gmra.mrb[0].mxu0 %v6614
    %v9264 = vpop.f32.mrb[0].mxu0
    %v9265 = vadd.f32 %v8810, %v9264
    %v9266 = vpop.f32.mrb[0].mxu0
    %9267 = vmatprep.mubr.f32.mxu0 %v6626
    %9268 = vmatmul.mubr.f32.gmra.mrb[0].mxu0 %v6625
    %v9269 = vpop.f32.mrb[0].mxu0
    %v9270 = vadd.f32 %v8815, %v9269
    %v9271 = vpop.f32.mrb[0].mxu0
    %9272 = vmatprep.mubr.f32.mxu0 %v6637
    %9273 = vmatmul.mubr.f32.gmra.mrb[0].mxu0 %v6636
    %v9274 = vpop.f32.mrb[0].mxu0
    %v9275 = vadd.f32 %v8820, %v9274
    %v9276 = vpop.f32.mrb[0].mxu0
    %9277 = vmatprep.mubr.f32.mxu0 %v6648
    %9278 = vmatmul.mubr.f32.gmra.mrb[0].mxu0 %v6647
    %v9279 = vpop.f32.mrb[0].mxu0
    %v9280 = vadd.f32 %v8825, %v9279
    %v9281 = vpop.f32.mrb[0].mxu0
    %9282 = vmatprep.mubr.f32.mxu0 %v6659
    %9283 = vmatmul.mubr.f32.gmra.mrb[0].mxu0 %v6658
    %v9284 = vpop.f32.mrb[0].mxu0
    %v9285 = vadd.f32 %v8830, %v9284
    %v9286 = vpop.f32.mrb[0].mxu0
    %9287 = vmatprep.mubr.f32.mxu0 %v6670
    %9288 = vmatmul.mubr.f32.gmra.mrb[0].mxu0 %v6669
    %v9289 = vpop.f32.mrb[0].mxu0
    %v9290 = vadd.f32 %v8835, %v9289
    %v9291 = vpop.f32.mrb[0].mxu0
    %9292 = vmatprep.mubr.f32.mxu0 %v6681
    %9293 = vmatmul.mubr.f32.gmra.mrb[0].mxu0 %v6680
    %v9294 = vpop.f32.mrb[0].mxu0
    %v9295 = vadd.f32 %v8840, %v9294
    %v9296 = vpop.f32.mrb[0].mxu0
    %9297 = vmatprep.mubr.f32.mxu0 %v6692
    %9298 = vmatmul.mubr.f32.gmra.mrb[0].mxu0 %v6691
    %v9299 = vpop.f32.mrb[0].mxu0
    %v9300 = vadd.f32 %v8845, %v9299
    %v9301 = vpop.f32.mrb[0].mxu0
    %9302 = vmatprep.mubr.f32.mxu0 %v6703
    %9303 = vmatmul.mubr.f32.gmra.mrb[0].mxu0 %v6702
    %v9304 = vpop.f32.mrb[0].mxu0
    %v9305 = vadd.f32 %v8850, %v9304
    %v9306 = vpop.f32.mrb[0].mxu0
    %9307 = vmatprep.mubr.f32.mxu0 %v6714
    %9308 = vmatmul.mubr.f32.gmra.mrb[0].mxu0 %v6713
    %v9309 = vpop.f32.mrb[0].mxu0
    %v9310 = vadd.f32 %v8855, %v9309
    %v9311 = vpop.f32.mrb[0].mxu0
    %9312 = vmatprep.mubr.f32.mxu0 %v6725
    %9313 = vmatmul.mubr.f32.gmra.mrb[0].mxu0 %v6724
    %v9314 = vpop.f32.mrb[0].mxu0
    %v9315 = vadd.f32 %v8860, %v9314
    %v9316 = vpop.f32.mrb[0].mxu0
    %9317 = vmatprep.mubr.f32.mxu0 %v6736
    %9318 = vmatmul.mubr.f32.gmra.mrb[0].mxu0 %v6735
    %v9319 = vpop.f32.mrb[0].mxu0
    %v9320 = vadd.f32 %v8865, %v9319
    %v9321 = vpop.f32.mrb[0].mxu0
    %9322 = vmatprep.mubr.f32.mxu0 %v6747
    %9323 = vmatmul.mubr.f32.gmra.mrb[0].mxu0 %v6746
    %v9324 = vpop.f32.mrb[0].mxu0
    %v9325 = vadd.f32 %v8870, %v9324
    %v9326 = vpop.f32.mrb[0].mxu0
    %9327 = vmatprep.mubr.f32.mxu0 %v6758
    %9328 = vmatmul.mubr.f32.gmra.mrb[0].mxu0 %v6757
    %v9329 = vpop.f32.mrb[0].mxu0
    %v9330 = vadd.f32 %v8875, %v9329
    %v9331 = vpop.f32.mrb[0].mxu0
    %9332 = vmatprep.mubr.f32.mxu0 %v6769
    %9333 = vmatmul.mubr.f32.gmra.mrb[0].mxu0 %v6768
    %v9334 = vpop.f32.mrb[0].mxu0
    %v9335 = vadd.f32 %v8880, %v9334
    %v9336 = vpop.f32.mrb[0].mxu0
    %9337 = vmatprep.mubr.f32.mxu0 %v6780
    %9338 = vmatmul.mubr.f32.gmra.mrb[0].mxu0 %v6779
    %v9339 = vpop.f32.mrb[0].mxu0
    %v9340 = vadd.f32 %v8885, %v9339
    %v9341 = vpop.f32.mrb[0].mxu0
    %9342 = vmatprep.mubr.f32.mxu0 %v6791
    %9343 = vmatmul.mubr.f32.gmra.mrb[0].mxu0 %v6790
    %v9344 = vpop.f32.mrb[0].mxu0
    %v9345 = vadd.f32 %v8890, %v9344
    %v9346 = vpop.f32.mrb[0].mxu0
    %9347 = vmatprep.mubr.f32.mxu0 %v6802
    %9348 = vmatmul.mubr.f32.gmra.mrb[0].mxu0 %v6801
    %v9349 = vpop.f32.mrb[0].mxu0
    %v9350 = vadd.f32 %v8895, %v9349
    %v9351 = vpop.f32.mrb[0].mxu0
    %9352 = vmatprep.mubr.f32.mxu0 %v6813
    %9353 = vmatmul.mubr.f32.gmra.mrb[0].mxu0 %v6812
    %v9354 = vpop.f32.mrb[0].mxu0
    %v9355 = vadd.f32 %v8900, %v9354
    %v9356 = vpop.f32.mrb[0].mxu0
    %9357 = vmatprep.mubr.f32.mxu0 %v6824
    %9358 = vmatmul.mubr.f32.gmra.mrb[0].mxu0 %v6823
    %v9359 = vpop.f32.mrb[0].mxu0
    %v9360 = vadd.f32 %v8905, %v9359
    %v9361 = vpop.f32.mrb[0].mxu0
    %9362 = vmatprep.mubr.f32.mxu0 %v6835
    %9363 = vmatmul.mubr.f32.gmra.mrb[0].mxu0 %v6834
    %v9364 = vpop.f32.mrb[0].mxu0
    %v9365 = vadd.f32 %v8910, %v9364
    %v9366 = vpop.f32.mrb[0].mxu0
    %9367 = vmatprep.mubr.f32.mxu0 %v6846
    %9368 = vmatmul.mubr.f32.gmra.mrb[0].mxu0 %v6845
    %v9369 = vpop.f32.mrb[0].mxu0
    %v9370 = vadd.f32 %v8915, %v9369
    %v9371 = vpop.f32.mrb[0].mxu0
    %9372 = vdwg.mxu0
    %9373 = vmatprep.subr.mxu0 0.0
    %9374 = vmatpush1.msra.mxu0 %v5948
    %9375 = vmatprep.subr.mxu0 0.0
    %9376 = vmatpush1.msra.mxu0 %v5949
    %9377 = vmatprep.subr.mxu0 0.0
    %9378 = vmatpush1.msra.mxu0 %v5950
    %9379 = vmatprep.subr.mxu0 0.0
    %9380 = vmatpush1.msra.mxu0 %v5951
    %9381 = vmatprep.subr.mxu0 0.0
    %9382 = vmatpush1.msra.mxu0 %v5952
    %9383 = vmatprep.subr.mxu0 0.0
    %9384 = vmatpush1.msra.mxu0 %v5953
    %9385 = vmatprep.subr.mxu0 0.0
    %9386 = vmatpush1.msra.mxu0 %v5954
    %9387 = vmatprep.subr.mxu0 0.0
    %9388 = vmatpush1.msra.mxu0 %v5955
    %9389 = vmatprep.subr.mxu0 0.0
    %9390 = vmatpush1.msra.mxu0 %v5956
    %9391 = vmatprep.subr.mxu0 0.0
    %9392 = vmatpush1.msra.mxu0 %v5957
    %9393 = vmatprep.subr.mxu0 0.0
    %9394 = vmatpush1.msra.mxu0 %v5958
    %9395 = vmatprep.subr.mxu0 0.0
    %9396 = vmatpush1.msra.mxu0 %v5959
    %9397 = vmatprep.subr.mxu0 0.0
    %9398 = vmatpush1.msra.mxu0 %v5960
    %9399 = vmatprep.subr.mxu0 0.0
    %9400 = vmatpush1.msra.mxu0 %v5961
    %9401 = vmatprep.subr.mxu0 0.0
    %9402 = vmatpush1.msra.mxu0 %v5962
    %9403 = vmatprep.subr.mxu0 0.0
    %9404 = vmatpush1.msra.mxu0 %v5963
    %9405 = vmatprep.subr.mxu0 0.0
    %9406 = vmatpush1.msra.mxu0 %v5964
    %9407 = vmatprep.subr.mxu0 0.0
    %9408 = vmatpush1.msra.mxu0 %v5965
    %9409 = vmatprep.subr.mxu0 0.0
    %9410 = vmatpush1.msra.mxu0 %v5966
    %9411 = vmatprep.subr.mxu0 0.0
    %9412 = vmatpush1.msra.mxu0 %v5967
    %9413 = vmatprep.subr.mxu0 0.0
    %9414 = vmatpush1.msra.mxu0 %v5968
    %9415 = vmatprep.subr.mxu0 0.0
    %9416 = vmatpush1.msra.mxu0 %v5969
    %9417 = vmatprep.subr.mxu0 0.0
    %9418 = vmatpush1.msra.mxu0 %v5970
    %9419 = vmatprep.subr.mxu0 0.0
    %9420 = vmatpush1.msra.mxu0 %v5971
    %9421 = vmatprep.subr.mxu0 0.0
    %9422 = vmatpush1.msra.mxu0 %v5972
    %9423 = vmatprep.subr.mxu0 0.0
    %9424 = vmatpush1.msra.mxu0 %v5973
    %9425 = vmatprep.subr.mxu0 0.0
    %9426 = vmatpush1.msra.mxu0 %v5974
    %9427 = vmatprep.subr.mxu0 0.0
    %9428 = vmatpush1.msra.mxu0 %v5975
    %9429 = vmatprep.subr.mxu0 0.0
    %9430 = vmatpush1.msra.mxu0 %v5976
    %9431 = vmatprep.subr.mxu0 0.0
    %9432 = vmatpush1.msra.mxu0 %v5977
    %9433 = vmatprep.subr.mxu0 0.0
    %9434 = vmatpush1.msra.mxu0 %v5978
    %9435 = vmatprep.subr.mxu0 0.0
    %9436 = vmatpush1.msra.mxu0 %v5979
    %9437 = vmatprep.mubr.f32.mxu0 %v6001
    %9438 = vmatmul.mubr.f32.gmra.mrb[0].mxu0 %v6000
    %v9439 = vpop.f32.mrb[0].mxu0
    %v9440 = vadd.f32 %v8985, %v9439
    %v9441 = vpop.f32.mrb[0].mxu0
    %9442 = vmatprep.mubr.f32.mxu0 %v6012
    %9443 = vmatmul.mubr.f32.gmra.mrb[0].mxu0 %v6011
    %v9444 = vpop.f32.mrb[0].mxu0
    %v9445 = vadd.f32 %v8990, %v9444
    %v9446 = vpop.f32.mrb[0].mxu0
    %9447 = vmatprep.mubr.f32.mxu0 %v6023
    %9448 = vmatmul.mubr.f32.gmra.mrb[0].mxu0 %v6022
    %v9449 = vpop.f32.mrb[0].mxu0
    %v9450 = vadd.f32 %v8995, %v9449
    %v9451 = vpop.f32.mrb[0].mxu0
    %9452 = vmatprep.mubr.f32.mxu0 %v6034
    %9453 = vmatmul.mubr.f32.gmra.mrb[0].mxu0 %v6033
    %v9454 = vpop.f32.mrb[0].mxu0
    %v9455 = vadd.f32 %v9000, %v9454
    %v9456 = vpop.f32.mrb[0].mxu0
    %9457 = vmatprep.mubr.f32.mxu0 %v6045
    %9458 = vmatmul.mubr.f32.gmra.mrb[0].mxu0 %v6044
    %v9459 = vpop.f32.mrb[0].mxu0
    %v9460 = vadd.f32 %v9005, %v9459
    %v9461 = vpop.f32.mrb[0].mxu0
    %9462 = vmatprep.mubr.f32.mxu0 %v6056
    %9463 = vmatmul.mubr.f32.gmra.mrb[0].mxu0 %v6055
    %v9464 = vpop.f32.mrb[0].mxu0
    %v9465 = vadd.f32 %v9010, %v9464
    %v9466 = vpop.f32.mrb[0].mxu0
    %9467 = vmatprep.mubr.f32.mxu0 %v6067
    %9468 = vmatmul.mubr.f32.gmra.mrb[0].mxu0 %v6066
    %v9469 = vpop.f32.mrb[0].mxu0
    %v9470 = vadd.f32 %v9015, %v9469
    %v9471 = vpop.f32.mrb[0].mxu0
    %9472 = vmatprep.mubr.f32.mxu0 %v6078
    %9473 = vmatmul.mubr.f32.gmra.mrb[0].mxu0 %v6077
    %v9474 = vpop.f32.mrb[0].mxu0
    %v9475 = vadd.f32 %v9020, %v9474
    %v9476 = vpop.f32.mrb[0].mxu0
    %9477 = vmatprep.mubr.f32.mxu0 %v6089
    %9478 = vmatmul.mubr.f32.gmra.mrb[0].mxu0 %v6088
    %v9479 = vpop.f32.mrb[0].mxu0
    %v9480 = vadd.f32 %v9025, %v9479
    %v9481 = vpop.f32.mrb[0].mxu0
    %9482 = vmatprep.mubr.f32.mxu0 %v6100
    %9483 = vmatmul.mubr.f32.gmra.mrb[0].mxu0 %v6099
    %v9484 = vpop.f32.mrb[0].mxu0
    %v9485 = vadd.f32 %v9030, %v9484
    %v9486 = vpop.f32.mrb[0].mxu0
    %9487 = vmatprep.mubr.f32.mxu0 %v6111
    %9488 = vmatmul.mubr.f32.gmra.mrb[0].mxu0 %v6110
    %v9489 = vpop.f32.mrb[0].mxu0
    %v9490 = vadd.f32 %v9035, %v9489
    %v9491 = vpop.f32.mrb[0].mxu0
    %9492 = vmatprep.mubr.f32.mxu0 %v6122
    %9493 = vmatmul.mubr.f32.gmra.mrb[0].mxu0 %v6121
    %v9494 = vpop.f32.mrb[0].mxu0
    %v9495 = vadd.f32 %v9040, %v9494
    %v9496 = vpop.f32.mrb[0].mxu0
    %9497 = vmatprep.mubr.f32.mxu0 %v6133
    %9498 = vmatmul.mubr.f32.gmra.mrb[0].mxu0 %v6132
    %v9499 = vpop.f32.mrb[0].mxu0
    %v9500 = vadd.f32 %v9045, %v9499
    %v9501 = vpop.f32.mrb[0].mxu0
    %9502 = vmatprep.mubr.f32.mxu0 %v6144
    %9503 = vmatmul.mubr.f32.gmra.mrb[0].mxu0 %v6143
    %v9504 = vpop.f32.mrb[0].mxu0
    %v9505 = vadd.f32 %v9050, %v9504
    %v9506 = vpop.f32.mrb[0].mxu0
    %9507 = vmatprep.mubr.f32.mxu0 %v6155
    %9508 = vmatmul.mubr.f32.gmra.mrb[0].mxu0 %v6154
    %v9509 = vpop.f32.mrb[0].mxu0
    %v9510 = vadd.f32 %v9055, %v9509
    %v9511 = vpop.f32.mrb[0].mxu0
    %9512 = vmatprep.mubr.f32.mxu0 %v6166
    %9513 = vmatmul.mubr.f32.gmra.mrb[0].mxu0 %v6165
    %v9514 = vpop.f32.mrb[0].mxu0
    %v9515 = vadd.f32 %v9060, %v9514
    %v9516 = vpop.f32.mrb[0].mxu0
    %9517 = vmatprep.mubr.f32.mxu0 %v6177
    %9518 = vmatmul.mubr.f32.gmra.mrb[0].mxu0 %v6176
    %v9519 = vpop.f32.mrb[0].mxu0
    %v9520 = vadd.f32 %v9065, %v9519
    %v9521 = vpop.f32.mrb[0].mxu0
    %9522 = vmatprep.mubr.f32.mxu0 %v6188
    %9523 = vmatmul.mubr.f32.gmra.mrb[0].mxu0 %v6187
    %v9524 = vpop.f32.mrb[0].mxu0
    %v9525 = vadd.f32 %v9070, %v9524
    %v9526 = vpop.f32.mrb[0].mxu0
    %9527 = vmatprep.mubr.f32.mxu0 %v6199
    %9528 = vmatmul.mubr.f32.gmra.mrb[0].mxu0 %v6198
    %v9529 = vpop.f32.mrb[0].mxu0
    %v9530 = vadd.f32 %v9075, %v9529
    %v9531 = vpop.f32.mrb[0].mxu0
    %9532 = vmatprep.mubr.f32.mxu0 %v6210
    %9533 = vmatmul.mubr.f32.gmra.mrb[0].mxu0 %v6209
    %v9534 = vpop.f32.mrb[0].mxu0
    %v9535 = vadd.f32 %v9080, %v9534
    %v9536 = vpop.f32.mrb[0].mxu0
    %9537 = vmatprep.mubr.f32.mxu0 %v6221
    %9538 = vmatmul.mubr.f32.gmra.mrb[0].mxu0 %v6220
    %v9539 = vpop.f32.mrb[0].mxu0
    %v9540 = vadd.f32 %v9085, %v9539
    %v9541 = vpop.f32.mrb[0].mxu0
    %9542 = vmatprep.mubr.f32.mxu0 %v6232
    %9543 = vmatmul.mubr.f32.gmra.mrb[0].mxu0 %v6231
    %v9544 = vpop.f32.mrb[0].mxu0
    %v9545 = vadd.f32 %v9090, %v9544
    %v9546 = vpop.f32.mrb[0].mxu0
    %9547 = vmatprep.mubr.f32.mxu0 %v6243
    %9548 = vmatmul.mubr.f32.gmra.mrb[0].mxu0 %v6242
    %v9549 = vpop.f32.mrb[0].mxu0
    %v9550 = vadd.f32 %v9095, %v9549
    %v9551 = vpop.f32.mrb[0].mxu0
    %9552 = vmatprep.mubr.f32.mxu0 %v6254
    %9553 = vmatmul.mubr.f32.gmra.mrb[0].mxu0 %v6253
    %v9554 = vpop.f32.mrb[0].mxu0
    %v9555 = vadd.f32 %v9100, %v9554
    %v9556 = vpop.f32.mrb[0].mxu0
    %9557 = vmatprep.mubr.f32.mxu0 %v6265
    %9558 = vmatmul.mubr.f32.gmra.mrb[0].mxu0 %v6264
    %v9559 = vpop.f32.mrb[0].mxu0
    %v9560 = vadd.f32 %v9105, %v9559
    %v9561 = vpop.f32.mrb[0].mxu0
    %9562 = vmatprep.mubr.f32.mxu0 %v6276
    %9563 = vmatmul.mubr.f32.gmra.mrb[0].mxu0 %v6275
    %v9564 = vpop.f32.mrb[0].mxu0
    %v9565 = vadd.f32 %v9110, %v9564
    %v9566 = vpop.f32.mrb[0].mxu0
    %9567 = vmatprep.mubr.f32.mxu0 %v6287
    %9568 = vmatmul.mubr.f32.gmra.mrb[0].mxu0 %v6286
    %v9569 = vpop.f32.mrb[0].mxu0
    %v9570 = vadd.f32 %v9115, %v9569
    %v9571 = vpop.f32.mrb[0].mxu0
    %9572 = vmatprep.mubr.f32.mxu0 %v6298
    %9573 = vmatmul.mubr.f32.gmra.mrb[0].mxu0 %v6297
    %v9574 = vpop.f32.mrb[0].mxu0
    %v9575 = vadd.f32 %v9120, %v9574
    %v9576 = vpop.f32.mrb[0].mxu0
    %9577 = vmatprep.mubr.f32.mxu0 %v6309
    %9578 = vmatmul.mubr.f32.gmra.mrb[0].mxu0 %v6308
    %v9579 = vpop.f32.mrb[0].mxu0
    %v9580 = vadd.f32 %v9125, %v9579
    %v9581 = vpop.f32.mrb[0].mxu0
    %9582 = vmatprep.mubr.f32.mxu0 %v6320
    %9583 = vmatmul.mubr.f32.gmra.mrb[0].mxu0 %v6319
    %v9584 = vpop.f32.mrb[0].mxu0
    %v9585 = vadd.f32 %v9130, %v9584
    %v9586 = vpop.f32.mrb[0].mxu0
    %9587 = vmatprep.mubr.f32.mxu0 %v6331
    %9588 = vmatmul.mubr.f32.gmra.mrb[0].mxu0 %v6330
    %v9589 = vpop.f32.mrb[0].mxu0
    %v9590 = vadd.f32 %v9135, %v9589
    %v9591 = vpop.f32.mrb[0].mxu0
    %9592 = vmatprep.mubr.f32.mxu0 %v6342
    %9593 = vmatmul.mubr.f32.gmra.mrb[0].mxu0 %v6341
    %v9594 = vpop.f32.mrb[0].mxu0
    %v9595 = vadd.f32 %v9140, %v9594
    %v9596 = vpop.f32.mrb[0].mxu0
    %9597 = vmatprep.mubr.f32.mxu0 %v6353
    %9598 = vmatmul.mubr.f32.gmra.mrb[0].mxu0 %v6352
    %v9599 = vpop.f32.mrb[0].mxu0
    %v9600 = vadd.f32 %v9145, %v9599
    %v9601 = vpop.f32.mrb[0].mxu0
    %9602 = vmatprep.mubr.f32.mxu0 %v6364
    %9603 = vmatmul.mubr.f32.gmra.mrb[0].mxu0 %v6363
    %v9604 = vpop.f32.mrb[0].mxu0
    %v9605 = vadd.f32 %v9150, %v9604
    %v9606 = vpop.f32.mrb[0].mxu0
    %9607 = vmatprep.mubr.f32.mxu0 %v6375
    %9608 = vmatmul.mubr.f32.gmra.mrb[0].mxu0 %v6374
    %v9609 = vpop.f32.mrb[0].mxu0
    %v9610 = vadd.f32 %v9155, %v9609
    %v9611 = vpop.f32.mrb[0].mxu0
    %9612 = vmatprep.mubr.f32.mxu0 %v6386
    %9613 = vmatmul.mubr.f32.gmra.mrb[0].mxu0 %v6385
    %v9614 = vpop.f32.mrb[0].mxu0
    %v9615 = vadd.f32 %v9160, %v9614
    %v9616 = vpop.f32.mrb[0].mxu0
    %9617 = vmatprep.mubr.f32.mxu0 %v6397
    %9618 = vmatmul.mubr.f32.gmra.mrb[0].mxu0 %v6396
    %v9619 = vpop.f32.mrb[0].mxu0
    %v9620 = vadd.f32 %v9165, %v9619
    %v9621 = vpop.f32.mrb[0].mxu0
    %9622 = vmatprep.mubr.f32.mxu0 %v6408
    %9623 = vmatmul.mubr.f32.gmra.mrb[0].mxu0 %v6407
    %v9624 = vpop.f32.mrb[0].mxu0
    %v9625 = vadd.f32 %v9170, %v9624
    %v9626 = vpop.f32.mrb[0].mxu0
    %9627 = vmatprep.mubr.f32.mxu0 %v6419
    %9628 = vmatmul.mubr.f32.gmra.mrb[0].mxu0 %v6418
    %v9629 = vpop.f32.mrb[0].mxu0
    %v9630 = vadd.f32 %v9175, %v9629
    %v9631 = vpop.f32.mrb[0].mxu0
    %9632 = vmatprep.mubr.f32.mxu0 %v6430
    %9633 = vmatmul.mubr.f32.gmra.mrb[0].mxu0 %v6429
    %v9634 = vpop.f32.mrb[0].mxu0
    %v9635 = vadd.f32 %v9180, %v9634
    %v9636 = vpop.f32.mrb[0].mxu0
    %9637 = vmatprep.mubr.f32.mxu0 %v6441
    %9638 = vmatmul.mubr.f32.gmra.mrb[0].mxu0 %v6440
    %v9639 = vpop.f32.mrb[0].mxu0
    %v9640 = vadd.f32 %v9185, %v9639
    %v9641 = vpop.f32.mrb[0].mxu0
    %9642 = vmatprep.mubr.f32.mxu0 %v6452
    %9643 = vmatmul.mubr.f32.gmra.mrb[0].mxu0 %v6451
    %v9644 = vpop.f32.mrb[0].mxu0
    %v9645 = vadd.f32 %v9190, %v9644
    %v9646 = vpop.f32.mrb[0].mxu0
    %9647 = vmatprep.mubr.f32.mxu0 %v6463
    %9648 = vmatmul.mubr.f32.gmra.mrb[0].mxu0 %v6462
    %v9649 = vpop.f32.mrb[0].mxu0
    %v9650 = vadd.f32 %v9195, %v9649
    %v9651 = vpop.f32.mrb[0].mxu0
    %9652 = vmatprep.mubr.f32.mxu0 %v6474
    %9653 = vmatmul.mubr.f32.gmra.mrb[0].mxu0 %v6473
    %v9654 = vpop.f32.mrb[0].mxu0
    %v9655 = vadd.f32 %v9200, %v9654
    %v9656 = vpop.f32.mrb[0].mxu0
    %9657 = vmatprep.mubr.f32.mxu0 %v6485
    %9658 = vmatmul.mubr.f32.gmra.mrb[0].mxu0 %v6484
    %v9659 = vpop.f32.mrb[0].mxu0
    %v9660 = vadd.f32 %v9205, %v9659
    %v9661 = vpop.f32.mrb[0].mxu0
    %9662 = vmatprep.mubr.f32.mxu0 %v6496
    %9663 = vmatmul.mubr.f32.gmra.mrb[0].mxu0 %v6495
    %v9664 = vpop.f32.mrb[0].mxu0
    %v9665 = vadd.f32 %v9210, %v9664
    %v9666 = vpop.f32.mrb[0].mxu0
    %9667 = vmatprep.mubr.f32.mxu0 %v6507
    %9668 = vmatmul.mubr.f32.gmra.mrb[0].mxu0 %v6506
    %v9669 = vpop.f32.mrb[0].mxu0
    %v9670 = vadd.f32 %v9215, %v9669
    %v9671 = vpop.f32.mrb[0].mxu0
    %9672 = vmatprep.mubr.f32.mxu0 %v6518
    %9673 = vmatmul.mubr.f32.gmra.mrb[0].mxu0 %v6517
    %v9674 = vpop.f32.mrb[0].mxu0
    %v9675 = vadd.f32 %v9220, %v9674
    %v9676 = vpop.f32.mrb[0].mxu0
    %9677 = vmatprep.mubr.f32.mxu0 %v6529
    %9678 = vmatmul.mubr.f32.gmra.mrb[0].mxu0 %v6528
    %v9679 = vpop.f32.mrb[0].mxu0
    %v9680 = vadd.f32 %v9225, %v9679
    %v9681 = vpop.f32.mrb[0].mxu0
    %9682 = vmatprep.mubr.f32.mxu0 %v6540
    %9683 = vmatmul.mubr.f32.gmra.mrb[0].mxu0 %v6539
    %v9684 = vpop.f32.mrb[0].mxu0
    %v9685 = vadd.f32 %v9230, %v9684
    %v9686 = vpop.f32.mrb[0].mxu0
    %9687 = vmatprep.mubr.f32.mxu0 %v6551
    %9688 = vmatmul.mubr.f32.gmra.mrb[0].mxu0 %v6550
    %v9689 = vpop.f32.mrb[0].mxu0
    %v9690 = vadd.f32 %v9235, %v9689
    %v9691 = vpop.f32.mrb[0].mxu0
    %9692 = vmatprep.mubr.f32.mxu0 %v6562
    %9693 = vmatmul.mubr.f32.gmra.mrb[0].mxu0 %v6561
    %v9694 = vpop.f32.mrb[0].mxu0
    %v9695 = vadd.f32 %v9240, %v9694
    %v9696 = vpop.f32.mrb[0].mxu0
    %9697 = vmatprep.mubr.f32.mxu0 %v6573
    %9698 = vmatmul.mubr.f32.gmra.mrb[0].mxu0 %v6572
    %v9699 = vpop.f32.mrb[0].mxu0
    %v9700 = vadd.f32 %v9245, %v9699
    %v9701 = vpop.f32.mrb[0].mxu0
    %9702 = vmatprep.mubr.f32.mxu0 %v6584
    %9703 = vmatmul.mubr.f32.gmra.mrb[0].mxu0 %v6583
    %v9704 = vpop.f32.mrb[0].mxu0
    %v9705 = vadd.f32 %v9250, %v9704
    %v9706 = vpop.f32.mrb[0].mxu0
    %9707 = vmatprep.mubr.f32.mxu0 %v6595
    %9708 = vmatmul.mubr.f32.gmra.mrb[0].mxu0 %v6594
    %v9709 = vpop.f32.mrb[0].mxu0
    %v9710 = vadd.f32 %v9255, %v9709
    %v9711 = vpop.f32.mrb[0].mxu0
    %9712 = vmatprep.mubr.f32.mxu0 %v6606
    %9713 = vmatmul.mubr.f32.gmra.mrb[0].mxu0 %v6605
    %v9714 = vpop.f32.mrb[0].mxu0
    %v9715 = vadd.f32 %v9260, %v9714
    %v9716 = vpop.f32.mrb[0].mxu0
    %9717 = vmatprep.mubr.f32.mxu0 %v6617
    %9718 = vmatmul.mubr.f32.gmra.mrb[0].mxu0 %v6616
    %v9719 = vpop.f32.mrb[0].mxu0
    %v9720 = vadd.f32 %v9265, %v9719
    %v9721 = vpop.f32.mrb[0].mxu0
    %9722 = vmatprep.mubr.f32.mxu0 %v6628
    %9723 = vmatmul.mubr.f32.gmra.mrb[0].mxu0 %v6627
    %v9724 = vpop.f32.mrb[0].mxu0
    %v9725 = vadd.f32 %v9270, %v9724
    %v9726 = vpop.f32.mrb[0].mxu0
    %9727 = vmatprep.mubr.f32.mxu0 %v6639
    %9728 = vmatmul.mubr.f32.gmra.mrb[0].mxu0 %v6638
    %v9729 = vpop.f32.mrb[0].mxu0
    %v9730 = vadd.f32 %v9275, %v9729
    %v9731 = vpop.f32.mrb[0].mxu0
    %9732 = vmatprep.mubr.f32.mxu0 %v6650
    %9733 = vmatmul.mubr.f32.gmra.mrb[0].mxu0 %v6649
    %v9734 = vpop.f32.mrb[0].mxu0
    %v9735 = vadd.f32 %v9280, %v9734
    %v9736 = vpop.f32.mrb[0].mxu0
    %9737 = vmatprep.mubr.f32.mxu0 %v6661
    %9738 = vmatmul.mubr.f32.gmra.mrb[0].mxu0 %v6660
    %v9739 = vpop.f32.mrb[0].mxu0
    %v9740 = vadd.f32 %v9285, %v9739
    %v9741 = vpop.f32.mrb[0].mxu0
    %9742 = vmatprep.mubr.f32.mxu0 %v6672
    %9743 = vmatmul.mubr.f32.gmra.mrb[0].mxu0 %v6671
    %v9744 = vpop.f32.mrb[0].mxu0
    %v9745 = vadd.f32 %v9290, %v9744
    %v9746 = vpop.f32.mrb[0].mxu0
    %9747 = vmatprep.mubr.f32.mxu0 %v6683
    %9748 = vmatmul.mubr.f32.gmra.mrb[0].mxu0 %v6682
    %v9749 = vpop.f32.mrb[0].mxu0
    %v9750 = vadd.f32 %v9295, %v9749
    %v9751 = vpop.f32.mrb[0].mxu0
    %9752 = vmatprep.mubr.f32.mxu0 %v6694
    %9753 = vmatmul.mubr.f32.gmra.mrb[0].mxu0 %v6693
    %v9754 = vpop.f32.mrb[0].mxu0
    %v9755 = vadd.f32 %v9300, %v9754
    %v9756 = vpop.f32.mrb[0].mxu0
    %9757 = vmatprep.mubr.f32.mxu0 %v6705
    %9758 = vmatmul.mubr.f32.gmra.mrb[0].mxu0 %v6704
    %v9759 = vpop.f32.mrb[0].mxu0
    %v9760 = vadd.f32 %v9305, %v9759
    %v9761 = vpop.f32.mrb[0].mxu0
    %9762 = vmatprep.mubr.f32.mxu0 %v6716
    %9763 = vmatmul.mubr.f32.gmra.mrb[0].mxu0 %v6715
    %v9764 = vpop.f32.mrb[0].mxu0
    %v9765 = vadd.f32 %v9310, %v9764
    %v9766 = vpop.f32.mrb[0].mxu0
    %9767 = vmatprep.mubr.f32.mxu0 %v6727
    %9768 = vmatmul.mubr.f32.gmra.mrb[0].mxu0 %v6726
    %v9769 = vpop.f32.mrb[0].mxu0
    %v9770 = vadd.f32 %v9315, %v9769
    %v9771 = vpop.f32.mrb[0].mxu0
    %9772 = vmatprep.mubr.f32.mxu0 %v6738
    %9773 = vmatmul.mubr.f32.gmra.mrb[0].mxu0 %v6737
    %v9774 = vpop.f32.mrb[0].mxu0
    %v9775 = vadd.f32 %v9320, %v9774
    %v9776 = vpop.f32.mrb[0].mxu0
    %9777 = vmatprep.mubr.f32.mxu0 %v6749
    %9778 = vmatmul.mubr.f32.gmra.mrb[0].mxu0 %v6748
    %v9779 = vpop.f32.mrb[0].mxu0
    %v9780 = vadd.f32 %v9325, %v9779
    %v9781 = vpop.f32.mrb[0].mxu0
    %9782 = vmatprep.mubr.f32.mxu0 %v6760
    %9783 = vmatmul.mubr.f32.gmra.mrb[0].mxu0 %v6759
    %v9784 = vpop.f32.mrb[0].mxu0
    %v9785 = vadd.f32 %v9330, %v9784
    %v9786 = vpop.f32.mrb[0].mxu0
    %9787 = vmatprep.mubr.f32.mxu0 %v6771
    %9788 = vmatmul.mubr.f32.gmra.mrb[0].mxu0 %v6770
    %v9789 = vpop.f32.mrb[0].mxu0
    %v9790 = vadd.f32 %v9335, %v9789
    %v9791 = vpop.f32.mrb[0].mxu0
    %9792 = vmatprep.mubr.f32.mxu0 %v6782
    %9793 = vmatmul.mubr.f32.gmra.mrb[0].mxu0 %v6781
    %v9794 = vpop.f32.mrb[0].mxu0
    %v9795 = vadd.f32 %v9340, %v9794
    %v9796 = vpop.f32.mrb[0].mxu0
    %9797 = vmatprep.mubr.f32.mxu0 %v6793
    %9798 = vmatmul.mubr.f32.gmra.mrb[0].mxu0 %v6792
    %v9799 = vpop.f32.mrb[0].mxu0
    %v9800 = vadd.f32 %v9345, %v9799
    %v9801 = vpop.f32.mrb[0].mxu0
    %9802 = vmatprep.mubr.f32.mxu0 %v6804
    %9803 = vmatmul.mubr.f32.gmra.mrb[0].mxu0 %v6803
    %v9804 = vpop.f32.mrb[0].mxu0
    %v9805 = vadd.f32 %v9350, %v9804
    %v9806 = vpop.f32.mrb[0].mxu0
    %9807 = vmatprep.mubr.f32.mxu0 %v6815
    %9808 = vmatmul.mubr.f32.gmra.mrb[0].mxu0 %v6814
    %v9809 = vpop.f32.mrb[0].mxu0
    %v9810 = vadd.f32 %v9355, %v9809
    %v9811 = vpop.f32.mrb[0].mxu0
    %9812 = vmatprep.mubr.f32.mxu0 %v6826
    %9813 = vmatmul.mubr.f32.gmra.mrb[0].mxu0 %v6825
    %v9814 = vpop.f32.mrb[0].mxu0
    %v9815 = vadd.f32 %v9360, %v9814
    %v9816 = vpop.f32.mrb[0].mxu0
    %9817 = vmatprep.mubr.f32.mxu0 %v6837
    %9818 = vmatmul.mubr.f32.gmra.mrb[0].mxu0 %v6836
    %v9819 = vpop.f32.mrb[0].mxu0
    %v9820 = vadd.f32 %v9365, %v9819
    %v9821 = vpop.f32.mrb[0].mxu0
    %9822 = vmatprep.mubr.f32.mxu0 %v6848
    %9823 = vmatmul.mubr.f32.gmra.mrb[0].mxu0 %v6847
    %v9824 = vpop.f32.mrb[0].mxu0
    %v9825 = vadd.f32 %v9370, %v9824
    %v9826 = vpop.f32.mrb[0].mxu0
    %9827 = vdwg.mxu0
    %9828 = vmatprep.subr.mxu0 0.0
    %9829 = vmatpush1.msra.mxu0 %v5980
    %9830 = vmatprep.subr.mxu0 0.0
    %9831 = vmatpush1.msra.mxu0 %v5981
    %9832 = vmatprep.subr.mxu0 0.0
    %9833 = vmatpush1.msra.mxu0 %v5982
    %9834 = vmatprep.subr.mxu0 0.0
    %9835 = vmatpush1.msra.mxu0 %v5983
    %9836 = vmatprep.subr.mxu0 0.0
    %9837 = vmatpush1.msra.mxu0 %v5984
    %9838 = vmatprep.subr.mxu0 0.0
    %9839 = vmatpush1.msra.mxu0 %v5985
    %9840 = vmatprep.subr.mxu0 0.0
    %9841 = vmatpush1.msra.mxu0 %v5986
    %9842 = vmatprep.subr.mxu0 0.0
    %9843 = vmatpush1.msra.mxu0 %v5987
    %9844 = vmatprep.subr.mxu0 0.0
    %9845 = vmatpush1.msra.mxu0 %v5988
    %9846 = vmatprep.subr.mxu0 0.0
    %9847 = vmatpush1.msra.mxu0 %v5989
    %9848 = vmatprep.subr.mxu0 0.0
    %9849 = vmatpush1.msra.mxu0 %v5990
    %9850 = vmatprep.subr.mxu0 0.0
    %9851 = vmatpush1.msra.mxu0 %v5991
    %9852 = vmatprep.subr.mxu0 0.0
    %9853 = vmatpush1.msra.mxu0 0.0
    %9854 = vmatprep.subr.mxu0 0.0
    %9855 = vmatpush1.msra.mxu0 0.0
    %9856 = vmatprep.subr.mxu0 0.0
    %9857 = vmatpush1.msra.mxu0 0.0
    %9858 = vmatprep.subr.mxu0 0.0
    %9859 = vmatpush1.msra.mxu0 0.0
    %9860 = vmatprep.subr.mxu0 0.0
    %9861 = vmatpush1.msra.mxu0 0.0
    %9862 = vmatprep.subr.mxu0 0.0
    %9863 = vmatpush1.msra.mxu0 0.0
    %9864 = vmatprep.subr.mxu0 0.0
    %9865 = vmatpush1.msra.mxu0 0.0
    %9866 = vmatprep.subr.mxu0 0.0
    %9867 = vmatpush1.msra.mxu0 0.0
    %9868 = vmatprep.subr.mxu0 0.0
    %9869 = vmatpush1.msra.mxu0 0.0
    %9870 = vmatprep.subr.mxu0 0.0
    %9871 = vmatpush1.msra.mxu0 0.0
    %9872 = vmatprep.subr.mxu0 0.0
    %9873 = vmatpush1.msra.mxu0 0.0
    %9874 = vmatprep.subr.mxu0 0.0
    %9875 = vmatpush1.msra.mxu0 0.0
    %9876 = vmatprep.subr.mxu0 0.0
    %9877 = vmatpush1.msra.mxu0 0.0
    %9878 = vmatprep.subr.mxu0 0.0
    %9879 = vmatpush1.msra.mxu0 0.0
    %9880 = vmatprep.subr.mxu0 0.0
    %9881 = vmatpush1.msra.mxu0 0.0
    %9882 = vmatprep.subr.mxu0 0.0
    %9883 = vmatpush1.msra.mxu0 0.0
    %9884 = vmatprep.subr.mxu0 0.0
    %9885 = vmatpush1.msra.mxu0 0.0
    %9886 = vmatprep.subr.mxu0 0.0
    %9887 = vmatpush1.msra.mxu0 0.0
    %9888 = vmatprep.subr.mxu0 0.0
    %9889 = vmatpush1.msra.mxu0 0.0
    %9890 = vmatprep.subr.mxu0 0.0
    %9891 = vmatpush1.msra.mxu0 0.0
    %9892 = vmatprep.mubr.f32.mxu0 0.0
    %9893 = vmatmul.mubr.f32.gmra.mrb[0].mxu0 %v7320
    %v9894 = vpop.f32.mrb[0].mxu0
    %v9895 = vadd.f32 %v9440, %v9894
    %v9896 = vpop.f32.mrb[0].mxu0
    %9897 = vmatprep.mubr.f32.mxu0 0.0
    %9898 = vmatmul.mubr.f32.gmra.mrb[0].mxu0 %v7323
    %v9899 = vpop.f32.mrb[0].mxu0
    %v9900 = vadd.f32 %v9445, %v9899
    %v9901 = vpop.f32.mrb[0].mxu0
    %9902 = vmatprep.mubr.f32.mxu0 0.0
    %9903 = vmatmul.mubr.f32.gmra.mrb[0].mxu0 %v7326
    %v9904 = vpop.f32.mrb[0].mxu0
    %v9905 = vadd.f32 %v9450, %v9904
    %v9906 = vpop.f32.mrb[0].mxu0
    %9907 = vmatprep.mubr.f32.mxu0 0.0
    %9908 = vmatmul.mubr.f32.gmra.mrb[0].mxu0 %v7329
    %v9909 = vpop.f32.mrb[0].mxu0
    %v9910 = vadd.f32 %v9455, %v9909
    %v9911 = vpop.f32.mrb[0].mxu0
    %9912 = vmatprep.mubr.f32.mxu0 0.0
    %9913 = vmatmul.mubr.f32.gmra.mrb[0].mxu0 %v7332
    %v9914 = vpop.f32.mrb[0].mxu0
    %v9915 = vadd.f32 %v9460, %v9914
    %v9916 = vpop.f32.mrb[0].mxu0
    %9917 = vmatprep.mubr.f32.mxu0 0.0
    %9918 = vmatmul.mubr.f32.gmra.mrb[0].mxu0 %v7335
    %v9919 = vpop.f32.mrb[0].mxu0
    %v9920 = vadd.f32 %v9465, %v9919
    %v9921 = vpop.f32.mrb[0].mxu0
    %9922 = vmatprep.mubr.f32.mxu0 0.0
    %9923 = vmatmul.mubr.f32.gmra.mrb[0].mxu0 %v7338
    %v9924 = vpop.f32.mrb[0].mxu0
    %v9925 = vadd.f32 %v9470, %v9924
    %v9926 = vpop.f32.mrb[0].mxu0
    %9927 = vmatprep.mubr.f32.mxu0 0.0
    %9928 = vmatmul.mubr.f32.gmra.mrb[0].mxu0 %v7341
    %v9929 = vpop.f32.mrb[0].mxu0
    %v9930 = vadd.f32 %v9475, %v9929
    %v9931 = vpop.f32.mrb[0].mxu0
    %9932 = vmatprep.mubr.f32.mxu0 0.0
    %9933 = vmatmul.mubr.f32.gmra.mrb[0].mxu0 %v7344
    %v9934 = vpop.f32.mrb[0].mxu0
    %v9935 = vadd.f32 %v9480, %v9934
    %v9936 = vpop.f32.mrb[0].mxu0
    %9937 = vmatprep.mubr.f32.mxu0 0.0
    %9938 = vmatmul.mubr.f32.gmra.mrb[0].mxu0 %v7347
    %v9939 = vpop.f32.mrb[0].mxu0
    %v9940 = vadd.f32 %v9485, %v9939
    %v9941 = vpop.f32.mrb[0].mxu0
    %9942 = vmatprep.mubr.f32.mxu0 0.0
    %9943 = vmatmul.mubr.f32.gmra.mrb[0].mxu0 %v7350
    %v9944 = vpop.f32.mrb[0].mxu0
    %v9945 = vadd.f32 %v9490, %v9944
    %v9946 = vpop.f32.mrb[0].mxu0
    %9947 = vmatprep.mubr.f32.mxu0 0.0
    %9948 = vmatmul.mubr.f32.gmra.mrb[0].mxu0 %v7353
    %v9949 = vpop.f32.mrb[0].mxu0
    %v9950 = vadd.f32 %v9495, %v9949
    %v9951 = vpop.f32.mrb[0].mxu0
    %9952 = vmatprep.mubr.f32.mxu0 0.0
    %9953 = vmatmul.mubr.f32.gmra.mrb[0].mxu0 %v7356
    %v9954 = vpop.f32.mrb[0].mxu0
    %v9955 = vadd.f32 %v9500, %v9954
    %v9956 = vpop.f32.mrb[0].mxu0
    %9957 = vmatprep.mubr.f32.mxu0 0.0
    %9958 = vmatmul.mubr.f32.gmra.mrb[0].mxu0 %v7359
    %v9959 = vpop.f32.mrb[0].mxu0
    %v9960 = vadd.f32 %v9505, %v9959
    %v9961 = vpop.f32.mrb[0].mxu0
    %9962 = vmatprep.mubr.f32.mxu0 0.0
    %9963 = vmatmul.mubr.f32.gmra.mrb[0].mxu0 %v7362
    %v9964 = vpop.f32.mrb[0].mxu0
    %v9965 = vadd.f32 %v9510, %v9964
    %v9966 = vpop.f32.mrb[0].mxu0
    %9967 = vmatprep.mubr.f32.mxu0 0.0
    %9968 = vmatmul.mubr.f32.gmra.mrb[0].mxu0 %v7365
    %v9969 = vpop.f32.mrb[0].mxu0
    %v9970 = vadd.f32 %v9515, %v9969
    %v9971 = vpop.f32.mrb[0].mxu0
    %9972 = vmatprep.mubr.f32.mxu0 0.0
    %9973 = vmatmul.mubr.f32.gmra.mrb[0].mxu0 %v7368
    %v9974 = vpop.f32.mrb[0].mxu0
    %v9975 = vadd.f32 %v9520, %v9974
    %v9976 = vpop.f32.mrb[0].mxu0
    %9977 = vmatprep.mubr.f32.mxu0 0.0
    %9978 = vmatmul.mubr.f32.gmra.mrb[0].mxu0 %v7371
    %v9979 = vpop.f32.mrb[0].mxu0
    %v9980 = vadd.f32 %v9525, %v9979
    %v9981 = vpop.f32.mrb[0].mxu0
    %9982 = vmatprep.mubr.f32.mxu0 0.0
    %9983 = vmatmul.mubr.f32.gmra.mrb[0].mxu0 %v7374
    %v9984 = vpop.f32.mrb[0].mxu0
    %v9985 = vadd.f32 %v9530, %v9984
    %v9986 = vpop.f32.mrb[0].mxu0
    %9987 = vmatprep.mubr.f32.mxu0 0.0
    %9988 = vmatmul.mubr.f32.gmra.mrb[0].mxu0 %v7377
    %v9989 = vpop.f32.mrb[0].mxu0
    %v9990 = vadd.f32 %v9535, %v9989
    %v9991 = vpop.f32.mrb[0].mxu0
    %9992 = vmatprep.mubr.f32.mxu0 0.0
    %9993 = vmatmul.mubr.f32.gmra.mrb[0].mxu0 %v7380
    %v9994 = vpop.f32.mrb[0].mxu0
    %v9995 = vadd.f32 %v9540, %v9994
    %v9996 = vpop.f32.mrb[0].mxu0
    %9997 = vmatprep.mubr.f32.mxu0 0.0
    %9998 = vmatmul.mubr.f32.gmra.mrb[0].mxu0 %v7383
    %v9999 = vpop.f32.mrb[0].mxu0
    %v10000 = vadd.f32 %v9545, %v9999
    %v10001 = vpop.f32.mrb[0].mxu0
    %10002 = vmatprep.mubr.f32.mxu0 0.0
    %10003 = vmatmul.mubr.f32.gmra.mrb[0].mxu0 %v7386
    %v10004 = vpop.f32.mrb[0].mxu0
    %v10005 = vadd.f32 %v9550, %v10004
    %v10006 = vpop.f32.mrb[0].mxu0
    %10007 = vmatprep.mubr.f32.mxu0 0.0
    %10008 = vmatmul.mubr.f32.gmra.mrb[0].mxu0 %v7389
    %v10009 = vpop.f32.mrb[0].mxu0
    %v10010 = vadd.f32 %v9555, %v10009
    %v10011 = vpop.f32.mrb[0].mxu0
    %10012 = vmatprep.mubr.f32.mxu0 0.0
    %10013 = vmatmul.mubr.f32.gmra.mrb[0].mxu0 %v7392
    %v10014 = vpop.f32.mrb[0].mxu0
    %v10015 = vadd.f32 %v9560, %v10014
    %v10016 = vpop.f32.mrb[0].mxu0
    %10017 = vmatprep.mubr.f32.mxu0 0.0
    %10018 = vmatmul.mubr.f32.gmra.mrb[0].mxu0 %v7395
    %v10019 = vpop.f32.mrb[0].mxu0
    %v10020 = vadd.f32 %v9565, %v10019
    %v10021 = vpop.f32.mrb[0].mxu0
    %10022 = vmatprep.mubr.f32.mxu0 0.0
    %10023 = vmatmul.mubr.f32.gmra.mrb[0].mxu0 %v7398
    %v10024 = vpop.f32.mrb[0].mxu0
    %v10025 = vadd.f32 %v9570, %v10024
    %v10026 = vpop.f32.mrb[0].mxu0
    %10027 = vmatprep.mubr.f32.mxu0 0.0
    %10028 = vmatmul.mubr.f32.gmra.mrb[0].mxu0 %v7401
    %v10029 = vpop.f32.mrb[0].mxu0
    %v10030 = vadd.f32 %v9575, %v10029
    %v10031 = vpop.f32.mrb[0].mxu0
    %10032 = vmatprep.mubr.f32.mxu0 0.0
    %10033 = vmatmul.mubr.f32.gmra.mrb[0].mxu0 %v7404
    %v10034 = vpop.f32.mrb[0].mxu0
    %v10035 = vadd.f32 %v9580, %v10034
    %v10036 = vpop.f32.mrb[0].mxu0
    %10037 = vmatprep.mubr.f32.mxu0 0.0
    %10038 = vmatmul.mubr.f32.gmra.mrb[0].mxu0 %v7407
    %v10039 = vpop.f32.mrb[0].mxu0
    %v10040 = vadd.f32 %v9585, %v10039
    %v10041 = vpop.f32.mrb[0].mxu0
    %10042 = vmatprep.mubr.f32.mxu0 0.0
    %10043 = vmatmul.mubr.f32.gmra.mrb[0].mxu0 %v7410
    %v10044 = vpop.f32.mrb[0].mxu0
    %v10045 = vadd.f32 %v9590, %v10044
    %v10046 = vpop.f32.mrb[0].mxu0
    %10047 = vmatprep.mubr.f32.mxu0 0.0
    %10048 = vmatmul.mubr.f32.gmra.mrb[0].mxu0 %v7413
    %v10049 = vpop.f32.mrb[0].mxu0
    %v10050 = vadd.f32 %v9595, %v10049
    %v10051 = vpop.f32.mrb[0].mxu0
    %10052 = vmatprep.mubr.f32.mxu0 0.0
    %10053 = vmatmul.mubr.f32.gmra.mrb[0].mxu0 %v7416
    %v10054 = vpop.f32.mrb[0].mxu0
    %v10055 = vadd.f32 %v9600, %v10054
    %v10056 = vpop.f32.mrb[0].mxu0
    %10057 = vmatprep.mubr.f32.mxu0 0.0
    %10058 = vmatmul.mubr.f32.gmra.mrb[0].mxu0 %v7419
    %v10059 = vpop.f32.mrb[0].mxu0
    %v10060 = vadd.f32 %v9605, %v10059
    %v10061 = vpop.f32.mrb[0].mxu0
    %10062 = vmatprep.mubr.f32.mxu0 0.0
    %10063 = vmatmul.mubr.f32.gmra.mrb[0].mxu0 %v7422
    %v10064 = vpop.f32.mrb[0].mxu0
    %v10065 = vadd.f32 %v9610, %v10064
    %v10066 = vpop.f32.mrb[0].mxu0
    %10067 = vmatprep.mubr.f32.mxu0 0.0
    %10068 = vmatmul.mubr.f32.gmra.mrb[0].mxu0 %v7425
    %v10069 = vpop.f32.mrb[0].mxu0
    %v10070 = vadd.f32 %v9615, %v10069
    %v10071 = vpop.f32.mrb[0].mxu0
    %10072 = vmatprep.mubr.f32.mxu0 0.0
    %10073 = vmatmul.mubr.f32.gmra.mrb[0].mxu0 %v7428
    %v10074 = vpop.f32.mrb[0].mxu0
    %v10075 = vadd.f32 %v9620, %v10074
    %v10076 = vpop.f32.mrb[0].mxu0
    %10077 = vmatprep.mubr.f32.mxu0 0.0
    %10078 = vmatmul.mubr.f32.gmra.mrb[0].mxu0 %v7431
    %v10079 = vpop.f32.mrb[0].mxu0
    %v10080 = vadd.f32 %v9625, %v10079
    %v10081 = vpop.f32.mrb[0].mxu0
    %10082 = vmatprep.mubr.f32.mxu0 0.0
    %10083 = vmatmul.mubr.f32.gmra.mrb[0].mxu0 %v7434
    %v10084 = vpop.f32.mrb[0].mxu0
    %v10085 = vadd.f32 %v9630, %v10084
    %v10086 = vpop.f32.mrb[0].mxu0
    %10087 = vmatprep.mubr.f32.mxu0 0.0
    %10088 = vmatmul.mubr.f32.gmra.mrb[0].mxu0 %v7437
    %v10089 = vpop.f32.mrb[0].mxu0
    %v10090 = vadd.f32 %v9635, %v10089
    %v10091 = vpop.f32.mrb[0].mxu0
    %10092 = vmatprep.mubr.f32.mxu0 0.0
    %10093 = vmatmul.mubr.f32.gmra.mrb[0].mxu0 %v7440
    %v10094 = vpop.f32.mrb[0].mxu0
    %v10095 = vadd.f32 %v9640, %v10094
    %v10096 = vpop.f32.mrb[0].mxu0
    %10097 = vmatprep.mubr.f32.mxu0 0.0
    %10098 = vmatmul.mubr.f32.gmra.mrb[0].mxu0 %v7443
    %v10099 = vpop.f32.mrb[0].mxu0
    %v10100 = vadd.f32 %v9645, %v10099
    %v10101 = vpop.f32.mrb[0].mxu0
    %10102 = vmatprep.mubr.f32.mxu0 0.0
    %10103 = vmatmul.mubr.f32.gmra.mrb[0].mxu0 %v7446
    %v10104 = vpop.f32.mrb[0].mxu0
    %v10105 = vadd.f32 %v9650, %v10104
    %v10106 = vpop.f32.mrb[0].mxu0
    %10107 = vmatprep.mubr.f32.mxu0 0.0
    %10108 = vmatmul.mubr.f32.gmra.mrb[0].mxu0 %v7449
    %v10109 = vpop.f32.mrb[0].mxu0
    %v10110 = vadd.f32 %v9655, %v10109
    %v10111 = vpop.f32.mrb[0].mxu0
    %10112 = vmatprep.mubr.f32.mxu0 0.0
    %10113 = vmatmul.mubr.f32.gmra.mrb[0].mxu0 %v7452
    %v10114 = vpop.f32.mrb[0].mxu0
    %v10115 = vadd.f32 %v9660, %v10114
    %v10116 = vpop.f32.mrb[0].mxu0
    %10117 = vmatprep.mubr.f32.mxu0 0.0
    %10118 = vmatmul.mubr.f32.gmra.mrb[0].mxu0 %v7455
    %v10119 = vpop.f32.mrb[0].mxu0
    %v10120 = vadd.f32 %v9665, %v10119
    %v10121 = vpop.f32.mrb[0].mxu0
    %10122 = vmatprep.mubr.f32.mxu0 0.0
    %10123 = vmatmul.mubr.f32.gmra.mrb[0].mxu0 %v7458
    %v10124 = vpop.f32.mrb[0].mxu0
    %v10125 = vadd.f32 %v9670, %v10124
    %v10126 = vpop.f32.mrb[0].mxu0
    %10127 = vmatprep.mubr.f32.mxu0 0.0
    %10128 = vmatmul.mubr.f32.gmra.mrb[0].mxu0 %v7461
    %v10129 = vpop.f32.mrb[0].mxu0
    %v10130 = vadd.f32 %v9675, %v10129
    %v10131 = vpop.f32.mrb[0].mxu0
    %10132 = vmatprep.mubr.f32.mxu0 0.0
    %10133 = vmatmul.mubr.f32.gmra.mrb[0].mxu0 %v7464
    %v10134 = vpop.f32.mrb[0].mxu0
    %v10135 = vadd.f32 %v9680, %v10134
    %v10136 = vpop.f32.mrb[0].mxu0
    %10137 = vmatprep.mubr.f32.mxu0 0.0
    %10138 = vmatmul.mubr.f32.gmra.mrb[0].mxu0 %v7467
    %v10139 = vpop.f32.mrb[0].mxu0
    %v10140 = vadd.f32 %v9685, %v10139
    %v10141 = vpop.f32.mrb[0].mxu0
    %10142 = vmatprep.mubr.f32.mxu0 0.0
    %10143 = vmatmul.mubr.f32.gmra.mrb[0].mxu0 %v7470
    %v10144 = vpop.f32.mrb[0].mxu0
    %v10145 = vadd.f32 %v9690, %v10144
    %v10146 = vpop.f32.mrb[0].mxu0
    %10147 = vmatprep.mubr.f32.mxu0 0.0
    %10148 = vmatmul.mubr.f32.gmra.mrb[0].mxu0 %v7473
    %v10149 = vpop.f32.mrb[0].mxu0
    %v10150 = vadd.f32 %v9695, %v10149
    %v10151 = vpop.f32.mrb[0].mxu0
    %10152 = vmatprep.mubr.f32.mxu0 0.0
    %10153 = vmatmul.mubr.f32.gmra.mrb[0].mxu0 %v7476
    %v10154 = vpop.f32.mrb[0].mxu0
    %v10155 = vadd.f32 %v9700, %v10154
    %v10156 = vpop.f32.mrb[0].mxu0
    %10157 = vmatprep.mubr.f32.mxu0 0.0
    %10158 = vmatmul.mubr.f32.gmra.mrb[0].mxu0 %v7479
    %v10159 = vpop.f32.mrb[0].mxu0
    %v10160 = vadd.f32 %v9705, %v10159
    %v10161 = vpop.f32.mrb[0].mxu0
    %10162 = vmatprep.mubr.f32.mxu0 0.0
    %10163 = vmatmul.mubr.f32.gmra.mrb[0].mxu0 %v7482
    %v10164 = vpop.f32.mrb[0].mxu0
    %v10165 = vadd.f32 %v9710, %v10164
    %v10166 = vpop.f32.mrb[0].mxu0
    %10167 = vmatprep.mubr.f32.mxu0 0.0
    %10168 = vmatmul.mubr.f32.gmra.mrb[0].mxu0 %v7485
    %v10169 = vpop.f32.mrb[0].mxu0
    %v10170 = vadd.f32 %v9715, %v10169
    %v10171 = vpop.f32.mrb[0].mxu0
    %10172 = vmatprep.mubr.f32.mxu0 0.0
    %10173 = vmatmul.mubr.f32.gmra.mrb[0].mxu0 %v7488
    %v10174 = vpop.f32.mrb[0].mxu0
    %v10175 = vadd.f32 %v9720, %v10174
    %v10176 = vpop.f32.mrb[0].mxu0
    %10177 = vmatprep.mubr.f32.mxu0 0.0
    %10178 = vmatmul.mubr.f32.gmra.mrb[0].mxu0 %v7491
    %v10179 = vpop.f32.mrb[0].mxu0
    %v10180 = vadd.f32 %v9725, %v10179
    %v10181 = vpop.f32.mrb[0].mxu0
    %10182 = vmatprep.mubr.f32.mxu0 0.0
    %10183 = vmatmul.mubr.f32.gmra.mrb[0].mxu0 %v7494
    %v10184 = vpop.f32.mrb[0].mxu0
    %v10185 = vadd.f32 %v9730, %v10184
    %v10186 = vpop.f32.mrb[0].mxu0
    %10187 = vmatprep.mubr.f32.mxu0 0.0
    %10188 = vmatmul.mubr.f32.gmra.mrb[0].mxu0 %v7497
    %v10189 = vpop.f32.mrb[0].mxu0
    %v10190 = vadd.f32 %v9735, %v10189
    %v10191 = vpop.f32.mrb[0].mxu0
    %10192 = vmatprep.mubr.f32.mxu0 0.0
    %10193 = vmatmul.mubr.f32.gmra.mrb[0].mxu0 %v7500
    %v10194 = vpop.f32.mrb[0].mxu0
    %v10195 = vadd.f32 %v9740, %v10194
    %v10196 = vpop.f32.mrb[0].mxu0
    %10197 = vmatprep.mubr.f32.mxu0 0.0
    %10198 = vmatmul.mubr.f32.gmra.mrb[0].mxu0 %v7503
    %v10199 = vpop.f32.mrb[0].mxu0
    %v10200 = vadd.f32 %v9745, %v10199
    %v10201 = vpop.f32.mrb[0].mxu0
    %10202 = vmatprep.mubr.f32.mxu0 0.0
    %10203 = vmatmul.mubr.f32.gmra.mrb[0].mxu0 %v7506
    %v10204 = vpop.f32.mrb[0].mxu0
    %v10205 = vadd.f32 %v9750, %v10204
    %v10206 = vpop.f32.mrb[0].mxu0
    %10207 = vmatprep.mubr.f32.mxu0 0.0
    %10208 = vmatmul.mubr.f32.gmra.mrb[0].mxu0 %v7509
    %v10209 = vpop.f32.mrb[0].mxu0
    %v10210 = vadd.f32 %v9755, %v10209
    %v10211 = vpop.f32.mrb[0].mxu0
    %10212 = vmatprep.mubr.f32.mxu0 0.0
    %10213 = vmatmul.mubr.f32.gmra.mrb[0].mxu0 %v7512
    %v10214 = vpop.f32.mrb[0].mxu0
    %v10215 = vadd.f32 %v9760, %v10214
    %v10216 = vpop.f32.mrb[0].mxu0
    %10217 = vmatprep.mubr.f32.mxu0 0.0
    %10218 = vmatmul.mubr.f32.gmra.mrb[0].mxu0 %v7515
    %v10219 = vpop.f32.mrb[0].mxu0
    %v10220 = vadd.f32 %v9765, %v10219
    %v10221 = vpop.f32.mrb[0].mxu0
    %10222 = vmatprep.mubr.f32.mxu0 0.0
    %10223 = vmatmul.mubr.f32.gmra.mrb[0].mxu0 %v7518
    %v10224 = vpop.f32.mrb[0].mxu0
    %v10225 = vadd.f32 %v9770, %v10224
    %v10226 = vpop.f32.mrb[0].mxu0
    %10227 = vmatprep.mubr.f32.mxu0 0.0
    %10228 = vmatmul.mubr.f32.gmra.mrb[0].mxu0 %v7521
    %v10229 = vpop.f32.mrb[0].mxu0
    %v10230 = vadd.f32 %v9775, %v10229
    %v10231 = vpop.f32.mrb[0].mxu0
    %10232 = vmatprep.mubr.f32.mxu0 0.0
    %10233 = vmatmul.mubr.f32.gmra.mrb[0].mxu0 %v7524
    %v10234 = vpop.f32.mrb[0].mxu0
    %v10235 = vadd.f32 %v9780, %v10234
    %v10236 = vpop.f32.mrb[0].mxu0
    %10237 = vmatprep.mubr.f32.mxu0 0.0
    %10238 = vmatmul.mubr.f32.gmra.mrb[0].mxu0 %v7527
    %v10239 = vpop.f32.mrb[0].mxu0
    %v10240 = vadd.f32 %v9785, %v10239
    %v10241 = vpop.f32.mrb[0].mxu0
    %10242 = vmatprep.mubr.f32.mxu0 0.0
    %10243 = vmatmul.mubr.f32.gmra.mrb[0].mxu0 %v7530
    %v10244 = vpop.f32.mrb[0].mxu0
    %v10245 = vadd.f32 %v9790, %v10244
    %v10246 = vpop.f32.mrb[0].mxu0
    %10247 = vmatprep.mubr.f32.mxu0 0.0
    %10248 = vmatmul.mubr.f32.gmra.mrb[0].mxu0 %v7533
    %v10249 = vpop.f32.mrb[0].mxu0
    %v10250 = vadd.f32 %v9795, %v10249
    %v10251 = vpop.f32.mrb[0].mxu0
    %10252 = vmatprep.mubr.f32.mxu0 0.0
    %10253 = vmatmul.mubr.f32.gmra.mrb[0].mxu0 %v7536
    %v10254 = vpop.f32.mrb[0].mxu0
    %v10255 = vadd.f32 %v9800, %v10254
    %v10256 = vpop.f32.mrb[0].mxu0
    %10257 = vmatprep.mubr.f32.mxu0 0.0
    %10258 = vmatmul.mubr.f32.gmra.mrb[0].mxu0 %v7539
    %v10259 = vpop.f32.mrb[0].mxu0
    %v10260 = vadd.f32 %v9805, %v10259
    %v10261 = vpop.f32.mrb[0].mxu0
    %10262 = vmatprep.mubr.f32.mxu0 0.0
    %10263 = vmatmul.mubr.f32.gmra.mrb[0].mxu0 %v7542
    %v10264 = vpop.f32.mrb[0].mxu0
    %v10265 = vadd.f32 %v9810, %v10264
    %v10266 = vpop.f32.mrb[0].mxu0
    %10267 = vmatprep.mubr.f32.mxu0 0.0
    %10268 = vmatmul.mubr.f32.gmra.mrb[0].mxu0 %v7545
    %v10269 = vpop.f32.mrb[0].mxu0
    %v10270 = vadd.f32 %v9815, %v10269
    %v10271 = vpop.f32.mrb[0].mxu0
    %10272 = vmatprep.mubr.f32.mxu0 0.0
    %10273 = vmatmul.mubr.f32.gmra.mrb[0].mxu0 %v7548
    %v10274 = vpop.f32.mrb[0].mxu0
    %v10275 = vadd.f32 %v9820, %v10274
    %v10276 = vpop.f32.mrb[0].mxu0
    %10277 = vmatprep.mubr.f32.mxu0 0.0
    %10278 = vmatmul.mubr.f32.gmra.mrb[0].mxu0 %v7551
    %v10279 = vpop.f32.mrb[0].mxu0
    %v10280 = vadd.f32 %v9825, %v10279
    %v10281 = vpop.f32.mrb[0].mxu0
    %10282 = vdwg.mxu0
    %v10283 = vmax.f32 %v9895, 0.0
    %v10284 = vmax.f32 %v9900, 0.0
    %v10285 = vmax.f32 %v9905, 0.0
    %v10286 = vmax.f32 %v9910, 0.0
    %v10287 = vmax.f32 %v9915, 0.0
    %v10288 = vmax.f32 %v9920, 0.0
    %v10289 = vmax.f32 %v9925, 0.0
    %v10290 = vmax.f32 %v9930, 0.0
    %v10291 = vmax.f32 %v9935, 0.0
    %v10292 = vmax.f32 %v9940, 0.0
    %v10293 = vmax.f32 %v9945, 0.0
    %v10294 = vmax.f32 %v9950, 0.0
    %v10295 = vmax.f32 %v9955, 0.0
    %v10296 = vmax.f32 %v9960, 0.0
    %v10297 = vmax.f32 %v9965, 0.0
    %v10298 = vmax.f32 %v9970, 0.0
    %v10299 = vmax.f32 %v9975, 0.0
    %v10300 = vmax.f32 %v9980, 0.0
    %v10301 = vmax.f32 %v9985, 0.0
    %v10302 = vmax.f32 %v9990, 0.0
    %v10303 = vmax.f32 %v9995, 0.0
    %v10304 = vmax.f32 %v10000, 0.0
    %v10305 = vmax.f32 %v10005, 0.0
    %v10306 = vmax.f32 %v10010, 0.0
    %v10307 = vmax.f32 %v10015, 0.0
    %v10308 = vmax.f32 %v10020, 0.0
    %v10309 = vmax.f32 %v10025, 0.0
    %v10310 = vmax.f32 %v10030, 0.0
    %v10311 = vmax.f32 %v10035, 0.0
    %v10312 = vmax.f32 %v10040, 0.0
    %v10313 = vmax.f32 %v10045, 0.0
    %v10314 = vmax.f32 %v10050, 0.0
    %v10315 = vmax.f32 %v10055, 0.0
    %v10316 = vmax.f32 %v10060, 0.0
    %v10317 = vmax.f32 %v10065, 0.0
    %v10318 = vmax.f32 %v10070, 0.0
    %v10319 = vmax.f32 %v10075, 0.0
    %v10320 = vmax.f32 %v10080, 0.0
    %v10321 = vmax.f32 %v10085, 0.0
    %v10322 = vmax.f32 %v10090, 0.0
    %v10323 = vmax.f32 %v10095, 0.0
    %v10324 = vmax.f32 %v10100, 0.0
    %v10325 = vmax.f32 %v10105, 0.0
    %v10326 = vmax.f32 %v10110, 0.0
    %v10327 = vmax.f32 %v10115, 0.0
    %v10328 = vmax.f32 %v10120, 0.0
    %v10329 = vmax.f32 %v10125, 0.0
    %v10330 = vmax.f32 %v10130, 0.0
    %v10331 = vmax.f32 %v10135, 0.0
    %v10332 = vmax.f32 %v10140, 0.0
    %v10333 = vmax.f32 %v10145, 0.0
    %v10334 = vmax.f32 %v10150, 0.0
    %v10335 = vmax.f32 %v10155, 0.0
    %v10336 = vmax.f32 %v10160, 0.0
    %v10337 = vmax.f32 %v10165, 0.0
    %v10338 = vmax.f32 %v10170, 0.0
    %v10339 = vmax.f32 %v10175, 0.0
    %v10340 = vmax.f32 %v10180, 0.0
    %v10341 = vmax.f32 %v10185, 0.0
    %v10342 = vmax.f32 %v10190, 0.0
    %v10343 = vmax.f32 %v10195, 0.0
    %v10344 = vmax.f32 %v10200, 0.0
    %v10345 = vmax.f32 %v10205, 0.0
    %v10346 = vmax.f32 %v10210, 0.0
    %v10347 = vmax.f32 %v10215, 0.0
    %v10348 = vmax.f32 %v10220, 0.0
    %v10349 = vmax.f32 %v10225, 0.0
    %v10350 = vmax.f32 %v10230, 0.0
    %v10351 = vmax.f32 %v10235, 0.0
    %v10352 = vmax.f32 %v10240, 0.0
    %v10353 = vmax.f32 %v10245, 0.0
    %v10354 = vmax.f32 %v10250, 0.0
    %v10355 = vmax.f32 %v10255, 0.0
    %v10356 = vmax.f32 %v10260, 0.0
    %v10357 = vmax.f32 %v10265, 0.0
    %v10358 = vmax.f32 %v10270, 0.0
    %v10359 = vmax.f32 %v10275, 0.0
    %v10360 = vmax.f32 %v10280, 0.0
    %v10361 = vld [vmem:[%s5] sm:$0xff]
    %v10362 = vld [vmem:[%s5 + $0x8] sm:$0xff]
    %v10363 = vld [vmem:[%s5 + $0x10] sm:$0xff]
    %v10364 = vld [vmem:[%s5 + $0x18] sm:$0xff]
    %v10365 = vld [vmem:[%s5 + $0x20] sm:$0xff]
    %v10366 = vld [vmem:[%s5 + $0x28] sm:$0xff]
    %v10367 = vld [vmem:[%s5 + $0x30] sm:$0xff]
    %v10368 = vld [vmem:[%s5 + $0x38] sm:$0xff]
    %v10369 = vld [vmem:[%s5 + $0x40] sm:$0xff]
    %v10370 = vld [vmem:[%s5 + $0x48] sm:$0xff]
    %v10371 = vld [vmem:[%s5 + $0x50] sm:$0xff]
    %v10372 = vld [vmem:[%s5 + $0x58] sm:$0xff]
    %v10373 = vld [vmem:[%s5 + $0x60] sm:$0xff]
    %v10374 = vld [vmem:[%s5 + $0x68] sm:$0xff]
    %v10375 = vld [vmem:[%s5 + $0x70] sm:$0xff]
    %v10376 = vld [vmem:[%s5 + $0x78] sm:$0xff]
    %v10377 = vld [vmem:[%s5 + $0x80] sm:$0xff]
    %v10378 = vld [vmem:[%s5 + $0x88] sm:$0xff]
    %v10379 = vld [vmem:[%s5 + $0x90] sm:$0xff]
    %v10380 = vld [vmem:[%s5 + $0x98] sm:$0xff]
    %v10381 = vld [vmem:[%s5 + $0xa0] sm:$0xff]
    %v10382 = vld [vmem:[%s5 + $0xa8] sm:$0xff]
    %v10383 = vld [vmem:[%s5 + $0xb0] sm:$0xff]
    %v10384 = vld [vmem:[%s5 + $0xb8] sm:$0xff]
    %v10385 = vld [vmem:[%s5 + $0xc0] sm:$0xff]
    %v10386 = vld [vmem:[%s5 + $0xc8] sm:$0xff]
    %v10387 = vld [vmem:[%s5 + $0xd0] sm:$0xff]
    %v10388 = vld [vmem:[%s5 + $0xd8] sm:$0xff]
    %v10389 = vld [vmem:[%s5 + $0xe0] sm:$0xff]
    %v10390 = vld [vmem:[%s5 + $0xe8] sm:$0xff]
    %v10391 = vld [vmem:[%s5 + $0xf0] sm:$0xff]
    %v10392 = vld [vmem:[%s5 + $0xf8] sm:$0xff]
    %v10393 = vld [vmem:[%s5 + $0x100] sm:$0xff]
    %v10394 = vld [vmem:[%s5 + $0x108] sm:$0xff]
    %v10395 = vld [vmem:[%s5 + $0x110] sm:$0xff]
    %v10396 = vld [vmem:[%s5 + $0x118] sm:$0xff]
    %v10397 = vld [vmem:[%s5 + $0x120] sm:$0xff]
    %v10398 = vld [vmem:[%s5 + $0x128] sm:$0xff]
    %v10399 = vld [vmem:[%s5 + $0x130] sm:$0xff]
    %v10400 = vld [vmem:[%s5 + $0x138] sm:$0xff]
    %v10401 = vld [vmem:[%s5 + $0x140] sm:$0xff]
    %v10402 = vld [vmem:[%s5 + $0x148] sm:$0xff]
    %v10403 = vld [vmem:[%s5 + $0x150] sm:$0xff]
    %v10404 = vld [vmem:[%s5 + $0x158] sm:$0xff]
    %v10405 = vld [vmem:[%s5 + $0x160] sm:$0xff]
    %v10406 = vld [vmem:[%s5 + $0x168] sm:$0xff]
    %v10407 = vld [vmem:[%s5 + $0x170] sm:$0xff]
    %v10408 = vld [vmem:[%s5 + $0x178] sm:$0xff]
    %v10409 = vld [vmem:[%s5 + $0x180] sm:$0xff]
    %v10410 = vld [vmem:[%s5 + $0x188] sm:$0xff]
    %v10411 = vld [vmem:[%s5 + $0x190] sm:$0xff]
    %v10412 = vld [vmem:[%s5 + $0x198] sm:$0xff]
    %v10413 = vld [vmem:[%s5 + $0x1a0] sm:$0xff]
    %v10414 = vld [vmem:[%s5 + $0x1a8] sm:$0xff]
    %v10415 = vld [vmem:[%s5 + $0x1b0] sm:$0xff]
    %v10416 = vld [vmem:[%s5 + $0x1b8] sm:$0xff]
    %v10417 = vld [vmem:[%s5 + $0x1c0] sm:$0xff]
    %v10418 = vld [vmem:[%s5 + $0x1c8] sm:$0xff]
    %v10419 = vld [vmem:[%s5 + $0x1d0] sm:$0xff]
    %v10420 = vld [vmem:[%s5 + $0x1d8] sm:$0xff]
    %v10421 = vld [vmem:[%s5 + $0x1e0] sm:$0xff]
    %v10422 = vld [vmem:[%s5 + $0x1e8] sm:$0xff]
    %v10423 = vld [vmem:[%s5 + $0x1f0] sm:$0xff]
    %v10424 = vld [vmem:[%s5 + $0x1f8] sm:$0xff]
    %v10425 = vld [vmem:[%s5 + $0x200] sm:$0xff]
    %v10426 = vld [vmem:[%s5 + $0x208] sm:$0xff]
    %v10427 = vld [vmem:[%s5 + $0x210] sm:$0xff]
    %v10428 = vld [vmem:[%s5 + $0x218] sm:$0xff]
    %v10429 = vld [vmem:[%s5 + $0x220] sm:$0xff]
    %v10430 = vld [vmem:[%s5 + $0x228] sm:$0xff]
    %v10431 = vld [vmem:[%s5 + $0x230] sm:$0xff]
    %v10432 = vld [vmem:[%s5 + $0x238] sm:$0xff]
    %v10433 = vld [vmem:[%s5 + $0x240] sm:$0xff]
    %v10434 = vld [vmem:[%s5 + $0x248] sm:$0xff]
    %v10435 = vld [vmem:[%s5 + $0x250] sm:$0xff]
    %v10436 = vld [vmem:[%s5 + $0x258] sm:$0xff]
    %v10437 = vld [vmem:[%s5 + $0x260] sm:$0xff]
    %v10438 = vld [vmem:[%s5 + $0x268] sm:$0xff]
    %v10439 = vld [vmem:[%s5 + $0x270] sm:$0xff]
    %v10440 = vld [vmem:[%s5 + $0x278] sm:$0xff]
    %v10441 = vld [vmem:[%s5 + $0x280] sm:$0xff]
    %v10442 = vld [vmem:[%s5 + $0x288] sm:$0xff]
    %v10443 = vld [vmem:[%s5 + $0x290] sm:$0xff]
    %v10444 = vld [vmem:[%s5 + $0x298] sm:$0xff]
    %v10445 = vld [vmem:[%s5 + $0x2a0] sm:$0xff]
    %v10446 = vld [vmem:[%s5 + $0x2a8] sm:$0xff]
    %v10447 = vld [vmem:[%s5 + $0x2b0] sm:$0xff]
    %v10448 = vld [vmem:[%s5 + $0x2b8] sm:$0xff]
    %v10449 = vld [vmem:[%s5 + $0x2c0] sm:$0xff]
    %v10450 = vld [vmem:[%s5 + $0x2c8] sm:$0xff]
    %v10451 = vld [vmem:[%s5 + $0x2d0] sm:$0xff]
    %v10452 = vld [vmem:[%s5 + $0x2d8] sm:$0xff]
    %v10453 = vld [vmem:[%s5 + $0x2e0] sm:$0xff]
    %v10454 = vld [vmem:[%s5 + $0x2e8] sm:$0xff]
    %v10455 = vld [vmem:[%s5 + $0x2f0] sm:$0xff]
    %v10456 = vld [vmem:[%s5 + $0x2f8] sm:$0xff]
    %v10457 = vld [vmem:[%s5 + $0x300] sm:$0xff]
    %v10458 = vld [vmem:[%s5 + $0x308] sm:$0xff]
    %v10459 = vld [vmem:[%s5 + $0x310] sm:$0xff]
    %v10460 = vld [vmem:[%s5 + $0x318] sm:$0xff]
    %v10461 = vld [vmem:[%s5 + $0x320] sm:$0xff]
    %v10462 = vld [vmem:[%s5 + $0x328] sm:$0xff]
    %v10463 = vld [vmem:[%s5 + $0x330] sm:$0xff]
    %v10464 = vld [vmem:[%s5 + $0x338] sm:$0xff]
    %v10465 = vld [vmem:[%s5 + $0x340] sm:$0xff]
    %v10466 = vld [vmem:[%s5 + $0x348] sm:$0xff]
    %v10467 = vld [vmem:[%s5 + $0x350] sm:$0xff]
    %v10468 = vld [vmem:[%s5 + $0x358] sm:$0xff]
    %v10469 = vld [vmem:[%s5 + $0x360] sm:$0xff]
    %v10470 = vld [vmem:[%s5 + $0x368] sm:$0xff]
    %v10471 = vld [vmem:[%s5 + $0x370] sm:$0xff]
    %v10472 = vld [vmem:[%s5 + $0x378] sm:$0xff]
    %v10473 = vld [vmem:[%s5 + $0x380] sm:$0xff]
    %v10474 = vld [vmem:[%s5 + $0x388] sm:$0xff]
    %v10475 = vld [vmem:[%s5 + $0x390] sm:$0xff]
    %v10476 = vld [vmem:[%s5 + $0x398] sm:$0xff]
    %v10477 = vld [vmem:[%s5 + $0x3a0] sm:$0xff]
    %v10478 = vld [vmem:[%s5 + $0x3a8] sm:$0xff]
    %v10479 = vld [vmem:[%s5 + $0x3b0] sm:$0xff]
    %v10480 = vld [vmem:[%s5 + $0x3b8] sm:$0xff]
    %v10481 = vld [vmem:[%s5 + $0x3c0] sm:$0xff]
    %v10482 = vld [vmem:[%s5 + $0x3c8] sm:$0xff]
    %v10483 = vld [vmem:[%s5 + $0x3d0] sm:$0xff]
    %v10484 = vld [vmem:[%s5 + $0x3d8] sm:$0xff]
    %v10485 = vld [vmem:[%s5 + $0x3e0] sm:$0xff]
    %v10486 = vld [vmem:[%s5 + $0x3e8] sm:$0xff]
    %v10487 = vld [vmem:[%s5 + $0x3f0] sm:$0xff]
    %v10488 = vld [vmem:[%s5 + $0x3f8] sm:$0xff]
    %v10489 = vld [vmem:[%s5 + $0x400] sm:$0xff]
    %v10490 = vld [vmem:[%s5 + $0x408] sm:$0xff]
    %v10491 = vld [vmem:[%s5 + $0x410] sm:$0xff]
    %v10492 = vld [vmem:[%s5 + $0x418] sm:$0xff]
    %v10493 = vld [vmem:[%s5 + $0x420] sm:$0xff]
    %v10494 = vld [vmem:[%s5 + $0x428] sm:$0xff]
    %v10495 = vld [vmem:[%s5 + $0x430] sm:$0xff]
    %v10496 = vld [vmem:[%s5 + $0x438] sm:$0xff]
    %v10497 = vld [vmem:[%s5 + $0x440] sm:$0xff]
    %v10498 = vld [vmem:[%s5 + $0x448] sm:$0xff]
    %v10499 = vld [vmem:[%s5 + $0x450] sm:$0xff]
    %v10500 = vld [vmem:[%s5 + $0x458] sm:$0xff]
    %v10501 = vld [vmem:[%s5 + $0x460] sm:$0xff]
    %v10502 = vld [vmem:[%s5 + $0x468] sm:$0xff]
    %v10503 = vld [vmem:[%s5 + $0x470] sm:$0xff]
    %v10504 = vld [vmem:[%s5 + $0x478] sm:$0xff]
    %v10505 = vld [vmem:[%s5 + $0x480] sm:$0xff]
    %v10506 = vld [vmem:[%s5 + $0x488] sm:$0xff]
    %v10507 = vld [vmem:[%s5 + $0x490] sm:$0xff]
    %v10508 = vld [vmem:[%s5 + $0x498] sm:$0xff]
    %v10509 = vld [vmem:[%s5 + $0x4a0] sm:$0xff]
    %v10510 = vld [vmem:[%s5 + $0x4a8] sm:$0xff]
    %v10511 = vld [vmem:[%s5 + $0x4b0] sm:$0xff]
    %v10512 = vld [vmem:[%s5 + $0x4b8] sm:$0xff]
    %v10513 = vld [vmem:[%s5 + $0x4c0] sm:$0xff]
    %v10514 = vld [vmem:[%s5 + $0x4c8] sm:$0xff]
    %v10515 = vld [vmem:[%s5 + $0x4d0] sm:$0xff]
    %v10516 = vld [vmem:[%s5 + $0x4d8] sm:$0xff]
    %v10517 = vld [vmem:[%s5 + $0x4e0] sm:$0xff]
    %v10518 = vld [vmem:[%s5 + $0x4e8] sm:$0xff]
    %v10519 = vld [vmem:[%s5 + $0x4f0] sm:$0xff]
    %v10520 = vld [vmem:[%s5 + $0x4f8] sm:$0xff]
    %v10521 = vld [vmem:[%s5 + $0x500] sm:$0xff]
    %v10522 = vld [vmem:[%s5 + $0x508] sm:$0xff]
    %v10523 = vld [vmem:[%s5 + $0x510] sm:$0xff]
    %v10524 = vld [vmem:[%s5 + $0x518] sm:$0xff]
    %v10525 = vld [vmem:[%s5 + $0x520] sm:$0xff]
    %v10526 = vld [vmem:[%s5 + $0x528] sm:$0xff]
    %v10527 = vld [vmem:[%s5 + $0x530] sm:$0xff]
    %v10528 = vld [vmem:[%s5 + $0x538] sm:$0xff]
    %v10529 = vld [vmem:[%s5 + $0x540] sm:$0xff]
    %v10530 = vld [vmem:[%s5 + $0x548] sm:$0xff]
    %v10531 = vld [vmem:[%s5 + $0x550] sm:$0xff]
    %v10532 = vld [vmem:[%s5 + $0x558] sm:$0xff]
    %v10533 = vld [vmem:[%s5 + $0x560] sm:$0xff]
    %v10534 = vld [vmem:[%s5 + $0x568] sm:$0xff]
    %v10535 = vld [vmem:[%s5 + $0x570] sm:$0xff]
    %v10536 = vld [vmem:[%s5 + $0x578] sm:$0xff]
    %v10537 = vld [vmem:[%s5 + $0x580] sm:$0xff]
    %v10538 = vld [vmem:[%s5 + $0x588] sm:$0xff]
    %v10539 = vld [vmem:[%s5 + $0x590] sm:$0xff]
    %v10540 = vld [vmem:[%s5 + $0x598] sm:$0xff]
    %v10541 = vld [vmem:[%s6] sm:$0xff]
    %v10542 = vld [vmem:[%s6 + $0x8] sm:$0xff]
    %v10543 = vld [vmem:[%s6 + $0x10] sm:$0xff]
    %v10544 = vld [vmem:[%s6 + $0x18] sm:$0xff]
    %v10545 = vld [vmem:[%s6 + $0x20] sm:$0xff]
    %v10546 = vld [vmem:[%s6 + $0x28] sm:$0xff]
    %v10547 = vld [vmem:[%s6 + $0x30] sm:$0xff]
    %v10548 = vld [vmem:[%s6 + $0x38] sm:$0xff]
    %v10549 = vld [vmem:[%s6 + $0x40] sm:$0xff]
    %v10550 = vld [vmem:[%s6 + $0x48] sm:$0xff]
    %v10551 = vld [vmem:[%s6 + $0x50] sm:$0xff]
    %v10552 = vld [vmem:[%s6 + $0x58] sm:$0xff]
    %v10553 = vld [vmem:[%s6 + $0x60] sm:$0xff]
    %v10554 = vld [vmem:[%s6 + $0x68] sm:$0xff]
    %v10555 = vld [vmem:[%s6 + $0x70] sm:$0xff]
    %v10556 = vld [vmem:[%s6 + $0x78] sm:$0xff]
    %v10557 = vld [vmem:[%s6 + $0x80] sm:$0xff]
    %v10558 = vld [vmem:[%s6 + $0x88] sm:$0xff]
    %v10559 = vld [vmem:[%s6 + $0x90] sm:$0xff]
    %v10560 = vld [vmem:[%s6 + $0x98] sm:$0xff]
    %v10561 = vld [vmem:[%s6 + $0xa0] sm:$0xff]
    %v10562 = vld [vmem:[%s6 + $0xa8] sm:$0xff]
    %v10563 = vld [vmem:[%s6 + $0xb0] sm:$0xff]
    %v10564 = vld [vmem:[%s6 + $0xb8] sm:$0xff]
    %v10565 = vld [vmem:[%s6 + $0xc0] sm:$0xff]
    %v10566 = vld [vmem:[%s6 + $0xc8] sm:$0xff]
    %v10567 = vld [vmem:[%s6 + $0xd0] sm:$0xff]
    %v10568 = vld [vmem:[%s6 + $0xd8] sm:$0xff]
    %v10569 = vld [vmem:[%s6 + $0xe0] sm:$0xff]
    %v10570 = vld [vmem:[%s6 + $0xe8] sm:$0xff]
    %v10571 = vld [vmem:[%s6 + $0xf0] sm:$0xff]
    %v10572 = vld [vmem:[%s6 + $0xf8] sm:$0xff]
    %v10573 = vld [vmem:[%s6 + $0x100] sm:$0xff]
    %v10574 = vld [vmem:[%s6 + $0x108] sm:$0xff]
    %v10575 = vld [vmem:[%s6 + $0x110] sm:$0xff]
    %v10576 = vld [vmem:[%s6 + $0x118] sm:$0xff]
    %10578 = vset.pattern.permute.xlu0 0
    %10579 = vperm.xlu0 %10578, %v10541
    %v10580 = vpop.permute.xlu0 %10579
    %10583 = vset.pattern.permute.xlu0 0
    %10584 = vperm.xlu0 %10583, %v10542
    %v10585 = vpop.permute.xlu0 %10584
    %10588 = vset.pattern.permute.xlu0 0
    %10589 = vperm.xlu0 %10588, %v10543
    %v10590 = vpop.permute.xlu0 %10589
    %10593 = vset.pattern.permute.xlu0 0
    %10594 = vperm.xlu0 %10593, %v10544
    %v10595 = vpop.permute.xlu0 %10594
    %10598 = vset.pattern.permute.xlu0 0
    %10599 = vperm.xlu0 %10598, %v10545
    %v10600 = vpop.permute.xlu0 %10599
    %10603 = vset.pattern.permute.xlu0 0
    %10604 = vperm.xlu0 %10603, %v10546
    %v10605 = vpop.permute.xlu0 %10604
    %10608 = vset.pattern.permute.xlu0 0
    %10609 = vperm.xlu0 %10608, %v10547
    %v10610 = vpop.permute.xlu0 %10609
    %10613 = vset.pattern.permute.xlu0 0
    %10614 = vperm.xlu0 %10613, %v10548
    %v10615 = vpop.permute.xlu0 %10614
    %10618 = vset.pattern.permute.xlu0 0
    %10619 = vperm.xlu0 %10618, %v10549
    %v10620 = vpop.permute.xlu0 %10619
    %10623 = vset.pattern.permute.xlu0 0
    %10624 = vperm.xlu0 %10623, %v10550
    %v10625 = vpop.permute.xlu0 %10624
    %10628 = vset.pattern.permute.xlu0 0
    %10629 = vperm.xlu0 %10628, %v10551
    %v10630 = vpop.permute.xlu0 %10629
    %10633 = vset.pattern.permute.xlu0 0
    %10634 = vperm.xlu0 %10633, %v10552
    %v10635 = vpop.permute.xlu0 %10634
    %10638 = vset.pattern.permute.xlu0 0
    %10639 = vperm.xlu0 %10638, %v10553
    %v10640 = vpop.permute.xlu0 %10639
    %10643 = vset.pattern.permute.xlu0 0
    %10644 = vperm.xlu0 %10643, %v10554
    %v10645 = vpop.permute.xlu0 %10644
    %10648 = vset.pattern.permute.xlu0 0
    %10649 = vperm.xlu0 %10648, %v10555
    %v10650 = vpop.permute.xlu0 %10649
    %10653 = vset.pattern.permute.xlu0 0
    %10654 = vperm.xlu0 %10653, %v10556
    %v10655 = vpop.permute.xlu0 %10654
    %10658 = vset.pattern.permute.xlu0 0
    %10659 = vperm.xlu0 %10658, %v10557
    %v10660 = vpop.permute.xlu0 %10659
    %10663 = vset.pattern.permute.xlu0 0
    %10664 = vperm.xlu0 %10663, %v10558
    %v10665 = vpop.permute.xlu0 %10664
    %10668 = vset.pattern.permute.xlu0 0
    %10669 = vperm.xlu0 %10668, %v10559
    %v10670 = vpop.permute.xlu0 %10669
    %10673 = vset.pattern.permute.xlu0 0
    %10674 = vperm.xlu0 %10673, %v10560
    %v10675 = vpop.permute.xlu0 %10674
    %10678 = vset.pattern.permute.xlu0 0
    %10679 = vperm.xlu0 %10678, %v10561
    %v10680 = vpop.permute.xlu0 %10679
    %10683 = vset.pattern.permute.xlu0 0
    %10684 = vperm.xlu0 %10683, %v10562
    %v10685 = vpop.permute.xlu0 %10684
    %10688 = vset.pattern.permute.xlu0 0
    %10689 = vperm.xlu0 %10688, %v10563
    %v10690 = vpop.permute.xlu0 %10689
    %10693 = vset.pattern.permute.xlu0 0
    %10694 = vperm.xlu0 %10693, %v10564
    %v10695 = vpop.permute.xlu0 %10694
    %10698 = vset.pattern.permute.xlu0 0
    %10699 = vperm.xlu0 %10698, %v10565
    %v10700 = vpop.permute.xlu0 %10699
    %10703 = vset.pattern.permute.xlu0 0
    %10704 = vperm.xlu0 %10703, %v10566
    %v10705 = vpop.permute.xlu0 %10704
    %10708 = vset.pattern.permute.xlu0 0
    %10709 = vperm.xlu0 %10708, %v10567
    %v10710 = vpop.permute.xlu0 %10709
    %10713 = vset.pattern.permute.xlu0 0
    %10714 = vperm.xlu0 %10713, %v10568
    %v10715 = vpop.permute.xlu0 %10714
    %10718 = vset.pattern.permute.xlu0 0
    %10719 = vperm.xlu0 %10718, %v10569
    %v10720 = vpop.permute.xlu0 %10719
    %10723 = vset.pattern.permute.xlu0 0
    %10724 = vperm.xlu0 %10723, %v10570
    %v10725 = vpop.permute.xlu0 %10724
    %10728 = vset.pattern.permute.xlu0 0
    %10729 = vperm.xlu0 %10728, %v10571
    %v10730 = vpop.permute.xlu0 %10729
    %10733 = vset.pattern.permute.xlu0 0
    %10734 = vperm.xlu0 %10733, %v10572
    %v10735 = vpop.permute.xlu0 %10734
    %10738 = vset.pattern.permute.xlu0 0
    %10739 = vperm.xlu0 %10738, %v10573
    %v10740 = vpop.permute.xlu0 %10739
    %10743 = vset.pattern.permute.xlu0 0
    %10744 = vperm.xlu0 %10743, %v10574
    %v10745 = vpop.permute.xlu0 %10744
    %10748 = vset.pattern.permute.xlu0 0
    %10749 = vperm.xlu0 %10748, %v10575
    %v10750 = vpop.permute.xlu0 %10749
    %10753 = vset.pattern.permute.xlu0 0
    %10754 = vperm.xlu0 %10753, %v10576
    %v10755 = vpop.permute.xlu0 %10754
    %vm10757 = vcmask 916480
    %v10759 = vsel %vm10757, %v10365, 0
    %v10762 = vsel %vm10757, %v10370, 0
    %v10765 = vsel %vm10757, %v10375, 0
    %v10768 = vsel %vm10757, %v10380, 0
    %v10771 = vsel %vm10757, %v10385, 0
    %v10774 = vsel %vm10757, %v10390, 0
    %v10777 = vsel %vm10757, %v10395, 0
    %v10780 = vsel %vm10757, %v10400, 0
    %v10783 = vsel %vm10757, %v10405, 0
    %v10786 = vsel %vm10757, %v10410, 0
    %v10789 = vsel %vm10757, %v10415, 0
    %v10792 = vsel %vm10757, %v10420, 0
    %v10795 = vsel %vm10757, %v10425, 0
    %v10798 = vsel %vm10757, %v10430, 0
    %v10801 = vsel %vm10757, %v10435, 0
    %v10804 = vsel %vm10757, %v10440, 0
    %v10807 = vsel %vm10757, %v10445, 0
    %v10810 = vsel %vm10757, %v10450, 0
    %v10813 = vsel %vm10757, %v10455, 0
    %v10816 = vsel %vm10757, %v10460, 0
    %v10819 = vsel %vm10757, %v10465, 0
    %v10822 = vsel %vm10757, %v10470, 0
    %v10825 = vsel %vm10757, %v10475, 0
    %v10828 = vsel %vm10757, %v10480, 0
    %v10831 = vsel %vm10757, %v10485, 0
    %v10834 = vsel %vm10757, %v10490, 0
    %v10837 = vsel %vm10757, %v10495, 0
    %v10840 = vsel %vm10757, %v10500, 0
    %v10843 = vsel %vm10757, %v10505, 0
    %v10846 = vsel %vm10757, %v10510, 0
    %v10849 = vsel %vm10757, %v10515, 0
    %v10852 = vsel %vm10757, %v10520, 0
    %v10855 = vsel %vm10757, %v10525, 0
    %v10858 = vsel %vm10757, %v10530, 0
    %v10861 = vsel %vm10757, %v10535, 0
    %v10864 = vsel %vm10757, %v10540, 0
    %10866 = vmatprep.subr.mxu0 0.0
    %10867 = vmatpush1.msra.mxu0 %v10283
    %10868 = vmatprep.subr.mxu0 0.0
    %10869 = vmatpush1.msra.mxu0 %v10284
    %10870 = vmatprep.subr.mxu0 0.0
    %10871 = vmatpush1.msra.mxu0 %v10285
    %10872 = vmatprep.subr.mxu0 0.0
    %10873 = vmatpush1.msra.mxu0 %v10286
    %10874 = vmatprep.subr.mxu0 0.0
    %10875 = vmatpush1.msra.mxu0 %v10287
    %10876 = vmatprep.subr.mxu0 0.0
    %10877 = vmatpush1.msra.mxu0 %v10288
    %10878 = vmatprep.subr.mxu0 0.0
    %10879 = vmatpush1.msra.mxu0 %v10289
    %10880 = vmatprep.subr.mxu0 0.0
    %10881 = vmatpush1.msra.mxu0 %v10290
    %10882 = vmatprep.subr.mxu0 0.0
    %10883 = vmatpush1.msra.mxu0 %v10291
    %10884 = vmatprep.subr.mxu0 0.0
    %10885 = vmatpush1.msra.mxu0 %v10292
    %10886 = vmatprep.subr.mxu0 0.0
    %10887 = vmatpush1.msra.mxu0 %v10293
    %10888 = vmatprep.subr.mxu0 0.0
    %10889 = vmatpush1.msra.mxu0 %v10294
    %10890 = vmatprep.subr.mxu0 0.0
    %10891 = vmatpush1.msra.mxu0 %v10295
    %10892 = vmatprep.subr.mxu0 0.0
    %10893 = vmatpush1.msra.mxu0 %v10296
    %10894 = vmatprep.subr.mxu0 0.0
    %10895 = vmatpush1.msra.mxu0 %v10297
    %10896 = vmatprep.subr.mxu0 0.0
    %10897 = vmatpush1.msra.mxu0 %v10298
    %10898 = vmatprep.subr.mxu0 0.0
    %10899 = vmatpush1.msra.mxu0 %v10299
    %10900 = vmatprep.subr.mxu0 0.0
    %10901 = vmatpush1.msra.mxu0 %v10300
    %10902 = vmatprep.subr.mxu0 0.0
    %10903 = vmatpush1.msra.mxu0 %v10301
    %10904 = vmatprep.subr.mxu0 0.0
    %10905 = vmatpush1.msra.mxu0 %v10302
    %10906 = vmatprep.subr.mxu0 0.0
    %10907 = vmatpush1.msra.mxu0 %v10303
    %10908 = vmatprep.subr.mxu0 0.0
    %10909 = vmatpush1.msra.mxu0 %v10304
    %10910 = vmatprep.subr.mxu0 0.0
    %10911 = vmatpush1.msra.mxu0 %v10305
    %10912 = vmatprep.subr.mxu0 0.0
    %10913 = vmatpush1.msra.mxu0 %v10306
    %10914 = vmatprep.subr.mxu0 0.0
    %10915 = vmatpush1.msra.mxu0 %v10307
    %10916 = vmatprep.subr.mxu0 0.0
    %10917 = vmatpush1.msra.mxu0 %v10308
    %10918 = vmatprep.subr.mxu0 0.0
    %10919 = vmatpush1.msra.mxu0 %v10309
    %10920 = vmatprep.subr.mxu0 0.0
    %10921 = vmatpush1.msra.mxu0 %v10310
    %10922 = vmatprep.subr.mxu0 0.0
    %10923 = vmatpush1.msra.mxu0 %v10311
    %10924 = vmatprep.subr.mxu0 0.0
    %10925 = vmatpush1.msra.mxu0 %v10312
    %10926 = vmatprep.subr.mxu0 0.0
    %10927 = vmatpush1.msra.mxu0 %v10313
    %10928 = vmatprep.subr.mxu0 0.0
    %10929 = vmatpush1.msra.mxu0 %v10314
    %10930 = vmatprep.mubr.f32.mxu0 %v10362
    %10931 = vmatmul.mubr.f32.gmra.mrb[0].mxu0 %v10361
    %v10932 = vpop.f32.mrb[0].mxu0
    %v10933 = vadd.f32 %v10580, %v10932
    %v10934 = vpop.f32.mrb[0].mxu0
    %10935 = vmatprep.mubr.f32.mxu0 %v10367
    %10936 = vmatmul.mubr.f32.gmra.mrb[0].mxu0 %v10366
    %v10937 = vpop.f32.mrb[0].mxu0
    %v10938 = vadd.f32 %v10585, %v10937
    %v10939 = vpop.f32.mrb[0].mxu0
    %10940 = vmatprep.mubr.f32.mxu0 %v10372
    %10941 = vmatmul.mubr.f32.gmra.mrb[0].mxu0 %v10371
    %v10942 = vpop.f32.mrb[0].mxu0
    %v10943 = vadd.f32 %v10590, %v10942
    %v10944 = vpop.f32.mrb[0].mxu0
    %10945 = vmatprep.mubr.f32.mxu0 %v10377
    %10946 = vmatmul.mubr.f32.gmra.mrb[0].mxu0 %v10376
    %v10947 = vpop.f32.mrb[0].mxu0
    %v10948 = vadd.f32 %v10595, %v10947
    %v10949 = vpop.f32.mrb[0].mxu0
    %10950 = vmatprep.mubr.f32.mxu0 %v10382
    %10951 = vmatmul.mubr.f32.gmra.mrb[0].mxu0 %v10381
    %v10952 = vpop.f32.mrb[0].mxu0
    %v10953 = vadd.f32 %v10600, %v10952
    %v10954 = vpop.f32.mrb[0].mxu0
    %10955 = vmatprep.mubr.f32.mxu0 %v10387
    %10956 = vmatmul.mubr.f32.gmra.mrb[0].mxu0 %v10386
    %v10957 = vpop.f32.mrb[0].mxu0
    %v10958 = vadd.f32 %v10605, %v10957
    %v10959 = vpop.f32.mrb[0].mxu0
    %10960 = vmatprep.mubr.f32.mxu0 %v10392
    %10961 = vmatmul.mubr.f32.gmra.mrb[0].mxu0 %v10391
    %v10962 = vpop.f32.mrb[0].mxu0
    %v10963 = vadd.f32 %v10610, %v10962
    %v10964 = vpop.f32.mrb[0].mxu0
    %10965 = vmatprep.mubr.f32.mxu0 %v10397
    %10966 = vmatmul.mubr.f32.gmra.mrb[0].mxu0 %v10396
    %v10967 = vpop.f32.mrb[0].mxu0
    %v10968 = vadd.f32 %v10615, %v10967
    %v10969 = vpop.f32.mrb[0].mxu0
    %10970 = vmatprep.mubr.f32.mxu0 %v10402
    %10971 = vmatmul.mubr.f32.gmra.mrb[0].mxu0 %v10401
    %v10972 = vpop.f32.mrb[0].mxu0
    %v10973 = vadd.f32 %v10620, %v10972
    %v10974 = vpop.f32.mrb[0].mxu0
    %10975 = vmatprep.mubr.f32.mxu0 %v10407
    %10976 = vmatmul.mubr.f32.gmra.mrb[0].mxu0 %v10406
    %v10977 = vpop.f32.mrb[0].mxu0
    %v10978 = vadd.f32 %v10625, %v10977
    %v10979 = vpop.f32.mrb[0].mxu0
    %10980 = vmatprep.mubr.f32.mxu0 %v10412
    %10981 = vmatmul.mubr.f32.gmra.mrb[0].mxu0 %v10411
    %v10982 = vpop.f32.mrb[0].mxu0
    %v10983 = vadd.f32 %v10630, %v10982
    %v10984 = vpop.f32.mrb[0].mxu0
    %10985 = vmatprep.mubr.f32.mxu0 %v10417
    %10986 = vmatmul.mubr.f32.gmra.mrb[0].mxu0 %v10416
    %v10987 = vpop.f32.mrb[0].mxu0
    %v10988 = vadd.f32 %v10635, %v10987
    %v10989 = vpop.f32.mrb[0].mxu0
    %10990 = vmatprep.mubr.f32.mxu0 %v10422
    %10991 = vmatmul.mubr.f32.gmra.mrb[0].mxu0 %v10421
    %v10992 = vpop.f32.mrb[0].mxu0
    %v10993 = vadd.f32 %v10640, %v10992
    %v10994 = vpop.f32.mrb[0].mxu0
    %10995 = vmatprep.mubr.f32.mxu0 %v10427
    %10996 = vmatmul.mubr.f32.gmra.mrb[0].mxu0 %v10426
    %v10997 = vpop.f32.mrb[0].mxu0
    %v10998 = vadd.f32 %v10645, %v10997
    %v10999 = vpop.f32.mrb[0].mxu0
    %11000 = vmatprep.mubr.f32.mxu0 %v10432
    %11001 = vmatmul.mubr.f32.gmra.mrb[0].mxu0 %v10431
    %v11002 = vpop.f32.mrb[0].mxu0
    %v11003 = vadd.f32 %v10650, %v11002
    %v11004 = vpop.f32.mrb[0].mxu0
    %11005 = vmatprep.mubr.f32.mxu0 %v10437
    %11006 = vmatmul.mubr.f32.gmra.mrb[0].mxu0 %v10436
    %v11007 = vpop.f32.mrb[0].mxu0
    %v11008 = vadd.f32 %v10655, %v11007
    %v11009 = vpop.f32.mrb[0].mxu0
    %11010 = vmatprep.mubr.f32.mxu0 %v10442
    %11011 = vmatmul.mubr.f32.gmra.mrb[0].mxu0 %v10441
    %v11012 = vpop.f32.mrb[0].mxu0
    %v11013 = vadd.f32 %v10660, %v11012
    %v11014 = vpop.f32.mrb[0].mxu0
    %11015 = vmatprep.mubr.f32.mxu0 %v10447
    %11016 = vmatmul.mubr.f32.gmra.mrb[0].mxu0 %v10446
    %v11017 = vpop.f32.mrb[0].mxu0
    %v11018 = vadd.f32 %v10665, %v11017
    %v11019 = vpop.f32.mrb[0].mxu0
    %11020 = vmatprep.mubr.f32.mxu0 %v10452
    %11021 = vmatmul.mubr.f32.gmra.mrb[0].mxu0 %v10451
    %v11022 = vpop.f32.mrb[0].mxu0
    %v11023 = vadd.f32 %v10670, %v11022
    %v11024 = vpop.f32.mrb[0].mxu0
    %11025 = vmatprep.mubr.f32.mxu0 %v10457
    %11026 = vmatmul.mubr.f32.gmra.mrb[0].mxu0 %v10456
    %v11027 = vpop.f32.mrb[0].mxu0
    %v11028 = vadd.f32 %v10675, %v11027
    %v11029 = vpop.f32.mrb[0].mxu0
    %11030 = vmatprep.mubr.f32.mxu0 %v10462
    %11031 = vmatmul.mubr.f32.gmra.mrb[0].mxu0 %v10461
    %v11032 = vpop.f32.mrb[0].mxu0
    %v11033 = vadd.f32 %v10680, %v11032
    %v11034 = vpop.f32.mrb[0].mxu0
    %11035 = vmatprep.mubr.f32.mxu0 %v10467
    %11036 = vmatmul.mubr.f32.gmra.mrb[0].mxu0 %v10466
    %v11037 = vpop.f32.mrb[0].mxu0
    %v11038 = vadd.f32 %v10685, %v11037
    %v11039 = vpop.f32.mrb[0].mxu0
    %11040 = vmatprep.mubr.f32.mxu0 %v10472
    %11041 = vmatmul.mubr.f32.gmra.mrb[0].mxu0 %v10471
    %v11042 = vpop.f32.mrb[0].mxu0
    %v11043 = vadd.f32 %v10690, %v11042
    %v11044 = vpop.f32.mrb[0].mxu0
    %11045 = vmatprep.mubr.f32.mxu0 %v10477
    %11046 = vmatmul.mubr.f32.gmra.mrb[0].mxu0 %v10476
    %v11047 = vpop.f32.mrb[0].mxu0
    %v11048 = vadd.f32 %v10695, %v11047
    %v11049 = vpop.f32.mrb[0].mxu0
    %11050 = vmatprep.mubr.f32.mxu0 %v10482
    %11051 = vmatmul.mubr.f32.gmra.mrb[0].mxu0 %v10481
    %v11052 = vpop.f32.mrb[0].mxu0
    %v11053 = vadd.f32 %v10700, %v11052
    %v11054 = vpop.f32.mrb[0].mxu0
    %11055 = vmatprep.mubr.f32.mxu0 %v10487
    %11056 = vmatmul.mubr.f32.gmra.mrb[0].mxu0 %v10486
    %v11057 = vpop.f32.mrb[0].mxu0
    %v11058 = vadd.f32 %v10705, %v11057
    %v11059 = vpop.f32.mrb[0].mxu0
    %11060 = vmatprep.mubr.f32.mxu0 %v10492
    %11061 = vmatmul.mubr.f32.gmra.mrb[0].mxu0 %v10491
    %v11062 = vpop.f32.mrb[0].mxu0
    %v11063 = vadd.f32 %v10710, %v11062
    %v11064 = vpop.f32.mrb[0].mxu0
    %11065 = vmatprep.mubr.f32.mxu0 %v10497
    %11066 = vmatmul.mubr.f32.gmra.mrb[0].mxu0 %v10496
    %v11067 = vpop.f32.mrb[0].mxu0
    %v11068 = vadd.f32 %v10715, %v11067
    %v11069 = vpop.f32.mrb[0].mxu0
    %11070 = vmatprep.mubr.f32.mxu0 %v10502
    %11071 = vmatmul.mubr.f32.gmra.mrb[0].mxu0 %v10501
    %v11072 = vpop.f32.mrb[0].mxu0
    %v11073 = vadd.f32 %v10720, %v11072
    %v11074 = vpop.f32.mrb[0].mxu0
    %11075 = vmatprep.mubr.f32.mxu0 %v10507
    %11076 = vmatmul.mubr.f32.gmra.mrb[0].mxu0 %v10506
    %v11077 = vpop.f32.mrb[0].mxu0
    %v11078 = vadd.f32 %v10725, %v11077
    %v11079 = vpop.f32.mrb[0].mxu0
    %11080 = vmatprep.mubr.f32.mxu0 %v10512
    %11081 = vmatmul.mubr.f32.gmra.mrb[0].mxu0 %v10511
    %v11082 = vpop.f32.mrb[0].mxu0
    %v11083 = vadd.f32 %v10730, %v11082
    %v11084 = vpop.f32.mrb[0].mxu0
    %11085 = vmatprep.mubr.f32.mxu0 %v10517
    %11086 = vmatmul.mubr.f32.gmra.mrb[0].mxu0 %v10516
    %v11087 = vpop.f32.mrb[0].mxu0
    %v11088 = vadd.f32 %v10735, %v11087
    %v11089 = vpop.f32.mrb[0].mxu0
    %11090 = vmatprep.mubr.f32.mxu0 %v10522
    %11091 = vmatmul.mubr.f32.gmra.mrb[0].mxu0 %v10521
    %v11092 = vpop.f32.mrb[0].mxu0
    %v11093 = vadd.f32 %v10740, %v11092
    %v11094 = vpop.f32.mrb[0].mxu0
    %11095 = vmatprep.mubr.f32.mxu0 %v10527
    %11096 = vmatmul.mubr.f32.gmra.mrb[0].mxu0 %v10526
    %v11097 = vpop.f32.mrb[0].mxu0
    %v11098 = vadd.f32 %v10745, %v11097
    %v11099 = vpop.f32.mrb[0].mxu0
    %11100 = vmatprep.mubr.f32.mxu0 %v10532
    %11101 = vmatmul.mubr.f32.gmra.mrb[0].mxu0 %v10531
    %v11102 = vpop.f32.mrb[0].mxu0
    %v11103 = vadd.f32 %v10750, %v11102
    %v11104 = vpop.f32.mrb[0].mxu0
    %11105 = vmatprep.mubr.f32.mxu0 %v10537
    %11106 = vmatmul.mubr.f32.gmra.mrb[0].mxu0 %v10536
    %v11107 = vpop.f32.mrb[0].mxu0
    %v11108 = vadd.f32 %v10755, %v11107
    %v11109 = vpop.f32.mrb[0].mxu0
    %11110 = vdwg.mxu0
    %11111 = vmatprep.subr.mxu0 0.0
    %11112 = vmatpush1.msra.mxu0 %v10315
    %11113 = vmatprep.subr.mxu0 0.0
    %11114 = vmatpush1.msra.mxu0 %v10316
    %11115 = vmatprep.subr.mxu0 0.0
    %11116 = vmatpush1.msra.mxu0 %v10317
    %11117 = vmatprep.subr.mxu0 0.0
    %11118 = vmatpush1.msra.mxu0 %v10318
    %11119 = vmatprep.subr.mxu0 0.0
    %11120 = vmatpush1.msra.mxu0 %v10319
    %11121 = vmatprep.subr.mxu0 0.0
    %11122 = vmatpush1.msra.mxu0 %v10320
    %11123 = vmatprep.subr.mxu0 0.0
    %11124 = vmatpush1.msra.mxu0 %v10321
    %11125 = vmatprep.subr.mxu0 0.0
    %11126 = vmatpush1.msra.mxu0 %v10322
    %11127 = vmatprep.subr.mxu0 0.0
    %11128 = vmatpush1.msra.mxu0 %v10323
    %11129 = vmatprep.subr.mxu0 0.0
    %11130 = vmatpush1.msra.mxu0 %v10324
    %11131 = vmatprep.subr.mxu0 0.0
    %11132 = vmatpush1.msra.mxu0 %v10325
    %11133 = vmatprep.subr.mxu0 0.0
    %11134 = vmatpush1.msra.mxu0 %v10326
    %11135 = vmatprep.subr.mxu0 0.0
    %11136 = vmatpush1.msra.mxu0 %v10327
    %11137 = vmatprep.subr.mxu0 0.0
    %11138 = vmatpush1.msra.mxu0 %v10328
    %11139 = vmatprep.subr.mxu0 0.0
    %11140 = vmatpush1.msra.mxu0 %v10329
    %11141 = vmatprep.subr.mxu0 0.0
    %11142 = vmatpush1.msra.mxu0 %v10330
    %11143 = vmatprep.subr.mxu0 0.0
    %11144 = vmatpush1.msra.mxu0 %v10331
    %11145 = vmatprep.subr.mxu0 0.0
    %11146 = vmatpush1.msra.mxu0 %v10332
    %11147 = vmatprep.subr.mxu0 0.0
    %11148 = vmatpush1.msra.mxu0 %v10333
    %11149 = vmatprep.subr.mxu0 0.0
    %11150 = vmatpush1.msra.mxu0 %v10334
    %11151 = vmatprep.subr.mxu0 0.0
    %11152 = vmatpush1.msra.mxu0 %v10335
    %11153 = vmatprep.subr.mxu0 0.0
    %11154 = vmatpush1.msra.mxu0 %v10336
    %11155 = vmatprep.subr.mxu0 0.0
    %11156 = vmatpush1.msra.mxu0 %v10337
    %11157 = vmatprep.subr.mxu0 0.0
    %11158 = vmatpush1.msra.mxu0 %v10338
    %11159 = vmatprep.subr.mxu0 0.0
    %11160 = vmatpush1.msra.mxu0 %v10339
    %11161 = vmatprep.subr.mxu0 0.0
    %11162 = vmatpush1.msra.mxu0 %v10340
    %11163 = vmatprep.subr.mxu0 0.0
    %11164 = vmatpush1.msra.mxu0 %v10341
    %11165 = vmatprep.subr.mxu0 0.0
    %11166 = vmatpush1.msra.mxu0 %v10342
    %11167 = vmatprep.subr.mxu0 0.0
    %11168 = vmatpush1.msra.mxu0 %v10343
    %11169 = vmatprep.subr.mxu0 0.0
    %11170 = vmatpush1.msra.mxu0 %v10344
    %11171 = vmatprep.subr.mxu0 0.0
    %11172 = vmatpush1.msra.mxu0 %v10345
    %11173 = vmatprep.subr.mxu0 0.0
    %11174 = vmatpush1.msra.mxu0 %v10346
    %11175 = vmatprep.mubr.f32.mxu0 %v10364
    %11176 = vmatmul.mubr.f32.gmra.mrb[0].mxu0 %v10363
    %v11177 = vpop.f32.mrb[0].mxu0
    %v11178 = vadd.f32 %v10933, %v11177
    %v11179 = vpop.f32.mrb[0].mxu0
    %11180 = vmatprep.mubr.f32.mxu0 %v10369
    %11181 = vmatmul.mubr.f32.gmra.mrb[0].mxu0 %v10368
    %v11182 = vpop.f32.mrb[0].mxu0
    %v11183 = vadd.f32 %v10938, %v11182
    %v11184 = vpop.f32.mrb[0].mxu0
    %11185 = vmatprep.mubr.f32.mxu0 %v10374
    %11186 = vmatmul.mubr.f32.gmra.mrb[0].mxu0 %v10373
    %v11187 = vpop.f32.mrb[0].mxu0
    %v11188 = vadd.f32 %v10943, %v11187
    %v11189 = vpop.f32.mrb[0].mxu0
    %11190 = vmatprep.mubr.f32.mxu0 %v10379
    %11191 = vmatmul.mubr.f32.gmra.mrb[0].mxu0 %v10378
    %v11192 = vpop.f32.mrb[0].mxu0
    %v11193 = vadd.f32 %v10948, %v11192
    %v11194 = vpop.f32.mrb[0].mxu0
    %11195 = vmatprep.mubr.f32.mxu0 %v10384
    %11196 = vmatmul.mubr.f32.gmra.mrb[0].mxu0 %v10383
    %v11197 = vpop.f32.mrb[0].mxu0
    %v11198 = vadd.f32 %v10953, %v11197
    %v11199 = vpop.f32.mrb[0].mxu0
    %11200 = vmatprep.mubr.f32.mxu0 %v10389
    %11201 = vmatmul.mubr.f32.gmra.mrb[0].mxu0 %v10388
    %v11202 = vpop.f32.mrb[0].mxu0
    %v11203 = vadd.f32 %v10958, %v11202
    %v11204 = vpop.f32.mrb[0].mxu0
    %11205 = vmatprep.mubr.f32.mxu0 %v10394
    %11206 = vmatmul.mubr.f32.gmra.mrb[0].mxu0 %v10393
    %v11207 = vpop.f32.mrb[0].mxu0
    %v11208 = vadd.f32 %v10963, %v11207
    %v11209 = vpop.f32.mrb[0].mxu0
    %11210 = vmatprep.mubr.f32.mxu0 %v10399
    %11211 = vmatmul.mubr.f32.gmra.mrb[0].mxu0 %v10398
    %v11212 = vpop.f32.mrb[0].mxu0
    %v11213 = vadd.f32 %v10968, %v11212
    %v11214 = vpop.f32.mrb[0].mxu0
    %11215 = vmatprep.mubr.f32.mxu0 %v10404
    %11216 = vmatmul.mubr.f32.gmra.mrb[0].mxu0 %v10403
    %v11217 = vpop.f32.mrb[0].mxu0
    %v11218 = vadd.f32 %v10973, %v11217
    %v11219 = vpop.f32.mrb[0].mxu0
    %11220 = vmatprep.mubr.f32.mxu0 %v10409
    %11221 = vmatmul.mubr.f32.gmra.mrb[0].mxu0 %v10408
    %v11222 = vpop.f32.mrb[0].mxu0
    %v11223 = vadd.f32 %v10978, %v11222
    %v11224 = vpop.f32.mrb[0].mxu0
    %11225 = vmatprep.mubr.f32.mxu0 %v10414
    %11226 = vmatmul.mubr.f32.gmra.mrb[0].mxu0 %v10413
    %v11227 = vpop.f32.mrb[0].mxu0
    %v11228 = vadd.f32 %v10983, %v11227
    %v11229 = vpop.f32.mrb[0].mxu0
    %11230 = vmatprep.mubr.f32.mxu0 %v10419
    %11231 = vmatmul.mubr.f32.gmra.mrb[0].mxu0 %v10418
    %v11232 = vpop.f32.mrb[0].mxu0
    %v11233 = vadd.f32 %v10988, %v11232
    %v11234 = vpop.f32.mrb[0].mxu0
    %11235 = vmatprep.mubr.f32.mxu0 %v10424
    %11236 = vmatmul.mubr.f32.gmra.mrb[0].mxu0 %v10423
    %v11237 = vpop.f32.mrb[0].mxu0
    %v11238 = vadd.f32 %v10993, %v11237
    %v11239 = vpop.f32.mrb[0].mxu0
    %11240 = vmatprep.mubr.f32.mxu0 %v10429
    %11241 = vmatmul.mubr.f32.gmra.mrb[0].mxu0 %v10428
    %v11242 = vpop.f32.mrb[0].mxu0
    %v11243 = vadd.f32 %v10998, %v11242
    %v11244 = vpop.f32.mrb[0].mxu0
    %11245 = vmatprep.mubr.f32.mxu0 %v10434
    %11246 = vmatmul.mubr.f32.gmra.mrb[0].mxu0 %v10433
    %v11247 = vpop.f32.mrb[0].mxu0
    %v11248 = vadd.f32 %v11003, %v11247
    %v11249 = vpop.f32.mrb[0].mxu0
    %11250 = vmatprep.mubr.f32.mxu0 %v10439
    %11251 = vmatmul.mubr.f32.gmra.mrb[0].mxu0 %v10438
    %v11252 = vpop.f32.mrb[0].mxu0
    %v11253 = vadd.f32 %v11008, %v11252
    %v11254 = vpop.f32.mrb[0].mxu0
    %11255 = vmatprep.mubr.f32.mxu0 %v10444
    %11256 = vmatmul.mubr.f32.gmra.mrb[0].mxu0 %v10443
    %v11257 = vpop.f32.mrb[0].mxu0
    %v11258 = vadd.f32 %v11013, %v11257
    %v11259 = vpop.f32.mrb[0].mxu0
    %11260 = vmatprep.mubr.f32.mxu0 %v10449
    %11261 = vmatmul.mubr.f32.gmra.mrb[0].mxu0 %v10448
    %v11262 = vpop.f32.mrb[0].mxu0
    %v11263 = vadd.f32 %v11018, %v11262
    %v11264 = vpop.f32.mrb[0].mxu0
    %11265 = vmatprep.mubr.f32.mxu0 %v10454
    %11266 = vmatmul.mubr.f32.gmra.mrb[0].mxu0 %v10453
    %v11267 = vpop.f32.mrb[0].mxu0
    %v11268 = vadd.f32 %v11023, %v11267
    %v11269 = vpop.f32.mrb[0].mxu0
    %11270 = vmatprep.mubr.f32.mxu0 %v10459
    %11271 = vmatmul.mubr.f32.gmra.mrb[0].mxu0 %v10458
    %v11272 = vpop.f32.mrb[0].mxu0
    %v11273 = vadd.f32 %v11028, %v11272
    %v11274 = vpop.f32.mrb[0].mxu0
    %11275 = vmatprep.mubr.f32.mxu0 %v10464
    %11276 = vmatmul.mubr.f32.gmra.mrb[0].mxu0 %v10463
    %v11277 = vpop.f32.mrb[0].mxu0
    %v11278 = vadd.f32 %v11033, %v11277
    %v11279 = vpop.f32.mrb[0].mxu0
    %11280 = vmatprep.mubr.f32.mxu0 %v10469
    %11281 = vmatmul.mubr.f32.gmra.mrb[0].mxu0 %v10468
    %v11282 = vpop.f32.mrb[0].mxu0
    %v11283 = vadd.f32 %v11038, %v11282
    %v11284 = vpop.f32.mrb[0].mxu0
    %11285 = vmatprep.mubr.f32.mxu0 %v10474
    %11286 = vmatmul.mubr.f32.gmra.mrb[0].mxu0 %v10473
    %v11287 = vpop.f32.mrb[0].mxu0
    %v11288 = vadd.f32 %v11043, %v11287
    %v11289 = vpop.f32.mrb[0].mxu0
    %11290 = vmatprep.mubr.f32.mxu0 %v10479
    %11291 = vmatmul.mubr.f32.gmra.mrb[0].mxu0 %v10478
    %v11292 = vpop.f32.mrb[0].mxu0
    %v11293 = vadd.f32 %v11048, %v11292
    %v11294 = vpop.f32.mrb[0].mxu0
    %11295 = vmatprep.mubr.f32.mxu0 %v10484
    %11296 = vmatmul.mubr.f32.gmra.mrb[0].mxu0 %v10483
    %v11297 = vpop.f32.mrb[0].mxu0
    %v11298 = vadd.f32 %v11053, %v11297
    %v11299 = vpop.f32.mrb[0].mxu0
    %11300 = vmatprep.mubr.f32.mxu0 %v10489
    %11301 = vmatmul.mubr.f32.gmra.mrb[0].mxu0 %v10488
    %v11302 = vpop.f32.mrb[0].mxu0
    %v11303 = vadd.f32 %v11058, %v11302
    %v11304 = vpop.f32.mrb[0].mxu0
    %11305 = vmatprep.mubr.f32.mxu0 %v10494
    %11306 = vmatmul.mubr.f32.gmra.mrb[0].mxu0 %v10493
    %v11307 = vpop.f32.mrb[0].mxu0
    %v11308 = vadd.f32 %v11063, %v11307
    %v11309 = vpop.f32.mrb[0].mxu0
    %11310 = vmatprep.mubr.f32.mxu0 %v10499
    %11311 = vmatmul.mubr.f32.gmra.mrb[0].mxu0 %v10498
    %v11312 = vpop.f32.mrb[0].mxu0
    %v11313 = vadd.f32 %v11068, %v11312
    %v11314 = vpop.f32.mrb[0].mxu0
    %11315 = vmatprep.mubr.f32.mxu0 %v10504
    %11316 = vmatmul.mubr.f32.gmra.mrb[0].mxu0 %v10503
    %v11317 = vpop.f32.mrb[0].mxu0
    %v11318 = vadd.f32 %v11073, %v11317
    %v11319 = vpop.f32.mrb[0].mxu0
    %11320 = vmatprep.mubr.f32.mxu0 %v10509
    %11321 = vmatmul.mubr.f32.gmra.mrb[0].mxu0 %v10508
    %v11322 = vpop.f32.mrb[0].mxu0
    %v11323 = vadd.f32 %v11078, %v11322
    %v11324 = vpop.f32.mrb[0].mxu0
    %11325 = vmatprep.mubr.f32.mxu0 %v10514
    %11326 = vmatmul.mubr.f32.gmra.mrb[0].mxu0 %v10513
    %v11327 = vpop.f32.mrb[0].mxu0
    %v11328 = vadd.f32 %v11083, %v11327
    %v11329 = vpop.f32.mrb[0].mxu0
    %11330 = vmatprep.mubr.f32.mxu0 %v10519
    %11331 = vmatmul.mubr.f32.gmra.mrb[0].mxu0 %v10518
    %v11332 = vpop.f32.mrb[0].mxu0
    %v11333 = vadd.f32 %v11088, %v11332
    %v11334 = vpop.f32.mrb[0].mxu0
    %11335 = vmatprep.mubr.f32.mxu0 %v10524
    %11336 = vmatmul.mubr.f32.gmra.mrb[0].mxu0 %v10523
    %v11337 = vpop.f32.mrb[0].mxu0
    %v11338 = vadd.f32 %v11093, %v11337
    %v11339 = vpop.f32.mrb[0].mxu0
    %11340 = vmatprep.mubr.f32.mxu0 %v10529
    %11341 = vmatmul.mubr.f32.gmra.mrb[0].mxu0 %v10528
    %v11342 = vpop.f32.mrb[0].mxu0
    %v11343 = vadd.f32 %v11098, %v11342
    %v11344 = vpop.f32.mrb[0].mxu0
    %11345 = vmatprep.mubr.f32.mxu0 %v10534
    %11346 = vmatmul.mubr.f32.gmra.mrb[0].mxu0 %v10533
    %v11347 = vpop.f32.mrb[0].mxu0
    %v11348 = vadd.f32 %v11103, %v11347
    %v11349 = vpop.f32.mrb[0].mxu0
    %11350 = vmatprep.mubr.f32.mxu0 %v10539
    %11351 = vmatmul.mubr.f32.gmra.mrb[0].mxu0 %v10538
    %v11352 = vpop.f32.mrb[0].mxu0
    %v11353 = vadd.f32 %v11108, %v11352
    %v11354 = vpop.f32.mrb[0].mxu0
    %11355 = vdwg.mxu0
    %11356 = vmatprep.subr.mxu0 0.0
    %11357 = vmatpush1.msra.mxu0 %v10347
    %11358 = vmatprep.subr.mxu0 0.0
    %11359 = vmatpush1.msra.mxu0 %v10348
    %11360 = vmatprep.subr.mxu0 0.0
    %11361 = vmatpush1.msra.mxu0 %v10349
    %11362 = vmatprep.subr.mxu0 0.0
    %11363 = vmatpush1.msra.mxu0 %v10350
    %11364 = vmatprep.subr.mxu0 0.0
    %11365 = vmatpush1.msra.mxu0 %v10351
    %11366 = vmatprep.subr.mxu0 0.0
    %11367 = vmatpush1.msra.mxu0 %v10352
    %11368 = vmatprep.subr.mxu0 0.0
    %11369 = vmatpush1.msra.mxu0 %v10353
    %11370 = vmatprep.subr.mxu0 0.0
    %11371 = vmatpush1.msra.mxu0 %v10354
    %11372 = vmatprep.subr.mxu0 0.0
    %11373 = vmatpush1.msra.mxu0 %v10355
    %11374 = vmatprep.subr.mxu0 0.0
    %11375 = vmatpush1.msra.mxu0 %v10356
    %11376 = vmatprep.subr.mxu0 0.0
    %11377 = vmatpush1.msra.mxu0 %v10357
    %11378 = vmatprep.subr.mxu0 0.0
    %11379 = vmatpush1.msra.mxu0 %v10358
    %11380 = vmatprep.subr.mxu0 0.0
    %11381 = vmatpush1.msra.mxu0 %v10359
    %11382 = vmatprep.subr.mxu0 0.0
    %11383 = vmatpush1.msra.mxu0 %v10360
    %11384 = vmatprep.subr.mxu0 0.0
    %11385 = vmatpush1.msra.mxu0 0.0
    %11386 = vmatprep.subr.mxu0 0.0
    %11387 = vmatpush1.msra.mxu0 0.0
    %11388 = vmatprep.subr.mxu0 0.0
    %11389 = vmatpush1.msra.mxu0 0.0
    %11390 = vmatprep.subr.mxu0 0.0
    %11391 = vmatpush1.msra.mxu0 0.0
    %11392 = vmatprep.subr.mxu0 0.0
    %11393 = vmatpush1.msra.mxu0 0.0
    %11394 = vmatprep.subr.mxu0 0.0
    %11395 = vmatpush1.msra.mxu0 0.0
    %11396 = vmatprep.subr.mxu0 0.0
    %11397 = vmatpush1.msra.mxu0 0.0
    %11398 = vmatprep.subr.mxu0 0.0
    %11399 = vmatpush1.msra.mxu0 0.0
    %11400 = vmatprep.subr.mxu0 0.0
    %11401 = vmatpush1.msra.mxu0 0.0
    %11402 = vmatprep.subr.mxu0 0.0
    %11403 = vmatpush1.msra.mxu0 0.0
    %11404 = vmatprep.subr.mxu0 0.0
    %11405 = vmatpush1.msra.mxu0 0.0
    %11406 = vmatprep.subr.mxu0 0.0
    %11407 = vmatpush1.msra.mxu0 0.0
    %11408 = vmatprep.subr.mxu0 0.0
    %11409 = vmatpush1.msra.mxu0 0.0
    %11410 = vmatprep.subr.mxu0 0.0
    %11411 = vmatpush1.msra.mxu0 0.0
    %11412 = vmatprep.subr.mxu0 0.0
    %11413 = vmatpush1.msra.mxu0 0.0
    %11414 = vmatprep.subr.mxu0 0.0
    %11415 = vmatpush1.msra.mxu0 0.0
    %11416 = vmatprep.subr.mxu0 0.0
    %11417 = vmatpush1.msra.mxu0 0.0
    %11418 = vmatprep.subr.mxu0 0.0
    %11419 = vmatpush1.msra.mxu0 0.0
    %11420 = vmatprep.mubr.f32.mxu0 0.0
    %11421 = vmatmul.mubr.f32.gmra.mrb[0].mxu0 %v10759
    %v11422 = vpop.f32.mrb[0].mxu0
    %v11423 = vadd.f32 %v11178, %v11422
    %v11424 = vpop.f32.mrb[0].mxu0
    %11425 = vmatprep.mubr.f32.mxu0 0.0
    %11426 = vmatmul.mubr.f32.gmra.mrb[0].mxu0 %v10762
    %v11427 = vpop.f32.mrb[0].mxu0
    %v11428 = vadd.f32 %v11183, %v11427
    %v11429 = vpop.f32.mrb[0].mxu0
    %11430 = vmatprep.mubr.f32.mxu0 0.0
    %11431 = vmatmul.mubr.f32.gmra.mrb[0].mxu0 %v10765
    %v11432 = vpop.f32.mrb[0].mxu0
    %v11433 = vadd.f32 %v11188, %v11432
    %v11434 = vpop.f32.mrb[0].mxu0
    %11435 = vmatprep.mubr.f32.mxu0 0.0
    %11436 = vmatmul.mubr.f32.gmra.mrb[0].mxu0 %v10768
    %v11437 = vpop.f32.mrb[0].mxu0
    %v11438 = vadd.f32 %v11193, %v11437
    %v11439 = vpop.f32.mrb[0].mxu0
    %11440 = vmatprep.mubr.f32.mxu0 0.0
    %11441 = vmatmul.mubr.f32.gmra.mrb[0].mxu0 %v10771
    %v11442 = vpop.f32.mrb[0].mxu0
    %v11443 = vadd.f32 %v11198, %v11442
    %v11444 = vpop.f32.mrb[0].mxu0
    %11445 = vmatprep.mubr.f32.mxu0 0.0
    %11446 = vmatmul.mubr.f32.gmra.mrb[0].mxu0 %v10774
    %v11447 = vpop.f32.mrb[0].mxu0
    %v11448 = vadd.f32 %v11203, %v11447
    %v11449 = vpop.f32.mrb[0].mxu0
    %11450 = vmatprep.mubr.f32.mxu0 0.0
    %11451 = vmatmul.mubr.f32.gmra.mrb[0].mxu0 %v10777
    %v11452 = vpop.f32.mrb[0].mxu0
    %v11453 = vadd.f32 %v11208, %v11452
    %v11454 = vpop.f32.mrb[0].mxu0
    %11455 = vmatprep.mubr.f32.mxu0 0.0
    %11456 = vmatmul.mubr.f32.gmra.mrb[0].mxu0 %v10780
    %v11457 = vpop.f32.mrb[0].mxu0
    %v11458 = vadd.f32 %v11213, %v11457
    %v11459 = vpop.f32.mrb[0].mxu0
    %11460 = vmatprep.mubr.f32.mxu0 0.0
    %11461 = vmatmul.mubr.f32.gmra.mrb[0].mxu0 %v10783
    %v11462 = vpop.f32.mrb[0].mxu0
    %v11463 = vadd.f32 %v11218, %v11462
    %v11464 = vpop.f32.mrb[0].mxu0
    %11465 = vmatprep.mubr.f32.mxu0 0.0
    %11466 = vmatmul.mubr.f32.gmra.mrb[0].mxu0 %v10786
    %v11467 = vpop.f32.mrb[0].mxu0
    %v11468 = vadd.f32 %v11223, %v11467
    %v11469 = vpop.f32.mrb[0].mxu0
    %11470 = vmatprep.mubr.f32.mxu0 0.0
    %11471 = vmatmul.mubr.f32.gmra.mrb[0].mxu0 %v10789
    %v11472 = vpop.f32.mrb[0].mxu0
    %v11473 = vadd.f32 %v11228, %v11472
    %v11474 = vpop.f32.mrb[0].mxu0
    %11475 = vmatprep.mubr.f32.mxu0 0.0
    %11476 = vmatmul.mubr.f32.gmra.mrb[0].mxu0 %v10792
    %v11477 = vpop.f32.mrb[0].mxu0
    %v11478 = vadd.f32 %v11233, %v11477
    %v11479 = vpop.f32.mrb[0].mxu0
    %11480 = vmatprep.mubr.f32.mxu0 0.0
    %11481 = vmatmul.mubr.f32.gmra.mrb[0].mxu0 %v10795
    %v11482 = vpop.f32.mrb[0].mxu0
    %v11483 = vadd.f32 %v11238, %v11482
    %v11484 = vpop.f32.mrb[0].mxu0
    %11485 = vmatprep.mubr.f32.mxu0 0.0
    %11486 = vmatmul.mubr.f32.gmra.mrb[0].mxu0 %v10798
    %v11487 = vpop.f32.mrb[0].mxu0
    %v11488 = vadd.f32 %v11243, %v11487
    %v11489 = vpop.f32.mrb[0].mxu0
    %11490 = vmatprep.mubr.f32.mxu0 0.0
    %11491 = vmatmul.mubr.f32.gmra.mrb[0].mxu0 %v10801
    %v11492 = vpop.f32.mrb[0].mxu0
    %v11493 = vadd.f32 %v11248, %v11492
    %v11494 = vpop.f32.mrb[0].mxu0
    %11495 = vmatprep.mubr.f32.mxu0 0.0
    %11496 = vmatmul.mubr.f32.gmra.mrb[0].mxu0 %v10804
    %v11497 = vpop.f32.mrb[0].mxu0
    %v11498 = vadd.f32 %v11253, %v11497
    %v11499 = vpop.f32.mrb[0].mxu0
    %11500 = vmatprep.mubr.f32.mxu0 0.0
    %11501 = vmatmul.mubr.f32.gmra.mrb[0].mxu0 %v10807
    %v11502 = vpop.f32.mrb[0].mxu0
    %v11503 = vadd.f32 %v11258, %v11502
    %v11504 = vpop.f32.mrb[0].mxu0
    %11505 = vmatprep.mubr.f32.mxu0 0.0
    %11506 = vmatmul.mubr.f32.gmra.mrb[0].mxu0 %v10810
    %v11507 = vpop.f32.mrb[0].mxu0
    %v11508 = vadd.f32 %v11263, %v11507
    %v11509 = vpop.f32.mrb[0].mxu0
    %11510 = vmatprep.mubr.f32.mxu0 0.0
    %11511 = vmatmul.mubr.f32.gmra.mrb[0].mxu0 %v10813
    %v11512 = vpop.f32.mrb[0].mxu0
    %v11513 = vadd.f32 %v11268, %v11512
    %v11514 = vpop.f32.mrb[0].mxu0
    %11515 = vmatprep.mubr.f32.mxu0 0.0
    %11516 = vmatmul.mubr.f32.gmra.mrb[0].mxu0 %v10816
    %v11517 = vpop.f32.mrb[0].mxu0
    %v11518 = vadd.f32 %v11273, %v11517
    %v11519 = vpop.f32.mrb[0].mxu0
    %11520 = vmatprep.mubr.f32.mxu0 0.0
    %11521 = vmatmul.mubr.f32.gmra.mrb[0].mxu0 %v10819
    %v11522 = vpop.f32.mrb[0].mxu0
    %v11523 = vadd.f32 %v11278, %v11522
    %v11524 = vpop.f32.mrb[0].mxu0
    %11525 = vmatprep.mubr.f32.mxu0 0.0
    %11526 = vmatmul.mubr.f32.gmra.mrb[0].mxu0 %v10822
    %v11527 = vpop.f32.mrb[0].mxu0
    %v11528 = vadd.f32 %v11283, %v11527
    %v11529 = vpop.f32.mrb[0].mxu0
    %11530 = vmatprep.mubr.f32.mxu0 0.0
    %11531 = vmatmul.mubr.f32.gmra.mrb[0].mxu0 %v10825
    %v11532 = vpop.f32.mrb[0].mxu0
    %v11533 = vadd.f32 %v11288, %v11532
    %v11534 = vpop.f32.mrb[0].mxu0
    %11535 = vmatprep.mubr.f32.mxu0 0.0
    %11536 = vmatmul.mubr.f32.gmra.mrb[0].mxu0 %v10828
    %v11537 = vpop.f32.mrb[0].mxu0
    %v11538 = vadd.f32 %v11293, %v11537
    %v11539 = vpop.f32.mrb[0].mxu0
    %11540 = vmatprep.mubr.f32.mxu0 0.0
    %11541 = vmatmul.mubr.f32.gmra.mrb[0].mxu0 %v10831
    %v11542 = vpop.f32.mrb[0].mxu0
    %v11543 = vadd.f32 %v11298, %v11542
    %v11544 = vpop.f32.mrb[0].mxu0
    %11545 = vmatprep.mubr.f32.mxu0 0.0
    %11546 = vmatmul.mubr.f32.gmra.mrb[0].mxu0 %v10834
    %v11547 = vpop.f32.mrb[0].mxu0
    %v11548 = vadd.f32 %v11303, %v11547
    %v11549 = vpop.f32.mrb[0].mxu0
    %11550 = vmatprep.mubr.f32.mxu0 0.0
    %11551 = vmatmul.mubr.f32.gmra.mrb[0].mxu0 %v10837
    %v11552 = vpop.f32.mrb[0].mxu0
    %v11553 = vadd.f32 %v11308, %v11552
    %v11554 = vpop.f32.mrb[0].mxu0
    %11555 = vmatprep.mubr.f32.mxu0 0.0
    %11556 = vmatmul.mubr.f32.gmra.mrb[0].mxu0 %v10840
    %v11557 = vpop.f32.mrb[0].mxu0
    %v11558 = vadd.f32 %v11313, %v11557
    %v11559 = vpop.f32.mrb[0].mxu0
    %11560 = vmatprep.mubr.f32.mxu0 0.0
    %11561 = vmatmul.mubr.f32.gmra.mrb[0].mxu0 %v10843
    %v11562 = vpop.f32.mrb[0].mxu0
    %v11563 = vadd.f32 %v11318, %v11562
    %v11564 = vpop.f32.mrb[0].mxu0
    %11565 = vmatprep.mubr.f32.mxu0 0.0
    %11566 = vmatmul.mubr.f32.gmra.mrb[0].mxu0 %v10846
    %v11567 = vpop.f32.mrb[0].mxu0
    %v11568 = vadd.f32 %v11323, %v11567
    %v11569 = vpop.f32.mrb[0].mxu0
    %11570 = vmatprep.mubr.f32.mxu0 0.0
    %11571 = vmatmul.mubr.f32.gmra.mrb[0].mxu0 %v10849
    %v11572 = vpop.f32.mrb[0].mxu0
    %v11573 = vadd.f32 %v11328, %v11572
    %v11574 = vpop.f32.mrb[0].mxu0
    %11575 = vmatprep.mubr.f32.mxu0 0.0
    %11576 = vmatmul.mubr.f32.gmra.mrb[0].mxu0 %v10852
    %v11577 = vpop.f32.mrb[0].mxu0
    %v11578 = vadd.f32 %v11333, %v11577
    %v11579 = vpop.f32.mrb[0].mxu0
    %11580 = vmatprep.mubr.f32.mxu0 0.0
    %11581 = vmatmul.mubr.f32.gmra.mrb[0].mxu0 %v10855
    %v11582 = vpop.f32.mrb[0].mxu0
    %v11583 = vadd.f32 %v11338, %v11582
    %v11584 = vpop.f32.mrb[0].mxu0
    %11585 = vmatprep.mubr.f32.mxu0 0.0
    %11586 = vmatmul.mubr.f32.gmra.mrb[0].mxu0 %v10858
    %v11587 = vpop.f32.mrb[0].mxu0
    %v11588 = vadd.f32 %v11343, %v11587
    %v11589 = vpop.f32.mrb[0].mxu0
    %11590 = vmatprep.mubr.f32.mxu0 0.0
    %11591 = vmatmul.mubr.f32.gmra.mrb[0].mxu0 %v10861
    %v11592 = vpop.f32.mrb[0].mxu0
    %v11593 = vadd.f32 %v11348, %v11592
    %v11594 = vpop.f32.mrb[0].mxu0
    %11595 = vmatprep.mubr.f32.mxu0 0.0
    %11596 = vmatmul.mubr.f32.gmra.mrb[0].mxu0 %v10864
    %v11597 = vpop.f32.mrb[0].mxu0
    %v11598 = vadd.f32 %v11353, %v11597
    %v11599 = vpop.f32.mrb[0].mxu0
    %11600 = vdwg.mxu0
    %v11601 = vmax.f32 %v11423, 0.0
    %v11602 = vmax.f32 %v11428, 0.0
    %v11603 = vmax.f32 %v11433, 0.0
    %v11604 = vmax.f32 %v11438, 0.0
    %v11605 = vmax.f32 %v11443, 0.0
    %v11606 = vmax.f32 %v11448, 0.0
    %v11607 = vmax.f32 %v11453, 0.0
    %v11608 = vmax.f32 %v11458, 0.0
    %v11609 = vmax.f32 %v11463, 0.0
    %v11610 = vmax.f32 %v11468, 0.0
    %v11611 = vmax.f32 %v11473, 0.0
    %v11612 = vmax.f32 %v11478, 0.0
    %v11613 = vmax.f32 %v11483, 0.0
    %v11614 = vmax.f32 %v11488, 0.0
    %v11615 = vmax.f32 %v11493, 0.0
    %v11616 = vmax.f32 %v11498, 0.0
    %v11617 = vmax.f32 %v11503, 0.0
    %v11618 = vmax.f32 %v11508, 0.0
    %v11619 = vmax.f32 %v11513, 0.0
    %v11620 = vmax.f32 %v11518, 0.0
    %v11621 = vmax.f32 %v11523, 0.0
    %v11622 = vmax.f32 %v11528, 0.0
    %v11623 = vmax.f32 %v11533, 0.0
    %v11624 = vmax.f32 %v11538, 0.0
    %v11625 = vmax.f32 %v11543, 0.0
    %v11626 = vmax.f32 %v11548, 0.0
    %v11627 = vmax.f32 %v11553, 0.0
    %v11628 = vmax.f32 %v11558, 0.0
    %v11629 = vmax.f32 %v11563, 0.0
    %v11630 = vmax.f32 %v11568, 0.0
    %v11631 = vmax.f32 %v11573, 0.0
    %v11632 = vmax.f32 %v11578, 0.0
    %v11633 = vmax.f32 %v11583, 0.0
    %v11634 = vmax.f32 %v11588, 0.0
    %v11635 = vmax.f32 %v11593, 0.0
    %v11636 = vmax.f32 %v11598, 0.0
    %v11637 = vld [vmem:[%s7] sm:$0x7f]
    %v11638 = vld [vmem:[%s7 + $0x8] sm:$0x7f]
    %v11639 = vld [vmem:[%s7 + $0x10] sm:$0x7f]
    %v11640 = vld [vmem:[%s8] sm:$0x7f]
    %11642 = vset.pattern.permute.xlu0 0
    %11643 = vperm.xlu0 %11642, %v11640
    %v11644 = vpop.permute.xlu0 %11643
    %vm11646 = vcmask 261120
    %v11648 = vsel %vm11646, %v11639, 0
    %11650 = vmatprep.subr.mxu0 0.0
    %11651 = vmatpush1.msra.mxu0 %v11601
    %11652 = vmatprep.subr.mxu0 0.0
    %11653 = vmatpush1.msra.mxu0 %v11602
    %11654 = vmatprep.subr.mxu0 0.0
    %11655 = vmatpush1.msra.mxu0 %v11603
    %11656 = vmatprep.subr.mxu0 0.0
    %11657 = vmatpush1.msra.mxu0 %v11604
    %11658 = vmatprep.subr.mxu0 0.0
    %11659 = vmatpush1.msra.mxu0 %v11605
    %11660 = vmatprep.subr.mxu0 0.0
    %11661 = vmatpush1.msra.mxu0 %v11606
    %11662 = vmatprep.subr.mxu0 0.0
    %11663 = vmatpush1.msra.mxu0 %v11607
    %11664 = vmatprep.subr.mxu0 0.0
    %11665 = vmatpush1.msra.mxu0 %v11608
    %11666 = vmatprep.subr.mxu0 0.0
    %11667 = vmatpush1.msra.mxu0 %v11609
    %11668 = vmatprep.subr.mxu0 0.0
    %11669 = vmatpush1.msra.mxu0 %v11610
    %11670 = vmatprep.subr.mxu0 0.0
    %11671 = vmatpush1.msra.mxu0 %v11611
    %11672 = vmatprep.subr.mxu0 0.0
    %11673 = vmatpush1.msra.mxu0 %v11612
    %11674 = vmatprep.subr.mxu0 0.0
    %11675 = vmatpush1.msra.mxu0 %v11613
    %11676 = vmatprep.subr.mxu0 0.0
    %11677 = vmatpush1.msra.mxu0 %v11614
    %11678 = vmatprep.subr.mxu0 0.0
    %11679 = vmatpush1.msra.mxu0 %v11615
    %11680 = vmatprep.subr.mxu0 0.0
    %11681 = vmatpush1.msra.mxu0 %v11616
    %11682 = vmatprep.subr.mxu0 0.0
    %11683 = vmatpush1.msra.mxu0 %v11617
    %11684 = vmatprep.subr.mxu0 0.0
    %11685 = vmatpush1.msra.mxu0 %v11618
    %11686 = vmatprep.subr.mxu0 0.0
    %11687 = vmatpush1.msra.mxu0 %v11619
    %11688 = vmatprep.subr.mxu0 0.0
    %11689 = vmatpush1.msra.mxu0 %v11620
    %11690 = vmatprep.subr.mxu0 0.0
    %11691 = vmatpush1.msra.mxu0 %v11621
    %11692 = vmatprep.subr.mxu0 0.0
    %11693 = vmatpush1.msra.mxu0 %v11622
    %11694 = vmatprep.subr.mxu0 0.0
    %11695 = vmatpush1.msra.mxu0 %v11623
    %11696 = vmatprep.subr.mxu0 0.0
    %11697 = vmatpush1.msra.mxu0 %v11624
    %11698 = vmatprep.subr.mxu0 0.0
    %11699 = vmatpush1.msra.mxu0 %v11625
    %11700 = vmatprep.subr.mxu0 0.0
    %11701 = vmatpush1.msra.mxu0 %v11626
    %11702 = vmatprep.subr.mxu0 0.0
    %11703 = vmatpush1.msra.mxu0 %v11627
    %11704 = vmatprep.subr.mxu0 0.0
    %11705 = vmatpush1.msra.mxu0 %v11628
    %11706 = vmatprep.subr.mxu0 0.0
    %11707 = vmatpush1.msra.mxu0 %v11629
    %11708 = vmatprep.subr.mxu0 0.0
    %11709 = vmatpush1.msra.mxu0 %v11630
    %11710 = vmatprep.subr.mxu0 0.0
    %11711 = vmatpush1.msra.mxu0 %v11631
    %11712 = vmatprep.subr.mxu0 0.0
    %11713 = vmatpush1.msra.mxu0 %v11632
    %11714 = vmatprep.mubr.f32.mxu0 %v11638
    %11715 = vmatmul.mubr.f32.gmra.mrb[0].mxu0 %v11637
    %v11716 = vpop.f32.mrb[0].mxu0
    %v11717 = vadd.f32 %v11644, %v11716
    %v11718 = vpop.f32.mrb[0].mxu0
    %11719 = vdwg.mxu0
    %11720 = vmatprep.subr.mxu0 0.0
    %11721 = vmatpush1.msra.mxu0 %v11633
    %11722 = vmatprep.subr.mxu0 0.0
    %11723 = vmatpush1.msra.mxu0 %v11634
    %11724 = vmatprep.subr.mxu0 0.0
    %11725 = vmatpush1.msra.mxu0 %v11635
    %11726 = vmatprep.subr.mxu0 0.0
    %11727 = vmatpush1.msra.mxu0 %v11636
    %11728 = vmatprep.subr.mxu0 0.0
    %11729 = vmatpush1.msra.mxu0 0.0
    %11730 = vmatprep.subr.mxu0 0.0
    %11731 = vmatpush1.msra.mxu0 0.0
    %11732 = vmatprep.subr.mxu0 0.0
    %11733 = vmatpush1.msra.mxu0 0.0
    %11734 = vmatprep.subr.mxu0 0.0
    %11735 = vmatpush1.msra.mxu0 0.0
    %11736 = vmatprep.subr.mxu0 0.0
    %11737 = vmatpush1.msra.mxu0 0.0
    %11738 = vmatprep.subr.mxu0 0.0
    %11739 = vmatpush1.msra.mxu0 0.0
    %11740 = vmatprep.subr.mxu0 0.0
    %11741 = vmatpush1.msra.mxu0 0.0
    %11742 = vmatprep.subr.mxu0 0.0
    %11743 = vmatpush1.msra.mxu0 0.0
    %11744 = vmatprep.subr.mxu0 0.0
    %11745 = vmatpush1.msra.mxu0 0.0
    %11746 = vmatprep.subr.mxu0 0.0
    %11747 = vmatpush1.msra.mxu0 0.0
    %11748 = vmatprep.subr.mxu0 0.0
    %11749 = vmatpush1.msra.mxu0 0.0
    %11750 = vmatprep.subr.mxu0 0.0
    %11751 = vmatpush1.msra.mxu0 0.0
    %11752 = vmatprep.subr.mxu0 0.0
    %11753 = vmatpush1.msra.mxu0 0.0
    %11754 = vmatprep.subr.mxu0 0.0
    %11755 = vmatpush1.msra.mxu0 0.0
    %11756 = vmatprep.subr.mxu0 0.0
    %11757 = vmatpush1.msra.mxu0 0.0
    %11758 = vmatprep.subr.mxu0 0.0
    %11759 = vmatpush1.msra.mxu0 0.0
    %11760 = vmatprep.subr.mxu0 0.0
    %11761 = vmatpush1.msra.mxu0 0.0
    %11762 = vmatprep.subr.mxu0 0.0
    %11763 = vmatpush1.msra.mxu0 0.0
    %11764 = vmatprep.subr.mxu0 0.0
    %11765 = vmatpush1.msra.mxu0 0.0
    %11766 = vmatprep.subr.mxu0 0.0
    %11767 = vmatpush1.msra.mxu0 0.0
    %11768 = vmatprep.subr.mxu0 0.0
    %11769 = vmatpush1.msra.mxu0 0.0
    %11770 = vmatprep.subr.mxu0 0.0
    %11771 = vmatpush1.msra.mxu0 0.0
    %11772 = vmatprep.subr.mxu0 0.0
    %11773 = vmatpush1.msra.mxu0 0.0
    %11774 = vmatprep.subr.mxu0 0.0
    %11775 = vmatpush1.msra.mxu0 0.0
    %11776 = vmatprep.subr.mxu0 0.0
    %11777 = vmatpush1.msra.mxu0 0.0
    %11778 = vmatprep.subr.mxu0 0.0
    %11779 = vmatpush1.msra.mxu0 0.0
    %11780 = vmatprep.subr.mxu0 0.0
    %11781 = vmatpush1.msra.mxu0 0.0
    %11782 = vmatprep.subr.mxu0 0.0
    %11783 = vmatpush1.msra.mxu0 0.0
    %11784 = vmatprep.mubr.f32.mxu0 0.0
    %11785 = vmatmul.mubr.f32.gmra.mrb[0].mxu0 %v11648
    %v11786 = vpop.f32.mrb[0].mxu0
    %v11787 = vadd.f32 %v11717, %v11786
    %v11788 = vpop.f32.mrb[0].mxu0
    %11789 = vdwg.mxu0
    %11790 = vst [vmem:[#allocation2] sm:$0x7f] %v11787
    // Predicated region
    $region38: #{tpu_custom_call.1} parent=1 // pred_check
      _
    $region39: #{tpu_custom_call.1} parent=1 // pred_check_branch
      %11792 = sbr.rel (0) target = $region41
    $region40: #{tpu_custom_call.1} parent=1 // pred_region
      %s11794 = ssub.s32 128, 128
      %11795 = vsyncadd [#allocation3], %s11794
      %s11797 = sshll.u32 [#allocation2], 4
      %s11798 = int_to_ptr.vmem [resolvable:$true] %s11797
      %11800 = dma.vmem_to_hbm [thread:$0]  %s11798, 128, %s9, [#allocation3]
    $region41: #{tpu_custom_call.1} parent=1 // pred_fallthru
      _
    // Predicated region
    $region42: #{tpu_custom_call.1} parent=1 // pred_check
      _
    $region43: #{tpu_custom_call.1} parent=1 // pred_check_branch
      %11802 = sbr.rel (0) target = $region45
    $region44: #{tpu_custom_call.1} parent=1 // pred_region
      %11803 = dma.done [#allocation3], 128
    $region45: #{tpu_custom_call.1} parent=1 // pred_fallthru
      _
    %11804 = vsyncpa [#allocation3], 1

</llo_original>
